<compile_context>
chip_gen: v6e
topology: v6e:2x2x1
jax: 0.10.0
libtpu: 0.0.40
codegen_flags: <defaults>
</compile_context>

<pallas_src>
import functools

import numpy as np
import jax
import jax.numpy as jnp
from jax.experimental import pallas as pl
from jax.experimental.pallas import tpu as pltpu


_ARB = pltpu.CompilerParams(dimension_semantics=("arbitrary",))
_EPS = 1e-5


# ----------------------------------------------------------------------------
# Pallas kernels
# ----------------------------------------------------------------------------

def _conv_bias_relu_bn_kernel(x_ref, w_ref, b_ref, g_ref, be_ref, o_ref, *, relu, eps):
    """Fused stage: (M,K)@(K,C) matmul + bias + ReLU + train-mode BatchNorm.

    x_ref: (M, 9*Cin) bf16 im2col operand with the batch folded into M = N*H*W.
    w_ref: (9*Cin, C) bf16; b/g/be: (1, C) f32; o_ref: (M, C) f32.
    """
    acc = jnp.dot(x_ref[...], w_ref[...], preferred_element_type=jnp.float32) + b_ref[...]
    if relu:
        acc = jnp.maximum(acc, 0.0)
    m = acc.shape[0]
    mean = jnp.sum(acc, axis=0, keepdims=True) * (1.0 / m)
    cen = acc - mean
    var = jnp.sum(cen * cen, axis=0, keepdims=True) * (1.0 / m)   # biased, like PyTorch
    scale = g_ref[...] * jax.lax.rsqrt(var + eps)
    o_ref[...] = cen * scale + be_ref[...]


def _conv_bias_kernel(x_ref, w_ref, b_ref, o_ref, *, relu):
    """Plain conv-as-matmul + bias (+ optional ReLU): used for the bottleneck."""
    acc = jnp.dot(x_ref[...], w_ref[...], preferred_element_type=jnp.float32) + b_ref[...]
    if relu:
        acc = jnp.maximum(acc, 0.0)
    o_ref[...] = acc


def _upsample_kernel(u_ref, x_ref, o_ref, *, N):
    """Exact bilinear x2 (align_corners=True): o[n] = U @ x[n].

    u_ref: (Mt, Ms) f32 Kronecker interpolation matrix; x_ref: (N, Ms, C); o_ref: (N, Mt, C).
    Channels stay on lanes; no transposes anywhere.
    """
    for n in range(N):
        o_ref[n] = jnp.dot(u_ref[...], x_ref[n], preferred_element_type=jnp.float32)


def _final_kernel(ut_ref, d2t_ref, c0t_ref, wup_ref, wsk_ref, b_ref, o_ref, *, N):
    """Final stage: upsample x2 + (channel-split) 1x1 conv + sigmoid, lane-dense output.

    conv1x1(cat(up, skip)) is split along input channels so no concat is needed:
        y = w_up^T @ up^T + w_skip^T @ skip^T + b.
    ut: (Ms, Mt) = U^T; d2t: (N, Cp, Ms); c0t: (N, Cs, Mt);
    wup: (1, Cp); wsk: (1, Cs); b: (1, 1); o: (N, 1, Mt) with Mt = H*W on lanes.
    """
    for n in range(N):
        upt = jnp.dot(d2t_ref[n], ut_ref[...], preferred_element_type=jnp.float32)   # (Cp, Mt)
        y = (jnp.dot(wup_ref[...], upt, preferred_element_type=jnp.float32)
             + jnp.dot(wsk_ref[...], c0t_ref[n], preferred_element_type=jnp.float32)
             + b_ref[...])
        o_ref[n] = jax.nn.sigmoid(y)


# ----------------------------------------------------------------------------
# Pallas-backed ops (thin wrappers)
# ----------------------------------------------------------------------------

def _im2col3x3(x, dtype):
    """(N,H,W,C) -> (N*H*W, 9*C) patches for a 3x3 'same' conv (zero padded)."""
    N, H, W, C = x.shape
    xp = jnp.pad(x.astype(dtype), ((0, 0), (1, 1), (1, 1), (0, 0)))
    cols = [xp[:, dy:dy + H, dx:dx + W, :] for dy in range(3) for dx in range(3)]
    return jnp.concatenate(cols, axis=-1).reshape(N * H * W, 9 * C)


def conv3x3(x, w, b, gamma=None, beta=None, *, relu, bn, eps=_EPS):
    """3x3 same conv (+ReLU +train-mode BN) as ONE Pallas call over the whole batch."""
    N, H, W, Cin = x.shape
    Cout = w.shape[-1]
    M = N * H * W
    K = 9 * Cin
    xcol = _im2col3x3(x, jnp.bfloat16)                     # bf16 MXU inputs, f32 accumulation
    w2 = w.reshape(K, Cout).astype(jnp.bfloat16)
    b2 = b.reshape(1, Cout)
    vec_spec = pl.BlockSpec((1, Cout), lambda i: (0, 0))
    in_specs = [pl.BlockSpec((M, K), lambda i: (0, 0)),
                pl.BlockSpec((K, Cout), lambda i: (0, 0)),
                vec_spec]
    if bn:
        kern = functools.partial(_conv_bias_relu_bn_kernel, relu=relu, eps=eps)
        args = (xcol, w2, b2, gamma.reshape(1, Cout), beta.reshape(1, Cout))
        in_specs = in_specs + [vec_spec, vec_spec]
    else:
        kern = functools.partial(_conv_bias_kernel, relu=relu)
        args = (xcol, w2, b2)
    out = pl.pallas_call(
        kern,
        out_shape=jax.ShapeDtypeStruct((M, Cout), jnp.float32),
        grid=(1,),
        in_specs=in_specs,
        out_specs=pl.BlockSpec((M, Cout), lambda i: (0, 0)),
        compiler_params=_ARB,
    )(*args)
    return out.reshape(N, H, W, Cout)


def maxpool2x2(x):
    # TODO(synk): 2x2 max-pool stays a single fused XLA reduce on the Pallas conv output;
    # an in-kernel version would need sublane-strided loads, skipped here for compile safety.
    N, H, W, C = x.shape
    return jnp.max(x.reshape(N, H // 2, 2, W // 2, 2, C), axis=(2, 4))


def _interp_matrix(size_in):
    """1-D bilinear x2 interpolation matrix, align_corners=True (nn.UpsamplingBilinear2d)."""
    size_out = 2 * size_in
    A = np.zeros((size_out, size_in), np.float32)
    if size_in == 1:
        A[:, 0] = 1.0
    else:
        for j in range(size_out):
            src = j * (size_in - 1) / (size_out - 1)
            i0 = int(np.floor(src))
            i1 = min(i0 + 1, size_in - 1)
            wgt = src - i0
            A[j, i0] += 1.0 - wgt
            A[j, i1] += wgt
    return A


def upsample_bilinear2x(x):
    """(N,Hs,Ws,C) -> (N,2Hs,2Ws,C); exact align_corners=True via one Pallas matmul."""
    N, Hs, Ws, C = x.shape
    if Hs == 1 and Ws == 1:
        return jnp.broadcast_to(x, (N, 2, 2, C))           # x2 of a 1x1 map is a broadcast
    U = jnp.asarray(np.kron(_interp_matrix(Hs), _interp_matrix(Ws)))   # (Mt, Ms)
    Mt, Ms = U.shape
    out = pl.pallas_call(
        functools.partial(_upsample_kernel, N=N),
        out_shape=jax.ShapeDtypeStruct((N, Mt, C), jnp.float32),
        grid=(1,),
        in_specs=[pl.BlockSpec((Mt, Ms), lambda i: (0, 0)),
                  pl.BlockSpec((N, Ms, C), lambda i: (0, 0, 0))],
        out_specs=pl.BlockSpec((N, Mt, C), lambda i: (0, 0, 0)),
        compiler_params=_ARB,
    )(U, x.reshape(N, Hs * Ws, C))
    return out.reshape(N, 2 * Hs, 2 * Ws, C)


def final_stage(d2, cat0, w, b):
    """sigmoid(conv1x1(cat(upsample2x(d2), cat0))) as one lane-dense Pallas kernel."""
    N, Hs, Ws, Cp = d2.shape
    _, Ht, Wt, Cs = cat0.shape
    Ms, Mt = Hs * Ws, Ht * Wt
    Ut = jnp.asarray(np.kron(_interp_matrix(Hs), _interp_matrix(Ws)).T)   # (Ms, Mt)
    d2t = jnp.transpose(d2.reshape(N, Ms, Cp), (0, 2, 1))      # (N, Cp, Ms)
    c0t = jnp.transpose(cat0.reshape(N, Mt, Cs), (0, 2, 1))    # (N, Cs, Mt)
    wup = w[:Cp, 0][None, :]                                   # (1, Cp) upsampled-branch weights
    wsk = w[Cp:, 0][None, :]                                   # (1, Cs) skip-branch weights
    out = pl.pallas_call(
        functools.partial(_final_kernel, N=N),
        out_shape=jax.ShapeDtypeStruct((N, 1, Mt), jnp.float32),
        grid=(1,),
        in_specs=[pl.BlockSpec((Ms, Mt), lambda i: (0, 0)),
                  pl.BlockSpec((N, Cp, Ms), lambda i: (0, 0, 0)),
                  pl.BlockSpec((N, Cs, Mt), lambda i: (0, 0, 0)),
                  pl.BlockSpec((1, Cp), lambda i: (0, 0)),
                  pl.BlockSpec((1, Cs), lambda i: (0, 0)),
                  pl.BlockSpec((1, 1), lambda i: (0, 0))],
        out_specs=pl.BlockSpec((N, 1, Mt), lambda i: (0, 0, 0)),
        compiler_params=_ARB,
    )(Ut, d2t, c0t, wup, wsk, b.reshape(1, 1))
    return out.reshape(N, 1, Ht, Wt)                           # already NCHW


# ----------------------------------------------------------------------------
# UNet forward (glue) + parameter init
# ----------------------------------------------------------------------------

_CONV_SHAPES = {
    "enc0": (3, 16), "enc1": (16, 32), "enc2": (32, 64), "enc3": (64, 128),
    "bott": (128, 256),
    "dec0": (384, 128), "dec1": (192, 64), "dec2": (96, 32),
}


def init_params(key):
    p = {}
    keys = jax.random.split(key, 2 * (len(_CONV_SHAPES) + 1))
    ki = 0
    for name, (cin, cout) in _CONV_SHAPES.items():
        fan_in = 3 * 3 * cin
        p[f"w_{name}"] = jax.random.normal(keys[ki], (3, 3, cin, cout),
                                           jnp.float32) / np.sqrt(fan_in)
        p[f"b_{name}"] = 0.01 * jax.random.normal(keys[ki + 1], (cout,), jnp.float32)
        ki += 2
    # dec_conv3: 1x1 conv, 48 -> 1 (channels 0..31 = upsampled d2, 32..47 = cat0)
    p["w_dec3"] = jax.random.normal(keys[ki], (48, 1), jnp.float32) / np.sqrt(48.0)
    p["b_dec3"] = 0.01 * jax.random.normal(keys[ki + 1], (1,), jnp.float32)
    # BatchNorm affine params (PyTorch defaults: gamma=1, beta=0)
    for name, c in [("bn0", 16), ("bn1", 32), ("bn2", 64), ("bn3", 128),
                    ("dbn0", 128), ("dbn1", 64), ("dbn2", 32)]:
        p[f"g_{name}"] = jnp.ones((c,), jnp.float32)
        p[f"be_{name}"] = jnp.zeros((c,), jnp.float32)
    return p


def _encoder_stage(x, w, b, g, be):
    cat = conv3x3(x, w, b, g, be, relu=True, bn=True)   # cat_i == pre-pool activation
    return cat, maxpool2x2(cat)


def _decoder_stage(prev, skip, w, b, g, be):
    xin = jnp.concatenate([upsample_bilinear2x(prev), skip], axis=-1)
    return conv3x3(xin, w, b, g, be, relu=True, bn=True)


@jax.jit
def unet_forward(x_nchw, p):
    x = jnp.transpose(x_nchw, (0, 2, 3, 1))             # NCHW -> NHWC (channels on lanes)
    cat0, e0 = _encoder_stage(x,  p["w_enc0"], p["b_enc0"], p["g_bn0"], p["be_bn0"])
    cat1, e1 = _encoder_stage(e0, p["w_enc1"], p["b_enc1"], p["g_bn1"], p["be_bn1"])
    cat2, e2 = _encoder_stage(e1, p["w_enc2"], p["b_enc2"], p["g_bn2"], p["be_bn2"])
    cat3, e3 = _encoder_stage(e2, p["w_enc3"], p["b_enc3"], p["g_bn3"], p["be_bn3"])
    # bottleneck (no activation / bn, as in the PyTorch forward)
    b = conv3x3(e3, p["w_bott"], p["b_bott"], relu=False, bn=False)
    d0 = _decoder_stage(b,  cat3, p["w_dec0"], p["b_dec0"], p["g_dbn0"], p["be_dbn0"])
    d1 = _decoder_stage(d0, cat2, p["w_dec1"], p["b_dec1"], p["g_dbn1"], p["be_dbn1"])
    d2 = _decoder_stage(d1, cat1, p["w_dec2"], p["b_dec2"], p["g_dbn2"], p["be_dbn2"])
    return final_stage(d2, cat0, p["w_dec3"], p["b_dec3"])   # (N, 1, H, W)


if __name__ == "__main__":
    x = jax.random.normal(jax.random.PRNGKey(0), (2, 3, 16, 16), jnp.float32)   # NCHW
    params = init_params(jax.random.PRNGKey(1))

    out = jax.block_until_ready(unet_forward(x, params))

    assert out.shape == (2, 1, 16, 16), out.shape
    assert out.dtype == jnp.float32
    assert bool(jnp.all(jnp.isfinite(out)))
    assert bool(jnp.all((out >= 0.0) & (out <= 1.0)))   # sigmoid output range
    print("KERNEL_OK")
</pallas_src>

<mosaic_0001>
module attributes {stable_mosaic.version = 11 : i64} {
  func.func @_conv_bias_relu_bn_kernel(%arg0: i32, %arg1: memref<512x27xbf16, #tpu.memory_space<vmem>>, %arg2: memref<27x16xbf16, #tpu.memory_space<vmem>>, %arg3: memref<1x16xf32, #tpu.memory_space<vmem>>, %arg4: memref<1x16xf32, #tpu.memory_space<vmem>>, %arg5: memref<1x16xf32, #tpu.memory_space<vmem>>, %arg6: memref<512x16xf32, #tpu.memory_space<vmem>>) attributes {dimension_semantics = [#tpu.dimension_semantics<arbitrary>], iteration_bounds = array<i64: 1>, scalar_prefetch = 0 : i64, scratch_operands = 0 : i64, tpu.core_type = #tpu.core_type<tc>, window_params = [{pipeline_mode = #tpu.pipeline_mode<synchronous>, transform_indices = @transform_0, window_bounds = array<i64: 512, 27>}, {pipeline_mode = #tpu.pipeline_mode<synchronous>, transform_indices = @transform_1, window_bounds = array<i64: 27, 16>}, {pipeline_mode = #tpu.pipeline_mode<synchronous>, transform_indices = @transform_2, window_bounds = array<i64: 1, 16>}, {pipeline_mode = #tpu.pipeline_mode<synchronous>, transform_indices = @transform_3, window_bounds = array<i64: 1, 16>}, {pipeline_mode = #tpu.pipeline_mode<synchronous>, transform_indices = @transform_4, window_bounds = array<i64: 1, 16>}, {pipeline_mode = #tpu.pipeline_mode<synchronous>, transform_indices = @transform_5, window_bounds = array<i64: 512, 16>}]} {
    %c0 = arith.constant 0 : index
    %c0_0 = arith.constant 0 : index
    %0 = vector.load %arg1[%c0, %c0_0] : memref<512x27xbf16, #tpu.memory_space<vmem>>, vector<512x27xbf16>
    %c0_1 = arith.constant 0 : index
    %c0_2 = arith.constant 0 : index
    %1 = vector.load %arg2[%c0_1, %c0_2] : memref<27x16xbf16, #tpu.memory_space<vmem>>, vector<27x16xbf16>
    %cst = arith.constant dense<0.000000e+00> : vector<512x16xf32>
    %2 = tpu.matmul %0, %1, %cst {dimension_numbers = #tpu.dot_dimension_numbers<[1], [0], [0], [1], [0, 0, 1, 1], [], []>} : vector<512x27xbf16>, vector<27x16xbf16>, vector<512x16xf32> -> vector<512x16xf32>
    %c0_3 = arith.constant 0 : index
    %c0_4 = arith.constant 0 : index
    %3 = vector.load %arg3[%c0_3, %c0_4] : memref<1x16xf32, #tpu.memory_space<vmem>>, vector<1x16xf32>
    %4 = vector.broadcast %3 : vector<1x16xf32> to vector<512x16xf32>
    %5 = arith.addf %2, %4 : vector<512x16xf32>
    %cst_5 = arith.constant 0.000000e+00 : f32
    %6 = vector.broadcast %cst_5 : f32 to vector<512x16xf32>
    %7 = arith.maximumf %5, %6 : vector<512x16xf32>
    %cst_6 = arith.constant dense<0.000000e+00> : vector<16xf32>
    %8 = vector.multi_reduction <add>, %7, %cst_6 [0] : vector<512x16xf32> to vector<16xf32>
    %9 = vector.shape_cast %8 : vector<16xf32> to vector<1x16xf32>
    %cst_7 = arith.constant 0.001953125 : f32
    %10 = vector.broadcast %cst_7 : f32 to vector<1x16xf32>
    %11 = arith.mulf %9, %10 : vector<1x16xf32>
    %12 = vector.broadcast %11 : vector<1x16xf32> to vector<512x16xf32>
    %13 = arith.subf %7, %12 : vector<512x16xf32>
    %14 = arith.mulf %13, %13 : vector<512x16xf32>
    %cst_8 = arith.constant dense<0.000000e+00> : vector<16xf32>
    %15 = vector.multi_reduction <add>, %14, %cst_8 [0] : vector<512x16xf32> to vector<16xf32>
    %16 = vector.shape_cast %15 : vector<16xf32> to vector<1x16xf32>
    %cst_9 = arith.constant 0.001953125 : f32
    %17 = vector.broadcast %cst_9 : f32 to vector<1x16xf32>
    %18 = arith.mulf %16, %17 : vector<1x16xf32>
    %c0_10 = arith.constant 0 : index
    %c0_11 = arith.constant 0 : index
    %19 = vector.load %arg4[%c0_10, %c0_11] : memref<1x16xf32, #tpu.memory_space<vmem>>, vector<1x16xf32>
    %cst_12 = arith.constant 9.99999974E-6 : f32
    %20 = vector.broadcast %cst_12 : f32 to vector<1x16xf32>
    %21 = arith.addf %18, %20 : vector<1x16xf32>
    %22 = math.rsqrt %21 : vector<1x16xf32>
    %23 = arith.mulf %19, %22 : vector<1x16xf32>
    %24 = vector.broadcast %23 : vector<1x16xf32> to vector<512x16xf32>
    %25 = arith.mulf %13, %24 : vector<512x16xf32>
    %c0_13 = arith.constant 0 : index
    %c0_14 = arith.constant 0 : index
    %26 = vector.load %arg5[%c0_13, %c0_14] : memref<1x16xf32, #tpu.memory_space<vmem>>, vector<1x16xf32>
    %27 = vector.broadcast %26 : vector<1x16xf32> to vector<512x16xf32>
    %28 = arith.addf %25, %27 : vector<512x16xf32>
    %c0_15 = arith.constant 0 : index
    %c0_16 = arith.constant 0 : index
    %29 = vector.load %arg6[%c0_15, %c0_16] : memref<512x16xf32, #tpu.memory_space<vmem>>, vector<512x16xf32>
    tpu.vector_store %arg6[%c0_15, %c0_16], %28 {strides = array<i32>} : memref<512x16xf32, #tpu.memory_space<vmem>>, vector<512x16xf32>,
    return
  }
  func.func @transform_0(%arg0: i32) -> (i32, i32) {
    %c0_i32 = arith.constant 0 : i32
    %c0_i32_0 = arith.constant 0 : i32
    %c0_i32_1 = arith.constant 0 : i32
    return %c0_i32, %c0_i32_0 : i32, i32
  }
  func.func @transform_1(%arg0: i32) -> (i32, i32) {
    %c0_i32 = arith.constant 0 : i32
    %c0_i32_0 = arith.constant 0 : i32
    %c0_i32_1 = arith.constant 0 : i32
    return %c0_i32, %c0_i32_0 : i32, i32
  }
  func.func @transform_2(%arg0: i32) -> (i32, i32) {
    %c0_i32 = arith.constant 0 : i32
    %c0_i32_0 = arith.constant 0 : i32
    %c0_i32_1 = arith.constant 0 : i32
    return %c0_i32, %c0_i32_0 : i32, i32
  }
  func.func @transform_3(%arg0: i32) -> (i32, i32) {
    %c0_i32 = arith.constant 0 : i32
    %c0_i32_0 = arith.constant 0 : i32
    %c0_i32_1 = arith.constant 0 : i32
    return %c0_i32, %c0_i32_0 : i32, i32
  }
  func.func @transform_4(%arg0: i32) -> (i32, i32) {
    %c0_i32 = arith.constant 0 : i32
    %c0_i32_0 = arith.constant 0 : i32
    %c0_i32_1 = arith.constant 0 : i32
    return %c0_i32, %c0_i32_0 : i32, i32
  }
  func.func @transform_5(%arg0: i32) -> (i32, i32) {
    %c0_i32 = arith.constant 0 : i32
    %c0_i32_0 = arith.constant 0 : i32
    %c0_i32_1 = arith.constant 0 : i32
    return %c0_i32, %c0_i32_0 : i32, i32
  }
}

module attributes {stable_mosaic.version = 11 : i64} {
  func.func @_conv_bias_relu_bn_kernel(%arg0: i32, %arg1: memref<128x144xbf16, #tpu.memory_space<vmem>>, %arg2: memref<144x32xbf16, #tpu.memory_space<vmem>>, %arg3: memref<1x32xf32, #tpu.memory_space<vmem>>, %arg4: memref<1x32xf32, #tpu.memory_space<vmem>>, %arg5: memref<1x32xf32, #tpu.memory_space<vmem>>, %arg6: memref<128x32xf32, #tpu.memory_space<vmem>>) attributes {dimension_semantics = [#tpu.dimension_semantics<arbitrary>], iteration_bounds = array<i64: 1>, scalar_prefetch = 0 : i64, scratch_operands = 0 : i64, tpu.core_type = #tpu.core_type<tc>, window_params = [{pipeline_mode = #tpu.pipeline_mode<synchronous>, transform_indices = @transform_0, window_bounds = array<i64: 128, 144>}, {pipeline_mode = #tpu.pipeline_mode<synchronous>, transform_indices = @transform_1, window_bounds = array<i64: 144, 32>}, {pipeline_mode = #tpu.pipeline_mode<synchronous>, transform_indices = @transform_2, window_bounds = array<i64: 1, 32>}, {pipeline_mode = #tpu.pipeline_mode<synchronous>, transform_indices = @transform_3, window_bounds = array<i64: 1, 32>}, {pipeline_mode = #tpu.pipeline_mode<synchronous>, transform_indices = @transform_4, window_bounds = array<i64: 1, 32>}, {pipeline_mode = #tpu.pipeline_mode<synchronous>, transform_indices = @transform_5, window_bounds = array<i64: 128, 32>}]} {
    %c0 = arith.constant 0 : index
    %c0_0 = arith.constant 0 : index
    %0 = vector.load %arg1[%c0, %c0_0] : memref<128x144xbf16, #tpu.memory_space<vmem>>, vector<128x144xbf16>
    %c0_1 = arith.constant 0 : index
    %c0_2 = arith.constant 0 : index
    %1 = vector.load %arg2[%c0_1, %c0_2] : memref<144x32xbf16, #tpu.memory_space<vmem>>, vector<144x32xbf16>
    %cst = arith.constant dense<0.000000e+00> : vector<128x32xf32>
    %2 = tpu.matmul %0, %1, %cst {dimension_numbers = #tpu.dot_dimension_numbers<[1], [0], [0], [1], [0, 0, 1, 1], [], []>} : vector<128x144xbf16>, vector<144x32xbf16>, vector<128x32xf32> -> vector<128x32xf32>
    %c0_3 = arith.constant 0 : index
    %c0_4 = arith.constant 0 : index
    %3 = vector.load %arg3[%c0_3, %c0_4] : memref<1x32xf32, #tpu.memory_space<vmem>>, vector<1x32xf32>
    %4 = vector.broadcast %3 : vector<1x32xf32> to vector<128x32xf32>
    %5 = arith.addf %2, %4 : vector<128x32xf32>
    %cst_5 = arith.constant 0.000000e+00 : f32
    %6 = vector.broadcast %cst_5 : f32 to vector<128x32xf32>
    %7 = arith.maximumf %5, %6 : vector<128x32xf32>
    %cst_6 = arith.constant dense<0.000000e+00> : vector<32xf32>
    %8 = vector.multi_reduction <add>, %7, %cst_6 [0] : vector<128x32xf32> to vector<32xf32>
    %9 = vector.shape_cast %8 : vector<32xf32> to vector<1x32xf32>
    %cst_7 = arith.constant 7.812500e-03 : f32
    %10 = vector.broadcast %cst_7 : f32 to vector<1x32xf32>
    %11 = arith.mulf %9, %10 : vector<1x32xf32>
    %12 = vector.broadcast %11 : vector<1x32xf32> to vector<128x32xf32>
    %13 = arith.subf %7, %12 : vector<128x32xf32>
    %14 = arith.mulf %13, %13 : vector<128x32xf32>
    %cst_8 = arith.constant dense<0.000000e+00> : vector<32xf32>
    %15 = vector.multi_reduction <add>, %14, %cst_8 [0] : vector<128x32xf32> to vector<32xf32>
    %16 = vector.shape_cast %15 : vector<32xf32> to vector<1x32xf32>
    %cst_9 = arith.constant 7.812500e-03 : f32
    %17 = vector.broadcast %cst_9 : f32 to vector<1x32xf32>
    %18 = arith.mulf %16, %17 : vector<1x32xf32>
    %c0_10 = arith.constant 0 : index
    %c0_11 = arith.constant 0 : index
    %19 = vector.load %arg4[%c0_10, %c0_11] : memref<1x32xf32, #tpu.memory_space<vmem>>, vector<1x32xf32>
    %cst_12 = arith.constant 9.99999974E-6 : f32
    %20 = vector.broadcast %cst_12 : f32 to vector<1x32xf32>
    %21 = arith.addf %18, %20 : vector<1x32xf32>
    %22 = math.rsqrt %21 : vector<1x32xf32>
    %23 = arith.mulf %19, %22 : vector<1x32xf32>
    %24 = vector.broadcast %23 : vector<1x32xf32> to vector<128x32xf32>
    %25 = arith.mulf %13, %24 : vector<128x32xf32>
    %c0_13 = arith.constant 0 : index
    %c0_14 = arith.constant 0 : index
    %26 = vector.load %arg5[%c0_13, %c0_14] : memref<1x32xf32, #tpu.memory_space<vmem>>, vector<1x32xf32>
    %27 = vector.broadcast %26 : vector<1x32xf32> to vector<128x32xf32>
    %28 = arith.addf %25, %27 : vector<128x32xf32>
    %c0_15 = arith.constant 0 : index
    %c0_16 = arith.constant 0 : index
    %29 = vector.load %arg6[%c0_15, %c0_16] : memref<128x32xf32, #tpu.memory_space<vmem>>, vector<128x32xf32>
    tpu.vector_store %arg6[%c0_15, %c0_16], %28 {strides = array<i32>} : memref<128x32xf32, #tpu.memory_space<vmem>>, vector<128x32xf32>,
    return
  }
  func.func @transform_0(%arg0: i32) -> (i32, i32) {
    %c0_i32 = arith.constant 0 : i32
    %c0_i32_0 = arith.constant 0 : i32
    %c0_i32_1 = arith.constant 0 : i32
    return %c0_i32, %c0_i32_0 : i32, i32
  }
  func.func @transform_1(%arg0: i32) -> (i32, i32) {
    %c0_i32 = arith.constant 0 : i32
    %c0_i32_0 = arith.constant 0 : i32
    %c0_i32_1 = arith.constant 0 : i32
    return %c0_i32, %c0_i32_0 : i32, i32
  }
  func.func @transform_2(%arg0: i32) -> (i32, i32) {
    %c0_i32 = arith.constant 0 : i32
    %c0_i32_0 = arith.constant 0 : i32
    %c0_i32_1 = arith.constant 0 : i32
    return %c0_i32, %c0_i32_0 : i32, i32
  }
  func.func @transform_3(%arg0: i32) -> (i32, i32) {
    %c0_i32 = arith.constant 0 : i32
    %c0_i32_0 = arith.constant 0 : i32
    %c0_i32_1 = arith.constant 0 : i32
    return %c0_i32, %c0_i32_0 : i32, i32
  }
  func.func @transform_4(%arg0: i32) -> (i32, i32) {
    %c0_i32 = arith.constant 0 : i32
    %c0_i32_0 = arith.constant 0 : i32
    %c0_i32_1 = arith.constant 0 : i32
    return %c0_i32, %c0_i32_0 : i32, i32
  }
  func.func @transform_5(%arg0: i32) -> (i32, i32) {
    %c0_i32 = arith.constant 0 : i32
    %c0_i32_0 = arith.constant 0 : i32
    %c0_i32_1 = arith.constant 0 : i32
    return %c0_i32, %c0_i32_0 : i32, i32
  }
}

module attributes {stable_mosaic.version = 11 : i64} {
  func.func @_conv_bias_relu_bn_kernel(%arg0: i32, %arg1: memref<32x288xbf16, #tpu.memory_space<vmem>>, %arg2: memref<288x64xbf16, #tpu.memory_space<vmem>>, %arg3: memref<1x64xf32, #tpu.memory_space<vmem>>, %arg4: memref<1x64xf32, #tpu.memory_space<vmem>>, %arg5: memref<1x64xf32, #tpu.memory_space<vmem>>, %arg6: memref<32x64xf32, #tpu.memory_space<vmem>>) attributes {dimension_semantics = [#tpu.dimension_semantics<arbitrary>], iteration_bounds = array<i64: 1>, scalar_prefetch = 0 : i64, scratch_operands = 0 : i64, tpu.core_type = #tpu.core_type<tc>, window_params = [{pipeline_mode = #tpu.pipeline_mode<synchronous>, transform_indices = @transform_0, window_bounds = array<i64: 32, 288>}, {pipeline_mode = #tpu.pipeline_mode<synchronous>, transform_indices = @transform_1, window_bounds = array<i64: 288, 64>}, {pipeline_mode = #tpu.pipeline_mode<synchronous>, transform_indices = @transform_2, window_bounds = array<i64: 1, 64>}, {pipeline_mode = #tpu.pipeline_mode<synchronous>, transform_indices = @transform_3, window_bounds = array<i64: 1, 64>}, {pipeline_mode = #tpu.pipeline_mode<synchronous>, transform_indices = @transform_4, window_bounds = array<i64: 1, 64>}, {pipeline_mode = #tpu.pipeline_mode<synchronous>, transform_indices = @transform_5, window_bounds = array<i64: 32, 64>}]} {
    %c0 = arith.constant 0 : index
    %c0_0 = arith.constant 0 : index
    %0 = vector.load %arg1[%c0, %c0_0] : memref<32x288xbf16, #tpu.memory_space<vmem>>, vector<32x288xbf16>
    %c0_1 = arith.constant 0 : index
    %c0_2 = arith.constant 0 : index
    %1 = vector.load %arg2[%c0_1, %c0_2] : memref<288x64xbf16, #tpu.memory_space<vmem>>, vector<288x64xbf16>
    %cst = arith.constant dense<0.000000e+00> : vector<32x64xf32>
    %2 = tpu.matmul %0, %1, %cst {dimension_numbers = #tpu.dot_dimension_numbers<[1], [0], [0], [1], [0, 0, 1, 1], [], []>} : vector<32x288xbf16>, vector<288x64xbf16>, vector<32x64xf32> -> vector<32x64xf32>
    %c0_3 = arith.constant 0 : index
    %c0_4 = arith.constant 0 : index
    %3 = vector.load %arg3[%c0_3, %c0_4] : memref<1x64xf32, #tpu.memory_space<vmem>>, vector<1x64xf32>
    %4 = vector.broadcast %3 : vector<1x64xf32> to vector<32x64xf32>
    %5 = arith.addf %2, %4 : vector<32x64xf32>
    %cst_5 = arith.constant 0.000000e+00 : f32
    %6 = vector.broadcast %cst_5 : f32 to vector<32x64xf32>
    %7 = arith.maximumf %5, %6 : vector<32x64xf32>
    %cst_6 = arith.constant dense<0.000000e+00> : vector<64xf32>
    %8 = vector.multi_reduction <add>, %7, %cst_6 [0] : vector<32x64xf32> to vector<64xf32>
    %9 = vector.shape_cast %8 : vector<64xf32> to vector<1x64xf32>
    %cst_7 = arith.constant 3.125000e-02 : f32
    %10 = vector.broadcast %cst_7 : f32 to vector<1x64xf32>
    %11 = arith.mulf %9, %10 : vector<1x64xf32>
    %12 = vector.broadcast %11 : vector<1x64xf32> to vector<32x64xf32>
    %13 = arith.subf %7, %12 : vector<32x64xf32>
    %14 = arith.mulf %13, %13 : vector<32x64xf32>
    %cst_8 = arith.constant dense<0.000000e+00> : vector<64xf32>
    %15 = vector.multi_reduction <add>, %14, %cst_8 [0] : vector<32x64xf32> to vector<64xf32>
    %16 = vector.shape_cast %15 : vector<64xf32> to vector<1x64xf32>
    %cst_9 = arith.constant 3.125000e-02 : f32
    %17 = vector.broadcast %cst_9 : f32 to vector<1x64xf32>
    %18 = arith.mulf %16, %17 : vector<1x64xf32>
    %c0_10 = arith.constant 0 : index
    %c0_11 = arith.constant 0 : index
    %19 = vector.load %arg4[%c0_10, %c0_11] : memref<1x64xf32, #tpu.memory_space<vmem>>, vector<1x64xf32>
    %cst_12 = arith.constant 9.99999974E-6 : f32
    %20 = vector.broadcast %cst_12 : f32 to vector<1x64xf32>
    %21 = arith.addf %18, %20 : vector<1x64xf32>
    %22 = math.rsqrt %21 : vector<1x64xf32>
    %23 = arith.mulf %19, %22 : vector<1x64xf32>
    %24 = vector.broadcast %23 : vector<1x64xf32> to vector<32x64xf32>
    %25 = arith.mulf %13, %24 : vector<32x64xf32>
    %c0_13 = arith.constant 0 : index
    %c0_14 = arith.constant 0 : index
    %26 = vector.load %arg5[%c0_13, %c0_14] : memref<1x64xf32, #tpu.memory_space<vmem>>, vector<1x64xf32>
    %27 = vector.broadcast %26 : vector<1x64xf32> to vector<32x64xf32>
    %28 = arith.addf %25, %27 : vector<32x64xf32>
    %c0_15 = arith.constant 0 : index
    %c0_16 = arith.constant 0 : index
    %29 = vector.load %arg6[%c0_15, %c0_16] : memref<32x64xf32, #tpu.memory_space<vmem>>, vector<32x64xf32>
    tpu.vector_store %arg6[%c0_15, %c0_16], %28 {strides = array<i32>} : memref<32x64xf32, #tpu.memory_space<vmem>>, vector<32x64xf32>,
    return
  }
  func.func @transform_0(%arg0: i32) -> (i32, i32) {
    %c0_i32 = arith.constant 0 : i32
    %c0_i32_0 = arith.constant 0 : i32
    %c0_i32_1 = arith.constant 0 : i32
    return %c0_i32, %c0_i32_0 : i32, i32
  }
  func.func @transform_1(%arg0: i32) -> (i32, i32) {
    %c0_i32 = arith.constant 0 : i32
    %c0_i32_0 = arith.constant 0 : i32
    %c0_i32_1 = arith.constant 0 : i32
    return %c0_i32, %c0_i32_0 : i32, i32
  }
  func.func @transform_2(%arg0: i32) -> (i32, i32) {
    %c0_i32 = arith.constant 0 : i32
    %c0_i32_0 = arith.constant 0 : i32
    %c0_i32_1 = arith.constant 0 : i32
    return %c0_i32, %c0_i32_0 : i32, i32
  }
  func.func @transform_3(%arg0: i32) -> (i32, i32) {
    %c0_i32 = arith.constant 0 : i32
    %c0_i32_0 = arith.constant 0 : i32
    %c0_i32_1 = arith.constant 0 : i32
    return %c0_i32, %c0_i32_0 : i32, i32
  }
  func.func @transform_4(%arg0: i32) -> (i32, i32) {
    %c0_i32 = arith.constant 0 : i32
    %c0_i32_0 = arith.constant 0 : i32
    %c0_i32_1 = arith.constant 0 : i32
    return %c0_i32, %c0_i32_0 : i32, i32
  }
  func.func @transform_5(%arg0: i32) -> (i32, i32) {
    %c0_i32 = arith.constant 0 : i32
    %c0_i32_0 = arith.constant 0 : i32
    %c0_i32_1 = arith.constant 0 : i32
    return %c0_i32, %c0_i32_0 : i32, i32
  }
}

module attributes {stable_mosaic.version = 11 : i64} {
  func.func @_conv_bias_kernel(%arg0: i32, %arg1: memref<2x1152xbf16, #tpu.memory_space<vmem>>, %arg2: memref<1152x256xbf16, #tpu.memory_space<vmem>>, %arg3: memref<1x256xf32, #tpu.memory_space<vmem>>, %arg4: memref<2x256xf32, #tpu.memory_space<vmem>>) attributes {dimension_semantics = [#tpu.dimension_semantics<arbitrary>], iteration_bounds = array<i64: 1>, scalar_prefetch = 0 : i64, scratch_operands = 0 : i64, tpu.core_type = #tpu.core_type<tc>, window_params = [{pipeline_mode = #tpu.pipeline_mode<synchronous>, transform_indices = @transform_0, window_bounds = array<i64: 2, 1152>}, {pipeline_mode = #tpu.pipeline_mode<synchronous>, transform_indices = @transform_1, window_bounds = array<i64: 1152, 256>}, {pipeline_mode = #tpu.pipeline_mode<synchronous>, transform_indices = @transform_2, window_bounds = array<i64: 1, 256>}, {pipeline_mode = #tpu.pipeline_mode<synchronous>, transform_indices = @transform_3, window_bounds = array<i64: 2, 256>}]} {
    %c0 = arith.constant 0 : index
    %c0_0 = arith.constant 0 : index
    %0 = vector.load %arg1[%c0, %c0_0] : memref<2x1152xbf16, #tpu.memory_space<vmem>>, vector<2x1152xbf16>
    %c0_1 = arith.constant 0 : index
    %c0_2 = arith.constant 0 : index
    %1 = vector.load %arg2[%c0_1, %c0_2] : memref<1152x256xbf16, #tpu.memory_space<vmem>>, vector<1152x256xbf16>
    %cst = arith.constant dense<0.000000e+00> : vector<2x256xf32>
    %2 = tpu.matmul %0, %1, %cst {dimension_numbers = #tpu.dot_dimension_numbers<[1], [0], [0], [1], [0, 0, 1, 1], [], []>} : vector<2x1152xbf16>, vector<1152x256xbf16>, vector<2x256xf32> -> vector<2x256xf32>
    %c0_3 = arith.constant 0 : index
    %c0_4 = arith.constant 0 : index
    %3 = vector.load %arg3[%c0_3, %c0_4] : memref<1x256xf32, #tpu.memory_space<vmem>>, vector<1x256xf32>
    %4 = vector.broadcast %3 : vector<1x256xf32> to vector<2x256xf32>
    %5 = arith.addf %2, %4 : vector<2x256xf32>
    %c0_5 = arith.constant 0 : index
    %c0_6 = arith.constant 0 : index
    %6 = vector.load %arg4[%c0_5, %c0_6] : memref<2x256xf32, #tpu.memory_space<vmem>>, vector<2x256xf32>
    tpu.vector_store %arg4[%c0_5, %c0_6], %5 {strides = array<i32>} : memref<2x256xf32, #tpu.memory_space<vmem>>, vector<2x256xf32>,
    return
  }
  func.func @transform_0(%arg0: i32) -> (i32, i32) {
    %c0_i32 = arith.constant 0 : i32
    %c0_i32_0 = arith.constant 0 : i32
    %c0_i32_1 = arith.constant 0 : i32
    return %c0_i32, %c0_i32_0 : i32, i32
  }
  func.func @transform_1(%arg0: i32) -> (i32, i32) {
    %c0_i32 = arith.constant 0 : i32
    %c0_i32_0 = arith.constant 0 : i32
    %c0_i32_1 = arith.constant 0 : i32
    return %c0_i32, %c0_i32_0 : i32, i32
  }
  func.func @transform_2(%arg0: i32) -> (i32, i32) {
    %c0_i32 = arith.constant 0 : i32
    %c0_i32_0 = arith.constant 0 : i32
    %c0_i32_1 = arith.constant 0 : i32
    return %c0_i32, %c0_i32_0 : i32, i32
  }
  func.func @transform_3(%arg0: i32) -> (i32, i32) {
    %c0_i32 = arith.constant 0 : i32
    %c0_i32_0 = arith.constant 0 : i32
    %c0_i32_1 = arith.constant 0 : i32
    return %c0_i32, %c0_i32_0 : i32, i32
  }
}

module attributes {stable_mosaic.version = 11 : i64} {
  func.func @_conv_bias_relu_bn_kernel(%arg0: i32, %arg1: memref<8x576xbf16, #tpu.memory_space<vmem>>, %arg2: memref<576x128xbf16, #tpu.memory_space<vmem>>, %arg3: memref<1x128xf32, #tpu.memory_space<vmem>>, %arg4: memref<1x128xf32, #tpu.memory_space<vmem>>, %arg5: memref<1x128xf32, #tpu.memory_space<vmem>>, %arg6: memref<8x128xf32, #tpu.memory_space<vmem>>) attributes {dimension_semantics = [#tpu.dimension_semantics<arbitrary>], iteration_bounds = array<i64: 1>, scalar_prefetch = 0 : i64, scratch_operands = 0 : i64, tpu.core_type = #tpu.core_type<tc>, window_params = [{pipeline_mode = #tpu.pipeline_mode<synchronous>, transform_indices = @transform_0, window_bounds = array<i64: 8, 576>}, {pipeline_mode = #tpu.pipeline_mode<synchronous>, transform_indices = @transform_1, window_bounds = array<i64: 576, 128>}, {pipeline_mode = #tpu.pipeline_mode<synchronous>, transform_indices = @transform_2, window_bounds = array<i64: 1, 128>}, {pipeline_mode = #tpu.pipeline_mode<synchronous>, transform_indices = @transform_3, window_bounds = array<i64: 1, 128>}, {pipeline_mode = #tpu.pipeline_mode<synchronous>, transform_indices = @transform_4, window_bounds = array<i64: 1, 128>}, {pipeline_mode = #tpu.pipeline_mode<synchronous>, transform_indices = @transform_5, window_bounds = array<i64: 8, 128>}]} {
    %c0 = arith.constant 0 : index
    %c0_0 = arith.constant 0 : index
    %0 = vector.load %arg1[%c0, %c0_0] : memref<8x576xbf16, #tpu.memory_space<vmem>>, vector<8x576xbf16>
    %c0_1 = arith.constant 0 : index
    %c0_2 = arith.constant 0 : index
    %1 = vector.load %arg2[%c0_1, %c0_2] : memref<576x128xbf16, #tpu.memory_space<vmem>>, vector<576x128xbf16>
    %cst = arith.constant dense<0.000000e+00> : vector<8x128xf32>
    %2 = tpu.matmul %0, %1, %cst {dimension_numbers = #tpu.dot_dimension_numbers<[1], [0], [0], [1], [0, 0, 1, 1], [], []>} : vector<8x576xbf16>, vector<576x128xbf16>, vector<8x128xf32> -> vector<8x128xf32>
    %c0_3 = arith.constant 0 : index
    %c0_4 = arith.constant 0 : index
    %3 = vector.load %arg3[%c0_3, %c0_4] : memref<1x128xf32, #tpu.memory_space<vmem>>, vector<1x128xf32>
    %4 = vector.broadcast %3 : vector<1x128xf32> to vector<8x128xf32>
    %5 = arith.addf %2, %4 : vector<8x128xf32>
    %cst_5 = arith.constant 0.000000e+00 : f32
    %6 = vector.broadcast %cst_5 : f32 to vector<8x128xf32>
    %7 = arith.maximumf %5, %6 : vector<8x128xf32>
    %cst_6 = arith.constant dense<0.000000e+00> : vector<128xf32>
    %8 = vector.multi_reduction <add>, %7, %cst_6 [0] : vector<8x128xf32> to vector<128xf32>
    %9 = vector.shape_cast %8 : vector<128xf32> to vector<1x128xf32>
    %cst_7 = arith.constant 1.250000e-01 : f32
    %10 = vector.broadcast %cst_7 : f32 to vector<1x128xf32>
    %11 = arith.mulf %9, %10 : vector<1x128xf32>
    %12 = vector.broadcast %11 : vector<1x128xf32> to vector<8x128xf32>
    %13 = arith.subf %7, %12 : vector<8x128xf32>
    %14 = arith.mulf %13, %13 : vector<8x128xf32>
    %cst_8 = arith.constant dense<0.000000e+00> : vector<128xf32>
    %15 = vector.multi_reduction <add>, %14, %cst_8 [0] : vector<8x128xf32> to vector<128xf32>
    %16 = vector.shape_cast %15 : vector<128xf32> to vector<1x128xf32>
    %cst_9 = arith.constant 1.250000e-01 : f32
    %17 = vector.broadcast %cst_9 : f32 to vector<1x128xf32>
    %18 = arith.mulf %16, %17 : vector<1x128xf32>
    %c0_10 = arith.constant 0 : index
    %c0_11 = arith.constant 0 : index
    %19 = vector.load %arg4[%c0_10, %c0_11] : memref<1x128xf32, #tpu.memory_space<vmem>>, vector<1x128xf32>
    %cst_12 = arith.constant 9.99999974E-6 : f32
    %20 = vector.broadcast %cst_12 : f32 to vector<1x128xf32>
    %21 = arith.addf %18, %20 : vector<1x128xf32>
    %22 = math.rsqrt %21 : vector<1x128xf32>
    %23 = arith.mulf %19, %22 : vector<1x128xf32>
    %24 = vector.broadcast %23 : vector<1x128xf32> to vector<8x128xf32>
    %25 = arith.mulf %13, %24 : vector<8x128xf32>
    %c0_13 = arith.constant 0 : index
    %c0_14 = arith.constant 0 : index
    %26 = vector.load %arg5[%c0_13, %c0_14] : memref<1x128xf32, #tpu.memory_space<vmem>>, vector<1x128xf32>
    %27 = vector.broadcast %26 : vector<1x128xf32> to vector<8x128xf32>
    %28 = arith.addf %25, %27 : vector<8x128xf32>
    %c0_15 = arith.constant 0 : index
    %c0_16 = arith.constant 0 : index
    %29 = vector.load %arg6[%c0_15, %c0_16] : memref<8x128xf32, #tpu.memory_space<vmem>>, vector<8x128xf32>
    tpu.vector_store %arg6[%c0_15, %c0_16], %28 {strides = array<i32>} : memref<8x128xf32, #tpu.memory_space<vmem>>, vector<8x128xf32>,
    return
  }
  func.func @transform_0(%arg0: i32) -> (i32, i32) {
    %c0_i32 = arith.constant 0 : i32
    %c0_i32_0 = arith.constant 0 : i32
    %c0_i32_1 = arith.constant 0 : i32
    return %c0_i32, %c0_i32_0 : i32, i32
  }
  func.func @transform_1(%arg0: i32) -> (i32, i32) {
    %c0_i32 = arith.constant 0 : i32
    %c0_i32_0 = arith.constant 0 : i32
    %c0_i32_1 = arith.constant 0 : i32
    return %c0_i32, %c0_i32_0 : i32, i32
  }
  func.func @transform_2(%arg0: i32) -> (i32, i32) {
    %c0_i32 = arith.constant 0 : i32
    %c0_i32_0 = arith.constant 0 : i32
    %c0_i32_1 = arith.constant 0 : i32
    return %c0_i32, %c0_i32_0 : i32, i32
  }
  func.func @transform_3(%arg0: i32) -> (i32, i32) {
    %c0_i32 = arith.constant 0 : i32
    %c0_i32_0 = arith.constant 0 : i32
    %c0_i32_1 = arith.constant 0 : i32
    return %c0_i32, %c0_i32_0 : i32, i32
  }
  func.func @transform_4(%arg0: i32) -> (i32, i32) {
    %c0_i32 = arith.constant 0 : i32
    %c0_i32_0 = arith.constant 0 : i32
    %c0_i32_1 = arith.constant 0 : i32
    return %c0_i32, %c0_i32_0 : i32, i32
  }
  func.func @transform_5(%arg0: i32) -> (i32, i32) {
    %c0_i32 = arith.constant 0 : i32
    %c0_i32_0 = arith.constant 0 : i32
    %c0_i32_1 = arith.constant 0 : i32
    return %c0_i32, %c0_i32_0 : i32, i32
  }
}

module attributes {stable_mosaic.version = 11 : i64} {
  func.func @_conv_bias_relu_bn_kernel(%arg0: i32, %arg1: memref<8x3456xbf16, #tpu.memory_space<vmem>>, %arg2: memref<3456x128xbf16, #tpu.memory_space<vmem>>, %arg3: memref<1x128xf32, #tpu.memory_space<vmem>>, %arg4: memref<1x128xf32, #tpu.memory_space<vmem>>, %arg5: memref<1x128xf32, #tpu.memory_space<vmem>>, %arg6: memref<8x128xf32, #tpu.memory_space<vmem>>) attributes {dimension_semantics = [#tpu.dimension_semantics<arbitrary>], iteration_bounds = array<i64: 1>, scalar_prefetch = 0 : i64, scratch_operands = 0 : i64, tpu.core_type = #tpu.core_type<tc>, window_params = [{pipeline_mode = #tpu.pipeline_mode<synchronous>, transform_indices = @transform_0, window_bounds = array<i64: 8, 3456>}, {pipeline_mode = #tpu.pipeline_mode<synchronous>, transform_indices = @transform_1, window_bounds = array<i64: 3456, 128>}, {pipeline_mode = #tpu.pipeline_mode<synchronous>, transform_indices = @transform_2, window_bounds = array<i64: 1, 128>}, {pipeline_mode = #tpu.pipeline_mode<synchronous>, transform_indices = @transform_3, window_bounds = array<i64: 1, 128>}, {pipeline_mode = #tpu.pipeline_mode<synchronous>, transform_indices = @transform_4, window_bounds = array<i64: 1, 128>}, {pipeline_mode = #tpu.pipeline_mode<synchronous>, transform_indices = @transform_5, window_bounds = array<i64: 8, 128>}]} {
    %c0 = arith.constant 0 : index
    %c0_0 = arith.constant 0 : index
    %0 = vector.load %arg1[%c0, %c0_0] : memref<8x3456xbf16, #tpu.memory_space<vmem>>, vector<8x3456xbf16>
    %c0_1 = arith.constant 0 : index
    %c0_2 = arith.constant 0 : index
    %1 = vector.load %arg2[%c0_1, %c0_2] : memref<3456x128xbf16, #tpu.memory_space<vmem>>, vector<3456x128xbf16>
    %cst = arith.constant dense<0.000000e+00> : vector<8x128xf32>
    %2 = tpu.matmul %0, %1, %cst {dimension_numbers = #tpu.dot_dimension_numbers<[1], [0], [0], [1], [0, 0, 1, 1], [], []>} : vector<8x3456xbf16>, vector<3456x128xbf16>, vector<8x128xf32> -> vector<8x128xf32>
    %c0_3 = arith.constant 0 : index
    %c0_4 = arith.constant 0 : index
    %3 = vector.load %arg3[%c0_3, %c0_4] : memref<1x128xf32, #tpu.memory_space<vmem>>, vector<1x128xf32>
    %4 = vector.broadcast %3 : vector<1x128xf32> to vector<8x128xf32>
    %5 = arith.addf %2, %4 : vector<8x128xf32>
    %cst_5 = arith.constant 0.000000e+00 : f32
    %6 = vector.broadcast %cst_5 : f32 to vector<8x128xf32>
    %7 = arith.maximumf %5, %6 : vector<8x128xf32>
    %cst_6 = arith.constant dense<0.000000e+00> : vector<128xf32>
    %8 = vector.multi_reduction <add>, %7, %cst_6 [0] : vector<8x128xf32> to vector<128xf32>
    %9 = vector.shape_cast %8 : vector<128xf32> to vector<1x128xf32>
    %cst_7 = arith.constant 1.250000e-01 : f32
    %10 = vector.broadcast %cst_7 : f32 to vector<1x128xf32>
    %11 = arith.mulf %9, %10 : vector<1x128xf32>
    %12 = vector.broadcast %11 : vector<1x128xf32> to vector<8x128xf32>
    %13 = arith.subf %7, %12 : vector<8x128xf32>
    %14 = arith.mulf %13, %13 : vector<8x128xf32>
    %cst_8 = arith.constant dense<0.000000e+00> : vector<128xf32>
    %15 = vector.multi_reduction <add>, %14, %cst_8 [0] : vector<8x128xf32> to vector<128xf32>
    %16 = vector.shape_cast %15 : vector<128xf32> to vector<1x128xf32>
    %cst_9 = arith.constant 1.250000e-01 : f32
    %17 = vector.broadcast %cst_9 : f32 to vector<1x128xf32>
    %18 = arith.mulf %16, %17 : vector<1x128xf32>
    %c0_10 = arith.constant 0 : index
    %c0_11 = arith.constant 0 : index
    %19 = vector.load %arg4[%c0_10, %c0_11] : memref<1x128xf32, #tpu.memory_space<vmem>>, vector<1x128xf32>
    %cst_12 = arith.constant 9.99999974E-6 : f32
    %20 = vector.broadcast %cst_12 : f32 to vector<1x128xf32>
    %21 = arith.addf %18, %20 : vector<1x128xf32>
    %22 = math.rsqrt %21 : vector<1x128xf32>
    %23 = arith.mulf %19, %22 : vector<1x128xf32>
    %24 = vector.broadcast %23 : vector<1x128xf32> to vector<8x128xf32>
    %25 = arith.mulf %13, %24 : vector<8x128xf32>
    %c0_13 = arith.constant 0 : index
    %c0_14 = arith.constant 0 : index
    %26 = vector.load %arg5[%c0_13, %c0_14] : memref<1x128xf32, #tpu.memory_space<vmem>>, vector<1x128xf32>
    %27 = vector.broadcast %26 : vector<1x128xf32> to vector<8x128xf32>
    %28 = arith.addf %25, %27 : vector<8x128xf32>
    %c0_15 = arith.constant 0 : index
    %c0_16 = arith.constant 0 : index
    %29 = vector.load %arg6[%c0_15, %c0_16] : memref<8x128xf32, #tpu.memory_space<vmem>>, vector<8x128xf32>
    tpu.vector_store %arg6[%c0_15, %c0_16], %28 {strides = array<i32>} : memref<8x128xf32, #tpu.memory_space<vmem>>, vector<8x128xf32>,
    return
  }
  func.func @transform_0(%arg0: i32) -> (i32, i32) {
    %c0_i32 = arith.constant 0 : i32
    %c0_i32_0 = arith.constant 0 : i32
    %c0_i32_1 = arith.constant 0 : i32
    return %c0_i32, %c0_i32_0 : i32, i32
  }
  func.func @transform_1(%arg0: i32) -> (i32, i32) {
    %c0_i32 = arith.constant 0 : i32
    %c0_i32_0 = arith.constant 0 : i32
    %c0_i32_1 = arith.constant 0 : i32
    return %c0_i32, %c0_i32_0 : i32, i32
  }
  func.func @transform_2(%arg0: i32) -> (i32, i32) {
    %c0_i32 = arith.constant 0 : i32
    %c0_i32_0 = arith.constant 0 : i32
    %c0_i32_1 = arith.constant 0 : i32
    return %c0_i32, %c0_i32_0 : i32, i32
  }
  func.func @transform_3(%arg0: i32) -> (i32, i32) {
    %c0_i32 = arith.constant 0 : i32
    %c0_i32_0 = arith.constant 0 : i32
    %c0_i32_1 = arith.constant 0 : i32
    return %c0_i32, %c0_i32_0 : i32, i32
  }
  func.func @transform_4(%arg0: i32) -> (i32, i32) {
    %c0_i32 = arith.constant 0 : i32
    %c0_i32_0 = arith.constant 0 : i32
    %c0_i32_1 = arith.constant 0 : i32
    return %c0_i32, %c0_i32_0 : i32, i32
  }
  func.func @transform_5(%arg0: i32) -> (i32, i32) {
    %c0_i32 = arith.constant 0 : i32
    %c0_i32_0 = arith.constant 0 : i32
    %c0_i32_1 = arith.constant 0 : i32
    return %c0_i32, %c0_i32_0 : i32, i32
  }
}

module attributes {stable_mosaic.version = 11 : i64} {
  func.func @_upsample_kernel(%arg0: i32, %arg1: memref<16x4xf32, #tpu.memory_space<vmem>>, %arg2: memref<2x4x128xf32, #tpu.memory_space<vmem>>, %arg3: memref<2x16x128xf32, #tpu.memory_space<vmem>>) attributes {dimension_semantics = [#tpu.dimension_semantics<arbitrary>], iteration_bounds = array<i64: 1>, scalar_prefetch = 0 : i64, scratch_operands = 0 : i64, tpu.core_type = #tpu.core_type<tc>, window_params = [{pipeline_mode = #tpu.pipeline_mode<synchronous>, transform_indices = @transform_0, window_bounds = array<i64: 16, 4>}, {pipeline_mode = #tpu.pipeline_mode<synchronous>, transform_indices = @transform_1, window_bounds = array<i64: 2, 4, 128>}, {pipeline_mode = #tpu.pipeline_mode<synchronous>, transform_indices = @transform_2, window_bounds = array<i64: 2, 16, 128>}]} {
    %c0 = arith.constant 0 : index
    %c0_0 = arith.constant 0 : index
    %0 = vector.load %arg1[%c0, %c0_0] : memref<16x4xf32, #tpu.memory_space<vmem>>, vector<16x4xf32>
    %c0_1 = arith.constant 0 : index
    %c0_2 = arith.constant 0 : index
    %c0_3 = arith.constant 0 : index
    %1 = vector.load %arg2[%c0_1, %c0_2, %c0_3] : memref<2x4x128xf32, #tpu.memory_space<vmem>>, vector<1x4x128xf32>
    %2 = vector.shape_cast %1 : vector<1x4x128xf32> to vector<4x128xf32>
    %cst = arith.constant dense<0.000000e+00> : vector<16x128xf32>
    %3 = tpu.matmul %0, %2, %cst {dimension_numbers = #tpu.dot_dimension_numbers<[1], [0], [0], [1], [0, 0, 1, 1], [], []>} : vector<16x4xf32>, vector<4x128xf32>, vector<16x128xf32> -> vector<16x128xf32>
    %c0_4 = arith.constant 0 : index
    %c0_5 = arith.constant 0 : index
    %c0_6 = arith.constant 0 : index
    %4 = vector.load %arg3[%c0_4, %c0_5, %c0_6] : memref<2x16x128xf32, #tpu.memory_space<vmem>>, vector<1x16x128xf32>
    %5 = vector.shape_cast %4 : vector<1x16x128xf32> to vector<16x128xf32>
    %6 = vector.shape_cast %3 : vector<16x128xf32> to vector<1x16x128xf32>
    tpu.vector_store %arg3[%c0_4, %c0_5, %c0_6], %6 {strides = array<i32>} : memref<2x16x128xf32, #tpu.memory_space<vmem>>, vector<1x16x128xf32>,
    %c0_7 = arith.constant 0 : index
    %c0_8 = arith.constant 0 : index
    %7 = vector.load %arg1[%c0_7, %c0_8] : memref<16x4xf32, #tpu.memory_space<vmem>>, vector<16x4xf32>
    %c1 = arith.constant 1 : index
    %c0_9 = arith.constant 0 : index
    %c0_10 = arith.constant 0 : index
    %8 = vector.load %arg2[%c1, %c0_9, %c0_10] : memref<2x4x128xf32, #tpu.memory_space<vmem>>, vector<1x4x128xf32>
    %9 = vector.shape_cast %8 : vector<1x4x128xf32> to vector<4x128xf32>
    %cst_11 = arith.constant dense<0.000000e+00> : vector<16x128xf32>
    %10 = tpu.matmul %7, %9, %cst_11 {dimension_numbers = #tpu.dot_dimension_numbers<[1], [0], [0], [1], [0, 0, 1, 1], [], []>} : vector<16x4xf32>, vector<4x128xf32>, vector<16x128xf32> -> vector<16x128xf32>
    %c1_12 = arith.constant 1 : index
    %c0_13 = arith.constant 0 : index
    %c0_14 = arith.constant 0 : index
    %11 = vector.load %arg3[%c1_12, %c0_13, %c0_14] : memref<2x16x128xf32, #tpu.memory_space<vmem>>, vector<1x16x128xf32>
    %12 = vector.shape_cast %11 : vector<1x16x128xf32> to vector<16x128xf32>
    %13 = vector.shape_cast %10 : vector<16x128xf32> to vector<1x16x128xf32>
    tpu.vector_store %arg3[%c1_12, %c0_13, %c0_14], %13 {strides = array<i32>} : memref<2x16x128xf32, #tpu.memory_space<vmem>>, vector<1x16x128xf32>,
    return
  }
  func.func @transform_0(%arg0: i32) -> (i32, i32) {
    %c0_i32 = arith.constant 0 : i32
    %c0_i32_0 = arith.constant 0 : i32
    %c0_i32_1 = arith.constant 0 : i32
    return %c0_i32, %c0_i32_0 : i32, i32
  }
  func.func @transform_1(%arg0: i32) -> (i32, i32, i32) {
    %c0_i32 = arith.constant 0 : i32
    %c0_i32_0 = arith.constant 0 : i32
    %c0_i32_1 = arith.constant 0 : i32
    %c0_i32_2 = arith.constant 0 : i32
    return %c0_i32, %c0_i32_0, %c0_i32_1 : i32, i32, i32
  }
  func.func @transform_2(%arg0: i32) -> (i32, i32, i32) {
    %c0_i32 = arith.constant 0 : i32
    %c0_i32_0 = arith.constant 0 : i32
    %c0_i32_1 = arith.constant 0 : i32
    %c0_i32_2 = arith.constant 0 : i32
    return %c0_i32, %c0_i32_0, %c0_i32_1 : i32, i32, i32
  }
}

module attributes {stable_mosaic.version = 11 : i64} {
  func.func @_conv_bias_relu_bn_kernel(%arg0: i32, %arg1: memref<32x1728xbf16, #tpu.memory_space<vmem>>, %arg2: memref<1728x64xbf16, #tpu.memory_space<vmem>>, %arg3: memref<1x64xf32, #tpu.memory_space<vmem>>, %arg4: memref<1x64xf32, #tpu.memory_space<vmem>>, %arg5: memref<1x64xf32, #tpu.memory_space<vmem>>, %arg6: memref<32x64xf32, #tpu.memory_space<vmem>>) attributes {dimension_semantics = [#tpu.dimension_semantics<arbitrary>], iteration_bounds = array<i64: 1>, scalar_prefetch = 0 : i64, scratch_operands = 0 : i64, tpu.core_type = #tpu.core_type<tc>, window_params = [{pipeline_mode = #tpu.pipeline_mode<synchronous>, transform_indices = @transform_0, window_bounds = array<i64: 32, 1728>}, {pipeline_mode = #tpu.pipeline_mode<synchronous>, transform_indices = @transform_1, window_bounds = array<i64: 1728, 64>}, {pipeline_mode = #tpu.pipeline_mode<synchronous>, transform_indices = @transform_2, window_bounds = array<i64: 1, 64>}, {pipeline_mode = #tpu.pipeline_mode<synchronous>, transform_indices = @transform_3, window_bounds = array<i64: 1, 64>}, {pipeline_mode = #tpu.pipeline_mode<synchronous>, transform_indices = @transform_4, window_bounds = array<i64: 1, 64>}, {pipeline_mode = #tpu.pipeline_mode<synchronous>, transform_indices = @transform_5, window_bounds = array<i64: 32, 64>}]} {
    %c0 = arith.constant 0 : index
    %c0_0 = arith.constant 0 : index
    %0 = vector.load %arg1[%c0, %c0_0] : memref<32x1728xbf16, #tpu.memory_space<vmem>>, vector<32x1728xbf16>
    %c0_1 = arith.constant 0 : index
    %c0_2 = arith.constant 0 : index
    %1 = vector.load %arg2[%c0_1, %c0_2] : memref<1728x64xbf16, #tpu.memory_space<vmem>>, vector<1728x64xbf16>
    %cst = arith.constant dense<0.000000e+00> : vector<32x64xf32>
    %2 = tpu.matmul %0, %1, %cst {dimension_numbers = #tpu.dot_dimension_numbers<[1], [0], [0], [1], [0, 0, 1, 1], [], []>} : vector<32x1728xbf16>, vector<1728x64xbf16>, vector<32x64xf32> -> vector<32x64xf32>
    %c0_3 = arith.constant 0 : index
    %c0_4 = arith.constant 0 : index
    %3 = vector.load %arg3[%c0_3, %c0_4] : memref<1x64xf32, #tpu.memory_space<vmem>>, vector<1x64xf32>
    %4 = vector.broadcast %3 : vector<1x64xf32> to vector<32x64xf32>
    %5 = arith.addf %2, %4 : vector<32x64xf32>
    %cst_5 = arith.constant 0.000000e+00 : f32
    %6 = vector.broadcast %cst_5 : f32 to vector<32x64xf32>
    %7 = arith.maximumf %5, %6 : vector<32x64xf32>
    %cst_6 = arith.constant dense<0.000000e+00> : vector<64xf32>
    %8 = vector.multi_reduction <add>, %7, %cst_6 [0] : vector<32x64xf32> to vector<64xf32>
    %9 = vector.shape_cast %8 : vector<64xf32> to vector<1x64xf32>
    %cst_7 = arith.constant 3.125000e-02 : f32
    %10 = vector.broadcast %cst_7 : f32 to vector<1x64xf32>
    %11 = arith.mulf %9, %10 : vector<1x64xf32>
    %12 = vector.broadcast %11 : vector<1x64xf32> to vector<32x64xf32>
    %13 = arith.subf %7, %12 : vector<32x64xf32>
    %14 = arith.mulf %13, %13 : vector<32x64xf32>
    %cst_8 = arith.constant dense<0.000000e+00> : vector<64xf32>
    %15 = vector.multi_reduction <add>, %14, %cst_8 [0] : vector<32x64xf32> to vector<64xf32>
    %16 = vector.shape_cast %15 : vector<64xf32> to vector<1x64xf32>
    %cst_9 = arith.constant 3.125000e-02 : f32
    %17 = vector.broadcast %cst_9 : f32 to vector<1x64xf32>
    %18 = arith.mulf %16, %17 : vector<1x64xf32>
    %c0_10 = arith.constant 0 : index
    %c0_11 = arith.constant 0 : index
    %19 = vector.load %arg4[%c0_10, %c0_11] : memref<1x64xf32, #tpu.memory_space<vmem>>, vector<1x64xf32>
    %cst_12 = arith.constant 9.99999974E-6 : f32
    %20 = vector.broadcast %cst_12 : f32 to vector<1x64xf32>
    %21 = arith.addf %18, %20 : vector<1x64xf32>
    %22 = math.rsqrt %21 : vector<1x64xf32>
    %23 = arith.mulf %19, %22 : vector<1x64xf32>
    %24 = vector.broadcast %23 : vector<1x64xf32> to vector<32x64xf32>
    %25 = arith.mulf %13, %24 : vector<32x64xf32>
    %c0_13 = arith.constant 0 : index
    %c0_14 = arith.constant 0 : index
    %26 = vector.load %arg5[%c0_13, %c0_14] : memref<1x64xf32, #tpu.memory_space<vmem>>, vector<1x64xf32>
    %27 = vector.broadcast %26 : vector<1x64xf32> to vector<32x64xf32>
    %28 = arith.addf %25, %27 : vector<32x64xf32>
    %c0_15 = arith.constant 0 : index
    %c0_16 = arith.constant 0 : index
    %29 = vector.load %arg6[%c0_15, %c0_16] : memref<32x64xf32, #tpu.memory_space<vmem>>, vector<32x64xf32>
    tpu.vector_store %arg6[%c0_15, %c0_16], %28 {strides = array<i32>} : memref<32x64xf32, #tpu.memory_space<vmem>>, vector<32x64xf32>,
    return
  }
  func.func @transform_0(%arg0: i32) -> (i32, i32) {
    %c0_i32 = arith.constant 0 : i32
    %c0_i32_0 = arith.constant 0 : i32
    %c0_i32_1 = arith.constant 0 : i32
    return %c0_i32, %c0_i32_0 : i32, i32
  }
  func.func @transform_1(%arg0: i32) -> (i32, i32) {
    %c0_i32 = arith.constant 0 : i32
    %c0_i32_0 = arith.constant 0 : i32
    %c0_i32_1 = arith.constant 0 : i32
    return %c0_i32, %c0_i32_0 : i32, i32
  }
  func.func @transform_2(%arg0: i32) -> (i32, i32) {
    %c0_i32 = arith.constant 0 : i32
    %c0_i32_0 = arith.constant 0 : i32
    %c0_i32_1 = arith.constant 0 : i32
    return %c0_i32, %c0_i32_0 : i32, i32
  }
  func.func @transform_3(%arg0: i32) -> (i32, i32) {
    %c0_i32 = arith.constant 0 : i32
    %c0_i32_0 = arith.constant 0 : i32
    %c0_i32_1 = arith.constant 0 : i32
    return %c0_i32, %c0_i32_0 : i32, i32
  }
  func.func @transform_4(%arg0: i32) -> (i32, i32) {
    %c0_i32 = arith.constant 0 : i32
    %c0_i32_0 = arith.constant 0 : i32
    %c0_i32_1 = arith.constant 0 : i32
    return %c0_i32, %c0_i32_0 : i32, i32
  }
  func.func @transform_5(%arg0: i32) -> (i32, i32) {
    %c0_i32 = arith.constant 0 : i32
    %c0_i32_0 = arith.constant 0 : i32
    %c0_i32_1 = arith.constant 0 : i32
    return %c0_i32, %c0_i32_0 : i32, i32
  }
}

module attributes {stable_mosaic.version = 11 : i64} {
  func.func @_upsample_kernel(%arg0: i32, %arg1: memref<64x16xf32, #tpu.memory_space<vmem>>, %arg2: memref<2x16x64xf32, #tpu.memory_space<vmem>>, %arg3: memref<2x64x64xf32, #tpu.memory_space<vmem>>) attributes {dimension_semantics = [#tpu.dimension_semantics<arbitrary>], iteration_bounds = array<i64: 1>, scalar_prefetch = 0 : i64, scratch_operands = 0 : i64, tpu.core_type = #tpu.core_type<tc>, window_params = [{pipeline_mode = #tpu.pipeline_mode<synchronous>, transform_indices = @transform_0, window_bounds = array<i64: 64, 16>}, {pipeline_mode = #tpu.pipeline_mode<synchronous>, transform_indices = @transform_1, window_bounds = array<i64: 2, 16, 64>}, {pipeline_mode = #tpu.pipeline_mode<synchronous>, transform_indices = @transform_2, window_bounds = array<i64: 2, 64, 64>}]} {
    %c0 = arith.constant 0 : index
    %c0_0 = arith.constant 0 : index
    %0 = vector.load %arg1[%c0, %c0_0] : memref<64x16xf32, #tpu.memory_space<vmem>>, vector<64x16xf32>
    %c0_1 = arith.constant 0 : index
    %c0_2 = arith.constant 0 : index
    %c0_3 = arith.constant 0 : index
    %1 = vector.load %arg2[%c0_1, %c0_2, %c0_3] : memref<2x16x64xf32, #tpu.memory_space<vmem>>, vector<1x16x64xf32>
    %2 = vector.shape_cast %1 : vector<1x16x64xf32> to vector<16x64xf32>
    %cst = arith.constant dense<0.000000e+00> : vector<64x64xf32>
    %3 = tpu.matmul %0, %2, %cst {dimension_numbers = #tpu.dot_dimension_numbers<[1], [0], [0], [1], [0, 0, 1, 1], [], []>} : vector<64x16xf32>, vector<16x64xf32>, vector<64x64xf32> -> vector<64x64xf32>
    %c0_4 = arith.constant 0 : index
    %c0_5 = arith.constant 0 : index
    %c0_6 = arith.constant 0 : index
    %4 = vector.load %arg3[%c0_4, %c0_5, %c0_6] : memref<2x64x64xf32, #tpu.memory_space<vmem>>, vector<1x64x64xf32>
    %5 = vector.shape_cast %4 : vector<1x64x64xf32> to vector<64x64xf32>
    %6 = vector.shape_cast %3 : vector<64x64xf32> to vector<1x64x64xf32>
    tpu.vector_store %arg3[%c0_4, %c0_5, %c0_6], %6 {strides = array<i32>} : memref<2x64x64xf32, #tpu.memory_space<vmem>>, vector<1x64x64xf32>,
    %c0_7 = arith.constant 0 : index
    %c0_8 = arith.constant 0 : index
    %7 = vector.load %arg1[%c0_7, %c0_8] : memref<64x16xf32, #tpu.memory_space<vmem>>, vector<64x16xf32>
    %c1 = arith.constant 1 : index
    %c0_9 = arith.constant 0 : index
    %c0_10 = arith.constant 0 : index
    %8 = vector.load %arg2[%c1, %c0_9, %c0_10] : memref<2x16x64xf32, #tpu.memory_space<vmem>>, vector<1x16x64xf32>
    %9 = vector.shape_cast %8 : vector<1x16x64xf32> to vector<16x64xf32>
    %cst_11 = arith.constant dense<0.000000e+00> : vector<64x64xf32>
    %10 = tpu.matmul %7, %9, %cst_11 {dimension_numbers = #tpu.dot_dimension_numbers<[1], [0], [0], [1], [0, 0, 1, 1], [], []>} : vector<64x16xf32>, vector<16x64xf32>, vector<64x64xf32> -> vector<64x64xf32>
    %c1_12 = arith.constant 1 : index
    %c0_13 = arith.constant 0 : index
    %c0_14 = arith.constant 0 : index
    %11 = vector.load %arg3[%c1_12, %c0_13, %c0_14] : memref<2x64x64xf32, #tpu.memory_space<vmem>>, vector<1x64x64xf32>
    %12 = vector.shape_cast %11 : vector<1x64x64xf32> to vector<64x64xf32>
    %13 = vector.shape_cast %10 : vector<64x64xf32> to vector<1x64x64xf32>
    tpu.vector_store %arg3[%c1_12, %c0_13, %c0_14], %13 {strides = array<i32>} : memref<2x64x64xf32, #tpu.memory_space<vmem>>, vector<1x64x64xf32>,
    return
  }
  func.func @transform_0(%arg0: i32) -> (i32, i32) {
    %c0_i32 = arith.constant 0 : i32
    %c0_i32_0 = arith.constant 0 : i32
    %c0_i32_1 = arith.constant 0 : i32
    return %c0_i32, %c0_i32_0 : i32, i32
  }
  func.func @transform_1(%arg0: i32) -> (i32, i32, i32) {
    %c0_i32 = arith.constant 0 : i32
    %c0_i32_0 = arith.constant 0 : i32
    %c0_i32_1 = arith.constant 0 : i32
    %c0_i32_2 = arith.constant 0 : i32
    return %c0_i32, %c0_i32_0, %c0_i32_1 : i32, i32, i32
  }
  func.func @transform_2(%arg0: i32) -> (i32, i32, i32) {
    %c0_i32 = arith.constant 0 : i32
    %c0_i32_0 = arith.constant 0 : i32
    %c0_i32_1 = arith.constant 0 : i32
    %c0_i32_2 = arith.constant 0 : i32
    return %c0_i32, %c0_i32_0, %c0_i32_1 : i32, i32, i32
  }
}

module attributes {stable_mosaic.version = 11 : i64} {
  func.func @_conv_bias_relu_bn_kernel(%arg0: i32, %arg1: memref<128x864xbf16, #tpu.memory_space<vmem>>, %arg2: memref<864x32xbf16, #tpu.memory_space<vmem>>, %arg3: memref<1x32xf32, #tpu.memory_space<vmem>>, %arg4: memref<1x32xf32, #tpu.memory_space<vmem>>, %arg5: memref<1x32xf32, #tpu.memory_space<vmem>>, %arg6: memref<128x32xf32, #tpu.memory_space<vmem>>) attributes {dimension_semantics = [#tpu.dimension_semantics<arbitrary>], iteration_bounds = array<i64: 1>, scalar_prefetch = 0 : i64, scratch_operands = 0 : i64, tpu.core_type = #tpu.core_type<tc>, window_params = [{pipeline_mode = #tpu.pipeline_mode<synchronous>, transform_indices = @transform_0, window_bounds = array<i64: 128, 864>}, {pipeline_mode = #tpu.pipeline_mode<synchronous>, transform_indices = @transform_1, window_bounds = array<i64: 864, 32>}, {pipeline_mode = #tpu.pipeline_mode<synchronous>, transform_indices = @transform_2, window_bounds = array<i64: 1, 32>}, {pipeline_mode = #tpu.pipeline_mode<synchronous>, transform_indices = @transform_3, window_bounds = array<i64: 1, 32>}, {pipeline_mode = #tpu.pipeline_mode<synchronous>, transform_indices = @transform_4, window_bounds = array<i64: 1, 32>}, {pipeline_mode = #tpu.pipeline_mode<synchronous>, transform_indices = @transform_5, window_bounds = array<i64: 128, 32>}]} {
    %c0 = arith.constant 0 : index
    %c0_0 = arith.constant 0 : index
    %0 = vector.load %arg1[%c0, %c0_0] : memref<128x864xbf16, #tpu.memory_space<vmem>>, vector<128x864xbf16>
    %c0_1 = arith.constant 0 : index
    %c0_2 = arith.constant 0 : index
    %1 = vector.load %arg2[%c0_1, %c0_2] : memref<864x32xbf16, #tpu.memory_space<vmem>>, vector<864x32xbf16>
    %cst = arith.constant dense<0.000000e+00> : vector<128x32xf32>
    %2 = tpu.matmul %0, %1, %cst {dimension_numbers = #tpu.dot_dimension_numbers<[1], [0], [0], [1], [0, 0, 1, 1], [], []>} : vector<128x864xbf16>, vector<864x32xbf16>, vector<128x32xf32> -> vector<128x32xf32>
    %c0_3 = arith.constant 0 : index
    %c0_4 = arith.constant 0 : index
    %3 = vector.load %arg3[%c0_3, %c0_4] : memref<1x32xf32, #tpu.memory_space<vmem>>, vector<1x32xf32>
    %4 = vector.broadcast %3 : vector<1x32xf32> to vector<128x32xf32>
    %5 = arith.addf %2, %4 : vector<128x32xf32>
    %cst_5 = arith.constant 0.000000e+00 : f32
    %6 = vector.broadcast %cst_5 : f32 to vector<128x32xf32>
    %7 = arith.maximumf %5, %6 : vector<128x32xf32>
    %cst_6 = arith.constant dense<0.000000e+00> : vector<32xf32>
    %8 = vector.multi_reduction <add>, %7, %cst_6 [0] : vector<128x32xf32> to vector<32xf32>
    %9 = vector.shape_cast %8 : vector<32xf32> to vector<1x32xf32>
    %cst_7 = arith.constant 7.812500e-03 : f32
    %10 = vector.broadcast %cst_7 : f32 to vector<1x32xf32>
    %11 = arith.mulf %9, %10 : vector<1x32xf32>
    %12 = vector.broadcast %11 : vector<1x32xf32> to vector<128x32xf32>
    %13 = arith.subf %7, %12 : vector<128x32xf32>
    %14 = arith.mulf %13, %13 : vector<128x32xf32>
    %cst_8 = arith.constant dense<0.000000e+00> : vector<32xf32>
    %15 = vector.multi_reduction <add>, %14, %cst_8 [0] : vector<128x32xf32> to vector<32xf32>
    %16 = vector.shape_cast %15 : vector<32xf32> to vector<1x32xf32>
    %cst_9 = arith.constant 7.812500e-03 : f32
    %17 = vector.broadcast %cst_9 : f32 to vector<1x32xf32>
    %18 = arith.mulf %16, %17 : vector<1x32xf32>
    %c0_10 = arith.constant 0 : index
    %c0_11 = arith.constant 0 : index
    %19 = vector.load %arg4[%c0_10, %c0_11] : memref<1x32xf32, #tpu.memory_space<vmem>>, vector<1x32xf32>
    %cst_12 = arith.constant 9.99999974E-6 : f32
    %20 = vector.broadcast %cst_12 : f32 to vector<1x32xf32>
    %21 = arith.addf %18, %20 : vector<1x32xf32>
    %22 = math.rsqrt %21 : vector<1x32xf32>
    %23 = arith.mulf %19, %22 : vector<1x32xf32>
    %24 = vector.broadcast %23 : vector<1x32xf32> to vector<128x32xf32>
    %25 = arith.mulf %13, %24 : vector<128x32xf32>
    %c0_13 = arith.constant 0 : index
    %c0_14 = arith.constant 0 : index
    %26 = vector.load %arg5[%c0_13, %c0_14] : memref<1x32xf32, #tpu.memory_space<vmem>>, vector<1x32xf32>
    %27 = vector.broadcast %26 : vector<1x32xf32> to vector<128x32xf32>
    %28 = arith.addf %25, %27 : vector<128x32xf32>
    %c0_15 = arith.constant 0 : index
    %c0_16 = arith.constant 0 : index
    %29 = vector.load %arg6[%c0_15, %c0_16] : memref<128x32xf32, #tpu.memory_space<vmem>>, vector<128x32xf32>
    tpu.vector_store %arg6[%c0_15, %c0_16], %28 {strides = array<i32>} : memref<128x32xf32, #tpu.memory_space<vmem>>, vector<128x32xf32>,
    return
  }
  func.func @transform_0(%arg0: i32) -> (i32, i32) {
    %c0_i32 = arith.constant 0 : i32
    %c0_i32_0 = arith.constant 0 : i32
    %c0_i32_1 = arith.constant 0 : i32
    return %c0_i32, %c0_i32_0 : i32, i32
  }
  func.func @transform_1(%arg0: i32) -> (i32, i32) {
    %c0_i32 = arith.constant 0 : i32
    %c0_i32_0 = arith.constant 0 : i32
    %c0_i32_1 = arith.constant 0 : i32
    return %c0_i32, %c0_i32_0 : i32, i32
  }
  func.func @transform_2(%arg0: i32) -> (i32, i32) {
    %c0_i32 = arith.constant 0 : i32
    %c0_i32_0 = arith.constant 0 : i32
    %c0_i32_1 = arith.constant 0 : i32
    return %c0_i32, %c0_i32_0 : i32, i32
  }
  func.func @transform_3(%arg0: i32) -> (i32, i32) {
    %c0_i32 = arith.constant 0 : i32
    %c0_i32_0 = arith.constant 0 : i32
    %c0_i32_1 = arith.constant 0 : i32
    return %c0_i32, %c0_i32_0 : i32, i32
  }
  func.func @transform_4(%arg0: i32) -> (i32, i32) {
    %c0_i32 = arith.constant 0 : i32
    %c0_i32_0 = arith.constant 0 : i32
    %c0_i32_1 = arith.constant 0 : i32
    return %c0_i32, %c0_i32_0 : i32, i32
  }
  func.func @transform_5(%arg0: i32) -> (i32, i32) {
    %c0_i32 = arith.constant 0 : i32
    %c0_i32_0 = arith.constant 0 : i32
    %c0_i32_1 = arith.constant 0 : i32
    return %c0_i32, %c0_i32_0 : i32, i32
  }
}

module attributes {stable_mosaic.version = 11 : i64} {
  func.func @_final_kernel(%arg0: i32, %arg1: memref<64x256xf32, #tpu.memory_space<vmem>>, %arg2: memref<2x32x64xf32, #tpu.memory_space<vmem>>, %arg3: memref<2x16x256xf32, #tpu.memory_space<vmem>>, %arg4: memref<1x32xf32, #tpu.memory_space<vmem>>, %arg5: memref<1x16xf32, #tpu.memory_space<vmem>>, %arg6: memref<1x1xf32, #tpu.memory_space<vmem>>, %arg7: memref<2x1x256xf32, #tpu.memory_space<vmem>>) attributes {dimension_semantics = [#tpu.dimension_semantics<arbitrary>], iteration_bounds = array<i64: 1>, scalar_prefetch = 0 : i64, scratch_operands = 0 : i64, tpu.core_type = #tpu.core_type<tc>, window_params = [{pipeline_mode = #tpu.pipeline_mode<synchronous>, transform_indices = @transform_0, window_bounds = array<i64: 64, 256>}, {pipeline_mode = #tpu.pipeline_mode<synchronous>, transform_indices = @transform_1, window_bounds = array<i64: 2, 32, 64>}, {pipeline_mode = #tpu.pipeline_mode<synchronous>, transform_indices = @transform_2, window_bounds = array<i64: 2, 16, 256>}, {pipeline_mode = #tpu.pipeline_mode<synchronous>, transform_indices = @transform_3, window_bounds = array<i64: 1, 32>}, {pipeline_mode = #tpu.pipeline_mode<synchronous>, transform_indices = @transform_4, window_bounds = array<i64: 1, 16>}, {pipeline_mode = #tpu.pipeline_mode<synchronous>, transform_indices = @transform_5, window_bounds = array<i64: 1, 1>}, {pipeline_mode = #tpu.pipeline_mode<synchronous>, transform_indices = @transform_6, window_bounds = array<i64: 2, 1, 256>}]} {
    %c0 = arith.constant 0 : index
    %c0_0 = arith.constant 0 : index
    %c0_1 = arith.constant 0 : index
    %0 = vector.load %arg2[%c0, %c0_0, %c0_1] : memref<2x32x64xf32, #tpu.memory_space<vmem>>, vector<1x32x64xf32>
    %1 = vector.shape_cast %0 : vector<1x32x64xf32> to vector<32x64xf32>
    %c0_2 = arith.constant 0 : index
    %c0_3 = arith.constant 0 : index
    %2 = vector.load %arg1[%c0_2, %c0_3] : memref<64x256xf32, #tpu.memory_space<vmem>>, vector<64x256xf32>
    %cst = arith.constant dense<0.000000e+00> : vector<32x256xf32>
    %3 = tpu.matmul %1, %2, %cst {dimension_numbers = #tpu.dot_dimension_numbers<[1], [0], [0], [1], [0, 0, 1, 1], [], []>} : vector<32x64xf32>, vector<64x256xf32>, vector<32x256xf32> -> vector<32x256xf32>
    %c0_4 = arith.constant 0 : index
    %c0_5 = arith.constant 0 : index
    %4 = vector.load %arg4[%c0_4, %c0_5] : memref<1x32xf32, #tpu.memory_space<vmem>>, vector<1x32xf32>
    %cst_6 = arith.constant dense<0.000000e+00> : vector<1x256xf32>
    %5 = tpu.matmul %4, %3, %cst_6 {dimension_numbers = #tpu.dot_dimension_numbers<[1], [0], [0], [1], [0, 0, 1, 1], [], []>} : vector<1x32xf32>, vector<32x256xf32>, vector<1x256xf32> -> vector<1x256xf32>
    %c0_7 = arith.constant 0 : index
    %c0_8 = arith.constant 0 : index
    %6 = vector.load %arg5[%c0_7, %c0_8] : memref<1x16xf32, #tpu.memory_space<vmem>>, vector<1x16xf32>
    %c0_9 = arith.constant 0 : index
    %c0_10 = arith.constant 0 : index
    %c0_11 = arith.constant 0 : index
    %7 = vector.load %arg3[%c0_9, %c0_10, %c0_11] : memref<2x16x256xf32, #tpu.memory_space<vmem>>, vector<1x16x256xf32>
    %8 = vector.shape_cast %7 : vector<1x16x256xf32> to vector<16x256xf32>
    %cst_12 = arith.constant dense<0.000000e+00> : vector<1x256xf32>
    %9 = tpu.matmul %6, %8, %cst_12 {dimension_numbers = #tpu.dot_dimension_numbers<[1], [0], [0], [1], [0, 0, 1, 1], [], []>} : vector<1x16xf32>, vector<16x256xf32>, vector<1x256xf32> -> vector<1x256xf32>
    %10 = arith.addf %5, %9 : vector<1x256xf32>
    %c0_13 = arith.constant 0 : index
    %c0_14 = arith.constant 0 : index
    %11 = vector.load %arg6[%c0_13, %c0_14] : memref<1x1xf32, #tpu.memory_space<vmem>>, vector<1x1xf32>
    %12 = vector.broadcast %11 : vector<1x1xf32> to vector<1x256xf32>
    %13 = arith.addf %10, %12 : vector<1x256xf32>
    %14 = arith.negf %13 : vector<1x256xf32>
    %15 = math.exp %14 : vector<1x256xf32>
    %cst_15 = arith.constant 1.000000e+00 : f32
    %16 = vector.broadcast %cst_15 : f32 to vector<1x256xf32>
    %17 = arith.addf %16, %15 : vector<1x256xf32>
    %18 = arith.divf %16, %17 : vector<1x256xf32>
    %c0_16 = arith.constant 0 : index
    %c0_17 = arith.constant 0 : index
    %c0_18 = arith.constant 0 : index
    %19 = vector.load %arg7[%c0_16, %c0_17, %c0_18] : memref<2x1x256xf32, #tpu.memory_space<vmem>>, vector<1x1x256xf32>
    %20 = vector.shape_cast %19 : vector<1x1x256xf32> to vector<1x256xf32>
    %21 = vector.shape_cast %18 : vector<1x256xf32> to vector<1x1x256xf32>
    tpu.vector_store %arg7[%c0_16, %c0_17, %c0_18], %21 {strides = array<i32>} : memref<2x1x256xf32, #tpu.memory_space<vmem>>, vector<1x1x256xf32>,
    %c1 = arith.constant 1 : index
    %c0_19 = arith.constant 0 : index
    %c0_20 = arith.constant 0 : index
    %22 = vector.load %arg2[%c1, %c0_19, %c0_20] : memref<2x32x64xf32, #tpu.memory_space<vmem>>, vector<1x32x64xf32>
    %23 = vector.shape_cast %22 : vector<1x32x64xf32> to vector<32x64xf32>
    %c0_21 = arith.constant 0 : index
    %c0_22 = arith.constant 0 : index
    %24 = vector.load %arg1[%c0_21, %c0_22] : memref<64x256xf32, #tpu.memory_space<vmem>>, vector<64x256xf32>
    %cst_23 = arith.constant dense<0.000000e+00> : vector<32x256xf32>
    %25 = tpu.matmul %23, %24, %cst_23 {dimension_numbers = #tpu.dot_dimension_numbers<[1], [0], [0], [1], [0, 0, 1, 1], [], []>} : vector<32x64xf32>, vector<64x256xf32>, vector<32x256xf32> -> vector<32x256xf32>
    %c0_24 = arith.constant 0 : index
    %c0_25 = arith.constant 0 : index
    %26 = vector.load %arg4[%c0_24, %c0_25] : memref<1x32xf32, #tpu.memory_space<vmem>>, vector<1x32xf32>
    %cst_26 = arith.constant dense<0.000000e+00> : vector<1x256xf32>
    %27 = tpu.matmul %26, %25, %cst_26 {dimension_numbers = #tpu.dot_dimension_numbers<[1], [0], [0], [1], [0, 0, 1, 1], [], []>} : vector<1x32xf32>, vector<32x256xf32>, vector<1x256xf32> -> vector<1x256xf32>
    %c0_27 = arith.constant 0 : index
    %c0_28 = arith.constant 0 : index
    %28 = vector.load %arg5[%c0_27, %c0_28] : memref<1x16xf32, #tpu.memory_space<vmem>>, vector<1x16xf32>
    %c1_29 = arith.constant 1 : index
    %c0_30 = arith.constant 0 : index
    %c0_31 = arith.constant 0 : index
    %29 = vector.load %arg3[%c1_29, %c0_30, %c0_31] : memref<2x16x256xf32, #tpu.memory_space<vmem>>, vector<1x16x256xf32>
    %30 = vector.shape_cast %29 : vector<1x16x256xf32> to vector<16x256xf32>
    %cst_32 = arith.constant dense<0.000000e+00> : vector<1x256xf32>
    %31 = tpu.matmul %28, %30, %cst_32 {dimension_numbers = #tpu.dot_dimension_numbers<[1], [0], [0], [1], [0, 0, 1, 1], [], []>} : vector<1x16xf32>, vector<16x256xf32>, vector<1x256xf32> -> vector<1x256xf32>
    %32 = arith.addf %27, %31 : vector<1x256xf32>
    %c0_33 = arith.constant 0 : index
    %c0_34 = arith.constant 0 : index
    %33 = vector.load %arg6[%c0_33, %c0_34] : memref<1x1xf32, #tpu.memory_space<vmem>>, vector<1x1xf32>
    %34 = vector.broadcast %33 : vector<1x1xf32> to vector<1x256xf32>
    %35 = arith.addf %32, %34 : vector<1x256xf32>
    %36 = arith.negf %35 : vector<1x256xf32>
    %37 = math.exp %36 : vector<1x256xf32>
    %cst_35 = arith.constant 1.000000e+00 : f32
    %38 = vector.broadcast %cst_35 : f32 to vector<1x256xf32>
    %39 = arith.addf %38, %37 : vector<1x256xf32>
    %40 = arith.divf %38, %39 : vector<1x256xf32>
    %c1_36 = arith.constant 1 : index
    %c0_37 = arith.constant 0 : index
    %c0_38 = arith.constant 0 : index
    %41 = vector.load %arg7[%c1_36, %c0_37, %c0_38] : memref<2x1x256xf32, #tpu.memory_space<vmem>>, vector<1x1x256xf32>
    %42 = vector.shape_cast %41 : vector<1x1x256xf32> to vector<1x256xf32>
    %43 = vector.shape_cast %40 : vector<1x256xf32> to vector<1x1x256xf32>
    tpu.vector_store %arg7[%c1_36, %c0_37, %c0_38], %43 {strides = array<i32>} : memref<2x1x256xf32, #tpu.memory_space<vmem>>, vector<1x1x256xf32>,
    return
  }
  func.func @transform_0(%arg0: i32) -> (i32, i32) {
    %c0_i32 = arith.constant 0 : i32
    %c0_i32_0 = arith.constant 0 : i32
    %c0_i32_1 = arith.constant 0 : i32
    return %c0_i32, %c0_i32_0 : i32, i32
  }
  func.func @transform_1(%arg0: i32) -> (i32, i32, i32) {
    %c0_i32 = arith.constant 0 : i32
    %c0_i32_0 = arith.constant 0 : i32
    %c0_i32_1 = arith.constant 0 : i32
    %c0_i32_2 = arith.constant 0 : i32
    return %c0_i32, %c0_i32_0, %c0_i32_1 : i32, i32, i32
  }
  func.func @transform_2(%arg0: i32) -> (i32, i32, i32) {
    %c0_i32 = arith.constant 0 : i32
    %c0_i32_0 = arith.constant 0 : i32
    %c0_i32_1 = arith.constant 0 : i32
    %c0_i32_2 = arith.constant 0 : i32
    return %c0_i32, %c0_i32_0, %c0_i32_1 : i32, i32, i32
  }
  func.func @transform_3(%arg0: i32) -> (i32, i32) {
    %c0_i32 = arith.constant 0 : i32
    %c0_i32_0 = arith.constant 0 : i32
    %c0_i32_1 = arith.constant 0 : i32
    return %c0_i32, %c0_i32_0 : i32, i32
  }
  func.func @transform_4(%arg0: i32) -> (i32, i32) {
    %c0_i32 = arith.constant 0 : i32
    %c0_i32_0 = arith.constant 0 : i32
    %c0_i32_1 = arith.constant 0 : i32
    return %c0_i32, %c0_i32_0 : i32, i32
  }
  func.func @transform_5(%arg0: i32) -> (i32, i32) {
    %c0_i32 = arith.constant 0 : i32
    %c0_i32_0 = arith.constant 0 : i32
    %c0_i32_1 = arith.constant 0 : i32
    return %c0_i32, %c0_i32_0 : i32, i32
  }
  func.func @transform_6(%arg0: i32) -> (i32, i32, i32) {
    %c0_i32 = arith.constant 0 : i32
    %c0_i32_0 = arith.constant 0 : i32
    %c0_i32_1 = arith.constant 0 : i32
    %c0_i32_2 = arith.constant 0 : i32
    return %c0_i32, %c0_i32_0, %c0_i32_1 : i32, i32, i32
  }
}

</mosaic_0001>

<llo_original>
// kernel: unet_forward.11
$region0: #{unet_forward.11}
  #allocation0 [shape = 'u32[]', space=smem, size = 0x4, offset = 0x4, fixed_abs, tag = 'smem constant byte address 0x4 - core index']
  #allocation1 [shape = 'u32[144,128]{1,0:T(1,128)}', space=vmem, size = 0x12000, scoped, tag = 'internal scratch']
  %s0 = inlined_call_operand.vmem [shape: bf16[512,27], index: 0, kind: input, shape index: {}]
  %s1 = inlined_call_operand.vmem [shape: bf16[27,16], index: 1, kind: input, shape index: {}]
  %s2 = inlined_call_operand.hbm [shape: f32[1,16], index: 2, kind: input, shape index: {}]
  %s3 = inlined_call_operand.hbm [shape: f32[1,16], index: 3, kind: input, shape index: {}]
  %s4 = inlined_call_operand.hbm [shape: f32[1,16], index: 4, kind: input, shape index: {}]
  %s5 = inlined_call_operand.vmem [shape: f32[512,16], index: 5, kind: output, shape index: {}]
  %s6 = sld [smem:[#allocation0]]
  $region42: #{unet_forward.11} parent=0
    _
  %s8 = ssub.s32 1, %s6
  %s9 = scalar_select 0, %s8, %s6
  $region1: #{unet_forward.11} parent=0
    #allocation2 [shape = 'u8[512]{0}', space=vmem, size = 0x400, scoped, tag = 'input window, operand 2, single buffered']
    #allocation3 [shape = 's32[1]{0}', space=sflag, size = 0x4, scoped, tag = 'scoped memory for unet_forward.11']
    #allocation4 [shape = 'u8[512]{0}', space=vmem, size = 0x400, scoped, tag = 'input window, operand 3, single buffered']
    #allocation5 [shape = 's32[1]{0}', space=sflag, size = 0x4, scoped, tag = 'scoped memory for unet_forward.11']
    #allocation6 [shape = 'u8[512]{0}', space=vmem, size = 0x400, scoped, tag = 'input window, operand 4, single buffered']
    %10 = vsyncpa [#allocation3], 0
    %11 = vsyncpa [#allocation5], 0
    // Predicated region
    $region2: #{unet_forward.11} parent=1 // pred_check
      _
    $region3: #{unet_forward.11} parent=1 // pred_check_branch
      %13 = sbr.rel (0) target = $region5
    $region4: #{unet_forward.11} parent=1 // pred_region
      _
    $region5: #{unet_forward.11} parent=1 // pred_fallthru
      _
    // Predicated region
    $region6: #{unet_forward.11} parent=1 // pred_check
      _
    $region7: #{unet_forward.11} parent=1 // pred_check_branch
      %15 = sbr.rel (0) target = $region9
    $region8: #{unet_forward.11} parent=1 // pred_region
      _
    $region9: #{unet_forward.11} parent=1 // pred_fallthru
      _
    // Predicated region
    $region10: #{unet_forward.11} parent=1 // pred_check
      _
    $region11: #{unet_forward.11} parent=1 // pred_check_branch
      %17 = sbr.rel (0) target = $region13
    $region12: #{unet_forward.11} parent=1 // pred_region
      %s19 = ssub.s32 16, 16
      %20 = vsyncadd [#allocation3], %s19
      %s22 = sshll.u32 [#allocation2], 4
      %s23 = int_to_ptr.vmem [resolvable:$true] %s22
      %25 = dma.hbm_to_vmem [thread:$0]  %s2, 16, %s23, [#allocation3]
    $region13: #{unet_forward.11} parent=1 // pred_fallthru
      _
    // Predicated region
    $region14: #{unet_forward.11} parent=1 // pred_check
      _
    $region15: #{unet_forward.11} parent=1 // pred_check_branch
      %27 = sbr.rel (0) target = $region17
    $region16: #{unet_forward.11} parent=1 // pred_region
      %s29 = ssub.s32 16, 16
      %30 = vsyncadd [#allocation5], %s29
      %s32 = sshll.u32 [#allocation4], 4
      %s33 = int_to_ptr.vmem [resolvable:$true] %s32
      %35 = dma.hbm_to_vmem [thread:$0]  %s3, 16, %s33, [#allocation5]
    $region17: #{unet_forward.11} parent=1 // pred_fallthru
      _
    // Predicated region
    $region18: #{unet_forward.11} parent=1 // pred_check
      _
    $region19: #{unet_forward.11} parent=1 // pred_check_branch
      %37 = sbr.rel (0) target = $region21
    $region20: #{unet_forward.11} parent=1 // pred_region
      %s39 = ssub.s32 16, 16
      %40 = vsyncadd [#allocation5], %s39
      %s42 = sshll.u32 [#allocation6], 4
      %s43 = int_to_ptr.vmem [resolvable:$true] %s42
      %45 = dma.hbm_to_vmem [thread:$0]  %s4, 16, %s43, [#allocation5]
    $region21: #{unet_forward.11} parent=1 // pred_fallthru
      _
    // Predicated region
    $region22: #{unet_forward.11} parent=1 // pred_check
      _
    $region23: #{unet_forward.11} parent=1 // pred_check_branch
      %47 = sbr.rel (0) target = $region25
    $region24: #{unet_forward.11} parent=1 // pred_region
      %48 = dma.done [#allocation3], 16
    $region25: #{unet_forward.11} parent=1 // pred_fallthru
      _
    // Predicated region
    $region26: #{unet_forward.11} parent=1 // pred_check
      _
    $region27: #{unet_forward.11} parent=1 // pred_check_branch
      %50 = sbr.rel (0) target = $region29
    $region28: #{unet_forward.11} parent=1 // pred_region
      %51 = dma.done [#allocation5], 16
    $region29: #{unet_forward.11} parent=1 // pred_fallthru
      _
    // Predicated region
    $region30: #{unet_forward.11} parent=1 // pred_check
      _
    $region31: #{unet_forward.11} parent=1 // pred_check_branch
      %53 = sbr.rel (0) target = $region33
    $region32: #{unet_forward.11} parent=1 // pred_region
      %54 = dma.done [#allocation5], 16
    $region33: #{unet_forward.11} parent=1 // pred_fallthru
      _
    %v56 = vld [vmem:[%s0] sm:$0xf]
    %v57 = vld [vmem:[%s0 + $0x4] sm:$0xf]
    %v58 = vld [vmem:[%s0 + $0x8] sm:$0xf]
    %v59 = vld [vmem:[%s0 + $0xc] sm:$0xf]
    %v60 = vld [vmem:[%s0 + $0x10] sm:$0xf]
    %v61 = vld [vmem:[%s0 + $0x14] sm:$0xf]
    %v62 = vld [vmem:[%s0 + $0x18] sm:$0xf]
    %v63 = vld [vmem:[%s0 + $0x1c] sm:$0xf]
    %v64 = vld [vmem:[%s0 + $0x20] sm:$0xf]
    %v65 = vld [vmem:[%s0 + $0x24] sm:$0xf]
    %v66 = vld [vmem:[%s0 + $0x28] sm:$0xf]
    %v67 = vld [vmem:[%s0 + $0x2c] sm:$0xf]
    %v68 = vld [vmem:[%s0 + $0x30] sm:$0xf]
    %v69 = vld [vmem:[%s0 + $0x34] sm:$0xf]
    %v70 = vld [vmem:[%s0 + $0x38] sm:$0xf]
    %v71 = vld [vmem:[%s0 + $0x3c] sm:$0xf]
    %v72 = vld [vmem:[%s0 + $0x40] sm:$0xf]
    %v73 = vld [vmem:[%s0 + $0x44] sm:$0xf]
    %v74 = vld [vmem:[%s0 + $0x48] sm:$0xf]
    %v75 = vld [vmem:[%s0 + $0x4c] sm:$0xf]
    %v76 = vld [vmem:[%s0 + $0x50] sm:$0xf]
    %v77 = vld [vmem:[%s0 + $0x54] sm:$0xf]
    %v78 = vld [vmem:[%s0 + $0x58] sm:$0xf]
    %v79 = vld [vmem:[%s0 + $0x5c] sm:$0xf]
    %v80 = vld [vmem:[%s0 + $0x60] sm:$0xf]
    %v81 = vld [vmem:[%s0 + $0x64] sm:$0xf]
    %v82 = vld [vmem:[%s0 + $0x68] sm:$0xf]
    %v83 = vld [vmem:[%s0 + $0x6c] sm:$0xf]
    %v84 = vld [vmem:[%s0 + $0x70] sm:$0xf]
    %v85 = vld [vmem:[%s0 + $0x74] sm:$0xf]
    %v86 = vld [vmem:[%s0 + $0x78] sm:$0xf]
    %v87 = vld [vmem:[%s0 + $0x7c] sm:$0xf]
    %v88 = vld [vmem:[%s0 + $0x80] sm:$0xf]
    %v89 = vld [vmem:[%s0 + $0x84] sm:$0xf]
    %v90 = vld [vmem:[%s0 + $0x88] sm:$0xf]
    %v91 = vld [vmem:[%s0 + $0x8c] sm:$0xf]
    %v92 = vld [vmem:[%s0 + $0x90] sm:$0xf]
    %v93 = vld [vmem:[%s0 + $0x94] sm:$0xf]
    %v94 = vld [vmem:[%s0 + $0x98] sm:$0xf]
    %v95 = vld [vmem:[%s0 + $0x9c] sm:$0xf]
    %v96 = vld [vmem:[%s0 + $0xa0] sm:$0xf]
    %v97 = vld [vmem:[%s0 + $0xa4] sm:$0xf]
    %v98 = vld [vmem:[%s0 + $0xa8] sm:$0xf]
    %v99 = vld [vmem:[%s0 + $0xac] sm:$0xf]
    %v100 = vld [vmem:[%s0 + $0xb0] sm:$0xf]
    %v101 = vld [vmem:[%s0 + $0xb4] sm:$0xf]
    %v102 = vld [vmem:[%s0 + $0xb8] sm:$0xf]
    %v103 = vld [vmem:[%s0 + $0xbc] sm:$0xf]
    %v104 = vld [vmem:[%s0 + $0xc0] sm:$0xf]
    %v105 = vld [vmem:[%s0 + $0xc4] sm:$0xf]
    %v106 = vld [vmem:[%s0 + $0xc8] sm:$0xf]
    %v107 = vld [vmem:[%s0 + $0xcc] sm:$0xf]
    %v108 = vld [vmem:[%s0 + $0xd0] sm:$0xf]
    %v109 = vld [vmem:[%s0 + $0xd4] sm:$0xf]
    %v110 = vld [vmem:[%s0 + $0xd8] sm:$0xf]
    %v111 = vld [vmem:[%s0 + $0xdc] sm:$0xf]
    %v112 = vld [vmem:[%s0 + $0xe0] sm:$0xf]
    %v113 = vld [vmem:[%s0 + $0xe4] sm:$0xf]
    %v114 = vld [vmem:[%s0 + $0xe8] sm:$0xf]
    %v115 = vld [vmem:[%s0 + $0xec] sm:$0xf]
    %v116 = vld [vmem:[%s0 + $0xf0] sm:$0xf]
    %v117 = vld [vmem:[%s0 + $0xf4] sm:$0xf]
    %v118 = vld [vmem:[%s0 + $0xf8] sm:$0xf]
    %v119 = vld [vmem:[%s0 + $0xfc] sm:$0xf]
    %v120 = vld [vmem:[%s1] sm:$0xf]
    %v121 = vld [vmem:[%s1 + $0x4] sm:$0xf]
    %v122 = vld [vmem:[%s1 + $0x8] sm:$0xf]
    %v123 = vld [vmem:[%s1 + $0xc] sm:$0x3]
    %v124 = vld [vmem:[#allocation2] sm:$0x1]
    %v126 = vlaneseq
    %v127 = vshrl.u32 %v126, 7
    %v128 = vsub.s32 0, %v127
    %v129 = vrot.slane %v124, %v128
    %v195 = vunpack.c.l.b16 %v56
    %v196 = vunpack.c.l.b16 %v57
    %v197 = vunpack.c.l.b16 %v58
    %v198 = vunpack.c.l.b16 %v59
    %v199 = vunpack.c.l.b16 %v60
    %v200 = vunpack.c.l.b16 %v61
    %v201 = vunpack.c.l.b16 %v62
    %v202 = vunpack.c.l.b16 %v63
    %v203 = vunpack.c.l.b16 %v64
    %v204 = vunpack.c.l.b16 %v65
    %v205 = vunpack.c.l.b16 %v66
    %v206 = vunpack.c.l.b16 %v67
    %v207 = vunpack.c.l.b16 %v68
    %v208 = vunpack.c.l.b16 %v69
    %v209 = vunpack.c.l.b16 %v70
    %v210 = vunpack.c.l.b16 %v71
    %v211 = vunpack.c.l.b16 %v72
    %v212 = vunpack.c.l.b16 %v73
    %v213 = vunpack.c.l.b16 %v74
    %v214 = vunpack.c.l.b16 %v75
    %v215 = vunpack.c.l.b16 %v76
    %v216 = vunpack.c.l.b16 %v77
    %v217 = vunpack.c.l.b16 %v78
    %v218 = vunpack.c.l.b16 %v79
    %v219 = vunpack.c.l.b16 %v80
    %v220 = vunpack.c.l.b16 %v81
    %v221 = vunpack.c.l.b16 %v82
    %v222 = vunpack.c.l.b16 %v83
    %v223 = vunpack.c.l.b16 %v84
    %v224 = vunpack.c.l.b16 %v85
    %v225 = vunpack.c.l.b16 %v86
    %v226 = vunpack.c.l.b16 %v87
    %v227 = vunpack.c.l.b16 %v88
    %v228 = vunpack.c.l.b16 %v89
    %v229 = vunpack.c.l.b16 %v90
    %v230 = vunpack.c.l.b16 %v91
    %v231 = vunpack.c.l.b16 %v92
    %v232 = vunpack.c.l.b16 %v93
    %v233 = vunpack.c.l.b16 %v94
    %v234 = vunpack.c.l.b16 %v95
    %v235 = vunpack.c.l.b16 %v96
    %v236 = vunpack.c.l.b16 %v97
    %v237 = vunpack.c.l.b16 %v98
    %v238 = vunpack.c.l.b16 %v99
    %v239 = vunpack.c.l.b16 %v100
    %v240 = vunpack.c.l.b16 %v101
    %v241 = vunpack.c.l.b16 %v102
    %v242 = vunpack.c.l.b16 %v103
    %v243 = vunpack.c.l.b16 %v104
    %v244 = vunpack.c.l.b16 %v105
    %v245 = vunpack.c.l.b16 %v106
    %v246 = vunpack.c.l.b16 %v107
    %v247 = vunpack.c.l.b16 %v108
    %v248 = vunpack.c.l.b16 %v109
    %v249 = vunpack.c.l.b16 %v110
    %v250 = vunpack.c.l.b16 %v111
    %v251 = vunpack.c.l.b16 %v112
    %v252 = vunpack.c.l.b16 %v113
    %v253 = vunpack.c.l.b16 %v114
    %v254 = vunpack.c.l.b16 %v115
    %v255 = vunpack.c.l.b16 %v116
    %v256 = vunpack.c.l.b16 %v117
    %v257 = vunpack.c.l.b16 %v118
    %v258 = vunpack.c.l.b16 %v119
    %v259 = vpack.c.b16 %v196, %v195
    %v260 = vpack.c.b16 %v198, %v197
    %v261 = vpack.c.b16 %v200, %v199
    %v262 = vpack.c.b16 %v202, %v201
    %v263 = vpack.c.b16 %v204, %v203
    %v264 = vpack.c.b16 %v206, %v205
    %v265 = vpack.c.b16 %v208, %v207
    %v266 = vpack.c.b16 %v210, %v209
    %v267 = vpack.c.b16 %v212, %v211
    %v268 = vpack.c.b16 %v214, %v213
    %v269 = vpack.c.b16 %v216, %v215
    %v270 = vpack.c.b16 %v218, %v217
    %v271 = vpack.c.b16 %v220, %v219
    %v272 = vpack.c.b16 %v222, %v221
    %v273 = vpack.c.b16 %v224, %v223
    %v274 = vpack.c.b16 %v226, %v225
    %v275 = vpack.c.b16 %v228, %v227
    %v276 = vpack.c.b16 %v230, %v229
    %v277 = vpack.c.b16 %v232, %v231
    %v278 = vpack.c.b16 %v234, %v233
    %v279 = vpack.c.b16 %v236, %v235
    %v280 = vpack.c.b16 %v238, %v237
    %v281 = vpack.c.b16 %v240, %v239
    %v282 = vpack.c.b16 %v242, %v241
    %v283 = vpack.c.b16 %v244, %v243
    %v284 = vpack.c.b16 %v246, %v245
    %v285 = vpack.c.b16 %v248, %v247
    %v286 = vpack.c.b16 %v250, %v249
    %v287 = vpack.c.b16 %v252, %v251
    %v288 = vpack.c.b16 %v254, %v253
    %v289 = vpack.c.b16 %v256, %v255
    %v290 = vpack.c.b16 %v258, %v257
    %v295 = vunpack.c.l.b16 %v120
    %v296 = vunpack.c.l.b16 %v121
    %v297 = vunpack.c.l.b16 %v122
    %v298 = vunpack.c.l.b16 %v123
    %v299 = vpack.c.b16 %v296, %v295
    %v300 = vpack.c.b16 %v298, %v297
    %vm302 = vcmask 220160
    %v304 = vsel %vm302, %v259, 0
    %v307 = vsel %vm302, %v260, 0
    %v310 = vsel %vm302, %v261, 0
    %v313 = vsel %vm302, %v262, 0
    %v316 = vsel %vm302, %v263, 0
    %v319 = vsel %vm302, %v264, 0
    %v322 = vsel %vm302, %v265, 0
    %v325 = vsel %vm302, %v266, 0
    %v328 = vsel %vm302, %v267, 0
    %v331 = vsel %vm302, %v268, 0
    %v334 = vsel %vm302, %v269, 0
    %v337 = vsel %vm302, %v270, 0
    %v340 = vsel %vm302, %v271, 0
    %v343 = vsel %vm302, %v272, 0
    %v346 = vsel %vm302, %v273, 0
    %v349 = vsel %vm302, %v274, 0
    %v352 = vsel %vm302, %v275, 0
    %v355 = vsel %vm302, %v276, 0
    %v358 = vsel %vm302, %v277, 0
    %v361 = vsel %vm302, %v278, 0
    %v364 = vsel %vm302, %v279, 0
    %v367 = vsel %vm302, %v280, 0
    %v370 = vsel %vm302, %v281, 0
    %v373 = vsel %vm302, %v282, 0
    %v376 = vsel %vm302, %v283, 0
    %v379 = vsel %vm302, %v284, 0
    %v382 = vsel %vm302, %v285, 0
    %v385 = vsel %vm302, %v286, 0
    %v388 = vsel %vm302, %v287, 0
    %v391 = vsel %vm302, %v288, 0
    %v394 = vsel %vm302, %v289, 0
    %v397 = vsel %vm302, %v290, 0
    %vm399 = vcmask 1044480
    %vm400 = vcmask 1045504
    %v401 = vsel %vm399, 4294967295, 65535
    %v402 = vsel %vm400, %v401, 0
    %v404 = vand.u32 %v300, %v402
    %406 = vmatprep.subr.bf16.mxu0 0
    %407 = vmatpush1.bf16.msra.mxu0 0
    %408 = vmatprep.subr.bf16.mxu0 0
    %409 = vmatpush1.bf16.msra.mxu0 0
    %410 = vmatprep.subr.bf16.mxu0 0
    %411 = vmatpush1.bf16.msra.mxu0 0
    %412 = vmatprep.subr.bf16.mxu0 0
    %413 = vmatpush1.bf16.msra.mxu0 0
    %414 = vmatprep.subr.bf16.mxu0 0
    %415 = vmatpush1.bf16.msra.mxu0 0
    %416 = vmatprep.subr.bf16.mxu0 0
    %417 = vmatpush1.bf16.msra.mxu0 0
    %418 = vmatprep.subr.bf16.mxu0 0
    %419 = vmatpush1.bf16.msra.mxu0 %v404
    %420 = vmatprep.subr.bf16.mxu0 0
    %421 = vmatpush1.bf16.msra.mxu0 %v299
    %422 = vmatprep.subr.bf16.mxu0 0
    %423 = vmatpush2.bf16.msra.mxu0 0
    %424 = vmatprep.subr.bf16.mxu0 0
    %425 = vmatpush2.bf16.msra.mxu0 0
    %426 = vmatprep.subr.bf16.mxu0 0
    %427 = vmatpush2.bf16.msra.mxu0 0
    %428 = vmatprep.subr.bf16.mxu0 0
    %429 = vmatpush2.bf16.msra.mxu0 0
    %430 = vmatprep.subr.bf16.mxu0 0
    %431 = vmatpush2.bf16.msra.mxu0 0
    %432 = vmatprep.subr.bf16.mxu0 0
    %433 = vmatpush2.bf16.msra.mxu0 0
    %434 = vmatprep.subr.bf16.mxu0 0
    %435 = vmatpush2.bf16.msra.mxu0 0
    %436 = vmatprep.subr.bf16.mxu0 0
    %437 = vmatpush2.bf16.msra.mxu0 0
    %438 = vmatprep.mubr.bf16.mxu0 0
    %439 = vmatmul.mubr.bf16.gmra.mxu0 %v304
    %v440 = vpop.f32.mrf.mxu0
    %v441 = vadd.f32 %v129, %v440
    %v442 = vpop.f32.mrf.mxu0
    %v443 = vpop.f32.mrf.mxu0
    %v444 = vadd.f32 %v129, %v443
    %v445 = vpop.f32.mrf.mxu0
    %446 = vmatprep.mubr.bf16.mxu0 0
    %447 = vmatmul.mubr.bf16.gmra.mxu0 %v307
    %v448 = vpop.f32.mrf.mxu0
    %v449 = vadd.f32 %v129, %v448
    %v450 = vpop.f32.mrf.mxu0
    %v451 = vpop.f32.mrf.mxu0
    %v452 = vadd.f32 %v129, %v451
    %v453 = vpop.f32.mrf.mxu0
    %454 = vmatprep.mubr.bf16.mxu0 0
    %455 = vmatmul.mubr.bf16.gmra.mxu0 %v310
    %v456 = vpop.f32.mrf.mxu0
    %v457 = vadd.f32 %v129, %v456
    %v458 = vpop.f32.mrf.mxu0
    %v459 = vpop.f32.mrf.mxu0
    %v460 = vadd.f32 %v129, %v459
    %v461 = vpop.f32.mrf.mxu0
    %462 = vmatprep.mubr.bf16.mxu0 0
    %463 = vmatmul.mubr.bf16.gmra.mxu0 %v313
    %v464 = vpop.f32.mrf.mxu0
    %v465 = vadd.f32 %v129, %v464
    %v466 = vpop.f32.mrf.mxu0
    %v467 = vpop.f32.mrf.mxu0
    %v468 = vadd.f32 %v129, %v467
    %v469 = vpop.f32.mrf.mxu0
    %470 = vmatprep.mubr.bf16.mxu0 0
    %471 = vmatmul.mubr.bf16.gmra.mxu0 %v316
    %v472 = vpop.f32.mrf.mxu0
    %v473 = vadd.f32 %v129, %v472
    %v474 = vpop.f32.mrf.mxu0
    %v475 = vpop.f32.mrf.mxu0
    %v476 = vadd.f32 %v129, %v475
    %v477 = vpop.f32.mrf.mxu0
    %478 = vmatprep.mubr.bf16.mxu0 0
    %479 = vmatmul.mubr.bf16.gmra.mxu0 %v319
    %v480 = vpop.f32.mrf.mxu0
    %v481 = vadd.f32 %v129, %v480
    %v482 = vpop.f32.mrf.mxu0
    %v483 = vpop.f32.mrf.mxu0
    %v484 = vadd.f32 %v129, %v483
    %v485 = vpop.f32.mrf.mxu0
    %486 = vmatprep.mubr.bf16.mxu0 0
    %487 = vmatmul.mubr.bf16.gmra.mxu0 %v322
    %v488 = vpop.f32.mrf.mxu0
    %v489 = vadd.f32 %v129, %v488
    %v490 = vpop.f32.mrf.mxu0
    %v491 = vpop.f32.mrf.mxu0
    %v492 = vadd.f32 %v129, %v491
    %v493 = vpop.f32.mrf.mxu0
    %494 = vmatprep.mubr.bf16.mxu0 0
    %495 = vmatmul.mubr.bf16.gmra.mxu0 %v325
    %v496 = vpop.f32.mrf.mxu0
    %v497 = vadd.f32 %v129, %v496
    %v498 = vpop.f32.mrf.mxu0
    %v499 = vpop.f32.mrf.mxu0
    %v500 = vadd.f32 %v129, %v499
    %v501 = vpop.f32.mrf.mxu0
    %502 = vmatprep.mubr.bf16.mxu0 0
    %503 = vmatmul.mubr.bf16.gmra.mxu0 %v328
    %v504 = vpop.f32.mrf.mxu0
    %v505 = vadd.f32 %v129, %v504
    %v506 = vpop.f32.mrf.mxu0
    %v507 = vpop.f32.mrf.mxu0
    %v508 = vadd.f32 %v129, %v507
    %v509 = vpop.f32.mrf.mxu0
    %510 = vmatprep.mubr.bf16.mxu0 0
    %511 = vmatmul.mubr.bf16.gmra.mxu0 %v331
    %v512 = vpop.f32.mrf.mxu0
    %v513 = vadd.f32 %v129, %v512
    %v514 = vpop.f32.mrf.mxu0
    %v515 = vpop.f32.mrf.mxu0
    %v516 = vadd.f32 %v129, %v515
    %v517 = vpop.f32.mrf.mxu0
    %518 = vmatprep.mubr.bf16.mxu0 0
    %519 = vmatmul.mubr.bf16.gmra.mxu0 %v334
    %v520 = vpop.f32.mrf.mxu0
    %v521 = vadd.f32 %v129, %v520
    %v522 = vpop.f32.mrf.mxu0
    %v523 = vpop.f32.mrf.mxu0
    %v524 = vadd.f32 %v129, %v523
    %v525 = vpop.f32.mrf.mxu0
    %526 = vmatprep.mubr.bf16.mxu0 0
    %527 = vmatmul.mubr.bf16.gmra.mxu0 %v337
    %v528 = vpop.f32.mrf.mxu0
    %v529 = vadd.f32 %v129, %v528
    %v530 = vpop.f32.mrf.mxu0
    %v531 = vpop.f32.mrf.mxu0
    %v532 = vadd.f32 %v129, %v531
    %v533 = vpop.f32.mrf.mxu0
    %534 = vmatprep.mubr.bf16.mxu0 0
    %535 = vmatmul.mubr.bf16.gmra.mxu0 %v340
    %v536 = vpop.f32.mrf.mxu0
    %v537 = vadd.f32 %v129, %v536
    %v538 = vpop.f32.mrf.mxu0
    %v539 = vpop.f32.mrf.mxu0
    %v540 = vadd.f32 %v129, %v539
    %v541 = vpop.f32.mrf.mxu0
    %542 = vmatprep.mubr.bf16.mxu0 0
    %543 = vmatmul.mubr.bf16.gmra.mxu0 %v343
    %v544 = vpop.f32.mrf.mxu0
    %v545 = vadd.f32 %v129, %v544
    %v546 = vpop.f32.mrf.mxu0
    %v547 = vpop.f32.mrf.mxu0
    %v548 = vadd.f32 %v129, %v547
    %v549 = vpop.f32.mrf.mxu0
    %550 = vmatprep.mubr.bf16.mxu0 0
    %551 = vmatmul.mubr.bf16.gmra.mxu0 %v346
    %v552 = vpop.f32.mrf.mxu0
    %v553 = vadd.f32 %v129, %v552
    %v554 = vpop.f32.mrf.mxu0
    %v555 = vpop.f32.mrf.mxu0
    %v556 = vadd.f32 %v129, %v555
    %v557 = vpop.f32.mrf.mxu0
    %558 = vmatprep.mubr.bf16.mxu0 0
    %559 = vmatmul.mubr.bf16.gmra.mxu0 %v349
    %v560 = vpop.f32.mrf.mxu0
    %v561 = vadd.f32 %v129, %v560
    %v562 = vpop.f32.mrf.mxu0
    %v563 = vpop.f32.mrf.mxu0
    %v564 = vadd.f32 %v129, %v563
    %v565 = vpop.f32.mrf.mxu0
    %566 = vmatprep.mubr.bf16.mxu0 0
    %567 = vmatmul.mubr.bf16.gmra.mxu0 %v352
    %v568 = vpop.f32.mrf.mxu0
    %v569 = vadd.f32 %v129, %v568
    %v570 = vpop.f32.mrf.mxu0
    %v571 = vpop.f32.mrf.mxu0
    %v572 = vadd.f32 %v129, %v571
    %v573 = vpop.f32.mrf.mxu0
    %574 = vmatprep.mubr.bf16.mxu0 0
    %575 = vmatmul.mubr.bf16.gmra.mxu0 %v355
    %v576 = vpop.f32.mrf.mxu0
    %v577 = vadd.f32 %v129, %v576
    %v578 = vpop.f32.mrf.mxu0
    %v579 = vpop.f32.mrf.mxu0
    %v580 = vadd.f32 %v129, %v579
    %v581 = vpop.f32.mrf.mxu0
    %582 = vmatprep.mubr.bf16.mxu0 0
    %583 = vmatmul.mubr.bf16.gmra.mxu0 %v358
    %v584 = vpop.f32.mrf.mxu0
    %v585 = vadd.f32 %v129, %v584
    %v586 = vpop.f32.mrf.mxu0
    %v587 = vpop.f32.mrf.mxu0
    %v588 = vadd.f32 %v129, %v587
    %v589 = vpop.f32.mrf.mxu0
    %590 = vmatprep.mubr.bf16.mxu0 0
    %591 = vmatmul.mubr.bf16.gmra.mxu0 %v361
    %v592 = vpop.f32.mrf.mxu0
    %v593 = vadd.f32 %v129, %v592
    %v594 = vpop.f32.mrf.mxu0
    %v595 = vpop.f32.mrf.mxu0
    %v596 = vadd.f32 %v129, %v595
    %v597 = vpop.f32.mrf.mxu0
    %598 = vmatprep.mubr.bf16.mxu0 0
    %599 = vmatmul.mubr.bf16.gmra.mxu0 %v364
    %v600 = vpop.f32.mrf.mxu0
    %v601 = vadd.f32 %v129, %v600
    %v602 = vpop.f32.mrf.mxu0
    %v603 = vpop.f32.mrf.mxu0
    %v604 = vadd.f32 %v129, %v603
    %v605 = vpop.f32.mrf.mxu0
    %606 = vmatprep.mubr.bf16.mxu0 0
    %607 = vmatmul.mubr.bf16.gmra.mxu0 %v367
    %v608 = vpop.f32.mrf.mxu0
    %v609 = vadd.f32 %v129, %v608
    %v610 = vpop.f32.mrf.mxu0
    %v611 = vpop.f32.mrf.mxu0
    %v612 = vadd.f32 %v129, %v611
    %v613 = vpop.f32.mrf.mxu0
    %614 = vmatprep.mubr.bf16.mxu0 0
    %615 = vmatmul.mubr.bf16.gmra.mxu0 %v370
    %v616 = vpop.f32.mrf.mxu0
    %v617 = vadd.f32 %v129, %v616
    %v618 = vpop.f32.mrf.mxu0
    %v619 = vpop.f32.mrf.mxu0
    %v620 = vadd.f32 %v129, %v619
    %v621 = vpop.f32.mrf.mxu0
    %622 = vmatprep.mubr.bf16.mxu0 0
    %623 = vmatmul.mubr.bf16.gmra.mxu0 %v373
    %v624 = vpop.f32.mrf.mxu0
    %v625 = vadd.f32 %v129, %v624
    %v626 = vpop.f32.mrf.mxu0
    %v627 = vpop.f32.mrf.mxu0
    %v628 = vadd.f32 %v129, %v627
    %v629 = vpop.f32.mrf.mxu0
    %630 = vmatprep.mubr.bf16.mxu0 0
    %631 = vmatmul.mubr.bf16.gmra.mxu0 %v376
    %v632 = vpop.f32.mrf.mxu0
    %v633 = vadd.f32 %v129, %v632
    %v634 = vpop.f32.mrf.mxu0
    %v635 = vpop.f32.mrf.mxu0
    %v636 = vadd.f32 %v129, %v635
    %v637 = vpop.f32.mrf.mxu0
    %638 = vmatprep.mubr.bf16.mxu0 0
    %639 = vmatmul.mubr.bf16.gmra.mxu0 %v379
    %v640 = vpop.f32.mrf.mxu0
    %v641 = vadd.f32 %v129, %v640
    %v642 = vpop.f32.mrf.mxu0
    %v643 = vpop.f32.mrf.mxu0
    %v644 = vadd.f32 %v129, %v643
    %v645 = vpop.f32.mrf.mxu0
    %646 = vmatprep.mubr.bf16.mxu0 0
    %647 = vmatmul.mubr.bf16.gmra.mxu0 %v382
    %v648 = vpop.f32.mrf.mxu0
    %v649 = vadd.f32 %v129, %v648
    %v650 = vpop.f32.mrf.mxu0
    %v651 = vpop.f32.mrf.mxu0
    %v652 = vadd.f32 %v129, %v651
    %v653 = vpop.f32.mrf.mxu0
    %654 = vmatprep.mubr.bf16.mxu0 0
    %655 = vmatmul.mubr.bf16.gmra.mxu0 %v385
    %v656 = vpop.f32.mrf.mxu0
    %v657 = vadd.f32 %v129, %v656
    %v658 = vpop.f32.mrf.mxu0
    %v659 = vpop.f32.mrf.mxu0
    %v660 = vadd.f32 %v129, %v659
    %v661 = vpop.f32.mrf.mxu0
    %662 = vmatprep.mubr.bf16.mxu0 0
    %663 = vmatmul.mubr.bf16.gmra.mxu0 %v388
    %v664 = vpop.f32.mrf.mxu0
    %v665 = vadd.f32 %v129, %v664
    %v666 = vpop.f32.mrf.mxu0
    %v667 = vpop.f32.mrf.mxu0
    %v668 = vadd.f32 %v129, %v667
    %v669 = vpop.f32.mrf.mxu0
    %670 = vmatprep.mubr.bf16.mxu0 0
    %671 = vmatmul.mubr.bf16.gmra.mxu0 %v391
    %v672 = vpop.f32.mrf.mxu0
    %v673 = vadd.f32 %v129, %v672
    %v674 = vpop.f32.mrf.mxu0
    %v675 = vpop.f32.mrf.mxu0
    %v676 = vadd.f32 %v129, %v675
    %v677 = vpop.f32.mrf.mxu0
    %678 = vmatprep.mubr.bf16.mxu0 0
    %679 = vmatmul.mubr.bf16.gmra.mxu0 %v394
    %v680 = vpop.f32.mrf.mxu0
    %v681 = vadd.f32 %v129, %v680
    %v682 = vpop.f32.mrf.mxu0
    %v683 = vpop.f32.mrf.mxu0
    %v684 = vadd.f32 %v129, %v683
    %v685 = vpop.f32.mrf.mxu0
    %686 = vmatprep.mubr.bf16.mxu0 0
    %687 = vmatmul.mubr.bf16.gmra.mxu0 %v397
    %v688 = vpop.f32.mrf.mxu0
    %v689 = vadd.f32 %v129, %v688
    %v690 = vpop.f32.mrf.mxu0
    %v691 = vpop.f32.mrf.mxu0
    %v692 = vadd.f32 %v129, %v691
    %v693 = vpop.f32.mrf.mxu0
    %694 = vdwg.mxu0
    %v695 = vmax.f32 %v441, 0.0
    %v696 = vmax.f32 %v444, 0.0
    %v697 = vmax.f32 %v449, 0.0
    %v698 = vmax.f32 %v452, 0.0
    %v699 = vmax.f32 %v457, 0.0
    %v700 = vmax.f32 %v460, 0.0
    %v701 = vmax.f32 %v465, 0.0
    %v702 = vmax.f32 %v468, 0.0
    %v703 = vmax.f32 %v473, 0.0
    %v704 = vmax.f32 %v476, 0.0
    %v705 = vmax.f32 %v481, 0.0
    %v706 = vmax.f32 %v484, 0.0
    %v707 = vmax.f32 %v489, 0.0
    %v708 = vmax.f32 %v492, 0.0
    %v709 = vmax.f32 %v497, 0.0
    %v710 = vmax.f32 %v500, 0.0
    %v711 = vmax.f32 %v505, 0.0
    %v712 = vmax.f32 %v508, 0.0
    %v713 = vmax.f32 %v513, 0.0
    %v714 = vmax.f32 %v516, 0.0
    %v715 = vmax.f32 %v521, 0.0
    %v716 = vmax.f32 %v524, 0.0
    %v717 = vmax.f32 %v529, 0.0
    %v718 = vmax.f32 %v532, 0.0
    %v719 = vmax.f32 %v537, 0.0
    %v720 = vmax.f32 %v540, 0.0
    %v721 = vmax.f32 %v545, 0.0
    %v722 = vmax.f32 %v548, 0.0
    %v723 = vmax.f32 %v553, 0.0
    %v724 = vmax.f32 %v556, 0.0
    %v725 = vmax.f32 %v561, 0.0
    %v726 = vmax.f32 %v564, 0.0
    %v727 = vmax.f32 %v569, 0.0
    %v728 = vmax.f32 %v572, 0.0
    %v729 = vmax.f32 %v577, 0.0
    %v730 = vmax.f32 %v580, 0.0
    %v731 = vmax.f32 %v585, 0.0
    %v732 = vmax.f32 %v588, 0.0
    %v733 = vmax.f32 %v593, 0.0
    %v734 = vmax.f32 %v596, 0.0
    %v735 = vmax.f32 %v601, 0.0
    %v736 = vmax.f32 %v604, 0.0
    %v737 = vmax.f32 %v609, 0.0
    %v738 = vmax.f32 %v612, 0.0
    %v739 = vmax.f32 %v617, 0.0
    %v740 = vmax.f32 %v620, 0.0
    %v741 = vmax.f32 %v625, 0.0
    %v742 = vmax.f32 %v628, 0.0
    %v743 = vmax.f32 %v633, 0.0
    %v744 = vmax.f32 %v636, 0.0
    %v745 = vmax.f32 %v641, 0.0
    %v746 = vmax.f32 %v644, 0.0
    %v747 = vmax.f32 %v649, 0.0
    %v748 = vmax.f32 %v652, 0.0
    %v749 = vmax.f32 %v657, 0.0
    %v750 = vmax.f32 %v660, 0.0
    %v751 = vmax.f32 %v665, 0.0
    %v752 = vmax.f32 %v668, 0.0
    %v753 = vmax.f32 %v673, 0.0
    %v754 = vmax.f32 %v676, 0.0
    %v755 = vmax.f32 %v681, 0.0
    %v756 = vmax.f32 %v684, 0.0
    %v757 = vmax.f32 %v689, 0.0
    %v758 = vmax.f32 %v692, 0.0
    %vm759 = vcmask 130048
    %v760 = vsel %vm759, %v695, 0.0
    %v761 = vsel %vm759, %v696, 0.0
    %v762 = vadd.f32 %v760, %v761
    %v763 = vsel %vm759, %v697, 0.0
    %v764 = vadd.f32 %v762, %v763
    %v765 = vsel %vm759, %v698, 0.0
    %v766 = vadd.f32 %v764, %v765
    %v767 = vsel %vm759, %v699, 0.0
    %v768 = vadd.f32 %v766, %v767
    %v769 = vsel %vm759, %v700, 0.0
    %v770 = vadd.f32 %v768, %v769
    %v771 = vsel %vm759, %v701, 0.0
    %v772 = vadd.f32 %v770, %v771
    %v773 = vsel %vm759, %v702, 0.0
    %v774 = vadd.f32 %v772, %v773
    %v775 = vsel %vm759, %v703, 0.0
    %v776 = vadd.f32 %v774, %v775
    %v777 = vsel %vm759, %v704, 0.0
    %v778 = vadd.f32 %v776, %v777
    %v779 = vsel %vm759, %v705, 0.0
    %v780 = vadd.f32 %v778, %v779
    %v781 = vsel %vm759, %v706, 0.0
    %v782 = vadd.f32 %v780, %v781
    %v783 = vsel %vm759, %v707, 0.0
    %v784 = vadd.f32 %v782, %v783
    %v785 = vsel %vm759, %v708, 0.0
    %v786 = vadd.f32 %v784, %v785
    %v787 = vsel %vm759, %v709, 0.0
    %v788 = vadd.f32 %v786, %v787
    %v789 = vsel %vm759, %v710, 0.0
    %v790 = vadd.f32 %v788, %v789
    %v791 = vsel %vm759, %v711, 0.0
    %v792 = vadd.f32 %v790, %v791
    %v793 = vsel %vm759, %v712, 0.0
    %v794 = vadd.f32 %v792, %v793
    %v795 = vsel %vm759, %v713, 0.0
    %v796 = vadd.f32 %v794, %v795
    %v797 = vsel %vm759, %v714, 0.0
    %v798 = vadd.f32 %v796, %v797
    %v799 = vsel %vm759, %v715, 0.0
    %v800 = vadd.f32 %v798, %v799
    %v801 = vsel %vm759, %v716, 0.0
    %v802 = vadd.f32 %v800, %v801
    %v803 = vsel %vm759, %v717, 0.0
    %v804 = vadd.f32 %v802, %v803
    %v805 = vsel %vm759, %v718, 0.0
    %v806 = vadd.f32 %v804, %v805
    %v807 = vsel %vm759, %v719, 0.0
    %v808 = vadd.f32 %v806, %v807
    %v809 = vsel %vm759, %v720, 0.0
    %v810 = vadd.f32 %v808, %v809
    %v811 = vsel %vm759, %v721, 0.0
    %v812 = vadd.f32 %v810, %v811
    %v813 = vsel %vm759, %v722, 0.0
    %v814 = vadd.f32 %v812, %v813
    %v815 = vsel %vm759, %v723, 0.0
    %v816 = vadd.f32 %v814, %v815
    %v817 = vsel %vm759, %v724, 0.0
    %v818 = vadd.f32 %v816, %v817
    %v819 = vsel %vm759, %v725, 0.0
    %v820 = vadd.f32 %v818, %v819
    %v821 = vsel %vm759, %v726, 0.0
    %v822 = vadd.f32 %v820, %v821
    %v823 = vsel %vm759, %v727, 0.0
    %v824 = vadd.f32 %v822, %v823
    %v825 = vsel %vm759, %v728, 0.0
    %v826 = vadd.f32 %v824, %v825
    %v827 = vsel %vm759, %v729, 0.0
    %v828 = vadd.f32 %v826, %v827
    %v829 = vsel %vm759, %v730, 0.0
    %v830 = vadd.f32 %v828, %v829
    %v831 = vsel %vm759, %v731, 0.0
    %v832 = vadd.f32 %v830, %v831
    %v833 = vsel %vm759, %v732, 0.0
    %v834 = vadd.f32 %v832, %v833
    %v835 = vsel %vm759, %v733, 0.0
    %v836 = vadd.f32 %v834, %v835
    %v837 = vsel %vm759, %v734, 0.0
    %v838 = vadd.f32 %v836, %v837
    %v839 = vsel %vm759, %v735, 0.0
    %v840 = vadd.f32 %v838, %v839
    %v841 = vsel %vm759, %v736, 0.0
    %v842 = vadd.f32 %v840, %v841
    %v843 = vsel %vm759, %v737, 0.0
    %v844 = vadd.f32 %v842, %v843
    %v845 = vsel %vm759, %v738, 0.0
    %v846 = vadd.f32 %v844, %v845
    %v847 = vsel %vm759, %v739, 0.0
    %v848 = vadd.f32 %v846, %v847
    %v849 = vsel %vm759, %v740, 0.0
    %v850 = vadd.f32 %v848, %v849
    %v851 = vsel %vm759, %v741, 0.0
    %v852 = vadd.f32 %v850, %v851
    %v853 = vsel %vm759, %v742, 0.0
    %v854 = vadd.f32 %v852, %v853
    %v855 = vsel %vm759, %v743, 0.0
    %v856 = vadd.f32 %v854, %v855
    %v857 = vsel %vm759, %v744, 0.0
    %v858 = vadd.f32 %v856, %v857
    %v859 = vsel %vm759, %v745, 0.0
    %v860 = vadd.f32 %v858, %v859
    %v861 = vsel %vm759, %v746, 0.0
    %v862 = vadd.f32 %v860, %v861
    %v863 = vsel %vm759, %v747, 0.0
    %v864 = vadd.f32 %v862, %v863
    %v865 = vsel %vm759, %v748, 0.0
    %v866 = vadd.f32 %v864, %v865
    %v867 = vsel %vm759, %v749, 0.0
    %v868 = vadd.f32 %v866, %v867
    %v869 = vsel %vm759, %v750, 0.0
    %v870 = vadd.f32 %v868, %v869
    %v871 = vsel %vm759, %v751, 0.0
    %v872 = vadd.f32 %v870, %v871
    %v873 = vsel %vm759, %v752, 0.0
    %v874 = vadd.f32 %v872, %v873
    %v875 = vsel %vm759, %v753, 0.0
    %v876 = vadd.f32 %v874, %v875
    %v877 = vsel %vm759, %v754, 0.0
    %v878 = vadd.f32 %v876, %v877
    %v879 = vsel %vm759, %v755, 0.0
    %v880 = vadd.f32 %v878, %v879
    %v881 = vsel %vm759, %v756, 0.0
    %v882 = vadd.f32 %v880, %v881
    %v883 = vsel %vm759, %v757, 0.0
    %v884 = vadd.f32 %v882, %v883
    %v885 = vsel %vm759, %v758, 0.0
    %v886 = vadd.f32 %v884, %v885
    %v887 = vrot.slane %v886, 4
    %v888 = vadd.f32 %v886, %v887
    %v889 = vrot.slane %v888, 2
    %v890 = vadd.f32 %v888, %v889
    %v891 = vrot.slane %v890, 1
    %v892 = vadd.f32 %v890, %v891
    %v893 = vmul.f32 %v892, 0.001953125
    %v894 = vsub.f32 %v695, %v893
    %v895 = vsub.f32 %v696, %v893
    %v896 = vsub.f32 %v697, %v893
    %v897 = vsub.f32 %v698, %v893
    %v898 = vsub.f32 %v699, %v893
    %v899 = vsub.f32 %v700, %v893
    %v900 = vsub.f32 %v701, %v893
    %v901 = vsub.f32 %v702, %v893
    %v902 = vsub.f32 %v703, %v893
    %v903 = vsub.f32 %v704, %v893
    %v904 = vsub.f32 %v705, %v893
    %v905 = vsub.f32 %v706, %v893
    %v906 = vsub.f32 %v707, %v893
    %v907 = vsub.f32 %v708, %v893
    %v908 = vsub.f32 %v709, %v893
    %v909 = vsub.f32 %v710, %v893
    %v910 = vsub.f32 %v711, %v893
    %v911 = vsub.f32 %v712, %v893
    %v912 = vsub.f32 %v713, %v893
    %v913 = vsub.f32 %v714, %v893
    %v914 = vsub.f32 %v715, %v893
    %v915 = vsub.f32 %v716, %v893
    %v916 = vsub.f32 %v717, %v893
    %v917 = vsub.f32 %v718, %v893
    %v918 = vsub.f32 %v719, %v893
    %v919 = vsub.f32 %v720, %v893
    %v920 = vsub.f32 %v721, %v893
    %v921 = vsub.f32 %v722, %v893
    %v922 = vsub.f32 %v723, %v893
    %v923 = vsub.f32 %v724, %v893
    %v924 = vsub.f32 %v725, %v893
    %v925 = vsub.f32 %v726, %v893
    %v926 = vsub.f32 %v727, %v893
    %v927 = vsub.f32 %v728, %v893
    %v928 = vsub.f32 %v729, %v893
    %v929 = vsub.f32 %v730, %v893
    %v930 = vsub.f32 %v731, %v893
    %v931 = vsub.f32 %v732, %v893
    %v932 = vsub.f32 %v733, %v893
    %v933 = vsub.f32 %v734, %v893
    %v934 = vsub.f32 %v735, %v893
    %v935 = vsub.f32 %v736, %v893
    %v936 = vsub.f32 %v737, %v893
    %v937 = vsub.f32 %v738, %v893
    %v938 = vsub.f32 %v739, %v893
    %v939 = vsub.f32 %v740, %v893
    %v940 = vsub.f32 %v741, %v893
    %v941 = vsub.f32 %v742, %v893
    %v942 = vsub.f32 %v743, %v893
    %v943 = vsub.f32 %v744, %v893
    %v944 = vsub.f32 %v745, %v893
    %v945 = vsub.f32 %v746, %v893
    %v946 = vsub.f32 %v747, %v893
    %v947 = vsub.f32 %v748, %v893
    %v948 = vsub.f32 %v749, %v893
    %v949 = vsub.f32 %v750, %v893
    %v950 = vsub.f32 %v751, %v893
    %v951 = vsub.f32 %v752, %v893
    %v952 = vsub.f32 %v753, %v893
    %v953 = vsub.f32 %v754, %v893
    %v954 = vsub.f32 %v755, %v893
    %v955 = vsub.f32 %v756, %v893
    %v956 = vsub.f32 %v757, %v893
    %v957 = vsub.f32 %v758, %v893
    %v958 = vmul.f32 %v894, %v894
    %v959 = vmul.f32 %v895, %v895
    %v960 = vmul.f32 %v896, %v896
    %v961 = vmul.f32 %v897, %v897
    %v962 = vmul.f32 %v898, %v898
    %v963 = vmul.f32 %v899, %v899
    %v964 = vmul.f32 %v900, %v900
    %v965 = vmul.f32 %v901, %v901
    %v966 = vmul.f32 %v902, %v902
    %v967 = vmul.f32 %v903, %v903
    %v968 = vmul.f32 %v904, %v904
    %v969 = vmul.f32 %v905, %v905
    %v970 = vmul.f32 %v906, %v906
    %v971 = vmul.f32 %v907, %v907
    %v972 = vmul.f32 %v908, %v908
    %v973 = vmul.f32 %v909, %v909
    %v974 = vmul.f32 %v910, %v910
    %v975 = vmul.f32 %v911, %v911
    %v976 = vmul.f32 %v912, %v912
    %v977 = vmul.f32 %v913, %v913
    %v978 = vmul.f32 %v914, %v914
    %v979 = vmul.f32 %v915, %v915
    %v980 = vmul.f32 %v916, %v916
    %v981 = vmul.f32 %v917, %v917
    %v982 = vmul.f32 %v918, %v918
    %v983 = vmul.f32 %v919, %v919
    %v984 = vmul.f32 %v920, %v920
    %v985 = vmul.f32 %v921, %v921
    %v986 = vmul.f32 %v922, %v922
    %v987 = vmul.f32 %v923, %v923
    %v988 = vmul.f32 %v924, %v924
    %v989 = vmul.f32 %v925, %v925
    %v990 = vmul.f32 %v926, %v926
    %v991 = vmul.f32 %v927, %v927
    %v992 = vmul.f32 %v928, %v928
    %v993 = vmul.f32 %v929, %v929
    %v994 = vmul.f32 %v930, %v930
    %v995 = vmul.f32 %v931, %v931
    %v996 = vmul.f32 %v932, %v932
    %v997 = vmul.f32 %v933, %v933
    %v998 = vmul.f32 %v934, %v934
    %v999 = vmul.f32 %v935, %v935
    %v1000 = vmul.f32 %v936, %v936
    %v1001 = vmul.f32 %v937, %v937
    %v1002 = vmul.f32 %v938, %v938
    %v1003 = vmul.f32 %v939, %v939
    %v1004 = vmul.f32 %v940, %v940
    %v1005 = vmul.f32 %v941, %v941
    %v1006 = vmul.f32 %v942, %v942
    %v1007 = vmul.f32 %v943, %v943
    %v1008 = vmul.f32 %v944, %v944
    %v1009 = vmul.f32 %v945, %v945
    %v1010 = vmul.f32 %v946, %v946
    %v1011 = vmul.f32 %v947, %v947
    %v1012 = vmul.f32 %v948, %v948
    %v1013 = vmul.f32 %v949, %v949
    %v1014 = vmul.f32 %v950, %v950
    %v1015 = vmul.f32 %v951, %v951
    %v1016 = vmul.f32 %v952, %v952
    %v1017 = vmul.f32 %v953, %v953
    %v1018 = vmul.f32 %v954, %v954
    %v1019 = vmul.f32 %v955, %v955
    %v1020 = vmul.f32 %v956, %v956
    %v1021 = vmul.f32 %v957, %v957
    %v1022 = vsel %vm759, %v958, 0.0
    %v1023 = vsel %vm759, %v959, 0.0
    %v1024 = vadd.f32 %v1022, %v1023
    %v1025 = vsel %vm759, %v960, 0.0
    %v1026 = vadd.f32 %v1024, %v1025
    %v1027 = vsel %vm759, %v961, 0.0
    %v1028 = vadd.f32 %v1026, %v1027
    %v1029 = vsel %vm759, %v962, 0.0
    %v1030 = vadd.f32 %v1028, %v1029
    %v1031 = vsel %vm759, %v963, 0.0
    %v1032 = vadd.f32 %v1030, %v1031
    %v1033 = vsel %vm759, %v964, 0.0
    %v1034 = vadd.f32 %v1032, %v1033
    %v1035 = vsel %vm759, %v965, 0.0
    %v1036 = vadd.f32 %v1034, %v1035
    %v1037 = vsel %vm759, %v966, 0.0
    %v1038 = vadd.f32 %v1036, %v1037
    %v1039 = vsel %vm759, %v967, 0.0
    %v1040 = vadd.f32 %v1038, %v1039
    %v1041 = vsel %vm759, %v968, 0.0
    %v1042 = vadd.f32 %v1040, %v1041
    %v1043 = vsel %vm759, %v969, 0.0
    %v1044 = vadd.f32 %v1042, %v1043
    %v1045 = vsel %vm759, %v970, 0.0
    %v1046 = vadd.f32 %v1044, %v1045
    %v1047 = vsel %vm759, %v971, 0.0
    %v1048 = vadd.f32 %v1046, %v1047
    %v1049 = vsel %vm759, %v972, 0.0
    %v1050 = vadd.f32 %v1048, %v1049
    %v1051 = vsel %vm759, %v973, 0.0
    %v1052 = vadd.f32 %v1050, %v1051
    %v1053 = vsel %vm759, %v974, 0.0
    %v1054 = vadd.f32 %v1052, %v1053
    %v1055 = vsel %vm759, %v975, 0.0
    %v1056 = vadd.f32 %v1054, %v1055
    %v1057 = vsel %vm759, %v976, 0.0
    %v1058 = vadd.f32 %v1056, %v1057
    %v1059 = vsel %vm759, %v977, 0.0
    %v1060 = vadd.f32 %v1058, %v1059
    %v1061 = vsel %vm759, %v978, 0.0
    %v1062 = vadd.f32 %v1060, %v1061
    %v1063 = vsel %vm759, %v979, 0.0
    %v1064 = vadd.f32 %v1062, %v1063
    %v1065 = vsel %vm759, %v980, 0.0
    %v1066 = vadd.f32 %v1064, %v1065
    %v1067 = vsel %vm759, %v981, 0.0
    %v1068 = vadd.f32 %v1066, %v1067
    %v1069 = vsel %vm759, %v982, 0.0
    %v1070 = vadd.f32 %v1068, %v1069
    %v1071 = vsel %vm759, %v983, 0.0
    %v1072 = vadd.f32 %v1070, %v1071
    %v1073 = vsel %vm759, %v984, 0.0
    %v1074 = vadd.f32 %v1072, %v1073
    %v1075 = vsel %vm759, %v985, 0.0
    %v1076 = vadd.f32 %v1074, %v1075
    %v1077 = vsel %vm759, %v986, 0.0
    %v1078 = vadd.f32 %v1076, %v1077
    %v1079 = vsel %vm759, %v987, 0.0
    %v1080 = vadd.f32 %v1078, %v1079
    %v1081 = vsel %vm759, %v988, 0.0
    %v1082 = vadd.f32 %v1080, %v1081
    %v1083 = vsel %vm759, %v989, 0.0
    %v1084 = vadd.f32 %v1082, %v1083
    %v1085 = vsel %vm759, %v990, 0.0
    %v1086 = vadd.f32 %v1084, %v1085
    %v1087 = vsel %vm759, %v991, 0.0
    %v1088 = vadd.f32 %v1086, %v1087
    %v1089 = vsel %vm759, %v992, 0.0
    %v1090 = vadd.f32 %v1088, %v1089
    %v1091 = vsel %vm759, %v993, 0.0
    %v1092 = vadd.f32 %v1090, %v1091
    %v1093 = vsel %vm759, %v994, 0.0
    %v1094 = vadd.f32 %v1092, %v1093
    %v1095 = vsel %vm759, %v995, 0.0
    %v1096 = vadd.f32 %v1094, %v1095
    %v1097 = vsel %vm759, %v996, 0.0
    %v1098 = vadd.f32 %v1096, %v1097
    %v1099 = vsel %vm759, %v997, 0.0
    %v1100 = vadd.f32 %v1098, %v1099
    %v1101 = vsel %vm759, %v998, 0.0
    %v1102 = vadd.f32 %v1100, %v1101
    %v1103 = vsel %vm759, %v999, 0.0
    %v1104 = vadd.f32 %v1102, %v1103
    %v1105 = vsel %vm759, %v1000, 0.0
    %v1106 = vadd.f32 %v1104, %v1105
    %v1107 = vsel %vm759, %v1001, 0.0
    %v1108 = vadd.f32 %v1106, %v1107
    %v1109 = vsel %vm759, %v1002, 0.0
    %v1110 = vadd.f32 %v1108, %v1109
    %v1111 = vsel %vm759, %v1003, 0.0
    %v1112 = vadd.f32 %v1110, %v1111
    %v1113 = vsel %vm759, %v1004, 0.0
    %v1114 = vadd.f32 %v1112, %v1113
    %v1115 = vsel %vm759, %v1005, 0.0
    %v1116 = vadd.f32 %v1114, %v1115
    %v1117 = vsel %vm759, %v1006, 0.0
    %v1118 = vadd.f32 %v1116, %v1117
    %v1119 = vsel %vm759, %v1007, 0.0
    %v1120 = vadd.f32 %v1118, %v1119
    %v1121 = vsel %vm759, %v1008, 0.0
    %v1122 = vadd.f32 %v1120, %v1121
    %v1123 = vsel %vm759, %v1009, 0.0
    %v1124 = vadd.f32 %v1122, %v1123
    %v1125 = vsel %vm759, %v1010, 0.0
    %v1126 = vadd.f32 %v1124, %v1125
    %v1127 = vsel %vm759, %v1011, 0.0
    %v1128 = vadd.f32 %v1126, %v1127
    %v1129 = vsel %vm759, %v1012, 0.0
    %v1130 = vadd.f32 %v1128, %v1129
    %v1131 = vsel %vm759, %v1013, 0.0
    %v1132 = vadd.f32 %v1130, %v1131
    %v1133 = vsel %vm759, %v1014, 0.0
    %v1134 = vadd.f32 %v1132, %v1133
    %v1135 = vsel %vm759, %v1015, 0.0
    %v1136 = vadd.f32 %v1134, %v1135
    %v1137 = vsel %vm759, %v1016, 0.0
    %v1138 = vadd.f32 %v1136, %v1137
    %v1139 = vsel %vm759, %v1017, 0.0
    %v1140 = vadd.f32 %v1138, %v1139
    %v1141 = vsel %vm759, %v1018, 0.0
    %v1142 = vadd.f32 %v1140, %v1141
    %v1143 = vsel %vm759, %v1019, 0.0
    %v1144 = vadd.f32 %v1142, %v1143
    %v1145 = vsel %vm759, %v1020, 0.0
    %v1146 = vadd.f32 %v1144, %v1145
    %v1147 = vsel %vm759, %v1021, 0.0
    %v1148 = vadd.f32 %v1146, %v1147
    %v1149 = vrot.slane %v1148, 4
    %v1150 = vadd.f32 %v1148, %v1149
    %v1151 = vrot.slane %v1150, 2
    %v1152 = vadd.f32 %v1150, %v1151
    %v1153 = vrot.slane %v1152, 1
    %v1154 = vadd.f32 %v1152, %v1153
    %v1155 = vmul.f32 %v1154, 0.001953125
    %v1156 = vld [vmem:[#allocation4] sm:$0x1]
    %v1157 = vadd.f32 %v1155, 1e-05
    %v1158 = vrsqrt.pop %v1157
    %v1159 = vmul.f32 %v1156, %v1158
    %v1161 = vlaneseq
    %v1162 = vshrl.u32 %v1161, 7
    %v1163 = vsub.s32 0, %v1162
    %v1164 = vrot.slane %v1159, %v1163
    %v1166 = vmul.f32 %v894, %v1164
    %v1167 = vmul.f32 %v895, %v1164
    %v1168 = vmul.f32 %v896, %v1164
    %v1169 = vmul.f32 %v897, %v1164
    %v1170 = vmul.f32 %v898, %v1164
    %v1171 = vmul.f32 %v899, %v1164
    %v1172 = vmul.f32 %v900, %v1164
    %v1173 = vmul.f32 %v901, %v1164
    %v1174 = vmul.f32 %v902, %v1164
    %v1175 = vmul.f32 %v903, %v1164
    %v1176 = vmul.f32 %v904, %v1164
    %v1177 = vmul.f32 %v905, %v1164
    %v1178 = vmul.f32 %v906, %v1164
    %v1179 = vmul.f32 %v907, %v1164
    %v1180 = vmul.f32 %v908, %v1164
    %v1181 = vmul.f32 %v909, %v1164
    %v1182 = vmul.f32 %v910, %v1164
    %v1183 = vmul.f32 %v911, %v1164
    %v1184 = vmul.f32 %v912, %v1164
    %v1185 = vmul.f32 %v913, %v1164
    %v1186 = vmul.f32 %v914, %v1164
    %v1187 = vmul.f32 %v915, %v1164
    %v1188 = vmul.f32 %v916, %v1164
    %v1189 = vmul.f32 %v917, %v1164
    %v1190 = vmul.f32 %v918, %v1164
    %v1191 = vmul.f32 %v919, %v1164
    %v1192 = vmul.f32 %v920, %v1164
    %v1193 = vmul.f32 %v921, %v1164
    %v1194 = vmul.f32 %v922, %v1164
    %v1195 = vmul.f32 %v923, %v1164
    %v1196 = vmul.f32 %v924, %v1164
    %v1197 = vmul.f32 %v925, %v1164
    %v1198 = vmul.f32 %v926, %v1164
    %v1199 = vmul.f32 %v927, %v1164
    %v1200 = vmul.f32 %v928, %v1164
    %v1201 = vmul.f32 %v929, %v1164
    %v1202 = vmul.f32 %v930, %v1164
    %v1203 = vmul.f32 %v931, %v1164
    %v1204 = vmul.f32 %v932, %v1164
    %v1205 = vmul.f32 %v933, %v1164
    %v1206 = vmul.f32 %v934, %v1164
    %v1207 = vmul.f32 %v935, %v1164
    %v1208 = vmul.f32 %v936, %v1164
    %v1209 = vmul.f32 %v937, %v1164
    %v1210 = vmul.f32 %v938, %v1164
    %v1211 = vmul.f32 %v939, %v1164
    %v1212 = vmul.f32 %v940, %v1164
    %v1213 = vmul.f32 %v941, %v1164
    %v1214 = vmul.f32 %v942, %v1164
    %v1215 = vmul.f32 %v943, %v1164
    %v1216 = vmul.f32 %v944, %v1164
    %v1217 = vmul.f32 %v945, %v1164
    %v1218 = vmul.f32 %v946, %v1164
    %v1219 = vmul.f32 %v947, %v1164
    %v1220 = vmul.f32 %v948, %v1164
    %v1221 = vmul.f32 %v949, %v1164
    %v1222 = vmul.f32 %v950, %v1164
    %v1223 = vmul.f32 %v951, %v1164
    %v1224 = vmul.f32 %v952, %v1164
    %v1225 = vmul.f32 %v953, %v1164
    %v1226 = vmul.f32 %v954, %v1164
    %v1227 = vmul.f32 %v955, %v1164
    %v1228 = vmul.f32 %v956, %v1164
    %v1229 = vmul.f32 %v957, %v1164
    %v1230 = vld [vmem:[#allocation6] sm:$0x1]
    %v1232 = vlaneseq
    %v1233 = vshrl.u32 %v1232, 7
    %v1234 = vsub.s32 0, %v1233
    %v1235 = vrot.slane %v1230, %v1234
    %v1237 = vadd.f32 %v1166, %v1235
    %v1238 = vadd.f32 %v1167, %v1235
    %v1239 = vadd.f32 %v1168, %v1235
    %v1240 = vadd.f32 %v1169, %v1235
    %v1241 = vadd.f32 %v1170, %v1235
    %v1242 = vadd.f32 %v1171, %v1235
    %v1243 = vadd.f32 %v1172, %v1235
    %v1244 = vadd.f32 %v1173, %v1235
    %v1245 = vadd.f32 %v1174, %v1235
    %v1246 = vadd.f32 %v1175, %v1235
    %v1247 = vadd.f32 %v1176, %v1235
    %v1248 = vadd.f32 %v1177, %v1235
    %v1249 = vadd.f32 %v1178, %v1235
    %v1250 = vadd.f32 %v1179, %v1235
    %v1251 = vadd.f32 %v1180, %v1235
    %v1252 = vadd.f32 %v1181, %v1235
    %v1253 = vadd.f32 %v1182, %v1235
    %v1254 = vadd.f32 %v1183, %v1235
    %v1255 = vadd.f32 %v1184, %v1235
    %v1256 = vadd.f32 %v1185, %v1235
    %v1257 = vadd.f32 %v1186, %v1235
    %v1258 = vadd.f32 %v1187, %v1235
    %v1259 = vadd.f32 %v1188, %v1235
    %v1260 = vadd.f32 %v1189, %v1235
    %v1261 = vadd.f32 %v1190, %v1235
    %v1262 = vadd.f32 %v1191, %v1235
    %v1263 = vadd.f32 %v1192, %v1235
    %v1264 = vadd.f32 %v1193, %v1235
    %v1265 = vadd.f32 %v1194, %v1235
    %v1266 = vadd.f32 %v1195, %v1235
    %v1267 = vadd.f32 %v1196, %v1235
    %v1268 = vadd.f32 %v1197, %v1235
    %v1269 = vadd.f32 %v1198, %v1235
    %v1270 = vadd.f32 %v1199, %v1235
    %v1271 = vadd.f32 %v1200, %v1235
    %v1272 = vadd.f32 %v1201, %v1235
    %v1273 = vadd.f32 %v1202, %v1235
    %v1274 = vadd.f32 %v1203, %v1235
    %v1275 = vadd.f32 %v1204, %v1235
    %v1276 = vadd.f32 %v1205, %v1235
    %v1277 = vadd.f32 %v1206, %v1235
    %v1278 = vadd.f32 %v1207, %v1235
    %v1279 = vadd.f32 %v1208, %v1235
    %v1280 = vadd.f32 %v1209, %v1235
    %v1281 = vadd.f32 %v1210, %v1235
    %v1282 = vadd.f32 %v1211, %v1235
    %v1283 = vadd.f32 %v1212, %v1235
    %v1284 = vadd.f32 %v1213, %v1235
    %v1285 = vadd.f32 %v1214, %v1235
    %v1286 = vadd.f32 %v1215, %v1235
    %v1287 = vadd.f32 %v1216, %v1235
    %v1288 = vadd.f32 %v1217, %v1235
    %v1289 = vadd.f32 %v1218, %v1235
    %v1290 = vadd.f32 %v1219, %v1235
    %v1291 = vadd.f32 %v1220, %v1235
    %v1292 = vadd.f32 %v1221, %v1235
    %v1293 = vadd.f32 %v1222, %v1235
    %v1294 = vadd.f32 %v1223, %v1235
    %v1295 = vadd.f32 %v1224, %v1235
    %v1296 = vadd.f32 %v1225, %v1235
    %v1297 = vadd.f32 %v1226, %v1235
    %v1298 = vadd.f32 %v1227, %v1235
    %v1299 = vadd.f32 %v1228, %v1235
    %v1300 = vadd.f32 %v1229, %v1235
    %1301 = vst.msk [vmem:[%s5] sm:$0xff] %vm759, %v1237
    %1302 = vst.msk [vmem:[%s5 + $0x8] sm:$0xff] %vm759, %v1238
    %1303 = vst.msk [vmem:[%s5 + $0x10] sm:$0xff] %vm759, %v1239
    %1304 = vst.msk [vmem:[%s5 + $0x18] sm:$0xff] %vm759, %v1240
    %1305 = vst.msk [vmem:[%s5 + $0x20] sm:$0xff] %vm759, %v1241
    %1306 = vst.msk [vmem:[%s5 + $0x28] sm:$0xff] %vm759, %v1242
    %1307 = vst.msk [vmem:[%s5 + $0x30] sm:$0xff] %vm759, %v1243
    %1308 = vst.msk [vmem:[%s5 + $0x38] sm:$0xff] %vm759, %v1244
    %1309 = vst.msk [vmem:[%s5 + $0x40] sm:$0xff] %vm759, %v1245
    %1310 = vst.msk [vmem:[%s5 + $0x48] sm:$0xff] %vm759, %v1246
    %1311 = vst.msk [vmem:[%s5 + $0x50] sm:$0xff] %vm759, %v1247
    %1312 = vst.msk [vmem:[%s5 + $0x58] sm:$0xff] %vm759, %v1248
    %1313 = vst.msk [vmem:[%s5 + $0x60] sm:$0xff] %vm759, %v1249
    %1314 = vst.msk [vmem:[%s5 + $0x68] sm:$0xff] %vm759, %v1250
    %1315 = vst.msk [vmem:[%s5 + $0x70] sm:$0xff] %vm759, %v1251
    %1316 = vst.msk [vmem:[%s5 + $0x78] sm:$0xff] %vm759, %v1252
    %1317 = vst.msk [vmem:[%s5 + $0x80] sm:$0xff] %vm759, %v1253
    %1318 = vst.msk [vmem:[%s5 + $0x88] sm:$0xff] %vm759, %v1254
    %1319 = vst.msk [vmem:[%s5 + $0x90] sm:$0xff] %vm759, %v1255
    %1320 = vst.msk [vmem:[%s5 + $0x98] sm:$0xff] %vm759, %v1256
    %1321 = vst.msk [vmem:[%s5 + $0xa0] sm:$0xff] %vm759, %v1257
    %1322 = vst.msk [vmem:[%s5 + $0xa8] sm:$0xff] %vm759, %v1258
    %1323 = vst.msk [vmem:[%s5 + $0xb0] sm:$0xff] %vm759, %v1259
    %1324 = vst.msk [vmem:[%s5 + $0xb8] sm:$0xff] %vm759, %v1260
    %1325 = vst.msk [vmem:[%s5 + $0xc0] sm:$0xff] %vm759, %v1261
    %1326 = vst.msk [vmem:[%s5 + $0xc8] sm:$0xff] %vm759, %v1262
    %1327 = vst.msk [vmem:[%s5 + $0xd0] sm:$0xff] %vm759, %v1263
    %1328 = vst.msk [vmem:[%s5 + $0xd8] sm:$0xff] %vm759, %v1264
    %1329 = vst.msk [vmem:[%s5 + $0xe0] sm:$0xff] %vm759, %v1265
    %1330 = vst.msk [vmem:[%s5 + $0xe8] sm:$0xff] %vm759, %v1266
    %1331 = vst.msk [vmem:[%s5 + $0xf0] sm:$0xff] %vm759, %v1267
    %1332 = vst.msk [vmem:[%s5 + $0xf8] sm:$0xff] %vm759, %v1268
    %1333 = vst.msk [vmem:[%s5 + $0x100] sm:$0xff] %vm759, %v1269
    %1334 = vst.msk [vmem:[%s5 + $0x108] sm:$0xff] %vm759, %v1270
    %1335 = vst.msk [vmem:[%s5 + $0x110] sm:$0xff] %vm759, %v1271
    %1336 = vst.msk [vmem:[%s5 + $0x118] sm:$0xff] %vm759, %v1272
    %1337 = vst.msk [vmem:[%s5 + $0x120] sm:$0xff] %vm759, %v1273
    %1338 = vst.msk [vmem:[%s5 + $0x128] sm:$0xff] %vm759, %v1274
    %1339 = vst.msk [vmem:[%s5 + $0x130] sm:$0xff] %vm759, %v1275
    %1340 = vst.msk [vmem:[%s5 + $0x138] sm:$0xff] %vm759, %v1276
    %1341 = vst.msk [vmem:[%s5 + $0x140] sm:$0xff] %vm759, %v1277
    %1342 = vst.msk [vmem:[%s5 + $0x148] sm:$0xff] %vm759, %v1278
    %1343 = vst.msk [vmem:[%s5 + $0x150] sm:$0xff] %vm759, %v1279
    %1344 = vst.msk [vmem:[%s5 + $0x158] sm:$0xff] %vm759, %v1280
    %1345 = vst.msk [vmem:[%s5 + $0x160] sm:$0xff] %vm759, %v1281
    %1346 = vst.msk [vmem:[%s5 + $0x168] sm:$0xff] %vm759, %v1282
    %1347 = vst.msk [vmem:[%s5 + $0x170] sm:$0xff] %vm759, %v1283
    %1348 = vst.msk [vmem:[%s5 + $0x178] sm:$0xff] %vm759, %v1284
    %1349 = vst.msk [vmem:[%s5 + $0x180] sm:$0xff] %vm759, %v1285
    %1350 = vst.msk [vmem:[%s5 + $0x188] sm:$0xff] %vm759, %v1286
    %1351 = vst.msk [vmem:[%s5 + $0x190] sm:$0xff] %vm759, %v1287
    %1352 = vst.msk [vmem:[%s5 + $0x198] sm:$0xff] %vm759, %v1288
    %1353 = vst.msk [vmem:[%s5 + $0x1a0] sm:$0xff] %vm759, %v1289
    %1354 = vst.msk [vmem:[%s5 + $0x1a8] sm:$0xff] %vm759, %v1290
    %1355 = vst.msk [vmem:[%s5 + $0x1b0] sm:$0xff] %vm759, %v1291
    %1356 = vst.msk [vmem:[%s5 + $0x1b8] sm:$0xff] %vm759, %v1292
    %1357 = vst.msk [vmem:[%s5 + $0x1c0] sm:$0xff] %vm759, %v1293
    %1358 = vst.msk [vmem:[%s5 + $0x1c8] sm:$0xff] %vm759, %v1294
    %1359 = vst.msk [vmem:[%s5 + $0x1d0] sm:$0xff] %vm759, %v1295
    %1360 = vst.msk [vmem:[%s5 + $0x1d8] sm:$0xff] %vm759, %v1296
    %1361 = vst.msk [vmem:[%s5 + $0x1e0] sm:$0xff] %vm759, %v1297
    %1362 = vst.msk [vmem:[%s5 + $0x1e8] sm:$0xff] %vm759, %v1298
    %1363 = vst.msk [vmem:[%s5 + $0x1f0] sm:$0xff] %vm759, %v1299
    %1364 = vst.msk [vmem:[%s5 + $0x1f8] sm:$0xff] %vm759, %v1300
    // Predicated region
    $region34: #{unet_forward.11} parent=1 // pred_check
      _
    $region35: #{unet_forward.11} parent=1 // pred_check_branch
      %1366 = sbr.rel (0) target = $region37
    $region36: #{unet_forward.11} parent=1 // pred_region
      _
    $region37: #{unet_forward.11} parent=1 // pred_fallthru
      _
    // Predicated region
    $region38: #{unet_forward.11} parent=1 // pred_check
      _
    $region39: #{unet_forward.11} parent=1 // pred_check_branch
      %1368 = sbr.rel (0) target = $region41
    $region40: #{unet_forward.11} parent=1 // pred_region
      _
    $region41: #{unet_forward.11} parent=1 // pred_fallthru
      _
    %1369 = vsyncpa [#allocation3], 1
    %1370 = vsyncpa [#allocation5], 1

// kernel: unet_forward.12
$region0: #{unet_forward.12}
  #allocation0 [shape = 'u32[]', space=smem, size = 0x4, offset = 0x4, fixed_abs, tag = 'smem constant byte address 0x4 - core index']
  #allocation1 [shape = 'u32[144,128]{1,0:T(1,128)}', space=vmem, size = 0x12000, scoped, tag = 'internal scratch']
  %s0 = inlined_call_operand.vmem [shape: bf16[128,144], index: 0, kind: input, shape index: {}]
  %s1 = inlined_call_operand.vmem [shape: bf16[144,32], index: 1, kind: input, shape index: {}]
  %s2 = inlined_call_operand.vmem [shape: f32[1,32], index: 2, kind: input, shape index: {}]
  %s3 = inlined_call_operand.vmem [shape: f32[1,32], index: 3, kind: input, shape index: {}]
  %s4 = inlined_call_operand.vmem [shape: f32[1,32], index: 4, kind: input, shape index: {}]
  %s5 = inlined_call_operand.vmem [shape: f32[128,32], index: 5, kind: output, shape index: {}]
  %s6 = sld [smem:[#allocation0]]
  $region30: #{unet_forward.12} parent=0
    _
  %s8 = ssub.s32 1, %s6
  %s9 = scalar_select 0, %s8, %s6
  // Predicated region
  $region2: #{unet_forward.12} parent=0 // pred_check
    _
  $region3: #{unet_forward.12} parent=0 // pred_check_branch
    %11 = sbr.rel (0) target = $region5
  $region4: #{unet_forward.12} parent=0 // pred_region
    _
  $region5: #{unet_forward.12} parent=0 // pred_fallthru
    _
  // Predicated region
  $region6: #{unet_forward.12} parent=0 // pred_check
    _
  $region7: #{unet_forward.12} parent=0 // pred_check_branch
    %13 = sbr.rel (0) target = $region9
  $region8: #{unet_forward.12} parent=0 // pred_region
    _
  $region9: #{unet_forward.12} parent=0 // pred_fallthru
    _
  // Predicated region
  $region10: #{unet_forward.12} parent=0 // pred_check
    _
  $region11: #{unet_forward.12} parent=0 // pred_check_branch
    %15 = sbr.rel (0) target = $region13
  $region12: #{unet_forward.12} parent=0 // pred_region
    _
  $region13: #{unet_forward.12} parent=0 // pred_fallthru
    _
  // Predicated region
  $region14: #{unet_forward.12} parent=0 // pred_check
    _
  $region15: #{unet_forward.12} parent=0 // pred_check_branch
    %17 = sbr.rel (0) target = $region17
  $region16: #{unet_forward.12} parent=0 // pred_region
    _
  $region17: #{unet_forward.12} parent=0 // pred_fallthru
    _
  // Predicated region
  $region18: #{unet_forward.12} parent=0 // pred_check
    _
  $region19: #{unet_forward.12} parent=0 // pred_check_branch
    %19 = sbr.rel (0) target = $region21
  $region20: #{unet_forward.12} parent=0 // pred_region
    _
  $region21: #{unet_forward.12} parent=0 // pred_fallthru
    _
  %v21 = vld [vmem:[%s0] sm:$0xff]
  %v22 = vld [vmem:[%s0 + $0x8] sm:$0xff]
  %v23 = vld [vmem:[%s0 + $0x10] sm:$0xff]
  %v24 = vld [vmem:[%s0 + $0x18] sm:$0xff]
  %v25 = vld [vmem:[%s0 + $0x20] sm:$0xff]
  %v26 = vld [vmem:[%s0 + $0x28] sm:$0xff]
  %v27 = vld [vmem:[%s0 + $0x30] sm:$0xff]
  %v28 = vld [vmem:[%s0 + $0x38] sm:$0xff]
  %v29 = vld [vmem:[%s0 + $0x40] sm:$0xff]
  %v30 = vld [vmem:[%s0 + $0x48] sm:$0xff]
  %v31 = vld [vmem:[%s0 + $0x50] sm:$0xff]
  %v32 = vld [vmem:[%s0 + $0x58] sm:$0xff]
  %v33 = vld [vmem:[%s0 + $0x60] sm:$0xff]
  %v34 = vld [vmem:[%s0 + $0x68] sm:$0xff]
  %v35 = vld [vmem:[%s0 + $0x70] sm:$0xff]
  %v36 = vld [vmem:[%s0 + $0x78] sm:$0xff]
  %v37 = vld [vmem:[%s1] sm:$0xf]
  %v38 = vld [vmem:[%s1 + $0x4] sm:$0xf]
  %v39 = vld [vmem:[%s1 + $0x8] sm:$0xf]
  %v40 = vld [vmem:[%s1 + $0xc] sm:$0xf]
  %v41 = vld [vmem:[%s1 + $0x10] sm:$0xf]
  %v42 = vld [vmem:[%s1 + $0x14] sm:$0xf]
  %v43 = vld [vmem:[%s1 + $0x18] sm:$0xf]
  %v44 = vld [vmem:[%s1 + $0x1c] sm:$0xf]
  %v45 = vld [vmem:[%s1 + $0x20] sm:$0xf]
  %v46 = vld [vmem:[%s1 + $0x24] sm:$0xf]
  %v47 = vld [vmem:[%s1 + $0x28] sm:$0xf]
  %v48 = vld [vmem:[%s1 + $0x2c] sm:$0xf]
  %v49 = vld [vmem:[%s1 + $0x30] sm:$0xf]
  %v50 = vld [vmem:[%s1 + $0x34] sm:$0xf]
  %v51 = vld [vmem:[%s1 + $0x38] sm:$0xf]
  %v52 = vld [vmem:[%s1 + $0x3c] sm:$0xf]
  %v53 = vld [vmem:[%s1 + $0x40] sm:$0xf]
  %v54 = vld [vmem:[%s1 + $0x44] sm:$0xf]
  %v55 = vld [vmem:[%s2] sm:$0x1]
  %v57 = vlaneseq
  %v58 = vshrl.u32 %v57, 7
  %v59 = vsub.s32 0, %v58
  %v60 = vrot.slane %v55, %v59
  %v78 = vunpack.c.l.b16 %v21
  %v79 = vunpack.c.h.b16 %v21
  %v80 = vunpack.c.l.b16 %v22
  %v81 = vunpack.c.h.b16 %v22
  %v82 = vunpack.c.l.b16 %v23
  %v83 = vunpack.c.h.b16 %v23
  %v84 = vunpack.c.l.b16 %v24
  %v85 = vunpack.c.h.b16 %v24
  %v86 = vunpack.c.l.b16 %v25
  %v87 = vunpack.c.h.b16 %v25
  %v88 = vunpack.c.l.b16 %v26
  %v89 = vunpack.c.h.b16 %v26
  %v90 = vunpack.c.l.b16 %v27
  %v91 = vunpack.c.h.b16 %v27
  %v92 = vunpack.c.l.b16 %v28
  %v93 = vunpack.c.h.b16 %v28
  %v94 = vunpack.c.l.b16 %v29
  %v95 = vunpack.c.h.b16 %v29
  %v96 = vunpack.c.l.b16 %v30
  %v97 = vunpack.c.h.b16 %v30
  %v98 = vunpack.c.l.b16 %v31
  %v99 = vunpack.c.h.b16 %v31
  %v100 = vunpack.c.l.b16 %v32
  %v101 = vunpack.c.h.b16 %v32
  %v102 = vunpack.c.l.b16 %v33
  %v103 = vunpack.c.h.b16 %v33
  %v104 = vunpack.c.l.b16 %v34
  %v105 = vunpack.c.h.b16 %v34
  %v106 = vunpack.c.l.b16 %v35
  %v107 = vunpack.c.h.b16 %v35
  %v108 = vunpack.c.l.b16 %v36
  %v109 = vunpack.c.h.b16 %v36
  %v110 = vpack.c.b16 %v80, %v78
  %v111 = vpack.c.b16 %v81, %v79
  %v112 = vpack.c.b16 %v84, %v82
  %v113 = vpack.c.b16 %v85, %v83
  %v114 = vpack.c.b16 %v88, %v86
  %v115 = vpack.c.b16 %v89, %v87
  %v116 = vpack.c.b16 %v92, %v90
  %v117 = vpack.c.b16 %v93, %v91
  %v118 = vpack.c.b16 %v96, %v94
  %v119 = vpack.c.b16 %v97, %v95
  %v120 = vpack.c.b16 %v100, %v98
  %v121 = vpack.c.b16 %v101, %v99
  %v122 = vpack.c.b16 %v104, %v102
  %v123 = vpack.c.b16 %v105, %v103
  %v124 = vpack.c.b16 %v108, %v106
  %v125 = vpack.c.b16 %v109, %v107
  %v152 = vunpack.c.l.b16 %v37
  %v153 = vunpack.c.l.b16 %v38
  %v154 = vunpack.c.l.b16 %v39
  %v155 = vunpack.c.l.b16 %v40
  %v156 = vunpack.c.l.b16 %v41
  %v157 = vunpack.c.l.b16 %v42
  %v158 = vunpack.c.l.b16 %v43
  %v159 = vunpack.c.l.b16 %v44
  %v160 = vunpack.c.l.b16 %v45
  %v161 = vunpack.c.l.b16 %v46
  %v162 = vunpack.c.l.b16 %v47
  %v163 = vunpack.c.l.b16 %v48
  %v164 = vunpack.c.l.b16 %v49
  %v165 = vunpack.c.l.b16 %v50
  %v166 = vunpack.c.l.b16 %v51
  %v167 = vunpack.c.l.b16 %v52
  %v168 = vunpack.c.l.b16 %v53
  %v169 = vunpack.c.l.b16 %v54
  %v170 = vpack.c.b16 %v153, %v152
  %v171 = vpack.c.b16 %v155, %v154
  %v172 = vpack.c.b16 %v157, %v156
  %v173 = vpack.c.b16 %v159, %v158
  %v174 = vpack.c.b16 %v161, %v160
  %v175 = vpack.c.b16 %v163, %v162
  %v176 = vpack.c.b16 %v165, %v164
  %v177 = vpack.c.b16 %v167, %v166
  %v178 = vpack.c.b16 %v169, %v168
  %vm188 = vcmask 130048
  %v190 = vsel %vm188, %v111, 0
  %v193 = vsel %vm188, %v113, 0
  %v196 = vsel %vm188, %v115, 0
  %v199 = vsel %vm188, %v117, 0
  %v202 = vsel %vm188, %v119, 0
  %v205 = vsel %vm188, %v121, 0
  %v208 = vsel %vm188, %v123, 0
  %v211 = vsel %vm188, %v125, 0
  %213 = vmatprep.subr.bf16.mxu0 0
  %214 = vmatpush1.bf16.msra.mxu0 %v177
  %215 = vmatprep.subr.bf16.mxu0 0
  %216 = vmatpush1.bf16.msra.mxu0 %v176
  %217 = vmatprep.subr.bf16.mxu0 0
  %218 = vmatpush1.bf16.msra.mxu0 %v175
  %219 = vmatprep.subr.bf16.mxu0 0
  %220 = vmatpush1.bf16.msra.mxu0 %v174
  %221 = vmatprep.subr.bf16.mxu0 0
  %222 = vmatpush1.bf16.msra.mxu0 %v173
  %223 = vmatprep.subr.bf16.mxu0 0
  %224 = vmatpush1.bf16.msra.mxu0 %v172
  %225 = vmatprep.subr.bf16.mxu0 0
  %226 = vmatpush1.bf16.msra.mxu0 %v171
  %227 = vmatprep.subr.bf16.mxu0 0
  %228 = vmatpush1.bf16.msra.mxu0 %v170
  %229 = vmatprep.subr.bf16.mxu0 0
  %230 = vmatpush2.bf16.msra.mxu0 0
  %231 = vmatprep.subr.bf16.mxu0 0
  %232 = vmatpush2.bf16.msra.mxu0 0
  %233 = vmatprep.subr.bf16.mxu0 0
  %234 = vmatpush2.bf16.msra.mxu0 0
  %235 = vmatprep.subr.bf16.mxu0 0
  %236 = vmatpush2.bf16.msra.mxu0 0
  %237 = vmatprep.subr.bf16.mxu0 0
  %238 = vmatpush2.bf16.msra.mxu0 0
  %239 = vmatprep.subr.bf16.mxu0 0
  %240 = vmatpush2.bf16.msra.mxu0 0
  %241 = vmatprep.subr.bf16.mxu0 0
  %242 = vmatpush2.bf16.msra.mxu0 0
  %243 = vmatprep.subr.bf16.mxu0 0
  %244 = vmatpush2.bf16.msra.mxu0 %v178
  %245 = vmatprep.mubr.bf16.mxu0 %v190
  %246 = vmatmul.mubr.bf16.gmra.mxu0 %v110
  %v247 = vpop.f32.mrf.mxu0
  %v248 = vadd.f32 %v60, %v247
  %v249 = vpop.f32.mrf.mxu0
  %v250 = vpop.f32.mrf.mxu0
  %v251 = vadd.f32 %v60, %v250
  %v252 = vpop.f32.mrf.mxu0
  %253 = vmatprep.mubr.bf16.mxu0 %v193
  %254 = vmatmul.mubr.bf16.gmra.mxu0 %v112
  %v255 = vpop.f32.mrf.mxu0
  %v256 = vadd.f32 %v60, %v255
  %v257 = vpop.f32.mrf.mxu0
  %v258 = vpop.f32.mrf.mxu0
  %v259 = vadd.f32 %v60, %v258
  %v260 = vpop.f32.mrf.mxu0
  %261 = vmatprep.mubr.bf16.mxu0 %v196
  %262 = vmatmul.mubr.bf16.gmra.mxu0 %v114
  %v263 = vpop.f32.mrf.mxu0
  %v264 = vadd.f32 %v60, %v263
  %v265 = vpop.f32.mrf.mxu0
  %v266 = vpop.f32.mrf.mxu0
  %v267 = vadd.f32 %v60, %v266
  %v268 = vpop.f32.mrf.mxu0
  %269 = vmatprep.mubr.bf16.mxu0 %v199
  %270 = vmatmul.mubr.bf16.gmra.mxu0 %v116
  %v271 = vpop.f32.mrf.mxu0
  %v272 = vadd.f32 %v60, %v271
  %v273 = vpop.f32.mrf.mxu0
  %v274 = vpop.f32.mrf.mxu0
  %v275 = vadd.f32 %v60, %v274
  %v276 = vpop.f32.mrf.mxu0
  %277 = vmatprep.mubr.bf16.mxu0 %v202
  %278 = vmatmul.mubr.bf16.gmra.mxu0 %v118
  %v279 = vpop.f32.mrf.mxu0
  %v280 = vadd.f32 %v60, %v279
  %v281 = vpop.f32.mrf.mxu0
  %v282 = vpop.f32.mrf.mxu0
  %v283 = vadd.f32 %v60, %v282
  %v284 = vpop.f32.mrf.mxu0
  %285 = vmatprep.mubr.bf16.mxu0 %v205
  %286 = vmatmul.mubr.bf16.gmra.mxu0 %v120
  %v287 = vpop.f32.mrf.mxu0
  %v288 = vadd.f32 %v60, %v287
  %v289 = vpop.f32.mrf.mxu0
  %v290 = vpop.f32.mrf.mxu0
  %v291 = vadd.f32 %v60, %v290
  %v292 = vpop.f32.mrf.mxu0
  %293 = vmatprep.mubr.bf16.mxu0 %v208
  %294 = vmatmul.mubr.bf16.gmra.mxu0 %v122
  %v295 = vpop.f32.mrf.mxu0
  %v296 = vadd.f32 %v60, %v295
  %v297 = vpop.f32.mrf.mxu0
  %v298 = vpop.f32.mrf.mxu0
  %v299 = vadd.f32 %v60, %v298
  %v300 = vpop.f32.mrf.mxu0
  %301 = vmatprep.mubr.bf16.mxu0 %v211
  %302 = vmatmul.mubr.bf16.gmra.mxu0 %v124
  %v303 = vpop.f32.mrf.mxu0
  %v304 = vadd.f32 %v60, %v303
  %v305 = vpop.f32.mrf.mxu0
  %v306 = vpop.f32.mrf.mxu0
  %v307 = vadd.f32 %v60, %v306
  %v308 = vpop.f32.mrf.mxu0
  %309 = vdwg.mxu0
  %v310 = vmax.f32 %v248, 0.0
  %v311 = vmax.f32 %v251, 0.0
  %v312 = vmax.f32 %v256, 0.0
  %v313 = vmax.f32 %v259, 0.0
  %v314 = vmax.f32 %v264, 0.0
  %v315 = vmax.f32 %v267, 0.0
  %v316 = vmax.f32 %v272, 0.0
  %v317 = vmax.f32 %v275, 0.0
  %v318 = vmax.f32 %v280, 0.0
  %v319 = vmax.f32 %v283, 0.0
  %v320 = vmax.f32 %v288, 0.0
  %v321 = vmax.f32 %v291, 0.0
  %v322 = vmax.f32 %v296, 0.0
  %v323 = vmax.f32 %v299, 0.0
  %v324 = vmax.f32 %v304, 0.0
  %v325 = vmax.f32 %v307, 0.0
  %vm326 = vcmask 261120
  %v327 = vsel %vm326, %v310, 0.0
  %v328 = vsel %vm326, %v311, 0.0
  %v329 = vadd.f32 %v327, %v328
  %v330 = vsel %vm326, %v312, 0.0
  %v331 = vadd.f32 %v329, %v330
  %v332 = vsel %vm326, %v313, 0.0
  %v333 = vadd.f32 %v331, %v332
  %v334 = vsel %vm326, %v314, 0.0
  %v335 = vadd.f32 %v333, %v334
  %v336 = vsel %vm326, %v315, 0.0
  %v337 = vadd.f32 %v335, %v336
  %v338 = vsel %vm326, %v316, 0.0
  %v339 = vadd.f32 %v337, %v338
  %v340 = vsel %vm326, %v317, 0.0
  %v341 = vadd.f32 %v339, %v340
  %v342 = vsel %vm326, %v318, 0.0
  %v343 = vadd.f32 %v341, %v342
  %v344 = vsel %vm326, %v319, 0.0
  %v345 = vadd.f32 %v343, %v344
  %v346 = vsel %vm326, %v320, 0.0
  %v347 = vadd.f32 %v345, %v346
  %v348 = vsel %vm326, %v321, 0.0
  %v349 = vadd.f32 %v347, %v348
  %v350 = vsel %vm326, %v322, 0.0
  %v351 = vadd.f32 %v349, %v350
  %v352 = vsel %vm326, %v323, 0.0
  %v353 = vadd.f32 %v351, %v352
  %v354 = vsel %vm326, %v324, 0.0
  %v355 = vadd.f32 %v353, %v354
  %v356 = vsel %vm326, %v325, 0.0
  %v357 = vadd.f32 %v355, %v356
  %v358 = vrot.slane %v357, 4
  %v359 = vadd.f32 %v357, %v358
  %v360 = vrot.slane %v359, 2
  %v361 = vadd.f32 %v359, %v360
  %v362 = vrot.slane %v361, 1
  %v363 = vadd.f32 %v361, %v362
  %v364 = vmul.f32 %v363, 0.0078125
  %v365 = vsub.f32 %v310, %v364
  %v366 = vsub.f32 %v311, %v364
  %v367 = vsub.f32 %v312, %v364
  %v368 = vsub.f32 %v313, %v364
  %v369 = vsub.f32 %v314, %v364
  %v370 = vsub.f32 %v315, %v364
  %v371 = vsub.f32 %v316, %v364
  %v372 = vsub.f32 %v317, %v364
  %v373 = vsub.f32 %v318, %v364
  %v374 = vsub.f32 %v319, %v364
  %v375 = vsub.f32 %v320, %v364
  %v376 = vsub.f32 %v321, %v364
  %v377 = vsub.f32 %v322, %v364
  %v378 = vsub.f32 %v323, %v364
  %v379 = vsub.f32 %v324, %v364
  %v380 = vsub.f32 %v325, %v364
  %v381 = vmul.f32 %v365, %v365
  %v382 = vmul.f32 %v366, %v366
  %v383 = vmul.f32 %v367, %v367
  %v384 = vmul.f32 %v368, %v368
  %v385 = vmul.f32 %v369, %v369
  %v386 = vmul.f32 %v370, %v370
  %v387 = vmul.f32 %v371, %v371
  %v388 = vmul.f32 %v372, %v372
  %v389 = vmul.f32 %v373, %v373
  %v390 = vmul.f32 %v374, %v374
  %v391 = vmul.f32 %v375, %v375
  %v392 = vmul.f32 %v376, %v376
  %v393 = vmul.f32 %v377, %v377
  %v394 = vmul.f32 %v378, %v378
  %v395 = vmul.f32 %v379, %v379
  %v396 = vmul.f32 %v380, %v380
  %v397 = vsel %vm326, %v381, 0.0
  %v398 = vsel %vm326, %v382, 0.0
  %v399 = vadd.f32 %v397, %v398
  %v400 = vsel %vm326, %v383, 0.0
  %v401 = vadd.f32 %v399, %v400
  %v402 = vsel %vm326, %v384, 0.0
  %v403 = vadd.f32 %v401, %v402
  %v404 = vsel %vm326, %v385, 0.0
  %v405 = vadd.f32 %v403, %v404
  %v406 = vsel %vm326, %v386, 0.0
  %v407 = vadd.f32 %v405, %v406
  %v408 = vsel %vm326, %v387, 0.0
  %v409 = vadd.f32 %v407, %v408
  %v410 = vsel %vm326, %v388, 0.0
  %v411 = vadd.f32 %v409, %v410
  %v412 = vsel %vm326, %v389, 0.0
  %v413 = vadd.f32 %v411, %v412
  %v414 = vsel %vm326, %v390, 0.0
  %v415 = vadd.f32 %v413, %v414
  %v416 = vsel %vm326, %v391, 0.0
  %v417 = vadd.f32 %v415, %v416
  %v418 = vsel %vm326, %v392, 0.0
  %v419 = vadd.f32 %v417, %v418
  %v420 = vsel %vm326, %v393, 0.0
  %v421 = vadd.f32 %v419, %v420
  %v422 = vsel %vm326, %v394, 0.0
  %v423 = vadd.f32 %v421, %v422
  %v424 = vsel %vm326, %v395, 0.0
  %v425 = vadd.f32 %v423, %v424
  %v426 = vsel %vm326, %v396, 0.0
  %v427 = vadd.f32 %v425, %v426
  %v428 = vrot.slane %v427, 4
  %v429 = vadd.f32 %v427, %v428
  %v430 = vrot.slane %v429, 2
  %v431 = vadd.f32 %v429, %v430
  %v432 = vrot.slane %v431, 1
  %v433 = vadd.f32 %v431, %v432
  %v434 = vmul.f32 %v433, 0.0078125
  %v435 = vld [vmem:[%s3] sm:$0x1]
  %v436 = vadd.f32 %v434, 1e-05
  %v437 = vrsqrt.pop %v436
  %v438 = vmul.f32 %v435, %v437
  %v440 = vlaneseq
  %v441 = vshrl.u32 %v440, 7
  %v442 = vsub.s32 0, %v441
  %v443 = vrot.slane %v438, %v442
  %v445 = vmul.f32 %v365, %v443
  %v446 = vmul.f32 %v366, %v443
  %v447 = vmul.f32 %v367, %v443
  %v448 = vmul.f32 %v368, %v443
  %v449 = vmul.f32 %v369, %v443
  %v450 = vmul.f32 %v370, %v443
  %v451 = vmul.f32 %v371, %v443
  %v452 = vmul.f32 %v372, %v443
  %v453 = vmul.f32 %v373, %v443
  %v454 = vmul.f32 %v374, %v443
  %v455 = vmul.f32 %v375, %v443
  %v456 = vmul.f32 %v376, %v443
  %v457 = vmul.f32 %v377, %v443
  %v458 = vmul.f32 %v378, %v443
  %v459 = vmul.f32 %v379, %v443
  %v460 = vmul.f32 %v380, %v443
  %v461 = vld [vmem:[%s4] sm:$0x1]
  %v463 = vlaneseq
  %v464 = vshrl.u32 %v463, 7
  %v465 = vsub.s32 0, %v464
  %v466 = vrot.slane %v461, %v465
  %v468 = vadd.f32 %v445, %v466
  %v469 = vadd.f32 %v446, %v466
  %v470 = vadd.f32 %v447, %v466
  %v471 = vadd.f32 %v448, %v466
  %v472 = vadd.f32 %v449, %v466
  %v473 = vadd.f32 %v450, %v466
  %v474 = vadd.f32 %v451, %v466
  %v475 = vadd.f32 %v452, %v466
  %v476 = vadd.f32 %v453, %v466
  %v477 = vadd.f32 %v454, %v466
  %v478 = vadd.f32 %v455, %v466
  %v479 = vadd.f32 %v456, %v466
  %v480 = vadd.f32 %v457, %v466
  %v481 = vadd.f32 %v458, %v466
  %v482 = vadd.f32 %v459, %v466
  %v483 = vadd.f32 %v460, %v466
  %484 = vst.msk [vmem:[%s5] sm:$0xff] %vm326, %v468
  %485 = vst.msk [vmem:[%s5 + $0x8] sm:$0xff] %vm326, %v469
  %486 = vst.msk [vmem:[%s5 + $0x10] sm:$0xff] %vm326, %v470
  %487 = vst.msk [vmem:[%s5 + $0x18] sm:$0xff] %vm326, %v471
  %488 = vst.msk [vmem:[%s5 + $0x20] sm:$0xff] %vm326, %v472
  %489 = vst.msk [vmem:[%s5 + $0x28] sm:$0xff] %vm326, %v473
  %490 = vst.msk [vmem:[%s5 + $0x30] sm:$0xff] %vm326, %v474
  %491 = vst.msk [vmem:[%s5 + $0x38] sm:$0xff] %vm326, %v475
  %492 = vst.msk [vmem:[%s5 + $0x40] sm:$0xff] %vm326, %v476
  %493 = vst.msk [vmem:[%s5 + $0x48] sm:$0xff] %vm326, %v477
  %494 = vst.msk [vmem:[%s5 + $0x50] sm:$0xff] %vm326, %v478
  %495 = vst.msk [vmem:[%s5 + $0x58] sm:$0xff] %vm326, %v479
  %496 = vst.msk [vmem:[%s5 + $0x60] sm:$0xff] %vm326, %v480
  %497 = vst.msk [vmem:[%s5 + $0x68] sm:$0xff] %vm326, %v481
  %498 = vst.msk [vmem:[%s5 + $0x70] sm:$0xff] %vm326, %v482
  %499 = vst.msk [vmem:[%s5 + $0x78] sm:$0xff] %vm326, %v483
  // Predicated region
  $region22: #{unet_forward.12} parent=0 // pred_check
    _
  $region23: #{unet_forward.12} parent=0 // pred_check_branch
    %501 = sbr.rel (0) target = $region25
  $region24: #{unet_forward.12} parent=0 // pred_region
    _
  $region25: #{unet_forward.12} parent=0 // pred_fallthru
    _
  // Predicated region
  $region26: #{unet_forward.12} parent=0 // pred_check
    _
  $region27: #{unet_forward.12} parent=0 // pred_check_branch
    %503 = sbr.rel (0) target = $region29
  $region28: #{unet_forward.12} parent=0 // pred_region
    _
  $region29: #{unet_forward.12} parent=0 // pred_fallthru
    _

// kernel: unet_forward.13
$region0: #{unet_forward.13}
  #allocation0 [shape = 'u32[]', space=smem, size = 0x4, offset = 0x4, fixed_abs, tag = 'smem constant byte address 0x4 - core index']
  #allocation1 [shape = 'u32[144,128]{1,0:T(1,128)}', space=vmem, size = 0x12000, scoped, tag = 'internal scratch']
  %s0 = inlined_call_operand.vmem [shape: bf16[32,288], index: 0, kind: input, shape index: {}]
  %s1 = inlined_call_operand.vmem [shape: bf16[288,64], index: 1, kind: input, shape index: {}]
  %s2 = inlined_call_operand.vmem [shape: f32[1,64], index: 2, kind: input, shape index: {}]
  %s3 = inlined_call_operand.vmem [shape: f32[1,64], index: 3, kind: input, shape index: {}]
  %s4 = inlined_call_operand.vmem [shape: f32[1,64], index: 4, kind: input, shape index: {}]
  %s5 = inlined_call_operand.vmem [shape: f32[32,64], index: 5, kind: output, shape index: {}]
  %s6 = sld [smem:[#allocation0]]
  $region30: #{unet_forward.13} parent=0
    _
  %s8 = ssub.s32 1, %s6
  %s9 = scalar_select 0, %s8, %s6
  // Predicated region
  $region2: #{unet_forward.13} parent=0 // pred_check
    _
  $region3: #{unet_forward.13} parent=0 // pred_check_branch
    %11 = sbr.rel (0) target = $region5
  $region4: #{unet_forward.13} parent=0 // pred_region
    _
  $region5: #{unet_forward.13} parent=0 // pred_fallthru
    _
  // Predicated region
  $region6: #{unet_forward.13} parent=0 // pred_check
    _
  $region7: #{unet_forward.13} parent=0 // pred_check_branch
    %13 = sbr.rel (0) target = $region9
  $region8: #{unet_forward.13} parent=0 // pred_region
    _
  $region9: #{unet_forward.13} parent=0 // pred_fallthru
    _
  // Predicated region
  $region10: #{unet_forward.13} parent=0 // pred_check
    _
  $region11: #{unet_forward.13} parent=0 // pred_check_branch
    %15 = sbr.rel (0) target = $region13
  $region12: #{unet_forward.13} parent=0 // pred_region
    _
  $region13: #{unet_forward.13} parent=0 // pred_fallthru
    _
  // Predicated region
  $region14: #{unet_forward.13} parent=0 // pred_check
    _
  $region15: #{unet_forward.13} parent=0 // pred_check_branch
    %17 = sbr.rel (0) target = $region17
  $region16: #{unet_forward.13} parent=0 // pred_region
    _
  $region17: #{unet_forward.13} parent=0 // pred_fallthru
    _
  // Predicated region
  $region18: #{unet_forward.13} parent=0 // pred_check
    _
  $region19: #{unet_forward.13} parent=0 // pred_check_branch
    %19 = sbr.rel (0) target = $region21
  $region20: #{unet_forward.13} parent=0 // pred_region
    _
  $region21: #{unet_forward.13} parent=0 // pred_fallthru
    _
  %v21 = vld [vmem:[%s0] sm:$0xff]
  %v22 = vld [vmem:[%s0 + $0x8] sm:$0xf]
  %v23 = vld [vmem:[%s0 + $0xc] sm:$0xff]
  %v24 = vld [vmem:[%s0 + $0x14] sm:$0xf]
  %v25 = vld [vmem:[%s0 + $0x18] sm:$0xff]
  %v26 = vld [vmem:[%s0 + $0x20] sm:$0xf]
  %v27 = vld [vmem:[%s0 + $0x24] sm:$0xff]
  %v28 = vld [vmem:[%s0 + $0x2c] sm:$0xf]
  %v29 = vld [vmem:[%s1] sm:$0xf]
  %v30 = vld [vmem:[%s1 + $0x4] sm:$0xf]
  %v31 = vld [vmem:[%s1 + $0x8] sm:$0xf]
  %v32 = vld [vmem:[%s1 + $0xc] sm:$0xf]
  %v33 = vld [vmem:[%s1 + $0x10] sm:$0xf]
  %v34 = vld [vmem:[%s1 + $0x14] sm:$0xf]
  %v35 = vld [vmem:[%s1 + $0x18] sm:$0xf]
  %v36 = vld [vmem:[%s1 + $0x1c] sm:$0xf]
  %v37 = vld [vmem:[%s1 + $0x20] sm:$0xf]
  %v38 = vld [vmem:[%s1 + $0x24] sm:$0xf]
  %v39 = vld [vmem:[%s1 + $0x28] sm:$0xf]
  %v40 = vld [vmem:[%s1 + $0x2c] sm:$0xf]
  %v41 = vld [vmem:[%s1 + $0x30] sm:$0xf]
  %v42 = vld [vmem:[%s1 + $0x34] sm:$0xf]
  %v43 = vld [vmem:[%s1 + $0x38] sm:$0xf]
  %v44 = vld [vmem:[%s1 + $0x3c] sm:$0xf]
  %v45 = vld [vmem:[%s1 + $0x40] sm:$0xf]
  %v46 = vld [vmem:[%s1 + $0x44] sm:$0xf]
  %v47 = vld [vmem:[%s1 + $0x48] sm:$0xf]
  %v48 = vld [vmem:[%s1 + $0x4c] sm:$0xf]
  %v49 = vld [vmem:[%s1 + $0x50] sm:$0xf]
  %v50 = vld [vmem:[%s1 + $0x54] sm:$0xf]
  %v51 = vld [vmem:[%s1 + $0x58] sm:$0xf]
  %v52 = vld [vmem:[%s1 + $0x5c] sm:$0xf]
  %v53 = vld [vmem:[%s1 + $0x60] sm:$0xf]
  %v54 = vld [vmem:[%s1 + $0x64] sm:$0xf]
  %v55 = vld [vmem:[%s1 + $0x68] sm:$0xf]
  %v56 = vld [vmem:[%s1 + $0x6c] sm:$0xf]
  %v57 = vld [vmem:[%s1 + $0x70] sm:$0xf]
  %v58 = vld [vmem:[%s1 + $0x74] sm:$0xf]
  %v59 = vld [vmem:[%s1 + $0x78] sm:$0xf]
  %v60 = vld [vmem:[%s1 + $0x7c] sm:$0xf]
  %v61 = vld [vmem:[%s1 + $0x80] sm:$0xf]
  %v62 = vld [vmem:[%s1 + $0x84] sm:$0xf]
  %v63 = vld [vmem:[%s1 + $0x88] sm:$0xf]
  %v64 = vld [vmem:[%s1 + $0x8c] sm:$0xf]
  %v65 = vld [vmem:[%s2] sm:$0x1]
  %v67 = vlaneseq
  %v68 = vshrl.u32 %v67, 7
  %v69 = vsub.s32 0, %v68
  %v70 = vrot.slane %v65, %v69
  %v80 = vunpack.c.l.b16 %v21
  %v81 = vunpack.c.h.b16 %v21
  %v82 = vunpack.c.l.b16 %v22
  %v83 = vunpack.c.l.b16 %v23
  %v84 = vunpack.c.h.b16 %v23
  %v85 = vunpack.c.l.b16 %v24
  %v86 = vunpack.c.l.b16 %v25
  %v87 = vunpack.c.h.b16 %v25
  %v88 = vunpack.c.l.b16 %v26
  %v89 = vunpack.c.l.b16 %v27
  %v90 = vunpack.c.h.b16 %v27
  %v91 = vunpack.c.l.b16 %v28
  %v92 = vpack.c.b16 %v83, %v80
  %v93 = vpack.c.b16 %v84, %v81
  %v94 = vpack.c.b16 %v85, %v82
  %v95 = vpack.c.b16 %v89, %v86
  %v96 = vpack.c.b16 %v90, %v87
  %v97 = vpack.c.b16 %v91, %v88
  %v138 = vunpack.c.l.b16 %v29
  %v139 = vunpack.c.l.b16 %v30
  %v140 = vunpack.c.l.b16 %v31
  %v141 = vunpack.c.l.b16 %v32
  %v142 = vunpack.c.l.b16 %v33
  %v143 = vunpack.c.l.b16 %v34
  %v144 = vunpack.c.l.b16 %v35
  %v145 = vunpack.c.l.b16 %v36
  %v146 = vunpack.c.l.b16 %v37
  %v147 = vunpack.c.l.b16 %v38
  %v148 = vunpack.c.l.b16 %v39
  %v149 = vunpack.c.l.b16 %v40
  %v150 = vunpack.c.l.b16 %v41
  %v151 = vunpack.c.l.b16 %v42
  %v152 = vunpack.c.l.b16 %v43
  %v153 = vunpack.c.l.b16 %v44
  %v154 = vunpack.c.l.b16 %v45
  %v155 = vunpack.c.l.b16 %v46
  %v156 = vunpack.c.l.b16 %v47
  %v157 = vunpack.c.l.b16 %v48
  %v158 = vunpack.c.l.b16 %v49
  %v159 = vunpack.c.l.b16 %v50
  %v160 = vunpack.c.l.b16 %v51
  %v161 = vunpack.c.l.b16 %v52
  %v162 = vunpack.c.l.b16 %v53
  %v163 = vunpack.c.l.b16 %v54
  %v164 = vunpack.c.l.b16 %v55
  %v165 = vunpack.c.l.b16 %v56
  %v166 = vunpack.c.l.b16 %v57
  %v167 = vunpack.c.l.b16 %v58
  %v168 = vunpack.c.l.b16 %v59
  %v169 = vunpack.c.l.b16 %v60
  %v170 = vunpack.c.l.b16 %v61
  %v171 = vunpack.c.l.b16 %v62
  %v172 = vunpack.c.l.b16 %v63
  %v173 = vunpack.c.l.b16 %v64
  %v174 = vpack.c.b16 %v139, %v138
  %v175 = vpack.c.b16 %v141, %v140
  %v176 = vpack.c.b16 %v143, %v142
  %v177 = vpack.c.b16 %v145, %v144
  %v178 = vpack.c.b16 %v147, %v146
  %v179 = vpack.c.b16 %v149, %v148
  %v180 = vpack.c.b16 %v151, %v150
  %v181 = vpack.c.b16 %v153, %v152
  %v182 = vpack.c.b16 %v155, %v154
  %v183 = vpack.c.b16 %v157, %v156
  %v184 = vpack.c.b16 %v159, %v158
  %v185 = vpack.c.b16 %v161, %v160
  %v186 = vpack.c.b16 %v163, %v162
  %v187 = vpack.c.b16 %v165, %v164
  %v188 = vpack.c.b16 %v167, %v166
  %v189 = vpack.c.b16 %v169, %v168
  %v190 = vpack.c.b16 %v171, %v170
  %v191 = vpack.c.b16 %v173, %v172
  %vm210 = vcmask 261120
  %v212 = vsel %vm210, %v94, 0
  %v215 = vsel %vm210, %v97, 0
  %217 = vmatprep.subr.bf16.mxu0 0
  %218 = vmatpush1.bf16.msra.mxu0 %v181
  %219 = vmatprep.subr.bf16.mxu0 0
  %220 = vmatpush1.bf16.msra.mxu0 %v180
  %221 = vmatprep.subr.bf16.mxu0 0
  %222 = vmatpush1.bf16.msra.mxu0 %v179
  %223 = vmatprep.subr.bf16.mxu0 0
  %224 = vmatpush1.bf16.msra.mxu0 %v178
  %225 = vmatprep.subr.bf16.mxu0 0
  %226 = vmatpush1.bf16.msra.mxu0 %v177
  %227 = vmatprep.subr.bf16.mxu0 0
  %228 = vmatpush1.bf16.msra.mxu0 %v176
  %229 = vmatprep.subr.bf16.mxu0 0
  %230 = vmatpush1.bf16.msra.mxu0 %v175
  %231 = vmatprep.subr.bf16.mxu0 0
  %232 = vmatpush1.bf16.msra.mxu0 %v174
  %233 = vmatprep.subr.bf16.mxu0 0
  %234 = vmatpush2.bf16.msra.mxu0 %v189
  %235 = vmatprep.subr.bf16.mxu0 0
  %236 = vmatpush2.bf16.msra.mxu0 %v188
  %237 = vmatprep.subr.bf16.mxu0 0
  %238 = vmatpush2.bf16.msra.mxu0 %v187
  %239 = vmatprep.subr.bf16.mxu0 0
  %240 = vmatpush2.bf16.msra.mxu0 %v186
  %241 = vmatprep.subr.bf16.mxu0 0
  %242 = vmatpush2.bf16.msra.mxu0 %v185
  %243 = vmatprep.subr.bf16.mxu0 0
  %244 = vmatpush2.bf16.msra.mxu0 %v184
  %245 = vmatprep.subr.bf16.mxu0 0
  %246 = vmatpush2.bf16.msra.mxu0 %v183
  %247 = vmatprep.subr.bf16.mxu0 0
  %248 = vmatpush2.bf16.msra.mxu0 %v182
  %249 = vmatprep.mubr.bf16.mxu0 %v93
  %250 = vmatmul.mubr.bf16.gmra.mxu0 %v92
  %v251 = vpop.f32.mrf.mxu0
  %v252 = vadd.f32 %v70, %v251
  %v253 = vpop.f32.mrf.mxu0
  %v254 = vpop.f32.mrf.mxu0
  %v255 = vadd.f32 %v70, %v254
  %v256 = vpop.f32.mrf.mxu0
  %257 = vmatprep.mubr.bf16.mxu0 %v96
  %258 = vmatmul.mubr.bf16.gmra.mxu0 %v95
  %v259 = vpop.f32.mrf.mxu0
  %v260 = vadd.f32 %v70, %v259
  %v261 = vpop.f32.mrf.mxu0
  %v262 = vpop.f32.mrf.mxu0
  %v263 = vadd.f32 %v70, %v262
  %v264 = vpop.f32.mrf.mxu0
  %265 = vdwg.mxu0
  %266 = vmatprep.subr.bf16.mxu0 0
  %267 = vmatpush1.bf16.msra.mxu0 0
  %268 = vmatprep.subr.bf16.mxu0 0
  %269 = vmatpush1.bf16.msra.mxu0 0
  %270 = vmatprep.subr.bf16.mxu0 0
  %271 = vmatpush1.bf16.msra.mxu0 0
  %272 = vmatprep.subr.bf16.mxu0 0
  %273 = vmatpush1.bf16.msra.mxu0 0
  %274 = vmatprep.subr.bf16.mxu0 0
  %275 = vmatpush1.bf16.msra.mxu0 0
  %276 = vmatprep.subr.bf16.mxu0 0
  %277 = vmatpush1.bf16.msra.mxu0 0
  %278 = vmatprep.subr.bf16.mxu0 0
  %279 = vmatpush1.bf16.msra.mxu0 %v191
  %280 = vmatprep.subr.bf16.mxu0 0
  %281 = vmatpush1.bf16.msra.mxu0 %v190
  %282 = vmatprep.subr.bf16.mxu0 0
  %283 = vmatpush2.bf16.msra.mxu0 0
  %284 = vmatprep.subr.bf16.mxu0 0
  %285 = vmatpush2.bf16.msra.mxu0 0
  %286 = vmatprep.subr.bf16.mxu0 0
  %287 = vmatpush2.bf16.msra.mxu0 0
  %288 = vmatprep.subr.bf16.mxu0 0
  %289 = vmatpush2.bf16.msra.mxu0 0
  %290 = vmatprep.subr.bf16.mxu0 0
  %291 = vmatpush2.bf16.msra.mxu0 0
  %292 = vmatprep.subr.bf16.mxu0 0
  %293 = vmatpush2.bf16.msra.mxu0 0
  %294 = vmatprep.subr.bf16.mxu0 0
  %295 = vmatpush2.bf16.msra.mxu0 0
  %296 = vmatprep.subr.bf16.mxu0 0
  %297 = vmatpush2.bf16.msra.mxu0 0
  %298 = vmatprep.mubr.bf16.mxu0 0
  %299 = vmatmul.mubr.bf16.gmra.mxu0 %v212
  %v300 = vpop.f32.mrf.mxu0
  %v301 = vadd.f32 %v252, %v300
  %v302 = vpop.f32.mrf.mxu0
  %v303 = vpop.f32.mrf.mxu0
  %v304 = vadd.f32 %v255, %v303
  %v305 = vpop.f32.mrf.mxu0
  %306 = vmatprep.mubr.bf16.mxu0 0
  %307 = vmatmul.mubr.bf16.gmra.mxu0 %v215
  %v308 = vpop.f32.mrf.mxu0
  %v309 = vadd.f32 %v260, %v308
  %v310 = vpop.f32.mrf.mxu0
  %v311 = vpop.f32.mrf.mxu0
  %v312 = vadd.f32 %v263, %v311
  %v313 = vpop.f32.mrf.mxu0
  %314 = vdwg.mxu0
  %v315 = vmax.f32 %v301, 0.0
  %v316 = vmax.f32 %v304, 0.0
  %v317 = vmax.f32 %v309, 0.0
  %v318 = vmax.f32 %v312, 0.0
  %vm319 = vcmask 523264
  %v320 = vsel %vm319, %v315, 0.0
  %v321 = vsel %vm319, %v316, 0.0
  %v322 = vadd.f32 %v320, %v321
  %v323 = vsel %vm319, %v317, 0.0
  %v324 = vadd.f32 %v322, %v323
  %v325 = vsel %vm319, %v318, 0.0
  %v326 = vadd.f32 %v324, %v325
  %v327 = vrot.slane %v326, 4
  %v328 = vadd.f32 %v326, %v327
  %v329 = vrot.slane %v328, 2
  %v330 = vadd.f32 %v328, %v329
  %v331 = vrot.slane %v330, 1
  %v332 = vadd.f32 %v330, %v331
  %v333 = vmul.f32 %v332, 0.03125
  %v334 = vsub.f32 %v315, %v333
  %v335 = vsub.f32 %v316, %v333
  %v336 = vsub.f32 %v317, %v333
  %v337 = vsub.f32 %v318, %v333
  %v338 = vmul.f32 %v334, %v334
  %v339 = vmul.f32 %v335, %v335
  %v340 = vmul.f32 %v336, %v336
  %v341 = vmul.f32 %v337, %v337
  %v342 = vsel %vm319, %v338, 0.0
  %v343 = vsel %vm319, %v339, 0.0
  %v344 = vadd.f32 %v342, %v343
  %v345 = vsel %vm319, %v340, 0.0
  %v346 = vadd.f32 %v344, %v345
  %v347 = vsel %vm319, %v341, 0.0
  %v348 = vadd.f32 %v346, %v347
  %v349 = vrot.slane %v348, 4
  %v350 = vadd.f32 %v348, %v349
  %v351 = vrot.slane %v350, 2
  %v352 = vadd.f32 %v350, %v351
  %v353 = vrot.slane %v352, 1
  %v354 = vadd.f32 %v352, %v353
  %v355 = vmul.f32 %v354, 0.03125
  %v356 = vld [vmem:[%s3] sm:$0x1]
  %v357 = vadd.f32 %v355, 1e-05
  %v358 = vrsqrt.pop %v357
  %v359 = vmul.f32 %v356, %v358
  %v361 = vlaneseq
  %v362 = vshrl.u32 %v361, 7
  %v363 = vsub.s32 0, %v362
  %v364 = vrot.slane %v359, %v363
  %v366 = vmul.f32 %v334, %v364
  %v367 = vmul.f32 %v335, %v364
  %v368 = vmul.f32 %v336, %v364
  %v369 = vmul.f32 %v337, %v364
  %v370 = vld [vmem:[%s4] sm:$0x1]
  %v372 = vlaneseq
  %v373 = vshrl.u32 %v372, 7
  %v374 = vsub.s32 0, %v373
  %v375 = vrot.slane %v370, %v374
  %v377 = vadd.f32 %v366, %v375
  %v378 = vadd.f32 %v367, %v375
  %v379 = vadd.f32 %v368, %v375
  %v380 = vadd.f32 %v369, %v375
  %381 = vst.msk [vmem:[%s5] sm:$0xff] %vm319, %v377
  %382 = vst.msk [vmem:[%s5 + $0x8] sm:$0xff] %vm319, %v378
  %383 = vst.msk [vmem:[%s5 + $0x10] sm:$0xff] %vm319, %v379
  %384 = vst.msk [vmem:[%s5 + $0x18] sm:$0xff] %vm319, %v380
  // Predicated region
  $region22: #{unet_forward.13} parent=0 // pred_check
    _
  $region23: #{unet_forward.13} parent=0 // pred_check_branch
    %386 = sbr.rel (0) target = $region25
  $region24: #{unet_forward.13} parent=0 // pred_region
    _
  $region25: #{unet_forward.13} parent=0 // pred_fallthru
    _
  // Predicated region
  $region26: #{unet_forward.13} parent=0 // pred_check
    _
  $region27: #{unet_forward.13} parent=0 // pred_check_branch
    %388 = sbr.rel (0) target = $region29
  $region28: #{unet_forward.13} parent=0 // pred_region
    _
  $region29: #{unet_forward.13} parent=0 // pred_fallthru
    _

// kernel: unet_forward.14
$region0: #{unet_forward.14}
  #allocation0 [shape = 'u32[]', space=smem, size = 0x4, offset = 0x4, fixed_abs, tag = 'smem constant byte address 0x4 - core index']
  #allocation1 [shape = 'u32[144,128]{1,0:T(1,128)}', space=vmem, size = 0x12000, scoped, tag = 'internal scratch']
  %s0 = inlined_call_operand.vmem [shape: bf16[8,576], index: 0, kind: input, shape index: {}]
  %s1 = inlined_call_operand.vmem [shape: bf16[576,128], index: 1, kind: input, shape index: {}]
  %s2 = inlined_call_operand.vmem [shape: f32[1,128], index: 2, kind: input, shape index: {}]
  %s3 = inlined_call_operand.vmem [shape: f32[1,128], index: 3, kind: input, shape index: {}]
  %s4 = inlined_call_operand.vmem [shape: f32[1,128], index: 4, kind: input, shape index: {}]
  %s5 = inlined_call_operand.vmem [shape: f32[8,128], index: 5, kind: output, shape index: {}]
  %s6 = sld [smem:[#allocation0]]
  $region30: #{unet_forward.14} parent=0
    _
  %s8 = ssub.s32 1, %s6
  %s9 = scalar_select 0, %s8, %s6
  // Predicated region
  $region2: #{unet_forward.14} parent=0 // pred_check
    _
  $region3: #{unet_forward.14} parent=0 // pred_check_branch
    %11 = sbr.rel (0) target = $region5
  $region4: #{unet_forward.14} parent=0 // pred_region
    _
  $region5: #{unet_forward.14} parent=0 // pred_fallthru
    _
  // Predicated region
  $region6: #{unet_forward.14} parent=0 // pred_check
    _
  $region7: #{unet_forward.14} parent=0 // pred_check_branch
    %13 = sbr.rel (0) target = $region9
  $region8: #{unet_forward.14} parent=0 // pred_region
    _
  $region9: #{unet_forward.14} parent=0 // pred_fallthru
    _
  // Predicated region
  $region10: #{unet_forward.14} parent=0 // pred_check
    _
  $region11: #{unet_forward.14} parent=0 // pred_check_branch
    %15 = sbr.rel (0) target = $region13
  $region12: #{unet_forward.14} parent=0 // pred_region
    _
  $region13: #{unet_forward.14} parent=0 // pred_fallthru
    _
  // Predicated region
  $region14: #{unet_forward.14} parent=0 // pred_check
    _
  $region15: #{unet_forward.14} parent=0 // pred_check_branch
    %17 = sbr.rel (0) target = $region17
  $region16: #{unet_forward.14} parent=0 // pred_region
    _
  $region17: #{unet_forward.14} parent=0 // pred_fallthru
    _
  // Predicated region
  $region18: #{unet_forward.14} parent=0 // pred_check
    _
  $region19: #{unet_forward.14} parent=0 // pred_check_branch
    %19 = sbr.rel (0) target = $region21
  $region20: #{unet_forward.14} parent=0 // pred_region
    _
  $region21: #{unet_forward.14} parent=0 // pred_fallthru
    _
  %v21 = vld [vmem:[%s0] sm:$0xff]
  %v22 = vld [vmem:[%s0 + $0x8] sm:$0xff]
  %v23 = vld [vmem:[%s0 + $0x10] sm:$0xf]
  %v24 = vld [vmem:[%s1] sm:$0xf]
  %v25 = vld [vmem:[%s1 + $0x4] sm:$0xf]
  %v26 = vld [vmem:[%s1 + $0x8] sm:$0xf]
  %v27 = vld [vmem:[%s1 + $0xc] sm:$0xf]
  %v28 = vld [vmem:[%s1 + $0x10] sm:$0xf]
  %v29 = vld [vmem:[%s1 + $0x14] sm:$0xf]
  %v30 = vld [vmem:[%s1 + $0x18] sm:$0xf]
  %v31 = vld [vmem:[%s1 + $0x1c] sm:$0xf]
  %v32 = vld [vmem:[%s1 + $0x20] sm:$0xf]
  %v33 = vld [vmem:[%s1 + $0x24] sm:$0xf]
  %v34 = vld [vmem:[%s1 + $0x28] sm:$0xf]
  %v35 = vld [vmem:[%s1 + $0x2c] sm:$0xf]
  %v36 = vld [vmem:[%s1 + $0x30] sm:$0xf]
  %v37 = vld [vmem:[%s1 + $0x34] sm:$0xf]
  %v38 = vld [vmem:[%s1 + $0x38] sm:$0xf]
  %v39 = vld [vmem:[%s1 + $0x3c] sm:$0xf]
  %v40 = vld [vmem:[%s1 + $0x40] sm:$0xf]
  %v41 = vld [vmem:[%s1 + $0x44] sm:$0xf]
  %v42 = vld [vmem:[%s1 + $0x48] sm:$0xf]
  %v43 = vld [vmem:[%s1 + $0x4c] sm:$0xf]
  %v44 = vld [vmem:[%s1 + $0x50] sm:$0xf]
  %v45 = vld [vmem:[%s1 + $0x54] sm:$0xf]
  %v46 = vld [vmem:[%s1 + $0x58] sm:$0xf]
  %v47 = vld [vmem:[%s1 + $0x5c] sm:$0xf]
  %v48 = vld [vmem:[%s1 + $0x60] sm:$0xf]
  %v49 = vld [vmem:[%s1 + $0x64] sm:$0xf]
  %v50 = vld [vmem:[%s1 + $0x68] sm:$0xf]
  %v51 = vld [vmem:[%s1 + $0x6c] sm:$0xf]
  %v52 = vld [vmem:[%s1 + $0x70] sm:$0xf]
  %v53 = vld [vmem:[%s1 + $0x74] sm:$0xf]
  %v54 = vld [vmem:[%s1 + $0x78] sm:$0xf]
  %v55 = vld [vmem:[%s1 + $0x7c] sm:$0xf]
  %v56 = vld [vmem:[%s1 + $0x80] sm:$0xf]
  %v57 = vld [vmem:[%s1 + $0x84] sm:$0xf]
  %v58 = vld [vmem:[%s1 + $0x88] sm:$0xf]
  %v59 = vld [vmem:[%s1 + $0x8c] sm:$0xf]
  %v60 = vld [vmem:[%s1 + $0x90] sm:$0xf]
  %v61 = vld [vmem:[%s1 + $0x94] sm:$0xf]
  %v62 = vld [vmem:[%s1 + $0x98] sm:$0xf]
  %v63 = vld [vmem:[%s1 + $0x9c] sm:$0xf]
  %v64 = vld [vmem:[%s1 + $0xa0] sm:$0xf]
  %v65 = vld [vmem:[%s1 + $0xa4] sm:$0xf]
  %v66 = vld [vmem:[%s1 + $0xa8] sm:$0xf]
  %v67 = vld [vmem:[%s1 + $0xac] sm:$0xf]
  %v68 = vld [vmem:[%s1 + $0xb0] sm:$0xf]
  %v69 = vld [vmem:[%s1 + $0xb4] sm:$0xf]
  %v70 = vld [vmem:[%s1 + $0xb8] sm:$0xf]
  %v71 = vld [vmem:[%s1 + $0xbc] sm:$0xf]
  %v72 = vld [vmem:[%s1 + $0xc0] sm:$0xf]
  %v73 = vld [vmem:[%s1 + $0xc4] sm:$0xf]
  %v74 = vld [vmem:[%s1 + $0xc8] sm:$0xf]
  %v75 = vld [vmem:[%s1 + $0xcc] sm:$0xf]
  %v76 = vld [vmem:[%s1 + $0xd0] sm:$0xf]
  %v77 = vld [vmem:[%s1 + $0xd4] sm:$0xf]
  %v78 = vld [vmem:[%s1 + $0xd8] sm:$0xf]
  %v79 = vld [vmem:[%s1 + $0xdc] sm:$0xf]
  %v80 = vld [vmem:[%s1 + $0xe0] sm:$0xf]
  %v81 = vld [vmem:[%s1 + $0xe4] sm:$0xf]
  %v82 = vld [vmem:[%s1 + $0xe8] sm:$0xf]
  %v83 = vld [vmem:[%s1 + $0xec] sm:$0xf]
  %v84 = vld [vmem:[%s1 + $0xf0] sm:$0xf]
  %v85 = vld [vmem:[%s1 + $0xf4] sm:$0xf]
  %v86 = vld [vmem:[%s1 + $0xf8] sm:$0xf]
  %v87 = vld [vmem:[%s1 + $0xfc] sm:$0xf]
  %v88 = vld [vmem:[%s1 + $0x100] sm:$0xf]
  %v89 = vld [vmem:[%s1 + $0x104] sm:$0xf]
  %v90 = vld [vmem:[%s1 + $0x108] sm:$0xf]
  %v91 = vld [vmem:[%s1 + $0x10c] sm:$0xf]
  %v92 = vld [vmem:[%s1 + $0x110] sm:$0xf]
  %v93 = vld [vmem:[%s1 + $0x114] sm:$0xf]
  %v94 = vld [vmem:[%s1 + $0x118] sm:$0xf]
  %v95 = vld [vmem:[%s1 + $0x11c] sm:$0xf]
  %v96 = vld [vmem:[%s2] sm:$0x1]
  %v98 = vlaneseq
  %v99 = vshrl.u32 %v98, 7
  %v100 = vsub.s32 0, %v99
  %v101 = vrot.slane %v96, %v100
  %v106 = vunpack.c.l.b16 %v21
  %v107 = vunpack.c.h.b16 %v21
  %v108 = vunpack.c.l.b16 %v22
  %v109 = vunpack.c.h.b16 %v22
  %v110 = vunpack.c.l.b16 %v23
  %v111 = vpack.c.b16 %v106, %v106
  %v112 = vpack.c.b16 %v107, %v107
  %v113 = vpack.c.b16 %v108, %v108
  %v114 = vpack.c.b16 %v109, %v109
  %v115 = vpack.c.b16 %v110, %v110
  %v192 = vunpack.c.l.b16 %v24
  %v193 = vunpack.c.l.b16 %v25
  %v194 = vunpack.c.l.b16 %v26
  %v195 = vunpack.c.l.b16 %v27
  %v196 = vunpack.c.l.b16 %v28
  %v197 = vunpack.c.l.b16 %v29
  %v198 = vunpack.c.l.b16 %v30
  %v199 = vunpack.c.l.b16 %v31
  %v200 = vunpack.c.l.b16 %v32
  %v201 = vunpack.c.l.b16 %v33
  %v202 = vunpack.c.l.b16 %v34
  %v203 = vunpack.c.l.b16 %v35
  %v204 = vunpack.c.l.b16 %v36
  %v205 = vunpack.c.l.b16 %v37
  %v206 = vunpack.c.l.b16 %v38
  %v207 = vunpack.c.l.b16 %v39
  %v208 = vunpack.c.l.b16 %v40
  %v209 = vunpack.c.l.b16 %v41
  %v210 = vunpack.c.l.b16 %v42
  %v211 = vunpack.c.l.b16 %v43
  %v212 = vunpack.c.l.b16 %v44
  %v213 = vunpack.c.l.b16 %v45
  %v214 = vunpack.c.l.b16 %v46
  %v215 = vunpack.c.l.b16 %v47
  %v216 = vunpack.c.l.b16 %v48
  %v217 = vunpack.c.l.b16 %v49
  %v218 = vunpack.c.l.b16 %v50
  %v219 = vunpack.c.l.b16 %v51
  %v220 = vunpack.c.l.b16 %v52
  %v221 = vunpack.c.l.b16 %v53
  %v222 = vunpack.c.l.b16 %v54
  %v223 = vunpack.c.l.b16 %v55
  %v224 = vunpack.c.l.b16 %v56
  %v225 = vunpack.c.l.b16 %v57
  %v226 = vunpack.c.l.b16 %v58
  %v227 = vunpack.c.l.b16 %v59
  %v228 = vunpack.c.l.b16 %v60
  %v229 = vunpack.c.l.b16 %v61
  %v230 = vunpack.c.l.b16 %v62
  %v231 = vunpack.c.l.b16 %v63
  %v232 = vunpack.c.l.b16 %v64
  %v233 = vunpack.c.l.b16 %v65
  %v234 = vunpack.c.l.b16 %v66
  %v235 = vunpack.c.l.b16 %v67
  %v236 = vunpack.c.l.b16 %v68
  %v237 = vunpack.c.l.b16 %v69
  %v238 = vunpack.c.l.b16 %v70
  %v239 = vunpack.c.l.b16 %v71
  %v240 = vunpack.c.l.b16 %v72
  %v241 = vunpack.c.l.b16 %v73
  %v242 = vunpack.c.l.b16 %v74
  %v243 = vunpack.c.l.b16 %v75
  %v244 = vunpack.c.l.b16 %v76
  %v245 = vunpack.c.l.b16 %v77
  %v246 = vunpack.c.l.b16 %v78
  %v247 = vunpack.c.l.b16 %v79
  %v248 = vunpack.c.l.b16 %v80
  %v249 = vunpack.c.l.b16 %v81
  %v250 = vunpack.c.l.b16 %v82
  %v251 = vunpack.c.l.b16 %v83
  %v252 = vunpack.c.l.b16 %v84
  %v253 = vunpack.c.l.b16 %v85
  %v254 = vunpack.c.l.b16 %v86
  %v255 = vunpack.c.l.b16 %v87
  %v256 = vunpack.c.l.b16 %v88
  %v257 = vunpack.c.l.b16 %v89
  %v258 = vunpack.c.l.b16 %v90
  %v259 = vunpack.c.l.b16 %v91
  %v260 = vunpack.c.l.b16 %v92
  %v261 = vunpack.c.l.b16 %v93
  %v262 = vunpack.c.l.b16 %v94
  %v263 = vunpack.c.l.b16 %v95
  %v264 = vpack.c.b16 %v193, %v192
  %v265 = vpack.c.b16 %v195, %v194
  %v266 = vpack.c.b16 %v197, %v196
  %v267 = vpack.c.b16 %v199, %v198
  %v268 = vpack.c.b16 %v201, %v200
  %v269 = vpack.c.b16 %v203, %v202
  %v270 = vpack.c.b16 %v205, %v204
  %v271 = vpack.c.b16 %v207, %v206
  %v272 = vpack.c.b16 %v209, %v208
  %v273 = vpack.c.b16 %v211, %v210
  %v274 = vpack.c.b16 %v213, %v212
  %v275 = vpack.c.b16 %v215, %v214
  %v276 = vpack.c.b16 %v217, %v216
  %v277 = vpack.c.b16 %v219, %v218
  %v278 = vpack.c.b16 %v221, %v220
  %v279 = vpack.c.b16 %v223, %v222
  %v280 = vpack.c.b16 %v225, %v224
  %v281 = vpack.c.b16 %v227, %v226
  %v282 = vpack.c.b16 %v229, %v228
  %v283 = vpack.c.b16 %v231, %v230
  %v284 = vpack.c.b16 %v233, %v232
  %v285 = vpack.c.b16 %v235, %v234
  %v286 = vpack.c.b16 %v237, %v236
  %v287 = vpack.c.b16 %v239, %v238
  %v288 = vpack.c.b16 %v241, %v240
  %v289 = vpack.c.b16 %v243, %v242
  %v290 = vpack.c.b16 %v245, %v244
  %v291 = vpack.c.b16 %v247, %v246
  %v292 = vpack.c.b16 %v249, %v248
  %v293 = vpack.c.b16 %v251, %v250
  %v294 = vpack.c.b16 %v253, %v252
  %v295 = vpack.c.b16 %v255, %v254
  %v296 = vpack.c.b16 %v257, %v256
  %v297 = vpack.c.b16 %v259, %v258
  %v298 = vpack.c.b16 %v261, %v260
  %v299 = vpack.c.b16 %v263, %v262
  %vm336 = vcmask 523264
  %v338 = vsel %vm336, %v115, 0
  %340 = vmatprep.subr.bf16.mxu0 0
  %341 = vmatpush1.bf16.msra.mxu0 %v271
  %342 = vmatprep.subr.bf16.mxu0 0
  %343 = vmatpush1.bf16.msra.mxu0 %v270
  %344 = vmatprep.subr.bf16.mxu0 0
  %345 = vmatpush1.bf16.msra.mxu0 %v269
  %346 = vmatprep.subr.bf16.mxu0 0
  %347 = vmatpush1.bf16.msra.mxu0 %v268
  %348 = vmatprep.subr.bf16.mxu0 0
  %349 = vmatpush1.bf16.msra.mxu0 %v267
  %350 = vmatprep.subr.bf16.mxu0 0
  %351 = vmatpush1.bf16.msra.mxu0 %v266
  %352 = vmatprep.subr.bf16.mxu0 0
  %353 = vmatpush1.bf16.msra.mxu0 %v265
  %354 = vmatprep.subr.bf16.mxu0 0
  %355 = vmatpush1.bf16.msra.mxu0 %v264
  %356 = vmatprep.subr.bf16.mxu0 0
  %357 = vmatpush2.bf16.msra.mxu0 %v279
  %358 = vmatprep.subr.bf16.mxu0 0
  %359 = vmatpush2.bf16.msra.mxu0 %v278
  %360 = vmatprep.subr.bf16.mxu0 0
  %361 = vmatpush2.bf16.msra.mxu0 %v277
  %362 = vmatprep.subr.bf16.mxu0 0
  %363 = vmatpush2.bf16.msra.mxu0 %v276
  %364 = vmatprep.subr.bf16.mxu0 0
  %365 = vmatpush2.bf16.msra.mxu0 %v275
  %366 = vmatprep.subr.bf16.mxu0 0
  %367 = vmatpush2.bf16.msra.mxu0 %v274
  %368 = vmatprep.subr.bf16.mxu0 0
  %369 = vmatpush2.bf16.msra.mxu0 %v273
  %370 = vmatprep.subr.bf16.mxu0 0
  %371 = vmatpush2.bf16.msra.mxu0 %v272
  %372 = vmatprep.mubr.bf16.mxu0 %v112
  %373 = vmatmul.mubr.bf16.gmra.mxu0 %v111
  %v374 = vpop.f32.mrf.mxu0
  %v375 = vadd.f32 %v101, %v374
  %v376 = vpop.f32.mrf.mxu0
  %v377 = vpop.f32.mrf.mxu0
  %v378 = vpop.f32.mrf.mxu0
  %379 = vdwg.mxu0
  %380 = vmatprep.subr.bf16.mxu0 0
  %381 = vmatpush1.bf16.msra.mxu0 %v287
  %382 = vmatprep.subr.bf16.mxu0 0
  %383 = vmatpush1.bf16.msra.mxu0 %v286
  %384 = vmatprep.subr.bf16.mxu0 0
  %385 = vmatpush1.bf16.msra.mxu0 %v285
  %386 = vmatprep.subr.bf16.mxu0 0
  %387 = vmatpush1.bf16.msra.mxu0 %v284
  %388 = vmatprep.subr.bf16.mxu0 0
  %389 = vmatpush1.bf16.msra.mxu0 %v283
  %390 = vmatprep.subr.bf16.mxu0 0
  %391 = vmatpush1.bf16.msra.mxu0 %v282
  %392 = vmatprep.subr.bf16.mxu0 0
  %393 = vmatpush1.bf16.msra.mxu0 %v281
  %394 = vmatprep.subr.bf16.mxu0 0
  %395 = vmatpush1.bf16.msra.mxu0 %v280
  %396 = vmatprep.subr.bf16.mxu0 0
  %397 = vmatpush2.bf16.msra.mxu0 %v295
  %398 = vmatprep.subr.bf16.mxu0 0
  %399 = vmatpush2.bf16.msra.mxu0 %v294
  %400 = vmatprep.subr.bf16.mxu0 0
  %401 = vmatpush2.bf16.msra.mxu0 %v293
  %402 = vmatprep.subr.bf16.mxu0 0
  %403 = vmatpush2.bf16.msra.mxu0 %v292
  %404 = vmatprep.subr.bf16.mxu0 0
  %405 = vmatpush2.bf16.msra.mxu0 %v291
  %406 = vmatprep.subr.bf16.mxu0 0
  %407 = vmatpush2.bf16.msra.mxu0 %v290
  %408 = vmatprep.subr.bf16.mxu0 0
  %409 = vmatpush2.bf16.msra.mxu0 %v289
  %410 = vmatprep.subr.bf16.mxu0 0
  %411 = vmatpush2.bf16.msra.mxu0 %v288
  %412 = vmatprep.mubr.bf16.mxu0 %v114
  %413 = vmatmul.mubr.bf16.gmra.mxu0 %v113
  %v414 = vpop.f32.mrf.mxu0
  %v415 = vadd.f32 %v375, %v414
  %v416 = vpop.f32.mrf.mxu0
  %v417 = vpop.f32.mrf.mxu0
  %v418 = vpop.f32.mrf.mxu0
  %419 = vdwg.mxu0
  %420 = vmatprep.subr.bf16.mxu0 0
  %421 = vmatpush1.bf16.msra.mxu0 0
  %422 = vmatprep.subr.bf16.mxu0 0
  %423 = vmatpush1.bf16.msra.mxu0 0
  %424 = vmatprep.subr.bf16.mxu0 0
  %425 = vmatpush1.bf16.msra.mxu0 0
  %426 = vmatprep.subr.bf16.mxu0 0
  %427 = vmatpush1.bf16.msra.mxu0 0
  %428 = vmatprep.subr.bf16.mxu0 0
  %429 = vmatpush1.bf16.msra.mxu0 %v299
  %430 = vmatprep.subr.bf16.mxu0 0
  %431 = vmatpush1.bf16.msra.mxu0 %v298
  %432 = vmatprep.subr.bf16.mxu0 0
  %433 = vmatpush1.bf16.msra.mxu0 %v297
  %434 = vmatprep.subr.bf16.mxu0 0
  %435 = vmatpush1.bf16.msra.mxu0 %v296
  %436 = vmatprep.subr.bf16.mxu0 0
  %437 = vmatpush2.bf16.msra.mxu0 0
  %438 = vmatprep.subr.bf16.mxu0 0
  %439 = vmatpush2.bf16.msra.mxu0 0
  %440 = vmatprep.subr.bf16.mxu0 0
  %441 = vmatpush2.bf16.msra.mxu0 0
  %442 = vmatprep.subr.bf16.mxu0 0
  %443 = vmatpush2.bf16.msra.mxu0 0
  %444 = vmatprep.subr.bf16.mxu0 0
  %445 = vmatpush2.bf16.msra.mxu0 0
  %446 = vmatprep.subr.bf16.mxu0 0
  %447 = vmatpush2.bf16.msra.mxu0 0
  %448 = vmatprep.subr.bf16.mxu0 0
  %449 = vmatpush2.bf16.msra.mxu0 0
  %450 = vmatprep.subr.bf16.mxu0 0
  %451 = vmatpush2.bf16.msra.mxu0 0
  %452 = vmatprep.mubr.bf16.mxu0 0
  %453 = vmatmul.mubr.bf16.gmra.mxu0 %v338
  %v454 = vpop.f32.mrf.mxu0
  %v455 = vadd.f32 %v415, %v454
  %v456 = vpop.f32.mrf.mxu0
  %v457 = vpop.f32.mrf.mxu0
  %v458 = vpop.f32.mrf.mxu0
  %459 = vdwg.mxu0
  %v460 = vmax.f32 %v455, 0.0
  %v461 = vrot.slane %v460, 4
  %v462 = vadd.f32 %v460, %v461
  %v463 = vrot.slane %v462, 2
  %v464 = vadd.f32 %v462, %v463
  %v465 = vrot.slane %v464, 1
  %v466 = vadd.f32 %v464, %v465
  %v467 = vmul.f32 %v466, 0.125
  %v468 = vsub.f32 %v460, %v467
  %v469 = vmul.f32 %v468, %v468
  %v470 = vrot.slane %v469, 4
  %v471 = vadd.f32 %v469, %v470
  %v472 = vrot.slane %v471, 2
  %v473 = vadd.f32 %v471, %v472
  %v474 = vrot.slane %v473, 1
  %v475 = vadd.f32 %v473, %v474
  %v476 = vmul.f32 %v475, 0.125
  %v477 = vld [vmem:[%s3] sm:$0x1]
  %v478 = vadd.f32 %v476, 1e-05
  %v479 = vrsqrt.pop %v478
  %v480 = vmul.f32 %v477, %v479
  %v482 = vlaneseq
  %v483 = vshrl.u32 %v482, 7
  %v484 = vsub.s32 0, %v483
  %v485 = vrot.slane %v480, %v484
  %v487 = vmul.f32 %v468, %v485
  %v488 = vld [vmem:[%s4] sm:$0x1]
  %v490 = vlaneseq
  %v491 = vshrl.u32 %v490, 7
  %v492 = vsub.s32 0, %v491
  %v493 = vrot.slane %v488, %v492
  %v495 = vadd.f32 %v487, %v493
  %496 = vst [vmem:[%s5] sm:$0xff] %v495
  // Predicated region
  $region22: #{unet_forward.14} parent=0 // pred_check
    _
  $region23: #{unet_forward.14} parent=0 // pred_check_branch
    %498 = sbr.rel (0) target = $region25
  $region24: #{unet_forward.14} parent=0 // pred_region
    _
  $region25: #{unet_forward.14} parent=0 // pred_fallthru
    _
  // Predicated region
  $region26: #{unet_forward.14} parent=0 // pred_check
    _
  $region27: #{unet_forward.14} parent=0 // pred_check_branch
    %500 = sbr.rel (0) target = $region29
  $region28: #{unet_forward.14} parent=0 // pred_region
    _
  $region29: #{unet_forward.14} parent=0 // pred_fallthru
    _

// kernel: unet_forward.15
$region0: #{unet_forward.15}
  #allocation0 [shape = 'u32[]', space=smem, size = 0x4, offset = 0x4, fixed_abs, tag = 'smem constant byte address 0x4 - core index']
  #allocation1 [shape = 'u32[144,128]{1,0:T(1,128)}', space=vmem, size = 0x12000, scoped, tag = 'internal scratch']
  %s0 = inlined_call_operand.vmem [shape: bf16[2,1152], index: 0, kind: input, shape index: {}]
  %s1 = inlined_call_operand.vmem [shape: bf16[1152,256], index: 1, kind: input, shape index: {}]
  %s2 = inlined_call_operand.vmem [shape: f32[1,256], index: 2, kind: input, shape index: {}]
  %s3 = inlined_call_operand.vmem [shape: f32[2,256], index: 3, kind: output, shape index: {}]
  %s4 = sld [smem:[#allocation0]]
  $region22: #{unet_forward.15} parent=0
    _
  %s6 = ssub.s32 1, %s4
  %s7 = scalar_select 0, %s6, %s4
  // Predicated region
  $region2: #{unet_forward.15} parent=0 // pred_check
    _
  $region3: #{unet_forward.15} parent=0 // pred_check_branch
    %9 = sbr.rel (0) target = $region5
  $region4: #{unet_forward.15} parent=0 // pred_region
    _
  $region5: #{unet_forward.15} parent=0 // pred_fallthru
    _
  // Predicated region
  $region6: #{unet_forward.15} parent=0 // pred_check
    _
  $region7: #{unet_forward.15} parent=0 // pred_check_branch
    %11 = sbr.rel (0) target = $region9
  $region8: #{unet_forward.15} parent=0 // pred_region
    _
  $region9: #{unet_forward.15} parent=0 // pred_fallthru
    _
  // Predicated region
  $region10: #{unet_forward.15} parent=0 // pred_check
    _
  $region11: #{unet_forward.15} parent=0 // pred_check_branch
    %13 = sbr.rel (0) target = $region13
  $region12: #{unet_forward.15} parent=0 // pred_region
    _
  $region13: #{unet_forward.15} parent=0 // pred_fallthru
    _
  %v15 = vld [vmem:[%s0] sm:$0xff]
  %v16 = vld [vmem:[%s0 + $0x8] sm:$0x1]
  %v17 = vld [vmem:[%s1] sm:$0xff]
  %v18 = vld [vmem:[%s1 + $0x8] sm:$0xff]
  %v19 = vld [vmem:[%s1 + $0x10] sm:$0xff]
  %v20 = vld [vmem:[%s1 + $0x18] sm:$0xff]
  %v21 = vld [vmem:[%s1 + $0x20] sm:$0xff]
  %v22 = vld [vmem:[%s1 + $0x28] sm:$0xff]
  %v23 = vld [vmem:[%s1 + $0x30] sm:$0xff]
  %v24 = vld [vmem:[%s1 + $0x38] sm:$0xff]
  %v25 = vld [vmem:[%s1 + $0x40] sm:$0xff]
  %v26 = vld [vmem:[%s1 + $0x48] sm:$0xff]
  %v27 = vld [vmem:[%s1 + $0x50] sm:$0xff]
  %v28 = vld [vmem:[%s1 + $0x58] sm:$0xff]
  %v29 = vld [vmem:[%s1 + $0x60] sm:$0xff]
  %v30 = vld [vmem:[%s1 + $0x68] sm:$0xff]
  %v31 = vld [vmem:[%s1 + $0x70] sm:$0xff]
  %v32 = vld [vmem:[%s1 + $0x78] sm:$0xff]
  %v33 = vld [vmem:[%s1 + $0x80] sm:$0xff]
  %v34 = vld [vmem:[%s1 + $0x88] sm:$0xff]
  %v35 = vld [vmem:[%s1 + $0x90] sm:$0xff]
  %v36 = vld [vmem:[%s1 + $0x98] sm:$0xff]
  %v37 = vld [vmem:[%s1 + $0xa0] sm:$0xff]
  %v38 = vld [vmem:[%s1 + $0xa8] sm:$0xff]
  %v39 = vld [vmem:[%s1 + $0xb0] sm:$0xff]
  %v40 = vld [vmem:[%s1 + $0xb8] sm:$0xff]
  %v41 = vld [vmem:[%s1 + $0xc0] sm:$0xff]
  %v42 = vld [vmem:[%s1 + $0xc8] sm:$0xff]
  %v43 = vld [vmem:[%s1 + $0xd0] sm:$0xff]
  %v44 = vld [vmem:[%s1 + $0xd8] sm:$0xff]
  %v45 = vld [vmem:[%s1 + $0xe0] sm:$0xff]
  %v46 = vld [vmem:[%s1 + $0xe8] sm:$0xff]
  %v47 = vld [vmem:[%s1 + $0xf0] sm:$0xff]
  %v48 = vld [vmem:[%s1 + $0xf8] sm:$0xff]
  %v49 = vld [vmem:[%s1 + $0x100] sm:$0xff]
  %v50 = vld [vmem:[%s1 + $0x108] sm:$0xff]
  %v51 = vld [vmem:[%s1 + $0x110] sm:$0xff]
  %v52 = vld [vmem:[%s1 + $0x118] sm:$0xff]
  %v53 = vld [vmem:[%s1 + $0x120] sm:$0xff]
  %v54 = vld [vmem:[%s1 + $0x128] sm:$0xff]
  %v55 = vld [vmem:[%s1 + $0x130] sm:$0xff]
  %v56 = vld [vmem:[%s1 + $0x138] sm:$0xff]
  %v57 = vld [vmem:[%s1 + $0x140] sm:$0xff]
  %v58 = vld [vmem:[%s1 + $0x148] sm:$0xff]
  %v59 = vld [vmem:[%s1 + $0x150] sm:$0xff]
  %v60 = vld [vmem:[%s1 + $0x158] sm:$0xff]
  %v61 = vld [vmem:[%s1 + $0x160] sm:$0xff]
  %v62 = vld [vmem:[%s1 + $0x168] sm:$0xff]
  %v63 = vld [vmem:[%s1 + $0x170] sm:$0xff]
  %v64 = vld [vmem:[%s1 + $0x178] sm:$0xff]
  %v65 = vld [vmem:[%s1 + $0x180] sm:$0xff]
  %v66 = vld [vmem:[%s1 + $0x188] sm:$0xff]
  %v67 = vld [vmem:[%s1 + $0x190] sm:$0xff]
  %v68 = vld [vmem:[%s1 + $0x198] sm:$0xff]
  %v69 = vld [vmem:[%s1 + $0x1a0] sm:$0xff]
  %v70 = vld [vmem:[%s1 + $0x1a8] sm:$0xff]
  %v71 = vld [vmem:[%s1 + $0x1b0] sm:$0xff]
  %v72 = vld [vmem:[%s1 + $0x1b8] sm:$0xff]
  %v73 = vld [vmem:[%s1 + $0x1c0] sm:$0xff]
  %v74 = vld [vmem:[%s1 + $0x1c8] sm:$0xff]
  %v75 = vld [vmem:[%s1 + $0x1d0] sm:$0xff]
  %v76 = vld [vmem:[%s1 + $0x1d8] sm:$0xff]
  %v77 = vld [vmem:[%s1 + $0x1e0] sm:$0xff]
  %v78 = vld [vmem:[%s1 + $0x1e8] sm:$0xff]
  %v79 = vld [vmem:[%s1 + $0x1f0] sm:$0xff]
  %v80 = vld [vmem:[%s1 + $0x1f8] sm:$0xff]
  %v81 = vld [vmem:[%s1 + $0x200] sm:$0xff]
  %v82 = vld [vmem:[%s1 + $0x208] sm:$0xff]
  %v83 = vld [vmem:[%s1 + $0x210] sm:$0xff]
  %v84 = vld [vmem:[%s1 + $0x218] sm:$0xff]
  %v85 = vld [vmem:[%s1 + $0x220] sm:$0xff]
  %v86 = vld [vmem:[%s1 + $0x228] sm:$0xff]
  %v87 = vld [vmem:[%s1 + $0x230] sm:$0xff]
  %v88 = vld [vmem:[%s1 + $0x238] sm:$0xff]
  %v89 = vld [vmem:[%s1 + $0x240] sm:$0xff]
  %v90 = vld [vmem:[%s1 + $0x248] sm:$0xff]
  %v91 = vld [vmem:[%s1 + $0x250] sm:$0xff]
  %v92 = vld [vmem:[%s1 + $0x258] sm:$0xff]
  %v93 = vld [vmem:[%s1 + $0x260] sm:$0xff]
  %v94 = vld [vmem:[%s1 + $0x268] sm:$0xff]
  %v95 = vld [vmem:[%s1 + $0x270] sm:$0xff]
  %v96 = vld [vmem:[%s1 + $0x278] sm:$0xff]
  %v97 = vld [vmem:[%s1 + $0x280] sm:$0xff]
  %v98 = vld [vmem:[%s1 + $0x288] sm:$0xff]
  %v99 = vld [vmem:[%s1 + $0x290] sm:$0xff]
  %v100 = vld [vmem:[%s1 + $0x298] sm:$0xff]
  %v101 = vld [vmem:[%s1 + $0x2a0] sm:$0xff]
  %v102 = vld [vmem:[%s1 + $0x2a8] sm:$0xff]
  %v103 = vld [vmem:[%s1 + $0x2b0] sm:$0xff]
  %v104 = vld [vmem:[%s1 + $0x2b8] sm:$0xff]
  %v105 = vld [vmem:[%s1 + $0x2c0] sm:$0xff]
  %v106 = vld [vmem:[%s1 + $0x2c8] sm:$0xff]
  %v107 = vld [vmem:[%s1 + $0x2d0] sm:$0xff]
  %v108 = vld [vmem:[%s1 + $0x2d8] sm:$0xff]
  %v109 = vld [vmem:[%s1 + $0x2e0] sm:$0xff]
  %v110 = vld [vmem:[%s1 + $0x2e8] sm:$0xff]
  %v111 = vld [vmem:[%s1 + $0x2f0] sm:$0xff]
  %v112 = vld [vmem:[%s1 + $0x2f8] sm:$0xff]
  %v113 = vld [vmem:[%s1 + $0x300] sm:$0xff]
  %v114 = vld [vmem:[%s1 + $0x308] sm:$0xff]
  %v115 = vld [vmem:[%s1 + $0x310] sm:$0xff]
  %v116 = vld [vmem:[%s1 + $0x318] sm:$0xff]
  %v117 = vld [vmem:[%s1 + $0x320] sm:$0xff]
  %v118 = vld [vmem:[%s1 + $0x328] sm:$0xff]
  %v119 = vld [vmem:[%s1 + $0x330] sm:$0xff]
  %v120 = vld [vmem:[%s1 + $0x338] sm:$0xff]
  %v121 = vld [vmem:[%s1 + $0x340] sm:$0xff]
  %v122 = vld [vmem:[%s1 + $0x348] sm:$0xff]
  %v123 = vld [vmem:[%s1 + $0x350] sm:$0xff]
  %v124 = vld [vmem:[%s1 + $0x358] sm:$0xff]
  %v125 = vld [vmem:[%s1 + $0x360] sm:$0xff]
  %v126 = vld [vmem:[%s1 + $0x368] sm:$0xff]
  %v127 = vld [vmem:[%s1 + $0x370] sm:$0xff]
  %v128 = vld [vmem:[%s1 + $0x378] sm:$0xff]
  %v129 = vld [vmem:[%s1 + $0x380] sm:$0xff]
  %v130 = vld [vmem:[%s1 + $0x388] sm:$0xff]
  %v131 = vld [vmem:[%s1 + $0x390] sm:$0xff]
  %v132 = vld [vmem:[%s1 + $0x398] sm:$0xff]
  %v133 = vld [vmem:[%s1 + $0x3a0] sm:$0xff]
  %v134 = vld [vmem:[%s1 + $0x3a8] sm:$0xff]
  %v135 = vld [vmem:[%s1 + $0x3b0] sm:$0xff]
  %v136 = vld [vmem:[%s1 + $0x3b8] sm:$0xff]
  %v137 = vld [vmem:[%s1 + $0x3c0] sm:$0xff]
  %v138 = vld [vmem:[%s1 + $0x3c8] sm:$0xff]
  %v139 = vld [vmem:[%s1 + $0x3d0] sm:$0xff]
  %v140 = vld [vmem:[%s1 + $0x3d8] sm:$0xff]
  %v141 = vld [vmem:[%s1 + $0x3e0] sm:$0xff]
  %v142 = vld [vmem:[%s1 + $0x3e8] sm:$0xff]
  %v143 = vld [vmem:[%s1 + $0x3f0] sm:$0xff]
  %v144 = vld [vmem:[%s1 + $0x3f8] sm:$0xff]
  %v145 = vld [vmem:[%s1 + $0x400] sm:$0xff]
  %v146 = vld [vmem:[%s1 + $0x408] sm:$0xff]
  %v147 = vld [vmem:[%s1 + $0x410] sm:$0xff]
  %v148 = vld [vmem:[%s1 + $0x418] sm:$0xff]
  %v149 = vld [vmem:[%s1 + $0x420] sm:$0xff]
  %v150 = vld [vmem:[%s1 + $0x428] sm:$0xff]
  %v151 = vld [vmem:[%s1 + $0x430] sm:$0xff]
  %v152 = vld [vmem:[%s1 + $0x438] sm:$0xff]
  %v153 = vld [vmem:[%s1 + $0x440] sm:$0xff]
  %v154 = vld [vmem:[%s1 + $0x448] sm:$0xff]
  %v155 = vld [vmem:[%s1 + $0x450] sm:$0xff]
  %v156 = vld [vmem:[%s1 + $0x458] sm:$0xff]
  %v157 = vld [vmem:[%s1 + $0x460] sm:$0xff]
  %v158 = vld [vmem:[%s1 + $0x468] sm:$0xff]
  %v159 = vld [vmem:[%s1 + $0x470] sm:$0xff]
  %v160 = vld [vmem:[%s1 + $0x478] sm:$0xff]
  %v161 = vld [vmem:[%s2] sm:$0x3]
  %v163 = vlaneseq
  %v164 = vshrl.u32 %v163, 7
  %v165 = vsub.s32 0, %v164
  %v166 = vrot.slane %v161, %v165
  %v167 = vlaneseq
  %v168 = vshrl.u32 %v167, 7
  %v169 = vsub.s32 1, %v168
  %v170 = vrot.slane %v161, %v169
  %v175 = vcombine.high %v15, %v15
  %v177 = vunpack.c.l.s4 1966171168
  %v178 = vunpack.c.0.s8 %v177
  %v179 = vlaneseq
  %v180 = vshrl.u32 %v179, 7
  %v181 = vsub.s32 %v178, %v180
  %v182 = vrot.slane %v15, %v181
  %v184 = vunpack.c.l.s4 1966171168
  %v185 = vunpack.c.0.s8 %v184
  %v186 = vlaneseq
  %v187 = vshrl.u32 %v186, 7
  %v188 = vsub.s32 %v185, %v187
  %v189 = vrot.slane %v175, %v188
  %v190 = vcombine.high %v182, %v182
  %v191 = vcombine.high %v189, %v189
  %v193 = vunpack.c.l.s4 1966171168
  %v194 = vunpack.c.0.s8 %v193
  %v195 = vlaneseq
  %v196 = vshrl.u32 %v195, 7
  %v197 = vsub.s32 %v194, %v196
  %v198 = vrot.slane %v182, %v197
  %v200 = vunpack.c.l.s4 1966171168
  %v201 = vunpack.c.0.s8 %v200
  %v202 = vlaneseq
  %v203 = vshrl.u32 %v202, 7
  %v204 = vsub.s32 %v201, %v203
  %v205 = vrot.slane %v189, %v204
  %v207 = vunpack.c.l.s4 1966171168
  %v208 = vunpack.c.0.s8 %v207
  %v209 = vlaneseq
  %v210 = vshrl.u32 %v209, 7
  %v211 = vsub.s32 %v208, %v210
  %v212 = vrot.slane %v190, %v211
  %v214 = vunpack.c.l.s4 1966171168
  %v215 = vunpack.c.0.s8 %v214
  %v216 = vlaneseq
  %v217 = vshrl.u32 %v216, 7
  %v218 = vsub.s32 %v215, %v217
  %v219 = vrot.slane %v191, %v218
  %v220 = vcombine.high %v198, %v198
  %v221 = vcombine.high %v205, %v205
  %v222 = vcombine.high %v212, %v212
  %v223 = vcombine.high %v219, %v219
  %v225 = vunpack.c.l.s4 1966171168
  %v226 = vunpack.c.0.s8 %v225
  %v227 = vlaneseq
  %v228 = vshrl.u32 %v227, 7
  %v229 = vsub.s32 %v226, %v228
  %v230 = vrot.slane %v16, %v229
  %v232 = vunpack.c.l.s4 1966171168
  %v233 = vunpack.c.0.s8 %v232
  %v234 = vlaneseq
  %v235 = vshrl.u32 %v234, 7
  %v236 = vsub.s32 %v233, %v235
  %v237 = vrot.slane %v230, %v236
  %v391 = vunpack.c.l.b16 %v17
  %v392 = vunpack.c.h.b16 %v17
  %v393 = vunpack.c.l.b16 %v18
  %v394 = vunpack.c.h.b16 %v18
  %v395 = vunpack.c.l.b16 %v19
  %v396 = vunpack.c.h.b16 %v19
  %v397 = vunpack.c.l.b16 %v20
  %v398 = vunpack.c.h.b16 %v20
  %v399 = vunpack.c.l.b16 %v21
  %v400 = vunpack.c.h.b16 %v21
  %v401 = vunpack.c.l.b16 %v22
  %v402 = vunpack.c.h.b16 %v22
  %v403 = vunpack.c.l.b16 %v23
  %v404 = vunpack.c.h.b16 %v23
  %v405 = vunpack.c.l.b16 %v24
  %v406 = vunpack.c.h.b16 %v24
  %v407 = vunpack.c.l.b16 %v25
  %v408 = vunpack.c.h.b16 %v25
  %v409 = vunpack.c.l.b16 %v26
  %v410 = vunpack.c.h.b16 %v26
  %v411 = vunpack.c.l.b16 %v27
  %v412 = vunpack.c.h.b16 %v27
  %v413 = vunpack.c.l.b16 %v28
  %v414 = vunpack.c.h.b16 %v28
  %v415 = vunpack.c.l.b16 %v29
  %v416 = vunpack.c.h.b16 %v29
  %v417 = vunpack.c.l.b16 %v30
  %v418 = vunpack.c.h.b16 %v30
  %v419 = vunpack.c.l.b16 %v31
  %v420 = vunpack.c.h.b16 %v31
  %v421 = vunpack.c.l.b16 %v32
  %v422 = vunpack.c.h.b16 %v32
  %v423 = vunpack.c.l.b16 %v33
  %v424 = vunpack.c.h.b16 %v33
  %v425 = vunpack.c.l.b16 %v34
  %v426 = vunpack.c.h.b16 %v34
  %v427 = vunpack.c.l.b16 %v35
  %v428 = vunpack.c.h.b16 %v35
  %v429 = vunpack.c.l.b16 %v36
  %v430 = vunpack.c.h.b16 %v36
  %v431 = vunpack.c.l.b16 %v37
  %v432 = vunpack.c.h.b16 %v37
  %v433 = vunpack.c.l.b16 %v38
  %v434 = vunpack.c.h.b16 %v38
  %v435 = vunpack.c.l.b16 %v39
  %v436 = vunpack.c.h.b16 %v39
  %v437 = vunpack.c.l.b16 %v40
  %v438 = vunpack.c.h.b16 %v40
  %v439 = vunpack.c.l.b16 %v41
  %v440 = vunpack.c.h.b16 %v41
  %v441 = vunpack.c.l.b16 %v42
  %v442 = vunpack.c.h.b16 %v42
  %v443 = vunpack.c.l.b16 %v43
  %v444 = vunpack.c.h.b16 %v43
  %v445 = vunpack.c.l.b16 %v44
  %v446 = vunpack.c.h.b16 %v44
  %v447 = vunpack.c.l.b16 %v45
  %v448 = vunpack.c.h.b16 %v45
  %v449 = vunpack.c.l.b16 %v46
  %v450 = vunpack.c.h.b16 %v46
  %v451 = vunpack.c.l.b16 %v47
  %v452 = vunpack.c.h.b16 %v47
  %v453 = vunpack.c.l.b16 %v48
  %v454 = vunpack.c.h.b16 %v48
  %v455 = vunpack.c.l.b16 %v49
  %v456 = vunpack.c.h.b16 %v49
  %v457 = vunpack.c.l.b16 %v50
  %v458 = vunpack.c.h.b16 %v50
  %v459 = vunpack.c.l.b16 %v51
  %v460 = vunpack.c.h.b16 %v51
  %v461 = vunpack.c.l.b16 %v52
  %v462 = vunpack.c.h.b16 %v52
  %v463 = vunpack.c.l.b16 %v53
  %v464 = vunpack.c.h.b16 %v53
  %v465 = vunpack.c.l.b16 %v54
  %v466 = vunpack.c.h.b16 %v54
  %v467 = vunpack.c.l.b16 %v55
  %v468 = vunpack.c.h.b16 %v55
  %v469 = vunpack.c.l.b16 %v56
  %v470 = vunpack.c.h.b16 %v56
  %v471 = vunpack.c.l.b16 %v57
  %v472 = vunpack.c.h.b16 %v57
  %v473 = vunpack.c.l.b16 %v58
  %v474 = vunpack.c.h.b16 %v58
  %v475 = vunpack.c.l.b16 %v59
  %v476 = vunpack.c.h.b16 %v59
  %v477 = vunpack.c.l.b16 %v60
  %v478 = vunpack.c.h.b16 %v60
  %v479 = vunpack.c.l.b16 %v61
  %v480 = vunpack.c.h.b16 %v61
  %v481 = vunpack.c.l.b16 %v62
  %v482 = vunpack.c.h.b16 %v62
  %v483 = vunpack.c.l.b16 %v63
  %v484 = vunpack.c.h.b16 %v63
  %v485 = vunpack.c.l.b16 %v64
  %v486 = vunpack.c.h.b16 %v64
  %v487 = vunpack.c.l.b16 %v65
  %v488 = vunpack.c.h.b16 %v65
  %v489 = vunpack.c.l.b16 %v66
  %v490 = vunpack.c.h.b16 %v66
  %v491 = vunpack.c.l.b16 %v67
  %v492 = vunpack.c.h.b16 %v67
  %v493 = vunpack.c.l.b16 %v68
  %v494 = vunpack.c.h.b16 %v68
  %v495 = vunpack.c.l.b16 %v69
  %v496 = vunpack.c.h.b16 %v69
  %v497 = vunpack.c.l.b16 %v70
  %v498 = vunpack.c.h.b16 %v70
  %v499 = vunpack.c.l.b16 %v71
  %v500 = vunpack.c.h.b16 %v71
  %v501 = vunpack.c.l.b16 %v72
  %v502 = vunpack.c.h.b16 %v72
  %v503 = vunpack.c.l.b16 %v73
  %v504 = vunpack.c.h.b16 %v73
  %v505 = vunpack.c.l.b16 %v74
  %v506 = vunpack.c.h.b16 %v74
  %v507 = vunpack.c.l.b16 %v75
  %v508 = vunpack.c.h.b16 %v75
  %v509 = vunpack.c.l.b16 %v76
  %v510 = vunpack.c.h.b16 %v76
  %v511 = vunpack.c.l.b16 %v77
  %v512 = vunpack.c.h.b16 %v77
  %v513 = vunpack.c.l.b16 %v78
  %v514 = vunpack.c.h.b16 %v78
  %v515 = vunpack.c.l.b16 %v79
  %v516 = vunpack.c.h.b16 %v79
  %v517 = vunpack.c.l.b16 %v80
  %v518 = vunpack.c.h.b16 %v80
  %v519 = vunpack.c.l.b16 %v81
  %v520 = vunpack.c.h.b16 %v81
  %v521 = vunpack.c.l.b16 %v82
  %v522 = vunpack.c.h.b16 %v82
  %v523 = vunpack.c.l.b16 %v83
  %v524 = vunpack.c.h.b16 %v83
  %v525 = vunpack.c.l.b16 %v84
  %v526 = vunpack.c.h.b16 %v84
  %v527 = vunpack.c.l.b16 %v85
  %v528 = vunpack.c.h.b16 %v85
  %v529 = vunpack.c.l.b16 %v86
  %v530 = vunpack.c.h.b16 %v86
  %v531 = vunpack.c.l.b16 %v87
  %v532 = vunpack.c.h.b16 %v87
  %v533 = vunpack.c.l.b16 %v88
  %v534 = vunpack.c.h.b16 %v88
  %v535 = vunpack.c.l.b16 %v89
  %v536 = vunpack.c.h.b16 %v89
  %v537 = vunpack.c.l.b16 %v90
  %v538 = vunpack.c.h.b16 %v90
  %v539 = vunpack.c.l.b16 %v91
  %v540 = vunpack.c.h.b16 %v91
  %v541 = vunpack.c.l.b16 %v92
  %v542 = vunpack.c.h.b16 %v92
  %v543 = vunpack.c.l.b16 %v93
  %v544 = vunpack.c.h.b16 %v93
  %v545 = vunpack.c.l.b16 %v94
  %v546 = vunpack.c.h.b16 %v94
  %v547 = vunpack.c.l.b16 %v95
  %v548 = vunpack.c.h.b16 %v95
  %v549 = vunpack.c.l.b16 %v96
  %v550 = vunpack.c.h.b16 %v96
  %v551 = vunpack.c.l.b16 %v97
  %v552 = vunpack.c.h.b16 %v97
  %v553 = vunpack.c.l.b16 %v98
  %v554 = vunpack.c.h.b16 %v98
  %v555 = vunpack.c.l.b16 %v99
  %v556 = vunpack.c.h.b16 %v99
  %v557 = vunpack.c.l.b16 %v100
  %v558 = vunpack.c.h.b16 %v100
  %v559 = vunpack.c.l.b16 %v101
  %v560 = vunpack.c.h.b16 %v101
  %v561 = vunpack.c.l.b16 %v102
  %v562 = vunpack.c.h.b16 %v102
  %v563 = vunpack.c.l.b16 %v103
  %v564 = vunpack.c.h.b16 %v103
  %v565 = vunpack.c.l.b16 %v104
  %v566 = vunpack.c.h.b16 %v104
  %v567 = vunpack.c.l.b16 %v105
  %v568 = vunpack.c.h.b16 %v105
  %v569 = vunpack.c.l.b16 %v106
  %v570 = vunpack.c.h.b16 %v106
  %v571 = vunpack.c.l.b16 %v107
  %v572 = vunpack.c.h.b16 %v107
  %v573 = vunpack.c.l.b16 %v108
  %v574 = vunpack.c.h.b16 %v108
  %v575 = vunpack.c.l.b16 %v109
  %v576 = vunpack.c.h.b16 %v109
  %v577 = vunpack.c.l.b16 %v110
  %v578 = vunpack.c.h.b16 %v110
  %v579 = vunpack.c.l.b16 %v111
  %v580 = vunpack.c.h.b16 %v111
  %v581 = vunpack.c.l.b16 %v112
  %v582 = vunpack.c.h.b16 %v112
  %v583 = vunpack.c.l.b16 %v113
  %v584 = vunpack.c.h.b16 %v113
  %v585 = vunpack.c.l.b16 %v114
  %v586 = vunpack.c.h.b16 %v114
  %v587 = vunpack.c.l.b16 %v115
  %v588 = vunpack.c.h.b16 %v115
  %v589 = vunpack.c.l.b16 %v116
  %v590 = vunpack.c.h.b16 %v116
  %v591 = vunpack.c.l.b16 %v117
  %v592 = vunpack.c.h.b16 %v117
  %v593 = vunpack.c.l.b16 %v118
  %v594 = vunpack.c.h.b16 %v118
  %v595 = vunpack.c.l.b16 %v119
  %v596 = vunpack.c.h.b16 %v119
  %v597 = vunpack.c.l.b16 %v120
  %v598 = vunpack.c.h.b16 %v120
  %v599 = vunpack.c.l.b16 %v121
  %v600 = vunpack.c.h.b16 %v121
  %v601 = vunpack.c.l.b16 %v122
  %v602 = vunpack.c.h.b16 %v122
  %v603 = vunpack.c.l.b16 %v123
  %v604 = vunpack.c.h.b16 %v123
  %v605 = vunpack.c.l.b16 %v124
  %v606 = vunpack.c.h.b16 %v124
  %v607 = vunpack.c.l.b16 %v125
  %v608 = vunpack.c.h.b16 %v125
  %v609 = vunpack.c.l.b16 %v126
  %v610 = vunpack.c.h.b16 %v126
  %v611 = vunpack.c.l.b16 %v127
  %v612 = vunpack.c.h.b16 %v127
  %v613 = vunpack.c.l.b16 %v128
  %v614 = vunpack.c.h.b16 %v128
  %v615 = vunpack.c.l.b16 %v129
  %v616 = vunpack.c.h.b16 %v129
  %v617 = vunpack.c.l.b16 %v130
  %v618 = vunpack.c.h.b16 %v130
  %v619 = vunpack.c.l.b16 %v131
  %v620 = vunpack.c.h.b16 %v131
  %v621 = vunpack.c.l.b16 %v132
  %v622 = vunpack.c.h.b16 %v132
  %v623 = vunpack.c.l.b16 %v133
  %v624 = vunpack.c.h.b16 %v133
  %v625 = vunpack.c.l.b16 %v134
  %v626 = vunpack.c.h.b16 %v134
  %v627 = vunpack.c.l.b16 %v135
  %v628 = vunpack.c.h.b16 %v135
  %v629 = vunpack.c.l.b16 %v136
  %v630 = vunpack.c.h.b16 %v136
  %v631 = vunpack.c.l.b16 %v137
  %v632 = vunpack.c.h.b16 %v137
  %v633 = vunpack.c.l.b16 %v138
  %v634 = vunpack.c.h.b16 %v138
  %v635 = vunpack.c.l.b16 %v139
  %v636 = vunpack.c.h.b16 %v139
  %v637 = vunpack.c.l.b16 %v140
  %v638 = vunpack.c.h.b16 %v140
  %v639 = vunpack.c.l.b16 %v141
  %v640 = vunpack.c.h.b16 %v141
  %v641 = vunpack.c.l.b16 %v142
  %v642 = vunpack.c.h.b16 %v142
  %v643 = vunpack.c.l.b16 %v143
  %v644 = vunpack.c.h.b16 %v143
  %v645 = vunpack.c.l.b16 %v144
  %v646 = vunpack.c.h.b16 %v144
  %v647 = vunpack.c.l.b16 %v145
  %v648 = vunpack.c.h.b16 %v145
  %v649 = vunpack.c.l.b16 %v146
  %v650 = vunpack.c.h.b16 %v146
  %v651 = vunpack.c.l.b16 %v147
  %v652 = vunpack.c.h.b16 %v147
  %v653 = vunpack.c.l.b16 %v148
  %v654 = vunpack.c.h.b16 %v148
  %v655 = vunpack.c.l.b16 %v149
  %v656 = vunpack.c.h.b16 %v149
  %v657 = vunpack.c.l.b16 %v150
  %v658 = vunpack.c.h.b16 %v150
  %v659 = vunpack.c.l.b16 %v151
  %v660 = vunpack.c.h.b16 %v151
  %v661 = vunpack.c.l.b16 %v152
  %v662 = vunpack.c.h.b16 %v152
  %v663 = vunpack.c.l.b16 %v153
  %v664 = vunpack.c.h.b16 %v153
  %v665 = vunpack.c.l.b16 %v154
  %v666 = vunpack.c.h.b16 %v154
  %v667 = vunpack.c.l.b16 %v155
  %v668 = vunpack.c.h.b16 %v155
  %v669 = vunpack.c.l.b16 %v156
  %v670 = vunpack.c.h.b16 %v156
  %v671 = vunpack.c.l.b16 %v157
  %v672 = vunpack.c.h.b16 %v157
  %v673 = vunpack.c.l.b16 %v158
  %v674 = vunpack.c.h.b16 %v158
  %v675 = vunpack.c.l.b16 %v159
  %v676 = vunpack.c.h.b16 %v159
  %v677 = vunpack.c.l.b16 %v160
  %v678 = vunpack.c.h.b16 %v160
  %v679 = vpack.c.b16 %v393, %v391
  %v680 = vpack.c.b16 %v394, %v392
  %v681 = vpack.c.b16 %v397, %v395
  %v682 = vpack.c.b16 %v398, %v396
  %v683 = vpack.c.b16 %v401, %v399
  %v684 = vpack.c.b16 %v402, %v400
  %v685 = vpack.c.b16 %v405, %v403
  %v686 = vpack.c.b16 %v406, %v404
  %v687 = vpack.c.b16 %v409, %v407
  %v688 = vpack.c.b16 %v410, %v408
  %v689 = vpack.c.b16 %v413, %v411
  %v690 = vpack.c.b16 %v414, %v412
  %v691 = vpack.c.b16 %v417, %v415
  %v692 = vpack.c.b16 %v418, %v416
  %v693 = vpack.c.b16 %v421, %v419
  %v694 = vpack.c.b16 %v422, %v420
  %v695 = vpack.c.b16 %v425, %v423
  %v696 = vpack.c.b16 %v426, %v424
  %v697 = vpack.c.b16 %v429, %v427
  %v698 = vpack.c.b16 %v430, %v428
  %v699 = vpack.c.b16 %v433, %v431
  %v700 = vpack.c.b16 %v434, %v432
  %v701 = vpack.c.b16 %v437, %v435
  %v702 = vpack.c.b16 %v438, %v436
  %v703 = vpack.c.b16 %v441, %v439
  %v704 = vpack.c.b16 %v442, %v440
  %v705 = vpack.c.b16 %v445, %v443
  %v706 = vpack.c.b16 %v446, %v444
  %v707 = vpack.c.b16 %v449, %v447
  %v708 = vpack.c.b16 %v450, %v448
  %v709 = vpack.c.b16 %v453, %v451
  %v710 = vpack.c.b16 %v454, %v452
  %v711 = vpack.c.b16 %v457, %v455
  %v712 = vpack.c.b16 %v458, %v456
  %v713 = vpack.c.b16 %v461, %v459
  %v714 = vpack.c.b16 %v462, %v460
  %v715 = vpack.c.b16 %v465, %v463
  %v716 = vpack.c.b16 %v466, %v464
  %v717 = vpack.c.b16 %v469, %v467
  %v718 = vpack.c.b16 %v470, %v468
  %v719 = vpack.c.b16 %v473, %v471
  %v720 = vpack.c.b16 %v474, %v472
  %v721 = vpack.c.b16 %v477, %v475
  %v722 = vpack.c.b16 %v478, %v476
  %v723 = vpack.c.b16 %v481, %v479
  %v724 = vpack.c.b16 %v482, %v480
  %v725 = vpack.c.b16 %v485, %v483
  %v726 = vpack.c.b16 %v486, %v484
  %v727 = vpack.c.b16 %v489, %v487
  %v728 = vpack.c.b16 %v490, %v488
  %v729 = vpack.c.b16 %v493, %v491
  %v730 = vpack.c.b16 %v494, %v492
  %v731 = vpack.c.b16 %v497, %v495
  %v732 = vpack.c.b16 %v498, %v496
  %v733 = vpack.c.b16 %v501, %v499
  %v734 = vpack.c.b16 %v502, %v500
  %v735 = vpack.c.b16 %v505, %v503
  %v736 = vpack.c.b16 %v506, %v504
  %v737 = vpack.c.b16 %v509, %v507
  %v738 = vpack.c.b16 %v510, %v508
  %v739 = vpack.c.b16 %v513, %v511
  %v740 = vpack.c.b16 %v514, %v512
  %v741 = vpack.c.b16 %v517, %v515
  %v742 = vpack.c.b16 %v518, %v516
  %v743 = vpack.c.b16 %v521, %v519
  %v744 = vpack.c.b16 %v522, %v520
  %v745 = vpack.c.b16 %v525, %v523
  %v746 = vpack.c.b16 %v526, %v524
  %v747 = vpack.c.b16 %v529, %v527
  %v748 = vpack.c.b16 %v530, %v528
  %v749 = vpack.c.b16 %v533, %v531
  %v750 = vpack.c.b16 %v534, %v532
  %v751 = vpack.c.b16 %v537, %v535
  %v752 = vpack.c.b16 %v538, %v536
  %v753 = vpack.c.b16 %v541, %v539
  %v754 = vpack.c.b16 %v542, %v540
  %v755 = vpack.c.b16 %v545, %v543
  %v756 = vpack.c.b16 %v546, %v544
  %v757 = vpack.c.b16 %v549, %v547
  %v758 = vpack.c.b16 %v550, %v548
  %v759 = vpack.c.b16 %v553, %v551
  %v760 = vpack.c.b16 %v554, %v552
  %v761 = vpack.c.b16 %v557, %v555
  %v762 = vpack.c.b16 %v558, %v556
  %v763 = vpack.c.b16 %v561, %v559
  %v764 = vpack.c.b16 %v562, %v560
  %v765 = vpack.c.b16 %v565, %v563
  %v766 = vpack.c.b16 %v566, %v564
  %v767 = vpack.c.b16 %v569, %v567
  %v768 = vpack.c.b16 %v570, %v568
  %v769 = vpack.c.b16 %v573, %v571
  %v770 = vpack.c.b16 %v574, %v572
  %v771 = vpack.c.b16 %v577, %v575
  %v772 = vpack.c.b16 %v578, %v576
  %v773 = vpack.c.b16 %v581, %v579
  %v774 = vpack.c.b16 %v582, %v580
  %v775 = vpack.c.b16 %v585, %v583
  %v776 = vpack.c.b16 %v586, %v584
  %v777 = vpack.c.b16 %v589, %v587
  %v778 = vpack.c.b16 %v590, %v588
  %v779 = vpack.c.b16 %v593, %v591
  %v780 = vpack.c.b16 %v594, %v592
  %v781 = vpack.c.b16 %v597, %v595
  %v782 = vpack.c.b16 %v598, %v596
  %v783 = vpack.c.b16 %v601, %v599
  %v784 = vpack.c.b16 %v602, %v600
  %v785 = vpack.c.b16 %v605, %v603
  %v786 = vpack.c.b16 %v606, %v604
  %v787 = vpack.c.b16 %v609, %v607
  %v788 = vpack.c.b16 %v610, %v608
  %v789 = vpack.c.b16 %v613, %v611
  %v790 = vpack.c.b16 %v614, %v612
  %v791 = vpack.c.b16 %v617, %v615
  %v792 = vpack.c.b16 %v618, %v616
  %v793 = vpack.c.b16 %v621, %v619
  %v794 = vpack.c.b16 %v622, %v620
  %v795 = vpack.c.b16 %v625, %v623
  %v796 = vpack.c.b16 %v626, %v624
  %v797 = vpack.c.b16 %v629, %v627
  %v798 = vpack.c.b16 %v630, %v628
  %v799 = vpack.c.b16 %v633, %v631
  %v800 = vpack.c.b16 %v634, %v632
  %v801 = vpack.c.b16 %v637, %v635
  %v802 = vpack.c.b16 %v638, %v636
  %v803 = vpack.c.b16 %v641, %v639
  %v804 = vpack.c.b16 %v642, %v640
  %v805 = vpack.c.b16 %v645, %v643
  %v806 = vpack.c.b16 %v646, %v644
  %v807 = vpack.c.b16 %v649, %v647
  %v808 = vpack.c.b16 %v650, %v648
  %v809 = vpack.c.b16 %v653, %v651
  %v810 = vpack.c.b16 %v654, %v652
  %v811 = vpack.c.b16 %v657, %v655
  %v812 = vpack.c.b16 %v658, %v656
  %v813 = vpack.c.b16 %v661, %v659
  %v814 = vpack.c.b16 %v662, %v660
  %v815 = vpack.c.b16 %v665, %v663
  %v816 = vpack.c.b16 %v666, %v664
  %v817 = vpack.c.b16 %v669, %v667
  %v818 = vpack.c.b16 %v670, %v668
  %v819 = vpack.c.b16 %v673, %v671
  %v820 = vpack.c.b16 %v674, %v672
  %v821 = vpack.c.b16 %v677, %v675
  %v822 = vpack.c.b16 %v678, %v676
  %967 = vmatprep.subr.bf16.mxu0 %v694
  %968 = vmatpush1.bf16.msra.mxu0 %v693
  %969 = vmatprep.subr.bf16.mxu0 %v692
  %970 = vmatpush1.bf16.msra.mxu0 %v691
  %971 = vmatprep.subr.bf16.mxu0 %v690
  %972 = vmatpush1.bf16.msra.mxu0 %v689
  %973 = vmatprep.subr.bf16.mxu0 %v688
  %974 = vmatpush1.bf16.msra.mxu0 %v687
  %975 = vmatprep.subr.bf16.mxu0 %v686
  %976 = vmatpush1.bf16.msra.mxu0 %v685
  %977 = vmatprep.subr.bf16.mxu0 %v684
  %978 = vmatpush1.bf16.msra.mxu0 %v683
  %979 = vmatprep.subr.bf16.mxu0 %v682
  %980 = vmatpush1.bf16.msra.mxu0 %v681
  %981 = vmatprep.subr.bf16.mxu0 %v680
  %982 = vmatpush1.bf16.msra.mxu0 %v679
  %983 = vmatprep.subr.bf16.mxu0 %v710
  %984 = vmatpush2.bf16.msra.mxu0 %v709
  %985 = vmatprep.subr.bf16.mxu0 %v708
  %986 = vmatpush2.bf16.msra.mxu0 %v707
  %987 = vmatprep.subr.bf16.mxu0 %v706
  %988 = vmatpush2.bf16.msra.mxu0 %v705
  %989 = vmatprep.subr.bf16.mxu0 %v704
  %990 = vmatpush2.bf16.msra.mxu0 %v703
  %991 = vmatprep.subr.bf16.mxu0 %v702
  %992 = vmatpush2.bf16.msra.mxu0 %v701
  %993 = vmatprep.subr.bf16.mxu0 %v700
  %994 = vmatpush2.bf16.msra.mxu0 %v699
  %995 = vmatprep.subr.bf16.mxu0 %v698
  %996 = vmatpush2.bf16.msra.mxu0 %v697
  %997 = vmatprep.subr.bf16.mxu0 %v696
  %998 = vmatpush2.bf16.msra.mxu0 %v695
  %999 = vmatprep.mubr.bf16.mxu0 %v212
  %1000 = vmatmul.mubr.bf16.gmra.mxu0 %v198
  %v1001 = vpop.f32.mrf.mxu0
  %v1002 = vadd.f32 %v166, %v1001
  %v1003 = vpop.f32.mrf.mxu0
  %v1004 = vadd.f32 %v170, %v1003
  %v1005 = vpop.f32.mrf.mxu0
  %v1006 = vpop.f32.mrf.mxu0
  %1007 = vdwg.mxu0
  %1008 = vmatprep.subr.bf16.mxu0 %v726
  %1009 = vmatpush1.bf16.msra.mxu0 %v725
  %1010 = vmatprep.subr.bf16.mxu0 %v724
  %1011 = vmatpush1.bf16.msra.mxu0 %v723
  %1012 = vmatprep.subr.bf16.mxu0 %v722
  %1013 = vmatpush1.bf16.msra.mxu0 %v721
  %1014 = vmatprep.subr.bf16.mxu0 %v720
  %1015 = vmatpush1.bf16.msra.mxu0 %v719
  %1016 = vmatprep.subr.bf16.mxu0 %v718
  %1017 = vmatpush1.bf16.msra.mxu0 %v717
  %1018 = vmatprep.subr.bf16.mxu0 %v716
  %1019 = vmatpush1.bf16.msra.mxu0 %v715
  %1020 = vmatprep.subr.bf16.mxu0 %v714
  %1021 = vmatpush1.bf16.msra.mxu0 %v713
  %1022 = vmatprep.subr.bf16.mxu0 %v712
  %1023 = vmatpush1.bf16.msra.mxu0 %v711
  %1024 = vmatprep.subr.bf16.mxu0 %v742
  %1025 = vmatpush2.bf16.msra.mxu0 %v741
  %1026 = vmatprep.subr.bf16.mxu0 %v740
  %1027 = vmatpush2.bf16.msra.mxu0 %v739
  %1028 = vmatprep.subr.bf16.mxu0 %v738
  %1029 = vmatpush2.bf16.msra.mxu0 %v737
  %1030 = vmatprep.subr.bf16.mxu0 %v736
  %1031 = vmatpush2.bf16.msra.mxu0 %v735
  %1032 = vmatprep.subr.bf16.mxu0 %v734
  %1033 = vmatpush2.bf16.msra.mxu0 %v733
  %1034 = vmatprep.subr.bf16.mxu0 %v732
  %1035 = vmatpush2.bf16.msra.mxu0 %v731
  %1036 = vmatprep.subr.bf16.mxu0 %v730
  %1037 = vmatpush2.bf16.msra.mxu0 %v729
  %1038 = vmatprep.subr.bf16.mxu0 %v728
  %1039 = vmatpush2.bf16.msra.mxu0 %v727
  %1040 = vmatprep.mubr.bf16.mxu0 %v222
  %1041 = vmatmul.mubr.bf16.gmra.mxu0 %v220
  %v1042 = vpop.f32.mrf.mxu0
  %v1043 = vadd.f32 %v1002, %v1042
  %v1044 = vpop.f32.mrf.mxu0
  %v1045 = vadd.f32 %v1004, %v1044
  %v1046 = vpop.f32.mrf.mxu0
  %v1047 = vpop.f32.mrf.mxu0
  %1048 = vdwg.mxu0
  %1049 = vmatprep.subr.bf16.mxu0 %v758
  %1050 = vmatpush1.bf16.msra.mxu0 %v757
  %1051 = vmatprep.subr.bf16.mxu0 %v756
  %1052 = vmatpush1.bf16.msra.mxu0 %v755
  %1053 = vmatprep.subr.bf16.mxu0 %v754
  %1054 = vmatpush1.bf16.msra.mxu0 %v753
  %1055 = vmatprep.subr.bf16.mxu0 %v752
  %1056 = vmatpush1.bf16.msra.mxu0 %v751
  %1057 = vmatprep.subr.bf16.mxu0 %v750
  %1058 = vmatpush1.bf16.msra.mxu0 %v749
  %1059 = vmatprep.subr.bf16.mxu0 %v748
  %1060 = vmatpush1.bf16.msra.mxu0 %v747
  %1061 = vmatprep.subr.bf16.mxu0 %v746
  %1062 = vmatpush1.bf16.msra.mxu0 %v745
  %1063 = vmatprep.subr.bf16.mxu0 %v744
  %1064 = vmatpush1.bf16.msra.mxu0 %v743
  %1065 = vmatprep.subr.bf16.mxu0 %v774
  %1066 = vmatpush2.bf16.msra.mxu0 %v773
  %1067 = vmatprep.subr.bf16.mxu0 %v772
  %1068 = vmatpush2.bf16.msra.mxu0 %v771
  %1069 = vmatprep.subr.bf16.mxu0 %v770
  %1070 = vmatpush2.bf16.msra.mxu0 %v769
  %1071 = vmatprep.subr.bf16.mxu0 %v768
  %1072 = vmatpush2.bf16.msra.mxu0 %v767
  %1073 = vmatprep.subr.bf16.mxu0 %v766
  %1074 = vmatpush2.bf16.msra.mxu0 %v765
  %1075 = vmatprep.subr.bf16.mxu0 %v764
  %1076 = vmatpush2.bf16.msra.mxu0 %v763
  %1077 = vmatprep.subr.bf16.mxu0 %v762
  %1078 = vmatpush2.bf16.msra.mxu0 %v761
  %1079 = vmatprep.subr.bf16.mxu0 %v760
  %1080 = vmatpush2.bf16.msra.mxu0 %v759
  %1081 = vmatprep.mubr.bf16.mxu0 %v219
  %1082 = vmatmul.mubr.bf16.gmra.mxu0 %v205
  %v1083 = vpop.f32.mrf.mxu0
  %v1084 = vadd.f32 %v1043, %v1083
  %v1085 = vpop.f32.mrf.mxu0
  %v1086 = vadd.f32 %v1045, %v1085
  %v1087 = vpop.f32.mrf.mxu0
  %v1088 = vpop.f32.mrf.mxu0
  %1089 = vdwg.mxu0
  %1090 = vmatprep.subr.bf16.mxu0 %v790
  %1091 = vmatpush1.bf16.msra.mxu0 %v789
  %1092 = vmatprep.subr.bf16.mxu0 %v788
  %1093 = vmatpush1.bf16.msra.mxu0 %v787
  %1094 = vmatprep.subr.bf16.mxu0 %v786
  %1095 = vmatpush1.bf16.msra.mxu0 %v785
  %1096 = vmatprep.subr.bf16.mxu0 %v784
  %1097 = vmatpush1.bf16.msra.mxu0 %v783
  %1098 = vmatprep.subr.bf16.mxu0 %v782
  %1099 = vmatpush1.bf16.msra.mxu0 %v781
  %1100 = vmatprep.subr.bf16.mxu0 %v780
  %1101 = vmatpush1.bf16.msra.mxu0 %v779
  %1102 = vmatprep.subr.bf16.mxu0 %v778
  %1103 = vmatpush1.bf16.msra.mxu0 %v777
  %1104 = vmatprep.subr.bf16.mxu0 %v776
  %1105 = vmatpush1.bf16.msra.mxu0 %v775
  %1106 = vmatprep.subr.bf16.mxu0 %v806
  %1107 = vmatpush2.bf16.msra.mxu0 %v805
  %1108 = vmatprep.subr.bf16.mxu0 %v804
  %1109 = vmatpush2.bf16.msra.mxu0 %v803
  %1110 = vmatprep.subr.bf16.mxu0 %v802
  %1111 = vmatpush2.bf16.msra.mxu0 %v801
  %1112 = vmatprep.subr.bf16.mxu0 %v800
  %1113 = vmatpush2.bf16.msra.mxu0 %v799
  %1114 = vmatprep.subr.bf16.mxu0 %v798
  %1115 = vmatpush2.bf16.msra.mxu0 %v797
  %1116 = vmatprep.subr.bf16.mxu0 %v796
  %1117 = vmatpush2.bf16.msra.mxu0 %v795
  %1118 = vmatprep.subr.bf16.mxu0 %v794
  %1119 = vmatpush2.bf16.msra.mxu0 %v793
  %1120 = vmatprep.subr.bf16.mxu0 %v792
  %1121 = vmatpush2.bf16.msra.mxu0 %v791
  %1122 = vmatprep.mubr.bf16.mxu0 %v223
  %1123 = vmatmul.mubr.bf16.gmra.mxu0 %v221
  %v1124 = vpop.f32.mrf.mxu0
  %v1125 = vadd.f32 %v1084, %v1124
  %v1126 = vpop.f32.mrf.mxu0
  %v1127 = vadd.f32 %v1086, %v1126
  %v1128 = vpop.f32.mrf.mxu0
  %v1129 = vpop.f32.mrf.mxu0
  %1130 = vdwg.mxu0
  %1131 = vmatprep.subr.bf16.mxu0 %v822
  %1132 = vmatpush1.bf16.msra.mxu0 %v821
  %1133 = vmatprep.subr.bf16.mxu0 %v820
  %1134 = vmatpush1.bf16.msra.mxu0 %v819
  %1135 = vmatprep.subr.bf16.mxu0 %v818
  %1136 = vmatpush1.bf16.msra.mxu0 %v817
  %1137 = vmatprep.subr.bf16.mxu0 %v816
  %1138 = vmatpush1.bf16.msra.mxu0 %v815
  %1139 = vmatprep.subr.bf16.mxu0 %v814
  %1140 = vmatpush1.bf16.msra.mxu0 %v813
  %1141 = vmatprep.subr.bf16.mxu0 %v812
  %1142 = vmatpush1.bf16.msra.mxu0 %v811
  %1143 = vmatprep.subr.bf16.mxu0 %v810
  %1144 = vmatpush1.bf16.msra.mxu0 %v809
  %1145 = vmatprep.subr.bf16.mxu0 %v808
  %1146 = vmatpush1.bf16.msra.mxu0 %v807
  %1147 = vmatprep.subr.bf16.mxu0 0
  %1148 = vmatpush2.bf16.msra.mxu0 0
  %1149 = vmatprep.subr.bf16.mxu0 0
  %1150 = vmatpush2.bf16.msra.mxu0 0
  %1151 = vmatprep.subr.bf16.mxu0 0
  %1152 = vmatpush2.bf16.msra.mxu0 0
  %1153 = vmatprep.subr.bf16.mxu0 0
  %1154 = vmatpush2.bf16.msra.mxu0 0
  %1155 = vmatprep.subr.bf16.mxu0 0
  %1156 = vmatpush2.bf16.msra.mxu0 0
  %1157 = vmatprep.subr.bf16.mxu0 0
  %1158 = vmatpush2.bf16.msra.mxu0 0
  %1159 = vmatprep.subr.bf16.mxu0 0
  %1160 = vmatpush2.bf16.msra.mxu0 0
  %1161 = vmatprep.subr.bf16.mxu0 0
  %1162 = vmatpush2.bf16.msra.mxu0 0
  %1163 = vmatprep.mubr.bf16.mxu0 0
  %1164 = vmatmul.mubr.bf16.gmra.mxu0 %v237
  %v1165 = vpop.f32.mrf.mxu0
  %v1166 = vadd.f32 %v1125, %v1165
  %v1167 = vpop.f32.mrf.mxu0
  %v1168 = vadd.f32 %v1127, %v1167
  %v1169 = vpop.f32.mrf.mxu0
  %v1170 = vpop.f32.mrf.mxu0
  %1171 = vdwg.mxu0
  %v1174 = vcombine.low %v1166, %v1168
  %v1176 = vunpack.c.l.s4 1983009808
  %v1177 = vunpack.c.0.s8 %v1176
  %v1178 = vlaneseq
  %v1179 = vshrl.u32 %v1178, 7
  %v1180 = vsub.s32 %v1177, %v1179
  %v1181 = vrot.slane %v1174, %v1180
  %1183 = vst [vmem:[%s3] sm:$0xf] %v1181
  // Predicated region
  $region14: #{unet_forward.15} parent=0 // pred_check
    _
  $region15: #{unet_forward.15} parent=0 // pred_check_branch
    %1185 = sbr.rel (0) target = $region17
  $region16: #{unet_forward.15} parent=0 // pred_region
    _
  $region17: #{unet_forward.15} parent=0 // pred_fallthru
    _
  // Predicated region
  $region18: #{unet_forward.15} parent=0 // pred_check
    _
  $region19: #{unet_forward.15} parent=0 // pred_check_branch
    %1187 = sbr.rel (0) target = $region21
  $region20: #{unet_forward.15} parent=0 // pred_region
    _
  $region21: #{unet_forward.15} parent=0 // pred_fallthru
    _

// kernel: unet_forward.17
$region0: #{unet_forward.17}
  #allocation0 [shape = 'u32[]', space=smem, size = 0x4, offset = 0x4, fixed_abs, tag = 'smem constant byte address 0x4 - core index']
  #allocation1 [shape = 'u32[144,128]{1,0:T(1,128)}', space=vmem, size = 0x12000, scoped, tag = 'internal scratch']
  %s0 = inlined_call_operand.vmem [shape: f32[16,4], index: 0, kind: input, shape index: {}]
  %s1 = inlined_call_operand.vmem [shape: f32[2,4,128], index: 1, kind: input, shape index: {}]
  %s2 = inlined_call_operand.vmem [shape: f32[2,16,128], index: 2, kind: output, shape index: {}]
  %s3 = sld [smem:[#allocation0]]
  $region18: #{unet_forward.17} parent=0
    _
  %s5 = ssub.s32 1, %s3
  %s6 = scalar_select 0, %s5, %s3
  // Predicated region
  $region2: #{unet_forward.17} parent=0 // pred_check
    _
  $region3: #{unet_forward.17} parent=0 // pred_check_branch
    %8 = sbr.rel (0) target = $region5
  $region4: #{unet_forward.17} parent=0 // pred_region
    _
  $region5: #{unet_forward.17} parent=0 // pred_fallthru
    _
  // Predicated region
  $region6: #{unet_forward.17} parent=0 // pred_check
    _
  $region7: #{unet_forward.17} parent=0 // pred_check_branch
    %10 = sbr.rel (0) target = $region9
  $region8: #{unet_forward.17} parent=0 // pred_region
    _
  $region9: #{unet_forward.17} parent=0 // pred_fallthru
    _
  %v11 = vld [vmem:[%s0] sm:$0xff]
  %v12 = vld [vmem:[%s0 + $0x8] sm:$0xff]
  %v13 = vld [vmem:[%s1] sm:$0xf]
  %vm14 = vcmask 31744
  %v16 = vsel %vm14, %v11, 0
  %v19 = vsel %vm14, %v12, 0
  %vm21 = vcmask 1043456
  %v23 = vsel %vm21, %v13, 0
  %25 = vmatprep.subr.mxu0 0.0
  %26 = vmatpush1.msra.mxu0 0.0
  %27 = vmatprep.subr.mxu0 0.0
  %28 = vmatpush1.msra.mxu0 0.0
  %29 = vmatprep.subr.mxu0 0.0
  %30 = vmatpush1.msra.mxu0 0.0
  %31 = vmatprep.subr.mxu0 0.0
  %32 = vmatpush1.msra.mxu0 0.0
  %33 = vmatprep.subr.mxu0 0.0
  %34 = vmatpush1.msra.mxu0 0.0
  %35 = vmatprep.subr.mxu0 0.0
  %36 = vmatpush1.msra.mxu0 0.0
  %37 = vmatprep.subr.mxu0 0.0
  %38 = vmatpush1.msra.mxu0 0.0
  %39 = vmatprep.subr.mxu0 0.0
  %40 = vmatpush1.msra.mxu0 0.0
  %41 = vmatprep.subr.mxu0 0.0
  %42 = vmatpush1.msra.mxu0 0.0
  %43 = vmatprep.subr.mxu0 0.0
  %44 = vmatpush1.msra.mxu0 0.0
  %45 = vmatprep.subr.mxu0 0.0
  %46 = vmatpush1.msra.mxu0 0.0
  %47 = vmatprep.subr.mxu0 0.0
  %48 = vmatpush1.msra.mxu0 0.0
  %49 = vmatprep.subr.mxu0 0.0
  %50 = vmatpush1.msra.mxu0 0.0
  %51 = vmatprep.subr.mxu0 0.0
  %52 = vmatpush1.msra.mxu0 0.0
  %53 = vmatprep.subr.mxu0 0.0
  %54 = vmatpush1.msra.mxu0 0.0
  %55 = vmatprep.subr.mxu0 0.0
  %56 = vmatpush1.msra.mxu0 %v23
  %57 = vmatprep.subr.mxu0 0.0
  %58 = vmatpush2.msra.mxu0 0.0
  %59 = vmatprep.subr.mxu0 0.0
  %60 = vmatpush2.msra.mxu0 0.0
  %61 = vmatprep.subr.mxu0 0.0
  %62 = vmatpush2.msra.mxu0 0.0
  %63 = vmatprep.subr.mxu0 0.0
  %64 = vmatpush2.msra.mxu0 0.0
  %65 = vmatprep.subr.mxu0 0.0
  %66 = vmatpush2.msra.mxu0 0.0
  %67 = vmatprep.subr.mxu0 0.0
  %68 = vmatpush2.msra.mxu0 0.0
  %69 = vmatprep.subr.mxu0 0.0
  %70 = vmatpush2.msra.mxu0 0.0
  %71 = vmatprep.subr.mxu0 0.0
  %72 = vmatpush2.msra.mxu0 0.0
  %73 = vmatprep.subr.mxu0 0.0
  %74 = vmatpush2.msra.mxu0 0.0
  %75 = vmatprep.subr.mxu0 0.0
  %76 = vmatpush2.msra.mxu0 0.0
  %77 = vmatprep.subr.mxu0 0.0
  %78 = vmatpush2.msra.mxu0 0.0
  %79 = vmatprep.subr.mxu0 0.0
  %80 = vmatpush2.msra.mxu0 0.0
  %81 = vmatprep.subr.mxu0 0.0
  %82 = vmatpush2.msra.mxu0 0.0
  %83 = vmatprep.subr.mxu0 0.0
  %84 = vmatpush2.msra.mxu0 0.0
  %85 = vmatprep.subr.mxu0 0.0
  %86 = vmatpush2.msra.mxu0 0.0
  %87 = vmatprep.subr.mxu0 0.0
  %88 = vmatpush2.msra.mxu0 0.0
  %89 = vmatprep.mubr.f32.mxu0 0.0
  %90 = vmatmul.mubr.f32.gmra.mxu0 %v16
  %v91 = vpop.f32.mrf.mxu0
  %v92 = vadd.f32 0.0, %v91
  %v93 = vpop.f32.mrf.mxu0
  %94 = vmatprep.mubr.f32.mxu0 0.0
  %95 = vmatmul.mubr.f32.gmra.mxu0 %v19
  %v96 = vpop.f32.mrf.mxu0
  %v97 = vadd.f32 0.0, %v96
  %v98 = vpop.f32.mrf.mxu0
  %99 = vdwg.mxu0
  %100 = vst [vmem:[%s2] sm:$0xff] %v92
  %101 = vst [vmem:[%s2 + $0x8] sm:$0xff] %v97
  %v102 = vld [vmem:[%s0] sm:$0xff]
  %v103 = vld [vmem:[%s0 + $0x8] sm:$0xff]
  %s104 = scalar_lea.vmem %s1, 4
  %v105 = vld [vmem:[%s104] sm:$0xf]
  %v107 = vsel %vm14, %v102, 0
  %v110 = vsel %vm14, %v103, 0
  %v113 = vsel %vm21, %v105, 0
  %115 = vmatprep.subr.mxu0 0.0
  %116 = vmatpush1.msra.mxu0 0.0
  %117 = vmatprep.subr.mxu0 0.0
  %118 = vmatpush1.msra.mxu0 0.0
  %119 = vmatprep.subr.mxu0 0.0
  %120 = vmatpush1.msra.mxu0 0.0
  %121 = vmatprep.subr.mxu0 0.0
  %122 = vmatpush1.msra.mxu0 0.0
  %123 = vmatprep.subr.mxu0 0.0
  %124 = vmatpush1.msra.mxu0 0.0
  %125 = vmatprep.subr.mxu0 0.0
  %126 = vmatpush1.msra.mxu0 0.0
  %127 = vmatprep.subr.mxu0 0.0
  %128 = vmatpush1.msra.mxu0 0.0
  %129 = vmatprep.subr.mxu0 0.0
  %130 = vmatpush1.msra.mxu0 0.0
  %131 = vmatprep.subr.mxu0 0.0
  %132 = vmatpush1.msra.mxu0 0.0
  %133 = vmatprep.subr.mxu0 0.0
  %134 = vmatpush1.msra.mxu0 0.0
  %135 = vmatprep.subr.mxu0 0.0
  %136 = vmatpush1.msra.mxu0 0.0
  %137 = vmatprep.subr.mxu0 0.0
  %138 = vmatpush1.msra.mxu0 0.0
  %139 = vmatprep.subr.mxu0 0.0
  %140 = vmatpush1.msra.mxu0 0.0
  %141 = vmatprep.subr.mxu0 0.0
  %142 = vmatpush1.msra.mxu0 0.0
  %143 = vmatprep.subr.mxu0 0.0
  %144 = vmatpush1.msra.mxu0 0.0
  %145 = vmatprep.subr.mxu0 0.0
  %146 = vmatpush1.msra.mxu0 %v113
  %147 = vmatprep.subr.mxu0 0.0
  %148 = vmatpush2.msra.mxu0 0.0
  %149 = vmatprep.subr.mxu0 0.0
  %150 = vmatpush2.msra.mxu0 0.0
  %151 = vmatprep.subr.mxu0 0.0
  %152 = vmatpush2.msra.mxu0 0.0
  %153 = vmatprep.subr.mxu0 0.0
  %154 = vmatpush2.msra.mxu0 0.0
  %155 = vmatprep.subr.mxu0 0.0
  %156 = vmatpush2.msra.mxu0 0.0
  %157 = vmatprep.subr.mxu0 0.0
  %158 = vmatpush2.msra.mxu0 0.0
  %159 = vmatprep.subr.mxu0 0.0
  %160 = vmatpush2.msra.mxu0 0.0
  %161 = vmatprep.subr.mxu0 0.0
  %162 = vmatpush2.msra.mxu0 0.0
  %163 = vmatprep.subr.mxu0 0.0
  %164 = vmatpush2.msra.mxu0 0.0
  %165 = vmatprep.subr.mxu0 0.0
  %166 = vmatpush2.msra.mxu0 0.0
  %167 = vmatprep.subr.mxu0 0.0
  %168 = vmatpush2.msra.mxu0 0.0
  %169 = vmatprep.subr.mxu0 0.0
  %170 = vmatpush2.msra.mxu0 0.0
  %171 = vmatprep.subr.mxu0 0.0
  %172 = vmatpush2.msra.mxu0 0.0
  %173 = vmatprep.subr.mxu0 0.0
  %174 = vmatpush2.msra.mxu0 0.0
  %175 = vmatprep.subr.mxu0 0.0
  %176 = vmatpush2.msra.mxu0 0.0
  %177 = vmatprep.subr.mxu0 0.0
  %178 = vmatpush2.msra.mxu0 0.0
  %179 = vmatprep.mubr.f32.mxu0 0.0
  %180 = vmatmul.mubr.f32.gmra.mxu0 %v107
  %v181 = vpop.f32.mrf.mxu0
  %v182 = vadd.f32 0.0, %v181
  %v183 = vpop.f32.mrf.mxu0
  %184 = vmatprep.mubr.f32.mxu0 0.0
  %185 = vmatmul.mubr.f32.gmra.mxu0 %v110
  %v186 = vpop.f32.mrf.mxu0
  %v187 = vadd.f32 0.0, %v186
  %v188 = vpop.f32.mrf.mxu0
  %189 = vdwg.mxu0
  %s190 = scalar_lea.vmem %s2, 16
  %191 = vst [vmem:[%s190] sm:$0xff] %v182
  %192 = vst [vmem:[%s190 + $0x8] sm:$0xff] %v187
  // Predicated region
  $region10: #{unet_forward.17} parent=0 // pred_check
    _
  $region11: #{unet_forward.17} parent=0 // pred_check_branch
    %194 = sbr.rel (0) target = $region13
  $region12: #{unet_forward.17} parent=0 // pred_region
    _
  $region13: #{unet_forward.17} parent=0 // pred_fallthru
    _
  // Predicated region
  $region14: #{unet_forward.17} parent=0 // pred_check
    _
  $region15: #{unet_forward.17} parent=0 // pred_check_branch
    %196 = sbr.rel (0) target = $region17
  $region16: #{unet_forward.17} parent=0 // pred_region
    _
  $region17: #{unet_forward.17} parent=0 // pred_fallthru
    _

// kernel: unet_forward.16
$region0: #{unet_forward.16}
  #allocation0 [shape = 'u32[]', space=smem, size = 0x4, offset = 0x4, fixed_abs, tag = 'smem constant byte address 0x4 - core index']
  #allocation1 [shape = 'u32[144,128]{1,0:T(1,128)}', space=vmem, size = 0x12000, scoped, tag = 'internal scratch']
  %s0 = inlined_call_operand.vmem [shape: bf16[8,3456], index: 0, kind: input, shape index: {}]
  %s1 = inlined_call_operand.vmem [shape: bf16[3456,128], index: 1, kind: input, shape index: {}]
  %s2 = inlined_call_operand.vmem [shape: f32[1,128], index: 2, kind: input, shape index: {}]
  %s3 = inlined_call_operand.vmem [shape: f32[1,128], index: 3, kind: input, shape index: {}]
  %s4 = inlined_call_operand.vmem [shape: f32[1,128], index: 4, kind: input, shape index: {}]
  %s5 = inlined_call_operand.vmem [shape: f32[8,128], index: 5, kind: output, shape index: {}]
  %s6 = sld [smem:[#allocation0]]
  $region30: #{unet_forward.16} parent=0
    _
  %s8 = ssub.s32 1, %s6
  %s9 = scalar_select 0, %s8, %s6
  // Predicated region
  $region2: #{unet_forward.16} parent=0 // pred_check
    _
  $region3: #{unet_forward.16} parent=0 // pred_check_branch
    %11 = sbr.rel (0) target = $region5
  $region4: #{unet_forward.16} parent=0 // pred_region
    _
  $region5: #{unet_forward.16} parent=0 // pred_fallthru
    _
  // Predicated region
  $region6: #{unet_forward.16} parent=0 // pred_check
    _
  $region7: #{unet_forward.16} parent=0 // pred_check_branch
    %13 = sbr.rel (0) target = $region9
  $region8: #{unet_forward.16} parent=0 // pred_region
    _
  $region9: #{unet_forward.16} parent=0 // pred_fallthru
    _
  // Predicated region
  $region10: #{unet_forward.16} parent=0 // pred_check
    _
  $region11: #{unet_forward.16} parent=0 // pred_check_branch
    %15 = sbr.rel (0) target = $region13
  $region12: #{unet_forward.16} parent=0 // pred_region
    _
  $region13: #{unet_forward.16} parent=0 // pred_fallthru
    _
  // Predicated region
  $region14: #{unet_forward.16} parent=0 // pred_check
    _
  $region15: #{unet_forward.16} parent=0 // pred_check_branch
    %17 = sbr.rel (0) target = $region17
  $region16: #{unet_forward.16} parent=0 // pred_region
    _
  $region17: #{unet_forward.16} parent=0 // pred_fallthru
    _
  // Predicated region
  $region18: #{unet_forward.16} parent=0 // pred_check
    _
  $region19: #{unet_forward.16} parent=0 // pred_check_branch
    %19 = sbr.rel (0) target = $region21
  $region20: #{unet_forward.16} parent=0 // pred_region
    _
  $region21: #{unet_forward.16} parent=0 // pred_fallthru
    _
  %v21 = vld [vmem:[%s0] sm:$0xff]
  %v22 = vld [vmem:[%s0 + $0x8] sm:$0xff]
  %v23 = vld [vmem:[%s0 + $0x10] sm:$0xff]
  %v24 = vld [vmem:[%s0 + $0x18] sm:$0xff]
  %v25 = vld [vmem:[%s0 + $0x20] sm:$0xff]
  %v26 = vld [vmem:[%s0 + $0x28] sm:$0xff]
  %v27 = vld [vmem:[%s0 + $0x30] sm:$0xff]
  %v28 = vld [vmem:[%s0 + $0x38] sm:$0xff]
  %v29 = vld [vmem:[%s0 + $0x40] sm:$0xff]
  %v30 = vld [vmem:[%s0 + $0x48] sm:$0xff]
  %v31 = vld [vmem:[%s0 + $0x50] sm:$0xff]
  %v32 = vld [vmem:[%s0 + $0x58] sm:$0xff]
  %v33 = vld [vmem:[%s0 + $0x60] sm:$0xff]
  %v34 = vld [vmem:[%s0 + $0x68] sm:$0xf]
  %v35 = vld [vmem:[%s1] sm:$0xf]
  %v36 = vld [vmem:[%s1 + $0x4] sm:$0xf]
  %v37 = vld [vmem:[%s1 + $0x8] sm:$0xf]
  %v38 = vld [vmem:[%s1 + $0xc] sm:$0xf]
  %v39 = vld [vmem:[%s1 + $0x10] sm:$0xf]
  %v40 = vld [vmem:[%s1 + $0x14] sm:$0xf]
  %v41 = vld [vmem:[%s1 + $0x18] sm:$0xf]
  %v42 = vld [vmem:[%s1 + $0x1c] sm:$0xf]
  %v43 = vld [vmem:[%s1 + $0x20] sm:$0xf]
  %v44 = vld [vmem:[%s1 + $0x24] sm:$0xf]
  %v45 = vld [vmem:[%s1 + $0x28] sm:$0xf]
  %v46 = vld [vmem:[%s1 + $0x2c] sm:$0xf]
  %v47 = vld [vmem:[%s1 + $0x30] sm:$0xf]
  %v48 = vld [vmem:[%s1 + $0x34] sm:$0xf]
  %v49 = vld [vmem:[%s1 + $0x38] sm:$0xf]
  %v50 = vld [vmem:[%s1 + $0x3c] sm:$0xf]
  %v51 = vld [vmem:[%s1 + $0x40] sm:$0xf]
  %v52 = vld [vmem:[%s1 + $0x44] sm:$0xf]
  %v53 = vld [vmem:[%s1 + $0x48] sm:$0xf]
  %v54 = vld [vmem:[%s1 + $0x4c] sm:$0xf]
  %v55 = vld [vmem:[%s1 + $0x50] sm:$0xf]
  %v56 = vld [vmem:[%s1 + $0x54] sm:$0xf]
  %v57 = vld [vmem:[%s1 + $0x58] sm:$0xf]
  %v58 = vld [vmem:[%s1 + $0x5c] sm:$0xf]
  %v59 = vld [vmem:[%s1 + $0x60] sm:$0xf]
  %v60 = vld [vmem:[%s1 + $0x64] sm:$0xf]
  %v61 = vld [vmem:[%s1 + $0x68] sm:$0xf]
  %v62 = vld [vmem:[%s1 + $0x6c] sm:$0xf]
  %v63 = vld [vmem:[%s1 + $0x70] sm:$0xf]
  %v64 = vld [vmem:[%s1 + $0x74] sm:$0xf]
  %v65 = vld [vmem:[%s1 + $0x78] sm:$0xf]
  %v66 = vld [vmem:[%s1 + $0x7c] sm:$0xf]
  %v67 = vld [vmem:[%s1 + $0x80] sm:$0xf]
  %v68 = vld [vmem:[%s1 + $0x84] sm:$0xf]
  %v69 = vld [vmem:[%s1 + $0x88] sm:$0xf]
  %v70 = vld [vmem:[%s1 + $0x8c] sm:$0xf]
  %v71 = vld [vmem:[%s1 + $0x90] sm:$0xf]
  %v72 = vld [vmem:[%s1 + $0x94] sm:$0xf]
  %v73 = vld [vmem:[%s1 + $0x98] sm:$0xf]
  %v74 = vld [vmem:[%s1 + $0x9c] sm:$0xf]
  %v75 = vld [vmem:[%s1 + $0xa0] sm:$0xf]
  %v76 = vld [vmem:[%s1 + $0xa4] sm:$0xf]
  %v77 = vld [vmem:[%s1 + $0xa8] sm:$0xf]
  %v78 = vld [vmem:[%s1 + $0xac] sm:$0xf]
  %v79 = vld [vmem:[%s1 + $0xb0] sm:$0xf]
  %v80 = vld [vmem:[%s1 + $0xb4] sm:$0xf]
  %v81 = vld [vmem:[%s1 + $0xb8] sm:$0xf]
  %v82 = vld [vmem:[%s1 + $0xbc] sm:$0xf]
  %v83 = vld [vmem:[%s1 + $0xc0] sm:$0xf]
  %v84 = vld [vmem:[%s1 + $0xc4] sm:$0xf]
  %v85 = vld [vmem:[%s1 + $0xc8] sm:$0xf]
  %v86 = vld [vmem:[%s1 + $0xcc] sm:$0xf]
  %v87 = vld [vmem:[%s1 + $0xd0] sm:$0xf]
  %v88 = vld [vmem:[%s1 + $0xd4] sm:$0xf]
  %v89 = vld [vmem:[%s1 + $0xd8] sm:$0xf]
  %v90 = vld [vmem:[%s1 + $0xdc] sm:$0xf]
  %v91 = vld [vmem:[%s1 + $0xe0] sm:$0xf]
  %v92 = vld [vmem:[%s1 + $0xe4] sm:$0xf]
  %v93 = vld [vmem:[%s1 + $0xe8] sm:$0xf]
  %v94 = vld [vmem:[%s1 + $0xec] sm:$0xf]
  %v95 = vld [vmem:[%s1 + $0xf0] sm:$0xf]
  %v96 = vld [vmem:[%s1 + $0xf4] sm:$0xf]
  %v97 = vld [vmem:[%s1 + $0xf8] sm:$0xf]
  %v98 = vld [vmem:[%s1 + $0xfc] sm:$0xf]
  %v99 = vld [vmem:[%s1 + $0x100] sm:$0xf]
  %v100 = vld [vmem:[%s1 + $0x104] sm:$0xf]
  %v101 = vld [vmem:[%s1 + $0x108] sm:$0xf]
  %v102 = vld [vmem:[%s1 + $0x10c] sm:$0xf]
  %v103 = vld [vmem:[%s1 + $0x110] sm:$0xf]
  %v104 = vld [vmem:[%s1 + $0x114] sm:$0xf]
  %v105 = vld [vmem:[%s1 + $0x118] sm:$0xf]
  %v106 = vld [vmem:[%s1 + $0x11c] sm:$0xf]
  %v107 = vld [vmem:[%s1 + $0x120] sm:$0xf]
  %v108 = vld [vmem:[%s1 + $0x124] sm:$0xf]
  %v109 = vld [vmem:[%s1 + $0x128] sm:$0xf]
  %v110 = vld [vmem:[%s1 + $0x12c] sm:$0xf]
  %v111 = vld [vmem:[%s1 + $0x130] sm:$0xf]
  %v112 = vld [vmem:[%s1 + $0x134] sm:$0xf]
  %v113 = vld [vmem:[%s1 + $0x138] sm:$0xf]
  %v114 = vld [vmem:[%s1 + $0x13c] sm:$0xf]
  %v115 = vld [vmem:[%s1 + $0x140] sm:$0xf]
  %v116 = vld [vmem:[%s1 + $0x144] sm:$0xf]
  %v117 = vld [vmem:[%s1 + $0x148] sm:$0xf]
  %v118 = vld [vmem:[%s1 + $0x14c] sm:$0xf]
  %v119 = vld [vmem:[%s1 + $0x150] sm:$0xf]
  %v120 = vld [vmem:[%s1 + $0x154] sm:$0xf]
  %v121 = vld [vmem:[%s1 + $0x158] sm:$0xf]
  %v122 = vld [vmem:[%s1 + $0x15c] sm:$0xf]
  %v123 = vld [vmem:[%s1 + $0x160] sm:$0xf]
  %v124 = vld [vmem:[%s1 + $0x164] sm:$0xf]
  %v125 = vld [vmem:[%s1 + $0x168] sm:$0xf]
  %v126 = vld [vmem:[%s1 + $0x16c] sm:$0xf]
  %v127 = vld [vmem:[%s1 + $0x170] sm:$0xf]
  %v128 = vld [vmem:[%s1 + $0x174] sm:$0xf]
  %v129 = vld [vmem:[%s1 + $0x178] sm:$0xf]
  %v130 = vld [vmem:[%s1 + $0x17c] sm:$0xf]
  %v131 = vld [vmem:[%s1 + $0x180] sm:$0xf]
  %v132 = vld [vmem:[%s1 + $0x184] sm:$0xf]
  %v133 = vld [vmem:[%s1 + $0x188] sm:$0xf]
  %v134 = vld [vmem:[%s1 + $0x18c] sm:$0xf]
  %v135 = vld [vmem:[%s1 + $0x190] sm:$0xf]
  %v136 = vld [vmem:[%s1 + $0x194] sm:$0xf]
  %v137 = vld [vmem:[%s1 + $0x198] sm:$0xf]
  %v138 = vld [vmem:[%s1 + $0x19c] sm:$0xf]
  %v139 = vld [vmem:[%s1 + $0x1a0] sm:$0xf]
  %v140 = vld [vmem:[%s1 + $0x1a4] sm:$0xf]
  %v141 = vld [vmem:[%s1 + $0x1a8] sm:$0xf]
  %v142 = vld [vmem:[%s1 + $0x1ac] sm:$0xf]
  %v143 = vld [vmem:[%s1 + $0x1b0] sm:$0xf]
  %v144 = vld [vmem:[%s1 + $0x1b4] sm:$0xf]
  %v145 = vld [vmem:[%s1 + $0x1b8] sm:$0xf]
  %v146 = vld [vmem:[%s1 + $0x1bc] sm:$0xf]
  %v147 = vld [vmem:[%s1 + $0x1c0] sm:$0xf]
  %v148 = vld [vmem:[%s1 + $0x1c4] sm:$0xf]
  %v149 = vld [vmem:[%s1 + $0x1c8] sm:$0xf]
  %v150 = vld [vmem:[%s1 + $0x1cc] sm:$0xf]
  %v151 = vld [vmem:[%s1 + $0x1d0] sm:$0xf]
  %v152 = vld [vmem:[%s1 + $0x1d4] sm:$0xf]
  %v153 = vld [vmem:[%s1 + $0x1d8] sm:$0xf]
  %v154 = vld [vmem:[%s1 + $0x1dc] sm:$0xf]
  %v155 = vld [vmem:[%s1 + $0x1e0] sm:$0xf]
  %v156 = vld [vmem:[%s1 + $0x1e4] sm:$0xf]
  %v157 = vld [vmem:[%s1 + $0x1e8] sm:$0xf]
  %v158 = vld [vmem:[%s1 + $0x1ec] sm:$0xf]
  %v159 = vld [vmem:[%s1 + $0x1f0] sm:$0xf]
  %v160 = vld [vmem:[%s1 + $0x1f4] sm:$0xf]
  %v161 = vld [vmem:[%s1 + $0x1f8] sm:$0xf]
  %v162 = vld [vmem:[%s1 + $0x1fc] sm:$0xf]
  %v163 = vld [vmem:[%s1 + $0x200] sm:$0xf]
  %v164 = vld [vmem:[%s1 + $0x204] sm:$0xf]
  %v165 = vld [vmem:[%s1 + $0x208] sm:$0xf]
  %v166 = vld [vmem:[%s1 + $0x20c] sm:$0xf]
  %v167 = vld [vmem:[%s1 + $0x210] sm:$0xf]
  %v168 = vld [vmem:[%s1 + $0x214] sm:$0xf]
  %v169 = vld [vmem:[%s1 + $0x218] sm:$0xf]
  %v170 = vld [vmem:[%s1 + $0x21c] sm:$0xf]
  %v171 = vld [vmem:[%s1 + $0x220] sm:$0xf]
  %v172 = vld [vmem:[%s1 + $0x224] sm:$0xf]
  %v173 = vld [vmem:[%s1 + $0x228] sm:$0xf]
  %v174 = vld [vmem:[%s1 + $0x22c] sm:$0xf]
  %v175 = vld [vmem:[%s1 + $0x230] sm:$0xf]
  %v176 = vld [vmem:[%s1 + $0x234] sm:$0xf]
  %v177 = vld [vmem:[%s1 + $0x238] sm:$0xf]
  %v178 = vld [vmem:[%s1 + $0x23c] sm:$0xf]
  %v179 = vld [vmem:[%s1 + $0x240] sm:$0xf]
  %v180 = vld [vmem:[%s1 + $0x244] sm:$0xf]
  %v181 = vld [vmem:[%s1 + $0x248] sm:$0xf]
  %v182 = vld [vmem:[%s1 + $0x24c] sm:$0xf]
  %v183 = vld [vmem:[%s1 + $0x250] sm:$0xf]
  %v184 = vld [vmem:[%s1 + $0x254] sm:$0xf]
  %v185 = vld [vmem:[%s1 + $0x258] sm:$0xf]
  %v186 = vld [vmem:[%s1 + $0x25c] sm:$0xf]
  %v187 = vld [vmem:[%s1 + $0x260] sm:$0xf]
  %v188 = vld [vmem:[%s1 + $0x264] sm:$0xf]
  %v189 = vld [vmem:[%s1 + $0x268] sm:$0xf]
  %v190 = vld [vmem:[%s1 + $0x26c] sm:$0xf]
  %v191 = vld [vmem:[%s1 + $0x270] sm:$0xf]
  %v192 = vld [vmem:[%s1 + $0x274] sm:$0xf]
  %v193 = vld [vmem:[%s1 + $0x278] sm:$0xf]
  %v194 = vld [vmem:[%s1 + $0x27c] sm:$0xf]
  %v195 = vld [vmem:[%s1 + $0x280] sm:$0xf]
  %v196 = vld [vmem:[%s1 + $0x284] sm:$0xf]
  %v197 = vld [vmem:[%s1 + $0x288] sm:$0xf]
  %v198 = vld [vmem:[%s1 + $0x28c] sm:$0xf]
  %v199 = vld [vmem:[%s1 + $0x290] sm:$0xf]
  %v200 = vld [vmem:[%s1 + $0x294] sm:$0xf]
  %v201 = vld [vmem:[%s1 + $0x298] sm:$0xf]
  %v202 = vld [vmem:[%s1 + $0x29c] sm:$0xf]
  %v203 = vld [vmem:[%s1 + $0x2a0] sm:$0xf]
  %v204 = vld [vmem:[%s1 + $0x2a4] sm:$0xf]
  %v205 = vld [vmem:[%s1 + $0x2a8] sm:$0xf]
  %v206 = vld [vmem:[%s1 + $0x2ac] sm:$0xf]
  %v207 = vld [vmem:[%s1 + $0x2b0] sm:$0xf]
  %v208 = vld [vmem:[%s1 + $0x2b4] sm:$0xf]
  %v209 = vld [vmem:[%s1 + $0x2b8] sm:$0xf]
  %v210 = vld [vmem:[%s1 + $0x2bc] sm:$0xf]
  %v211 = vld [vmem:[%s1 + $0x2c0] sm:$0xf]
  %v212 = vld [vmem:[%s1 + $0x2c4] sm:$0xf]
  %v213 = vld [vmem:[%s1 + $0x2c8] sm:$0xf]
  %v214 = vld [vmem:[%s1 + $0x2cc] sm:$0xf]
  %v215 = vld [vmem:[%s1 + $0x2d0] sm:$0xf]
  %v216 = vld [vmem:[%s1 + $0x2d4] sm:$0xf]
  %v217 = vld [vmem:[%s1 + $0x2d8] sm:$0xf]
  %v218 = vld [vmem:[%s1 + $0x2dc] sm:$0xf]
  %v219 = vld [vmem:[%s1 + $0x2e0] sm:$0xf]
  %v220 = vld [vmem:[%s1 + $0x2e4] sm:$0xf]
  %v221 = vld [vmem:[%s1 + $0x2e8] sm:$0xf]
  %v222 = vld [vmem:[%s1 + $0x2ec] sm:$0xf]
  %v223 = vld [vmem:[%s1 + $0x2f0] sm:$0xf]
  %v224 = vld [vmem:[%s1 + $0x2f4] sm:$0xf]
  %v225 = vld [vmem:[%s1 + $0x2f8] sm:$0xf]
  %v226 = vld [vmem:[%s1 + $0x2fc] sm:$0xf]
  %v227 = vld [vmem:[%s1 + $0x300] sm:$0xf]
  %v228 = vld [vmem:[%s1 + $0x304] sm:$0xf]
  %v229 = vld [vmem:[%s1 + $0x308] sm:$0xf]
  %v230 = vld [vmem:[%s1 + $0x30c] sm:$0xf]
  %v231 = vld [vmem:[%s1 + $0x310] sm:$0xf]
  %v232 = vld [vmem:[%s1 + $0x314] sm:$0xf]
  %v233 = vld [vmem:[%s1 + $0x318] sm:$0xf]
  %v234 = vld [vmem:[%s1 + $0x31c] sm:$0xf]
  %v235 = vld [vmem:[%s1 + $0x320] sm:$0xf]
  %v236 = vld [vmem:[%s1 + $0x324] sm:$0xf]
  %v237 = vld [vmem:[%s1 + $0x328] sm:$0xf]
  %v238 = vld [vmem:[%s1 + $0x32c] sm:$0xf]
  %v239 = vld [vmem:[%s1 + $0x330] sm:$0xf]
  %v240 = vld [vmem:[%s1 + $0x334] sm:$0xf]
  %v241 = vld [vmem:[%s1 + $0x338] sm:$0xf]
  %v242 = vld [vmem:[%s1 + $0x33c] sm:$0xf]
  %v243 = vld [vmem:[%s1 + $0x340] sm:$0xf]
  %v244 = vld [vmem:[%s1 + $0x344] sm:$0xf]
  %v245 = vld [vmem:[%s1 + $0x348] sm:$0xf]
  %v246 = vld [vmem:[%s1 + $0x34c] sm:$0xf]
  %v247 = vld [vmem:[%s1 + $0x350] sm:$0xf]
  %v248 = vld [vmem:[%s1 + $0x354] sm:$0xf]
  %v249 = vld [vmem:[%s1 + $0x358] sm:$0xf]
  %v250 = vld [vmem:[%s1 + $0x35c] sm:$0xf]
  %v251 = vld [vmem:[%s1 + $0x360] sm:$0xf]
  %v252 = vld [vmem:[%s1 + $0x364] sm:$0xf]
  %v253 = vld [vmem:[%s1 + $0x368] sm:$0xf]
  %v254 = vld [vmem:[%s1 + $0x36c] sm:$0xf]
  %v255 = vld [vmem:[%s1 + $0x370] sm:$0xf]
  %v256 = vld [vmem:[%s1 + $0x374] sm:$0xf]
  %v257 = vld [vmem:[%s1 + $0x378] sm:$0xf]
  %v258 = vld [vmem:[%s1 + $0x37c] sm:$0xf]
  %v259 = vld [vmem:[%s1 + $0x380] sm:$0xf]
  %v260 = vld [vmem:[%s1 + $0x384] sm:$0xf]
  %v261 = vld [vmem:[%s1 + $0x388] sm:$0xf]
  %v262 = vld [vmem:[%s1 + $0x38c] sm:$0xf]
  %v263 = vld [vmem:[%s1 + $0x390] sm:$0xf]
  %v264 = vld [vmem:[%s1 + $0x394] sm:$0xf]
  %v265 = vld [vmem:[%s1 + $0x398] sm:$0xf]
  %v266 = vld [vmem:[%s1 + $0x39c] sm:$0xf]
  %v267 = vld [vmem:[%s1 + $0x3a0] sm:$0xf]
  %v268 = vld [vmem:[%s1 + $0x3a4] sm:$0xf]
  %v269 = vld [vmem:[%s1 + $0x3a8] sm:$0xf]
  %v270 = vld [vmem:[%s1 + $0x3ac] sm:$0xf]
  %v271 = vld [vmem:[%s1 + $0x3b0] sm:$0xf]
  %v272 = vld [vmem:[%s1 + $0x3b4] sm:$0xf]
  %v273 = vld [vmem:[%s1 + $0x3b8] sm:$0xf]
  %v274 = vld [vmem:[%s1 + $0x3bc] sm:$0xf]
  %v275 = vld [vmem:[%s1 + $0x3c0] sm:$0xf]
  %v276 = vld [vmem:[%s1 + $0x3c4] sm:$0xf]
  %v277 = vld [vmem:[%s1 + $0x3c8] sm:$0xf]
  %v278 = vld [vmem:[%s1 + $0x3cc] sm:$0xf]
  %v279 = vld [vmem:[%s1 + $0x3d0] sm:$0xf]
  %v280 = vld [vmem:[%s1 + $0x3d4] sm:$0xf]
  %v281 = vld [vmem:[%s1 + $0x3d8] sm:$0xf]
  %v282 = vld [vmem:[%s1 + $0x3dc] sm:$0xf]
  %v283 = vld [vmem:[%s1 + $0x3e0] sm:$0xf]
  %v284 = vld [vmem:[%s1 + $0x3e4] sm:$0xf]
  %v285 = vld [vmem:[%s1 + $0x3e8] sm:$0xf]
  %v286 = vld [vmem:[%s1 + $0x3ec] sm:$0xf]
  %v287 = vld [vmem:[%s1 + $0x3f0] sm:$0xf]
  %v288 = vld [vmem:[%s1 + $0x3f4] sm:$0xf]
  %v289 = vld [vmem:[%s1 + $0x3f8] sm:$0xf]
  %v290 = vld [vmem:[%s1 + $0x3fc] sm:$0xf]
  %v291 = vld [vmem:[%s1 + $0x400] sm:$0xf]
  %v292 = vld [vmem:[%s1 + $0x404] sm:$0xf]
  %v293 = vld [vmem:[%s1 + $0x408] sm:$0xf]
  %v294 = vld [vmem:[%s1 + $0x40c] sm:$0xf]
  %v295 = vld [vmem:[%s1 + $0x410] sm:$0xf]
  %v296 = vld [vmem:[%s1 + $0x414] sm:$0xf]
  %v297 = vld [vmem:[%s1 + $0x418] sm:$0xf]
  %v298 = vld [vmem:[%s1 + $0x41c] sm:$0xf]
  %v299 = vld [vmem:[%s1 + $0x420] sm:$0xf]
  %v300 = vld [vmem:[%s1 + $0x424] sm:$0xf]
  %v301 = vld [vmem:[%s1 + $0x428] sm:$0xf]
  %v302 = vld [vmem:[%s1 + $0x42c] sm:$0xf]
  %v303 = vld [vmem:[%s1 + $0x430] sm:$0xf]
  %v304 = vld [vmem:[%s1 + $0x434] sm:$0xf]
  %v305 = vld [vmem:[%s1 + $0x438] sm:$0xf]
  %v306 = vld [vmem:[%s1 + $0x43c] sm:$0xf]
  %v307 = vld [vmem:[%s1 + $0x440] sm:$0xf]
  %v308 = vld [vmem:[%s1 + $0x444] sm:$0xf]
  %v309 = vld [vmem:[%s1 + $0x448] sm:$0xf]
  %v310 = vld [vmem:[%s1 + $0x44c] sm:$0xf]
  %v311 = vld [vmem:[%s1 + $0x450] sm:$0xf]
  %v312 = vld [vmem:[%s1 + $0x454] sm:$0xf]
  %v313 = vld [vmem:[%s1 + $0x458] sm:$0xf]
  %v314 = vld [vmem:[%s1 + $0x45c] sm:$0xf]
  %v315 = vld [vmem:[%s1 + $0x460] sm:$0xf]
  %v316 = vld [vmem:[%s1 + $0x464] sm:$0xf]
  %v317 = vld [vmem:[%s1 + $0x468] sm:$0xf]
  %v318 = vld [vmem:[%s1 + $0x46c] sm:$0xf]
  %v319 = vld [vmem:[%s1 + $0x470] sm:$0xf]
  %v320 = vld [vmem:[%s1 + $0x474] sm:$0xf]
  %v321 = vld [vmem:[%s1 + $0x478] sm:$0xf]
  %v322 = vld [vmem:[%s1 + $0x47c] sm:$0xf]
  %v323 = vld [vmem:[%s1 + $0x480] sm:$0xf]
  %v324 = vld [vmem:[%s1 + $0x484] sm:$0xf]
  %v325 = vld [vmem:[%s1 + $0x488] sm:$0xf]
  %v326 = vld [vmem:[%s1 + $0x48c] sm:$0xf]
  %v327 = vld [vmem:[%s1 + $0x490] sm:$0xf]
  %v328 = vld [vmem:[%s1 + $0x494] sm:$0xf]
  %v329 = vld [vmem:[%s1 + $0x498] sm:$0xf]
  %v330 = vld [vmem:[%s1 + $0x49c] sm:$0xf]
  %v331 = vld [vmem:[%s1 + $0x4a0] sm:$0xf]
  %v332 = vld [vmem:[%s1 + $0x4a4] sm:$0xf]
  %v333 = vld [vmem:[%s1 + $0x4a8] sm:$0xf]
  %v334 = vld [vmem:[%s1 + $0x4ac] sm:$0xf]
  %v335 = vld [vmem:[%s1 + $0x4b0] sm:$0xf]
  %v336 = vld [vmem:[%s1 + $0x4b4] sm:$0xf]
  %v337 = vld [vmem:[%s1 + $0x4b8] sm:$0xf]
  %v338 = vld [vmem:[%s1 + $0x4bc] sm:$0xf]
  %v339 = vld [vmem:[%s1 + $0x4c0] sm:$0xf]
  %v340 = vld [vmem:[%s1 + $0x4c4] sm:$0xf]
  %v341 = vld [vmem:[%s1 + $0x4c8] sm:$0xf]
  %v342 = vld [vmem:[%s1 + $0x4cc] sm:$0xf]
  %v343 = vld [vmem:[%s1 + $0x4d0] sm:$0xf]
  %v344 = vld [vmem:[%s1 + $0x4d4] sm:$0xf]
  %v345 = vld [vmem:[%s1 + $0x4d8] sm:$0xf]
  %v346 = vld [vmem:[%s1 + $0x4dc] sm:$0xf]
  %v347 = vld [vmem:[%s1 + $0x4e0] sm:$0xf]
  %v348 = vld [vmem:[%s1 + $0x4e4] sm:$0xf]
  %v349 = vld [vmem:[%s1 + $0x4e8] sm:$0xf]
  %v350 = vld [vmem:[%s1 + $0x4ec] sm:$0xf]
  %v351 = vld [vmem:[%s1 + $0x4f0] sm:$0xf]
  %v352 = vld [vmem:[%s1 + $0x4f4] sm:$0xf]
  %v353 = vld [vmem:[%s1 + $0x4f8] sm:$0xf]
  %v354 = vld [vmem:[%s1 + $0x4fc] sm:$0xf]
  %v355 = vld [vmem:[%s1 + $0x500] sm:$0xf]
  %v356 = vld [vmem:[%s1 + $0x504] sm:$0xf]
  %v357 = vld [vmem:[%s1 + $0x508] sm:$0xf]
  %v358 = vld [vmem:[%s1 + $0x50c] sm:$0xf]
  %v359 = vld [vmem:[%s1 + $0x510] sm:$0xf]
  %v360 = vld [vmem:[%s1 + $0x514] sm:$0xf]
  %v361 = vld [vmem:[%s1 + $0x518] sm:$0xf]
  %v362 = vld [vmem:[%s1 + $0x51c] sm:$0xf]
  %v363 = vld [vmem:[%s1 + $0x520] sm:$0xf]
  %v364 = vld [vmem:[%s1 + $0x524] sm:$0xf]
  %v365 = vld [vmem:[%s1 + $0x528] sm:$0xf]
  %v366 = vld [vmem:[%s1 + $0x52c] sm:$0xf]
  %v367 = vld [vmem:[%s1 + $0x530] sm:$0xf]
  %v368 = vld [vmem:[%s1 + $0x534] sm:$0xf]
  %v369 = vld [vmem:[%s1 + $0x538] sm:$0xf]
  %v370 = vld [vmem:[%s1 + $0x53c] sm:$0xf]
  %v371 = vld [vmem:[%s1 + $0x540] sm:$0xf]
  %v372 = vld [vmem:[%s1 + $0x544] sm:$0xf]
  %v373 = vld [vmem:[%s1 + $0x548] sm:$0xf]
  %v374 = vld [vmem:[%s1 + $0x54c] sm:$0xf]
  %v375 = vld [vmem:[%s1 + $0x550] sm:$0xf]
  %v376 = vld [vmem:[%s1 + $0x554] sm:$0xf]
  %v377 = vld [vmem:[%s1 + $0x558] sm:$0xf]
  %v378 = vld [vmem:[%s1 + $0x55c] sm:$0xf]
  %v379 = vld [vmem:[%s1 + $0x560] sm:$0xf]
  %v380 = vld [vmem:[%s1 + $0x564] sm:$0xf]
  %v381 = vld [vmem:[%s1 + $0x568] sm:$0xf]
  %v382 = vld [vmem:[%s1 + $0x56c] sm:$0xf]
  %v383 = vld [vmem:[%s1 + $0x570] sm:$0xf]
  %v384 = vld [vmem:[%s1 + $0x574] sm:$0xf]
  %v385 = vld [vmem:[%s1 + $0x578] sm:$0xf]
  %v386 = vld [vmem:[%s1 + $0x57c] sm:$0xf]
  %v387 = vld [vmem:[%s1 + $0x580] sm:$0xf]
  %v388 = vld [vmem:[%s1 + $0x584] sm:$0xf]
  %v389 = vld [vmem:[%s1 + $0x588] sm:$0xf]
  %v390 = vld [vmem:[%s1 + $0x58c] sm:$0xf]
  %v391 = vld [vmem:[%s1 + $0x590] sm:$0xf]
  %v392 = vld [vmem:[%s1 + $0x594] sm:$0xf]
  %v393 = vld [vmem:[%s1 + $0x598] sm:$0xf]
  %v394 = vld [vmem:[%s1 + $0x59c] sm:$0xf]
  %v395 = vld [vmem:[%s1 + $0x5a0] sm:$0xf]
  %v396 = vld [vmem:[%s1 + $0x5a4] sm:$0xf]
  %v397 = vld [vmem:[%s1 + $0x5a8] sm:$0xf]
  %v398 = vld [vmem:[%s1 + $0x5ac] sm:$0xf]
  %v399 = vld [vmem:[%s1 + $0x5b0] sm:$0xf]
  %v400 = vld [vmem:[%s1 + $0x5b4] sm:$0xf]
  %v401 = vld [vmem:[%s1 + $0x5b8] sm:$0xf]
  %v402 = vld [vmem:[%s1 + $0x5bc] sm:$0xf]
  %v403 = vld [vmem:[%s1 + $0x5c0] sm:$0xf]
  %v404 = vld [vmem:[%s1 + $0x5c4] sm:$0xf]
  %v405 = vld [vmem:[%s1 + $0x5c8] sm:$0xf]
  %v406 = vld [vmem:[%s1 + $0x5cc] sm:$0xf]
  %v407 = vld [vmem:[%s1 + $0x5d0] sm:$0xf]
  %v408 = vld [vmem:[%s1 + $0x5d4] sm:$0xf]
  %v409 = vld [vmem:[%s1 + $0x5d8] sm:$0xf]
  %v410 = vld [vmem:[%s1 + $0x5dc] sm:$0xf]
  %v411 = vld [vmem:[%s1 + $0x5e0] sm:$0xf]
  %v412 = vld [vmem:[%s1 + $0x5e4] sm:$0xf]
  %v413 = vld [vmem:[%s1 + $0x5e8] sm:$0xf]
  %v414 = vld [vmem:[%s1 + $0x5ec] sm:$0xf]
  %v415 = vld [vmem:[%s1 + $0x5f0] sm:$0xf]
  %v416 = vld [vmem:[%s1 + $0x5f4] sm:$0xf]
  %v417 = vld [vmem:[%s1 + $0x5f8] sm:$0xf]
  %v418 = vld [vmem:[%s1 + $0x5fc] sm:$0xf]
  %v419 = vld [vmem:[%s1 + $0x600] sm:$0xf]
  %v420 = vld [vmem:[%s1 + $0x604] sm:$0xf]
  %v421 = vld [vmem:[%s1 + $0x608] sm:$0xf]
  %v422 = vld [vmem:[%s1 + $0x60c] sm:$0xf]
  %v423 = vld [vmem:[%s1 + $0x610] sm:$0xf]
  %v424 = vld [vmem:[%s1 + $0x614] sm:$0xf]
  %v425 = vld [vmem:[%s1 + $0x618] sm:$0xf]
  %v426 = vld [vmem:[%s1 + $0x61c] sm:$0xf]
  %v427 = vld [vmem:[%s1 + $0x620] sm:$0xf]
  %v428 = vld [vmem:[%s1 + $0x624] sm:$0xf]
  %v429 = vld [vmem:[%s1 + $0x628] sm:$0xf]
  %v430 = vld [vmem:[%s1 + $0x62c] sm:$0xf]
  %v431 = vld [vmem:[%s1 + $0x630] sm:$0xf]
  %v432 = vld [vmem:[%s1 + $0x634] sm:$0xf]
  %v433 = vld [vmem:[%s1 + $0x638] sm:$0xf]
  %v434 = vld [vmem:[%s1 + $0x63c] sm:$0xf]
  %v435 = vld [vmem:[%s1 + $0x640] sm:$0xf]
  %v436 = vld [vmem:[%s1 + $0x644] sm:$0xf]
  %v437 = vld [vmem:[%s1 + $0x648] sm:$0xf]
  %v438 = vld [vmem:[%s1 + $0x64c] sm:$0xf]
  %v439 = vld [vmem:[%s1 + $0x650] sm:$0xf]
  %v440 = vld [vmem:[%s1 + $0x654] sm:$0xf]
  %v441 = vld [vmem:[%s1 + $0x658] sm:$0xf]
  %v442 = vld [vmem:[%s1 + $0x65c] sm:$0xf]
  %v443 = vld [vmem:[%s1 + $0x660] sm:$0xf]
  %v444 = vld [vmem:[%s1 + $0x664] sm:$0xf]
  %v445 = vld [vmem:[%s1 + $0x668] sm:$0xf]
  %v446 = vld [vmem:[%s1 + $0x66c] sm:$0xf]
  %v447 = vld [vmem:[%s1 + $0x670] sm:$0xf]
  %v448 = vld [vmem:[%s1 + $0x674] sm:$0xf]
  %v449 = vld [vmem:[%s1 + $0x678] sm:$0xf]
  %v450 = vld [vmem:[%s1 + $0x67c] sm:$0xf]
  %v451 = vld [vmem:[%s1 + $0x680] sm:$0xf]
  %v452 = vld [vmem:[%s1 + $0x684] sm:$0xf]
  %v453 = vld [vmem:[%s1 + $0x688] sm:$0xf]
  %v454 = vld [vmem:[%s1 + $0x68c] sm:$0xf]
  %v455 = vld [vmem:[%s1 + $0x690] sm:$0xf]
  %v456 = vld [vmem:[%s1 + $0x694] sm:$0xf]
  %v457 = vld [vmem:[%s1 + $0x698] sm:$0xf]
  %v458 = vld [vmem:[%s1 + $0x69c] sm:$0xf]
  %v459 = vld [vmem:[%s1 + $0x6a0] sm:$0xf]
  %v460 = vld [vmem:[%s1 + $0x6a4] sm:$0xf]
  %v461 = vld [vmem:[%s1 + $0x6a8] sm:$0xf]
  %v462 = vld [vmem:[%s1 + $0x6ac] sm:$0xf]
  %v463 = vld [vmem:[%s1 + $0x6b0] sm:$0xf]
  %v464 = vld [vmem:[%s1 + $0x6b4] sm:$0xf]
  %v465 = vld [vmem:[%s1 + $0x6b8] sm:$0xf]
  %v466 = vld [vmem:[%s1 + $0x6bc] sm:$0xf]
  %v467 = vld [vmem:[%s2] sm:$0x1]
  %v469 = vlaneseq
  %v470 = vshrl.u32 %v469, 7
  %v471 = vsub.s32 0, %v470
  %v472 = vrot.slane %v467, %v471
  %v488 = vunpack.c.l.b16 %v21
  %v489 = vunpack.c.h.b16 %v21
  %v490 = vunpack.c.l.b16 %v22
  %v491 = vunpack.c.h.b16 %v22
  %v492 = vunpack.c.l.b16 %v23
  %v493 = vunpack.c.h.b16 %v23
  %v494 = vunpack.c.l.b16 %v24
  %v495 = vunpack.c.h.b16 %v24
  %v496 = vunpack.c.l.b16 %v25
  %v497 = vunpack.c.h.b16 %v25
  %v498 = vunpack.c.l.b16 %v26
  %v499 = vunpack.c.h.b16 %v26
  %v500 = vunpack.c.l.b16 %v27
  %v501 = vunpack.c.h.b16 %v27
  %v502 = vunpack.c.l.b16 %v28
  %v503 = vunpack.c.h.b16 %v28
  %v504 = vunpack.c.l.b16 %v29
  %v505 = vunpack.c.h.b16 %v29
  %v506 = vunpack.c.l.b16 %v30
  %v507 = vunpack.c.h.b16 %v30
  %v508 = vunpack.c.l.b16 %v31
  %v509 = vunpack.c.h.b16 %v31
  %v510 = vunpack.c.l.b16 %v32
  %v511 = vunpack.c.h.b16 %v32
  %v512 = vunpack.c.l.b16 %v33
  %v513 = vunpack.c.h.b16 %v33
  %v514 = vunpack.c.l.b16 %v34
  %v515 = vpack.c.b16 %v488, %v488
  %v516 = vpack.c.b16 %v489, %v489
  %v517 = vpack.c.b16 %v490, %v490
  %v518 = vpack.c.b16 %v491, %v491
  %v519 = vpack.c.b16 %v492, %v492
  %v520 = vpack.c.b16 %v493, %v493
  %v521 = vpack.c.b16 %v494, %v494
  %v522 = vpack.c.b16 %v495, %v495
  %v523 = vpack.c.b16 %v496, %v496
  %v524 = vpack.c.b16 %v497, %v497
  %v525 = vpack.c.b16 %v498, %v498
  %v526 = vpack.c.b16 %v499, %v499
  %v527 = vpack.c.b16 %v500, %v500
  %v528 = vpack.c.b16 %v501, %v501
  %v529 = vpack.c.b16 %v502, %v502
  %v530 = vpack.c.b16 %v503, %v503
  %v531 = vpack.c.b16 %v504, %v504
  %v532 = vpack.c.b16 %v505, %v505
  %v533 = vpack.c.b16 %v506, %v506
  %v534 = vpack.c.b16 %v507, %v507
  %v535 = vpack.c.b16 %v508, %v508
  %v536 = vpack.c.b16 %v509, %v509
  %v537 = vpack.c.b16 %v510, %v510
  %v538 = vpack.c.b16 %v511, %v511
  %v539 = vpack.c.b16 %v512, %v512
  %v540 = vpack.c.b16 %v513, %v513
  %v541 = vpack.c.b16 %v514, %v514
  %v1001 = vunpack.c.l.b16 %v35
  %v1002 = vunpack.c.l.b16 %v36
  %v1003 = vunpack.c.l.b16 %v37
  %v1004 = vunpack.c.l.b16 %v38
  %v1005 = vunpack.c.l.b16 %v39
  %v1006 = vunpack.c.l.b16 %v40
  %v1007 = vunpack.c.l.b16 %v41
  %v1008 = vunpack.c.l.b16 %v42
  %v1009 = vunpack.c.l.b16 %v43
  %v1010 = vunpack.c.l.b16 %v44
  %v1011 = vunpack.c.l.b16 %v45
  %v1012 = vunpack.c.l.b16 %v46
  %v1013 = vunpack.c.l.b16 %v47
  %v1014 = vunpack.c.l.b16 %v48
  %v1015 = vunpack.c.l.b16 %v49
  %v1016 = vunpack.c.l.b16 %v50
  %v1017 = vunpack.c.l.b16 %v51
  %v1018 = vunpack.c.l.b16 %v52
  %v1019 = vunpack.c.l.b16 %v53
  %v1020 = vunpack.c.l.b16 %v54
  %v1021 = vunpack.c.l.b16 %v55
  %v1022 = vunpack.c.l.b16 %v56
  %v1023 = vunpack.c.l.b16 %v57
  %v1024 = vunpack.c.l.b16 %v58
  %v1025 = vunpack.c.l.b16 %v59
  %v1026 = vunpack.c.l.b16 %v60
  %v1027 = vunpack.c.l.b16 %v61
  %v1028 = vunpack.c.l.b16 %v62
  %v1029 = vunpack.c.l.b16 %v63
  %v1030 = vunpack.c.l.b16 %v64
  %v1031 = vunpack.c.l.b16 %v65
  %v1032 = vunpack.c.l.b16 %v66
  %v1033 = vunpack.c.l.b16 %v67
  %v1034 = vunpack.c.l.b16 %v68
  %v1035 = vunpack.c.l.b16 %v69
  %v1036 = vunpack.c.l.b16 %v70
  %v1037 = vunpack.c.l.b16 %v71
  %v1038 = vunpack.c.l.b16 %v72
  %v1039 = vunpack.c.l.b16 %v73
  %v1040 = vunpack.c.l.b16 %v74
  %v1041 = vunpack.c.l.b16 %v75
  %v1042 = vunpack.c.l.b16 %v76
  %v1043 = vunpack.c.l.b16 %v77
  %v1044 = vunpack.c.l.b16 %v78
  %v1045 = vunpack.c.l.b16 %v79
  %v1046 = vunpack.c.l.b16 %v80
  %v1047 = vunpack.c.l.b16 %v81
  %v1048 = vunpack.c.l.b16 %v82
  %v1049 = vunpack.c.l.b16 %v83
  %v1050 = vunpack.c.l.b16 %v84
  %v1051 = vunpack.c.l.b16 %v85
  %v1052 = vunpack.c.l.b16 %v86
  %v1053 = vunpack.c.l.b16 %v87
  %v1054 = vunpack.c.l.b16 %v88
  %v1055 = vunpack.c.l.b16 %v89
  %v1056 = vunpack.c.l.b16 %v90
  %v1057 = vunpack.c.l.b16 %v91
  %v1058 = vunpack.c.l.b16 %v92
  %v1059 = vunpack.c.l.b16 %v93
  %v1060 = vunpack.c.l.b16 %v94
  %v1061 = vunpack.c.l.b16 %v95
  %v1062 = vunpack.c.l.b16 %v96
  %v1063 = vunpack.c.l.b16 %v97
  %v1064 = vunpack.c.l.b16 %v98
  %v1065 = vunpack.c.l.b16 %v99
  %v1066 = vunpack.c.l.b16 %v100
  %v1067 = vunpack.c.l.b16 %v101
  %v1068 = vunpack.c.l.b16 %v102
  %v1069 = vunpack.c.l.b16 %v103
  %v1070 = vunpack.c.l.b16 %v104
  %v1071 = vunpack.c.l.b16 %v105
  %v1072 = vunpack.c.l.b16 %v106
  %v1073 = vunpack.c.l.b16 %v107
  %v1074 = vunpack.c.l.b16 %v108
  %v1075 = vunpack.c.l.b16 %v109
  %v1076 = vunpack.c.l.b16 %v110
  %v1077 = vunpack.c.l.b16 %v111
  %v1078 = vunpack.c.l.b16 %v112
  %v1079 = vunpack.c.l.b16 %v113
  %v1080 = vunpack.c.l.b16 %v114
  %v1081 = vunpack.c.l.b16 %v115
  %v1082 = vunpack.c.l.b16 %v116
  %v1083 = vunpack.c.l.b16 %v117
  %v1084 = vunpack.c.l.b16 %v118
  %v1085 = vunpack.c.l.b16 %v119
  %v1086 = vunpack.c.l.b16 %v120
  %v1087 = vunpack.c.l.b16 %v121
  %v1088 = vunpack.c.l.b16 %v122
  %v1089 = vunpack.c.l.b16 %v123
  %v1090 = vunpack.c.l.b16 %v124
  %v1091 = vunpack.c.l.b16 %v125
  %v1092 = vunpack.c.l.b16 %v126
  %v1093 = vunpack.c.l.b16 %v127
  %v1094 = vunpack.c.l.b16 %v128
  %v1095 = vunpack.c.l.b16 %v129
  %v1096 = vunpack.c.l.b16 %v130
  %v1097 = vunpack.c.l.b16 %v131
  %v1098 = vunpack.c.l.b16 %v132
  %v1099 = vunpack.c.l.b16 %v133
  %v1100 = vunpack.c.l.b16 %v134
  %v1101 = vunpack.c.l.b16 %v135
  %v1102 = vunpack.c.l.b16 %v136
  %v1103 = vunpack.c.l.b16 %v137
  %v1104 = vunpack.c.l.b16 %v138
  %v1105 = vunpack.c.l.b16 %v139
  %v1106 = vunpack.c.l.b16 %v140
  %v1107 = vunpack.c.l.b16 %v141
  %v1108 = vunpack.c.l.b16 %v142
  %v1109 = vunpack.c.l.b16 %v143
  %v1110 = vunpack.c.l.b16 %v144
  %v1111 = vunpack.c.l.b16 %v145
  %v1112 = vunpack.c.l.b16 %v146
  %v1113 = vunpack.c.l.b16 %v147
  %v1114 = vunpack.c.l.b16 %v148
  %v1115 = vunpack.c.l.b16 %v149
  %v1116 = vunpack.c.l.b16 %v150
  %v1117 = vunpack.c.l.b16 %v151
  %v1118 = vunpack.c.l.b16 %v152
  %v1119 = vunpack.c.l.b16 %v153
  %v1120 = vunpack.c.l.b16 %v154
  %v1121 = vunpack.c.l.b16 %v155
  %v1122 = vunpack.c.l.b16 %v156
  %v1123 = vunpack.c.l.b16 %v157
  %v1124 = vunpack.c.l.b16 %v158
  %v1125 = vunpack.c.l.b16 %v159
  %v1126 = vunpack.c.l.b16 %v160
  %v1127 = vunpack.c.l.b16 %v161
  %v1128 = vunpack.c.l.b16 %v162
  %v1129 = vunpack.c.l.b16 %v163
  %v1130 = vunpack.c.l.b16 %v164
  %v1131 = vunpack.c.l.b16 %v165
  %v1132 = vunpack.c.l.b16 %v166
  %v1133 = vunpack.c.l.b16 %v167
  %v1134 = vunpack.c.l.b16 %v168
  %v1135 = vunpack.c.l.b16 %v169
  %v1136 = vunpack.c.l.b16 %v170
  %v1137 = vunpack.c.l.b16 %v171
  %v1138 = vunpack.c.l.b16 %v172
  %v1139 = vunpack.c.l.b16 %v173
  %v1140 = vunpack.c.l.b16 %v174
  %v1141 = vunpack.c.l.b16 %v175
  %v1142 = vunpack.c.l.b16 %v176
  %v1143 = vunpack.c.l.b16 %v177
  %v1144 = vunpack.c.l.b16 %v178
  %v1145 = vunpack.c.l.b16 %v179
  %v1146 = vunpack.c.l.b16 %v180
  %v1147 = vunpack.c.l.b16 %v181
  %v1148 = vunpack.c.l.b16 %v182
  %v1149 = vunpack.c.l.b16 %v183
  %v1150 = vunpack.c.l.b16 %v184
  %v1151 = vunpack.c.l.b16 %v185
  %v1152 = vunpack.c.l.b16 %v186
  %v1153 = vunpack.c.l.b16 %v187
  %v1154 = vunpack.c.l.b16 %v188
  %v1155 = vunpack.c.l.b16 %v189
  %v1156 = vunpack.c.l.b16 %v190
  %v1157 = vunpack.c.l.b16 %v191
  %v1158 = vunpack.c.l.b16 %v192
  %v1159 = vunpack.c.l.b16 %v193
  %v1160 = vunpack.c.l.b16 %v194
  %v1161 = vunpack.c.l.b16 %v195
  %v1162 = vunpack.c.l.b16 %v196
  %v1163 = vunpack.c.l.b16 %v197
  %v1164 = vunpack.c.l.b16 %v198
  %v1165 = vunpack.c.l.b16 %v199
  %v1166 = vunpack.c.l.b16 %v200
  %v1167 = vunpack.c.l.b16 %v201
  %v1168 = vunpack.c.l.b16 %v202
  %v1169 = vunpack.c.l.b16 %v203
  %v1170 = vunpack.c.l.b16 %v204
  %v1171 = vunpack.c.l.b16 %v205
  %v1172 = vunpack.c.l.b16 %v206
  %v1173 = vunpack.c.l.b16 %v207
  %v1174 = vunpack.c.l.b16 %v208
  %v1175 = vunpack.c.l.b16 %v209
  %v1176 = vunpack.c.l.b16 %v210
  %v1177 = vunpack.c.l.b16 %v211
  %v1178 = vunpack.c.l.b16 %v212
  %v1179 = vunpack.c.l.b16 %v213
  %v1180 = vunpack.c.l.b16 %v214
  %v1181 = vunpack.c.l.b16 %v215
  %v1182 = vunpack.c.l.b16 %v216
  %v1183 = vunpack.c.l.b16 %v217
  %v1184 = vunpack.c.l.b16 %v218
  %v1185 = vunpack.c.l.b16 %v219
  %v1186 = vunpack.c.l.b16 %v220
  %v1187 = vunpack.c.l.b16 %v221
  %v1188 = vunpack.c.l.b16 %v222
  %v1189 = vunpack.c.l.b16 %v223
  %v1190 = vunpack.c.l.b16 %v224
  %v1191 = vunpack.c.l.b16 %v225
  %v1192 = vunpack.c.l.b16 %v226
  %v1193 = vunpack.c.l.b16 %v227
  %v1194 = vunpack.c.l.b16 %v228
  %v1195 = vunpack.c.l.b16 %v229
  %v1196 = vunpack.c.l.b16 %v230
  %v1197 = vunpack.c.l.b16 %v231
  %v1198 = vunpack.c.l.b16 %v232
  %v1199 = vunpack.c.l.b16 %v233
  %v1200 = vunpack.c.l.b16 %v234
  %v1201 = vunpack.c.l.b16 %v235
  %v1202 = vunpack.c.l.b16 %v236
  %v1203 = vunpack.c.l.b16 %v237
  %v1204 = vunpack.c.l.b16 %v238
  %v1205 = vunpack.c.l.b16 %v239
  %v1206 = vunpack.c.l.b16 %v240
  %v1207 = vunpack.c.l.b16 %v241
  %v1208 = vunpack.c.l.b16 %v242
  %v1209 = vunpack.c.l.b16 %v243
  %v1210 = vunpack.c.l.b16 %v244
  %v1211 = vunpack.c.l.b16 %v245
  %v1212 = vunpack.c.l.b16 %v246
  %v1213 = vunpack.c.l.b16 %v247
  %v1214 = vunpack.c.l.b16 %v248
  %v1215 = vunpack.c.l.b16 %v249
  %v1216 = vunpack.c.l.b16 %v250
  %v1217 = vunpack.c.l.b16 %v251
  %v1218 = vunpack.c.l.b16 %v252
  %v1219 = vunpack.c.l.b16 %v253
  %v1220 = vunpack.c.l.b16 %v254
  %v1221 = vunpack.c.l.b16 %v255
  %v1222 = vunpack.c.l.b16 %v256
  %v1223 = vunpack.c.l.b16 %v257
  %v1224 = vunpack.c.l.b16 %v258
  %v1225 = vunpack.c.l.b16 %v259
  %v1226 = vunpack.c.l.b16 %v260
  %v1227 = vunpack.c.l.b16 %v261
  %v1228 = vunpack.c.l.b16 %v262
  %v1229 = vunpack.c.l.b16 %v263
  %v1230 = vunpack.c.l.b16 %v264
  %v1231 = vunpack.c.l.b16 %v265
  %v1232 = vunpack.c.l.b16 %v266
  %v1233 = vunpack.c.l.b16 %v267
  %v1234 = vunpack.c.l.b16 %v268
  %v1235 = vunpack.c.l.b16 %v269
  %v1236 = vunpack.c.l.b16 %v270
  %v1237 = vunpack.c.l.b16 %v271
  %v1238 = vunpack.c.l.b16 %v272
  %v1239 = vunpack.c.l.b16 %v273
  %v1240 = vunpack.c.l.b16 %v274
  %v1241 = vunpack.c.l.b16 %v275
  %v1242 = vunpack.c.l.b16 %v276
  %v1243 = vunpack.c.l.b16 %v277
  %v1244 = vunpack.c.l.b16 %v278
  %v1245 = vunpack.c.l.b16 %v279
  %v1246 = vunpack.c.l.b16 %v280
  %v1247 = vunpack.c.l.b16 %v281
  %v1248 = vunpack.c.l.b16 %v282
  %v1249 = vunpack.c.l.b16 %v283
  %v1250 = vunpack.c.l.b16 %v284
  %v1251 = vunpack.c.l.b16 %v285
  %v1252 = vunpack.c.l.b16 %v286
  %v1253 = vunpack.c.l.b16 %v287
  %v1254 = vunpack.c.l.b16 %v288
  %v1255 = vunpack.c.l.b16 %v289
  %v1256 = vunpack.c.l.b16 %v290
  %v1257 = vunpack.c.l.b16 %v291
  %v1258 = vunpack.c.l.b16 %v292
  %v1259 = vunpack.c.l.b16 %v293
  %v1260 = vunpack.c.l.b16 %v294
  %v1261 = vunpack.c.l.b16 %v295
  %v1262 = vunpack.c.l.b16 %v296
  %v1263 = vunpack.c.l.b16 %v297
  %v1264 = vunpack.c.l.b16 %v298
  %v1265 = vunpack.c.l.b16 %v299
  %v1266 = vunpack.c.l.b16 %v300
  %v1267 = vunpack.c.l.b16 %v301
  %v1268 = vunpack.c.l.b16 %v302
  %v1269 = vunpack.c.l.b16 %v303
  %v1270 = vunpack.c.l.b16 %v304
  %v1271 = vunpack.c.l.b16 %v305
  %v1272 = vunpack.c.l.b16 %v306
  %v1273 = vunpack.c.l.b16 %v307
  %v1274 = vunpack.c.l.b16 %v308
  %v1275 = vunpack.c.l.b16 %v309
  %v1276 = vunpack.c.l.b16 %v310
  %v1277 = vunpack.c.l.b16 %v311
  %v1278 = vunpack.c.l.b16 %v312
  %v1279 = vunpack.c.l.b16 %v313
  %v1280 = vunpack.c.l.b16 %v314
  %v1281 = vunpack.c.l.b16 %v315
  %v1282 = vunpack.c.l.b16 %v316
  %v1283 = vunpack.c.l.b16 %v317
  %v1284 = vunpack.c.l.b16 %v318
  %v1285 = vunpack.c.l.b16 %v319
  %v1286 = vunpack.c.l.b16 %v320
  %v1287 = vunpack.c.l.b16 %v321
  %v1288 = vunpack.c.l.b16 %v322
  %v1289 = vunpack.c.l.b16 %v323
  %v1290 = vunpack.c.l.b16 %v324
  %v1291 = vunpack.c.l.b16 %v325
  %v1292 = vunpack.c.l.b16 %v326
  %v1293 = vunpack.c.l.b16 %v327
  %v1294 = vunpack.c.l.b16 %v328
  %v1295 = vunpack.c.l.b16 %v329
  %v1296 = vunpack.c.l.b16 %v330
  %v1297 = vunpack.c.l.b16 %v331
  %v1298 = vunpack.c.l.b16 %v332
  %v1299 = vunpack.c.l.b16 %v333
  %v1300 = vunpack.c.l.b16 %v334
  %v1301 = vunpack.c.l.b16 %v335
  %v1302 = vunpack.c.l.b16 %v336
  %v1303 = vunpack.c.l.b16 %v337
  %v1304 = vunpack.c.l.b16 %v338
  %v1305 = vunpack.c.l.b16 %v339
  %v1306 = vunpack.c.l.b16 %v340
  %v1307 = vunpack.c.l.b16 %v341
  %v1308 = vunpack.c.l.b16 %v342
  %v1309 = vunpack.c.l.b16 %v343
  %v1310 = vunpack.c.l.b16 %v344
  %v1311 = vunpack.c.l.b16 %v345
  %v1312 = vunpack.c.l.b16 %v346
  %v1313 = vunpack.c.l.b16 %v347
  %v1314 = vunpack.c.l.b16 %v348
  %v1315 = vunpack.c.l.b16 %v349
  %v1316 = vunpack.c.l.b16 %v350
  %v1317 = vunpack.c.l.b16 %v351
  %v1318 = vunpack.c.l.b16 %v352
  %v1319 = vunpack.c.l.b16 %v353
  %v1320 = vunpack.c.l.b16 %v354
  %v1321 = vunpack.c.l.b16 %v355
  %v1322 = vunpack.c.l.b16 %v356
  %v1323 = vunpack.c.l.b16 %v357
  %v1324 = vunpack.c.l.b16 %v358
  %v1325 = vunpack.c.l.b16 %v359
  %v1326 = vunpack.c.l.b16 %v360
  %v1327 = vunpack.c.l.b16 %v361
  %v1328 = vunpack.c.l.b16 %v362
  %v1329 = vunpack.c.l.b16 %v363
  %v1330 = vunpack.c.l.b16 %v364
  %v1331 = vunpack.c.l.b16 %v365
  %v1332 = vunpack.c.l.b16 %v366
  %v1333 = vunpack.c.l.b16 %v367
  %v1334 = vunpack.c.l.b16 %v368
  %v1335 = vunpack.c.l.b16 %v369
  %v1336 = vunpack.c.l.b16 %v370
  %v1337 = vunpack.c.l.b16 %v371
  %v1338 = vunpack.c.l.b16 %v372
  %v1339 = vunpack.c.l.b16 %v373
  %v1340 = vunpack.c.l.b16 %v374
  %v1341 = vunpack.c.l.b16 %v375
  %v1342 = vunpack.c.l.b16 %v376
  %v1343 = vunpack.c.l.b16 %v377
  %v1344 = vunpack.c.l.b16 %v378
  %v1345 = vunpack.c.l.b16 %v379
  %v1346 = vunpack.c.l.b16 %v380
  %v1347 = vunpack.c.l.b16 %v381
  %v1348 = vunpack.c.l.b16 %v382
  %v1349 = vunpack.c.l.b16 %v383
  %v1350 = vunpack.c.l.b16 %v384
  %v1351 = vunpack.c.l.b16 %v385
  %v1352 = vunpack.c.l.b16 %v386
  %v1353 = vunpack.c.l.b16 %v387
  %v1354 = vunpack.c.l.b16 %v388
  %v1355 = vunpack.c.l.b16 %v389
  %v1356 = vunpack.c.l.b16 %v390
  %v1357 = vunpack.c.l.b16 %v391
  %v1358 = vunpack.c.l.b16 %v392
  %v1359 = vunpack.c.l.b16 %v393
  %v1360 = vunpack.c.l.b16 %v394
  %v1361 = vunpack.c.l.b16 %v395
  %v1362 = vunpack.c.l.b16 %v396
  %v1363 = vunpack.c.l.b16 %v397
  %v1364 = vunpack.c.l.b16 %v398
  %v1365 = vunpack.c.l.b16 %v399
  %v1366 = vunpack.c.l.b16 %v400
  %v1367 = vunpack.c.l.b16 %v401
  %v1368 = vunpack.c.l.b16 %v402
  %v1369 = vunpack.c.l.b16 %v403
  %v1370 = vunpack.c.l.b16 %v404
  %v1371 = vunpack.c.l.b16 %v405
  %v1372 = vunpack.c.l.b16 %v406
  %v1373 = vunpack.c.l.b16 %v407
  %v1374 = vunpack.c.l.b16 %v408
  %v1375 = vunpack.c.l.b16 %v409
  %v1376 = vunpack.c.l.b16 %v410
  %v1377 = vunpack.c.l.b16 %v411
  %v1378 = vunpack.c.l.b16 %v412
  %v1379 = vunpack.c.l.b16 %v413
  %v1380 = vunpack.c.l.b16 %v414
  %v1381 = vunpack.c.l.b16 %v415
  %v1382 = vunpack.c.l.b16 %v416
  %v1383 = vunpack.c.l.b16 %v417
  %v1384 = vunpack.c.l.b16 %v418
  %v1385 = vunpack.c.l.b16 %v419
  %v1386 = vunpack.c.l.b16 %v420
  %v1387 = vunpack.c.l.b16 %v421
  %v1388 = vunpack.c.l.b16 %v422
  %v1389 = vunpack.c.l.b16 %v423
  %v1390 = vunpack.c.l.b16 %v424
  %v1391 = vunpack.c.l.b16 %v425
  %v1392 = vunpack.c.l.b16 %v426
  %v1393 = vunpack.c.l.b16 %v427
  %v1394 = vunpack.c.l.b16 %v428
  %v1395 = vunpack.c.l.b16 %v429
  %v1396 = vunpack.c.l.b16 %v430
  %v1397 = vunpack.c.l.b16 %v431
  %v1398 = vunpack.c.l.b16 %v432
  %v1399 = vunpack.c.l.b16 %v433
  %v1400 = vunpack.c.l.b16 %v434
  %v1401 = vunpack.c.l.b16 %v435
  %v1402 = vunpack.c.l.b16 %v436
  %v1403 = vunpack.c.l.b16 %v437
  %v1404 = vunpack.c.l.b16 %v438
  %v1405 = vunpack.c.l.b16 %v439
  %v1406 = vunpack.c.l.b16 %v440
  %v1407 = vunpack.c.l.b16 %v441
  %v1408 = vunpack.c.l.b16 %v442
  %v1409 = vunpack.c.l.b16 %v443
  %v1410 = vunpack.c.l.b16 %v444
  %v1411 = vunpack.c.l.b16 %v445
  %v1412 = vunpack.c.l.b16 %v446
  %v1413 = vunpack.c.l.b16 %v447
  %v1414 = vunpack.c.l.b16 %v448
  %v1415 = vunpack.c.l.b16 %v449
  %v1416 = vunpack.c.l.b16 %v450
  %v1417 = vunpack.c.l.b16 %v451
  %v1418 = vunpack.c.l.b16 %v452
  %v1419 = vunpack.c.l.b16 %v453
  %v1420 = vunpack.c.l.b16 %v454
  %v1421 = vunpack.c.l.b16 %v455
  %v1422 = vunpack.c.l.b16 %v456
  %v1423 = vunpack.c.l.b16 %v457
  %v1424 = vunpack.c.l.b16 %v458
  %v1425 = vunpack.c.l.b16 %v459
  %v1426 = vunpack.c.l.b16 %v460
  %v1427 = vunpack.c.l.b16 %v461
  %v1428 = vunpack.c.l.b16 %v462
  %v1429 = vunpack.c.l.b16 %v463
  %v1430 = vunpack.c.l.b16 %v464
  %v1431 = vunpack.c.l.b16 %v465
  %v1432 = vunpack.c.l.b16 %v466
  %v1433 = vpack.c.b16 %v1002, %v1001
  %v1434 = vpack.c.b16 %v1004, %v1003
  %v1435 = vpack.c.b16 %v1006, %v1005
  %v1436 = vpack.c.b16 %v1008, %v1007
  %v1437 = vpack.c.b16 %v1010, %v1009
  %v1438 = vpack.c.b16 %v1012, %v1011
  %v1439 = vpack.c.b16 %v1014, %v1013
  %v1440 = vpack.c.b16 %v1016, %v1015
  %v1441 = vpack.c.b16 %v1018, %v1017
  %v1442 = vpack.c.b16 %v1020, %v1019
  %v1443 = vpack.c.b16 %v1022, %v1021
  %v1444 = vpack.c.b16 %v1024, %v1023
  %v1445 = vpack.c.b16 %v1026, %v1025
  %v1446 = vpack.c.b16 %v1028, %v1027
  %v1447 = vpack.c.b16 %v1030, %v1029
  %v1448 = vpack.c.b16 %v1032, %v1031
  %v1449 = vpack.c.b16 %v1034, %v1033
  %v1450 = vpack.c.b16 %v1036, %v1035
  %v1451 = vpack.c.b16 %v1038, %v1037
  %v1452 = vpack.c.b16 %v1040, %v1039
  %v1453 = vpack.c.b16 %v1042, %v1041
  %v1454 = vpack.c.b16 %v1044, %v1043
  %v1455 = vpack.c.b16 %v1046, %v1045
  %v1456 = vpack.c.b16 %v1048, %v1047
  %v1457 = vpack.c.b16 %v1050, %v1049
  %v1458 = vpack.c.b16 %v1052, %v1051
  %v1459 = vpack.c.b16 %v1054, %v1053
  %v1460 = vpack.c.b16 %v1056, %v1055
  %v1461 = vpack.c.b16 %v1058, %v1057
  %v1462 = vpack.c.b16 %v1060, %v1059
  %v1463 = vpack.c.b16 %v1062, %v1061
  %v1464 = vpack.c.b16 %v1064, %v1063
  %v1465 = vpack.c.b16 %v1066, %v1065
  %v1466 = vpack.c.b16 %v1068, %v1067
  %v1467 = vpack.c.b16 %v1070, %v1069
  %v1468 = vpack.c.b16 %v1072, %v1071
  %v1469 = vpack.c.b16 %v1074, %v1073
  %v1470 = vpack.c.b16 %v1076, %v1075
  %v1471 = vpack.c.b16 %v1078, %v1077
  %v1472 = vpack.c.b16 %v1080, %v1079
  %v1473 = vpack.c.b16 %v1082, %v1081
  %v1474 = vpack.c.b16 %v1084, %v1083
  %v1475 = vpack.c.b16 %v1086, %v1085
  %v1476 = vpack.c.b16 %v1088, %v1087
  %v1477 = vpack.c.b16 %v1090, %v1089
  %v1478 = vpack.c.b16 %v1092, %v1091
  %v1479 = vpack.c.b16 %v1094, %v1093
  %v1480 = vpack.c.b16 %v1096, %v1095
  %v1481 = vpack.c.b16 %v1098, %v1097
  %v1482 = vpack.c.b16 %v1100, %v1099
  %v1483 = vpack.c.b16 %v1102, %v1101
  %v1484 = vpack.c.b16 %v1104, %v1103
  %v1485 = vpack.c.b16 %v1106, %v1105
  %v1486 = vpack.c.b16 %v1108, %v1107
  %v1487 = vpack.c.b16 %v1110, %v1109
  %v1488 = vpack.c.b16 %v1112, %v1111
  %v1489 = vpack.c.b16 %v1114, %v1113
  %v1490 = vpack.c.b16 %v1116, %v1115
  %v1491 = vpack.c.b16 %v1118, %v1117
  %v1492 = vpack.c.b16 %v1120, %v1119
  %v1493 = vpack.c.b16 %v1122, %v1121
  %v1494 = vpack.c.b16 %v1124, %v1123
  %v1495 = vpack.c.b16 %v1126, %v1125
  %v1496 = vpack.c.b16 %v1128, %v1127
  %v1497 = vpack.c.b16 %v1130, %v1129
  %v1498 = vpack.c.b16 %v1132, %v1131
  %v1499 = vpack.c.b16 %v1134, %v1133
  %v1500 = vpack.c.b16 %v1136, %v1135
  %v1501 = vpack.c.b16 %v1138, %v1137
  %v1502 = vpack.c.b16 %v1140, %v1139
  %v1503 = vpack.c.b16 %v1142, %v1141
  %v1504 = vpack.c.b16 %v1144, %v1143
  %v1505 = vpack.c.b16 %v1146, %v1145
  %v1506 = vpack.c.b16 %v1148, %v1147
  %v1507 = vpack.c.b16 %v1150, %v1149
  %v1508 = vpack.c.b16 %v1152, %v1151
  %v1509 = vpack.c.b16 %v1154, %v1153
  %v1510 = vpack.c.b16 %v1156, %v1155
  %v1511 = vpack.c.b16 %v1158, %v1157
  %v1512 = vpack.c.b16 %v1160, %v1159
  %v1513 = vpack.c.b16 %v1162, %v1161
  %v1514 = vpack.c.b16 %v1164, %v1163
  %v1515 = vpack.c.b16 %v1166, %v1165
  %v1516 = vpack.c.b16 %v1168, %v1167
  %v1517 = vpack.c.b16 %v1170, %v1169
  %v1518 = vpack.c.b16 %v1172, %v1171
  %v1519 = vpack.c.b16 %v1174, %v1173
  %v1520 = vpack.c.b16 %v1176, %v1175
  %v1521 = vpack.c.b16 %v1178, %v1177
  %v1522 = vpack.c.b16 %v1180, %v1179
  %v1523 = vpack.c.b16 %v1182, %v1181
  %v1524 = vpack.c.b16 %v1184, %v1183
  %v1525 = vpack.c.b16 %v1186, %v1185
  %v1526 = vpack.c.b16 %v1188, %v1187
  %v1527 = vpack.c.b16 %v1190, %v1189
  %v1528 = vpack.c.b16 %v1192, %v1191
  %v1529 = vpack.c.b16 %v1194, %v1193
  %v1530 = vpack.c.b16 %v1196, %v1195
  %v1531 = vpack.c.b16 %v1198, %v1197
  %v1532 = vpack.c.b16 %v1200, %v1199
  %v1533 = vpack.c.b16 %v1202, %v1201
  %v1534 = vpack.c.b16 %v1204, %v1203
  %v1535 = vpack.c.b16 %v1206, %v1205
  %v1536 = vpack.c.b16 %v1208, %v1207
  %v1537 = vpack.c.b16 %v1210, %v1209
  %v1538 = vpack.c.b16 %v1212, %v1211
  %v1539 = vpack.c.b16 %v1214, %v1213
  %v1540 = vpack.c.b16 %v1216, %v1215
  %v1541 = vpack.c.b16 %v1218, %v1217
  %v1542 = vpack.c.b16 %v1220, %v1219
  %v1543 = vpack.c.b16 %v1222, %v1221
  %v1544 = vpack.c.b16 %v1224, %v1223
  %v1545 = vpack.c.b16 %v1226, %v1225
  %v1546 = vpack.c.b16 %v1228, %v1227
  %v1547 = vpack.c.b16 %v1230, %v1229
  %v1548 = vpack.c.b16 %v1232, %v1231
  %v1549 = vpack.c.b16 %v1234, %v1233
  %v1550 = vpack.c.b16 %v1236, %v1235
  %v1551 = vpack.c.b16 %v1238, %v1237
  %v1552 = vpack.c.b16 %v1240, %v1239
  %v1553 = vpack.c.b16 %v1242, %v1241
  %v1554 = vpack.c.b16 %v1244, %v1243
  %v1555 = vpack.c.b16 %v1246, %v1245
  %v1556 = vpack.c.b16 %v1248, %v1247
  %v1557 = vpack.c.b16 %v1250, %v1249
  %v1558 = vpack.c.b16 %v1252, %v1251
  %v1559 = vpack.c.b16 %v1254, %v1253
  %v1560 = vpack.c.b16 %v1256, %v1255
  %v1561 = vpack.c.b16 %v1258, %v1257
  %v1562 = vpack.c.b16 %v1260, %v1259
  %v1563 = vpack.c.b16 %v1262, %v1261
  %v1564 = vpack.c.b16 %v1264, %v1263
  %v1565 = vpack.c.b16 %v1266, %v1265
  %v1566 = vpack.c.b16 %v1268, %v1267
  %v1567 = vpack.c.b16 %v1270, %v1269
  %v1568 = vpack.c.b16 %v1272, %v1271
  %v1569 = vpack.c.b16 %v1274, %v1273
  %v1570 = vpack.c.b16 %v1276, %v1275
  %v1571 = vpack.c.b16 %v1278, %v1277
  %v1572 = vpack.c.b16 %v1280, %v1279
  %v1573 = vpack.c.b16 %v1282, %v1281
  %v1574 = vpack.c.b16 %v1284, %v1283
  %v1575 = vpack.c.b16 %v1286, %v1285
  %v1576 = vpack.c.b16 %v1288, %v1287
  %v1577 = vpack.c.b16 %v1290, %v1289
  %v1578 = vpack.c.b16 %v1292, %v1291
  %v1579 = vpack.c.b16 %v1294, %v1293
  %v1580 = vpack.c.b16 %v1296, %v1295
  %v1581 = vpack.c.b16 %v1298, %v1297
  %v1582 = vpack.c.b16 %v1300, %v1299
  %v1583 = vpack.c.b16 %v1302, %v1301
  %v1584 = vpack.c.b16 %v1304, %v1303
  %v1585 = vpack.c.b16 %v1306, %v1305
  %v1586 = vpack.c.b16 %v1308, %v1307
  %v1587 = vpack.c.b16 %v1310, %v1309
  %v1588 = vpack.c.b16 %v1312, %v1311
  %v1589 = vpack.c.b16 %v1314, %v1313
  %v1590 = vpack.c.b16 %v1316, %v1315
  %v1591 = vpack.c.b16 %v1318, %v1317
  %v1592 = vpack.c.b16 %v1320, %v1319
  %v1593 = vpack.c.b16 %v1322, %v1321
  %v1594 = vpack.c.b16 %v1324, %v1323
  %v1595 = vpack.c.b16 %v1326, %v1325
  %v1596 = vpack.c.b16 %v1328, %v1327
  %v1597 = vpack.c.b16 %v1330, %v1329
  %v1598 = vpack.c.b16 %v1332, %v1331
  %v1599 = vpack.c.b16 %v1334, %v1333
  %v1600 = vpack.c.b16 %v1336, %v1335
  %v1601 = vpack.c.b16 %v1338, %v1337
  %v1602 = vpack.c.b16 %v1340, %v1339
  %v1603 = vpack.c.b16 %v1342, %v1341
  %v1604 = vpack.c.b16 %v1344, %v1343
  %v1605 = vpack.c.b16 %v1346, %v1345
  %v1606 = vpack.c.b16 %v1348, %v1347
  %v1607 = vpack.c.b16 %v1350, %v1349
  %v1608 = vpack.c.b16 %v1352, %v1351
  %v1609 = vpack.c.b16 %v1354, %v1353
  %v1610 = vpack.c.b16 %v1356, %v1355
  %v1611 = vpack.c.b16 %v1358, %v1357
  %v1612 = vpack.c.b16 %v1360, %v1359
  %v1613 = vpack.c.b16 %v1362, %v1361
  %v1614 = vpack.c.b16 %v1364, %v1363
  %v1615 = vpack.c.b16 %v1366, %v1365
  %v1616 = vpack.c.b16 %v1368, %v1367
  %v1617 = vpack.c.b16 %v1370, %v1369
  %v1618 = vpack.c.b16 %v1372, %v1371
  %v1619 = vpack.c.b16 %v1374, %v1373
  %v1620 = vpack.c.b16 %v1376, %v1375
  %v1621 = vpack.c.b16 %v1378, %v1377
  %v1622 = vpack.c.b16 %v1380, %v1379
  %v1623 = vpack.c.b16 %v1382, %v1381
  %v1624 = vpack.c.b16 %v1384, %v1383
  %v1625 = vpack.c.b16 %v1386, %v1385
  %v1626 = vpack.c.b16 %v1388, %v1387
  %v1627 = vpack.c.b16 %v1390, %v1389
  %v1628 = vpack.c.b16 %v1392, %v1391
  %v1629 = vpack.c.b16 %v1394, %v1393
  %v1630 = vpack.c.b16 %v1396, %v1395
  %v1631 = vpack.c.b16 %v1398, %v1397
  %v1632 = vpack.c.b16 %v1400, %v1399
  %v1633 = vpack.c.b16 %v1402, %v1401
  %v1634 = vpack.c.b16 %v1404, %v1403
  %v1635 = vpack.c.b16 %v1406, %v1405
  %v1636 = vpack.c.b16 %v1408, %v1407
  %v1637 = vpack.c.b16 %v1410, %v1409
  %v1638 = vpack.c.b16 %v1412, %v1411
  %v1639 = vpack.c.b16 %v1414, %v1413
  %v1640 = vpack.c.b16 %v1416, %v1415
  %v1641 = vpack.c.b16 %v1418, %v1417
  %v1642 = vpack.c.b16 %v1420, %v1419
  %v1643 = vpack.c.b16 %v1422, %v1421
  %v1644 = vpack.c.b16 %v1424, %v1423
  %v1645 = vpack.c.b16 %v1426, %v1425
  %v1646 = vpack.c.b16 %v1428, %v1427
  %v1647 = vpack.c.b16 %v1430, %v1429
  %v1648 = vpack.c.b16 %v1432, %v1431
  %1865 = vmatprep.subr.bf16.mxu0 0
  %1866 = vmatpush1.bf16.msra.mxu0 %v1440
  %1867 = vmatprep.subr.bf16.mxu0 0
  %1868 = vmatpush1.bf16.msra.mxu0 %v1439
  %1869 = vmatprep.subr.bf16.mxu0 0
  %1870 = vmatpush1.bf16.msra.mxu0 %v1438
  %1871 = vmatprep.subr.bf16.mxu0 0
  %1872 = vmatpush1.bf16.msra.mxu0 %v1437
  %1873 = vmatprep.subr.bf16.mxu0 0
  %1874 = vmatpush1.bf16.msra.mxu0 %v1436
  %1875 = vmatprep.subr.bf16.mxu0 0
  %1876 = vmatpush1.bf16.msra.mxu0 %v1435
  %1877 = vmatprep.subr.bf16.mxu0 0
  %1878 = vmatpush1.bf16.msra.mxu0 %v1434
  %1879 = vmatprep.subr.bf16.mxu0 0
  %1880 = vmatpush1.bf16.msra.mxu0 %v1433
  %1881 = vmatprep.subr.bf16.mxu0 0
  %1882 = vmatpush2.bf16.msra.mxu0 %v1448
  %1883 = vmatprep.subr.bf16.mxu0 0
  %1884 = vmatpush2.bf16.msra.mxu0 %v1447
  %1885 = vmatprep.subr.bf16.mxu0 0
  %1886 = vmatpush2.bf16.msra.mxu0 %v1446
  %1887 = vmatprep.subr.bf16.mxu0 0
  %1888 = vmatpush2.bf16.msra.mxu0 %v1445
  %1889 = vmatprep.subr.bf16.mxu0 0
  %1890 = vmatpush2.bf16.msra.mxu0 %v1444
  %1891 = vmatprep.subr.bf16.mxu0 0
  %1892 = vmatpush2.bf16.msra.mxu0 %v1443
  %1893 = vmatprep.subr.bf16.mxu0 0
  %1894 = vmatpush2.bf16.msra.mxu0 %v1442
  %1895 = vmatprep.subr.bf16.mxu0 0
  %1896 = vmatpush2.bf16.msra.mxu0 %v1441
  %1897 = vmatprep.mubr.bf16.mxu0 %v516
  %1898 = vmatmul.mubr.bf16.gmra.mxu0 %v515
  %v1899 = vpop.f32.mrf.mxu0
  %v1900 = vadd.f32 %v472, %v1899
  %v1901 = vpop.f32.mrf.mxu0
  %v1902 = vpop.f32.mrf.mxu0
  %v1903 = vpop.f32.mrf.mxu0
  %1904 = vdwg.mxu0
  %1905 = vmatprep.subr.bf16.mxu0 0
  %1906 = vmatpush1.bf16.msra.mxu0 %v1456
  %1907 = vmatprep.subr.bf16.mxu0 0
  %1908 = vmatpush1.bf16.msra.mxu0 %v1455
  %1909 = vmatprep.subr.bf16.mxu0 0
  %1910 = vmatpush1.bf16.msra.mxu0 %v1454
  %1911 = vmatprep.subr.bf16.mxu0 0
  %1912 = vmatpush1.bf16.msra.mxu0 %v1453
  %1913 = vmatprep.subr.bf16.mxu0 0
  %1914 = vmatpush1.bf16.msra.mxu0 %v1452
  %1915 = vmatprep.subr.bf16.mxu0 0
  %1916 = vmatpush1.bf16.msra.mxu0 %v1451
  %1917 = vmatprep.subr.bf16.mxu0 0
  %1918 = vmatpush1.bf16.msra.mxu0 %v1450
  %1919 = vmatprep.subr.bf16.mxu0 0
  %1920 = vmatpush1.bf16.msra.mxu0 %v1449
  %1921 = vmatprep.subr.bf16.mxu0 0
  %1922 = vmatpush2.bf16.msra.mxu0 %v1464
  %1923 = vmatprep.subr.bf16.mxu0 0
  %1924 = vmatpush2.bf16.msra.mxu0 %v1463
  %1925 = vmatprep.subr.bf16.mxu0 0
  %1926 = vmatpush2.bf16.msra.mxu0 %v1462
  %1927 = vmatprep.subr.bf16.mxu0 0
  %1928 = vmatpush2.bf16.msra.mxu0 %v1461
  %1929 = vmatprep.subr.bf16.mxu0 0
  %1930 = vmatpush2.bf16.msra.mxu0 %v1460
  %1931 = vmatprep.subr.bf16.mxu0 0
  %1932 = vmatpush2.bf16.msra.mxu0 %v1459
  %1933 = vmatprep.subr.bf16.mxu0 0
  %1934 = vmatpush2.bf16.msra.mxu0 %v1458
  %1935 = vmatprep.subr.bf16.mxu0 0
  %1936 = vmatpush2.bf16.msra.mxu0 %v1457
  %1937 = vmatprep.mubr.bf16.mxu0 %v518
  %1938 = vmatmul.mubr.bf16.gmra.mxu0 %v517
  %v1939 = vpop.f32.mrf.mxu0
  %v1940 = vadd.f32 %v1900, %v1939
  %v1941 = vpop.f32.mrf.mxu0
  %v1942 = vpop.f32.mrf.mxu0
  %v1943 = vpop.f32.mrf.mxu0
  %1944 = vdwg.mxu0
  %1945 = vmatprep.subr.bf16.mxu0 0
  %1946 = vmatpush1.bf16.msra.mxu0 %v1472
  %1947 = vmatprep.subr.bf16.mxu0 0
  %1948 = vmatpush1.bf16.msra.mxu0 %v1471
  %1949 = vmatprep.subr.bf16.mxu0 0
  %1950 = vmatpush1.bf16.msra.mxu0 %v1470
  %1951 = vmatprep.subr.bf16.mxu0 0
  %1952 = vmatpush1.bf16.msra.mxu0 %v1469
  %1953 = vmatprep.subr.bf16.mxu0 0
  %1954 = vmatpush1.bf16.msra.mxu0 %v1468
  %1955 = vmatprep.subr.bf16.mxu0 0
  %1956 = vmatpush1.bf16.msra.mxu0 %v1467
  %1957 = vmatprep.subr.bf16.mxu0 0
  %1958 = vmatpush1.bf16.msra.mxu0 %v1466
  %1959 = vmatprep.subr.bf16.mxu0 0
  %1960 = vmatpush1.bf16.msra.mxu0 %v1465
  %1961 = vmatprep.subr.bf16.mxu0 0
  %1962 = vmatpush2.bf16.msra.mxu0 %v1480
  %1963 = vmatprep.subr.bf16.mxu0 0
  %1964 = vmatpush2.bf16.msra.mxu0 %v1479
  %1965 = vmatprep.subr.bf16.mxu0 0
  %1966 = vmatpush2.bf16.msra.mxu0 %v1478
  %1967 = vmatprep.subr.bf16.mxu0 0
  %1968 = vmatpush2.bf16.msra.mxu0 %v1477
  %1969 = vmatprep.subr.bf16.mxu0 0
  %1970 = vmatpush2.bf16.msra.mxu0 %v1476
  %1971 = vmatprep.subr.bf16.mxu0 0
  %1972 = vmatpush2.bf16.msra.mxu0 %v1475
  %1973 = vmatprep.subr.bf16.mxu0 0
  %1974 = vmatpush2.bf16.msra.mxu0 %v1474
  %1975 = vmatprep.subr.bf16.mxu0 0
  %1976 = vmatpush2.bf16.msra.mxu0 %v1473
  %1977 = vmatprep.mubr.bf16.mxu0 %v520
  %1978 = vmatmul.mubr.bf16.gmra.mxu0 %v519
  %v1979 = vpop.f32.mrf.mxu0
  %v1980 = vadd.f32 %v1940, %v1979
  %v1981 = vpop.f32.mrf.mxu0
  %v1982 = vpop.f32.mrf.mxu0
  %v1983 = vpop.f32.mrf.mxu0
  %1984 = vdwg.mxu0
  %1985 = vmatprep.subr.bf16.mxu0 0
  %1986 = vmatpush1.bf16.msra.mxu0 %v1488
  %1987 = vmatprep.subr.bf16.mxu0 0
  %1988 = vmatpush1.bf16.msra.mxu0 %v1487
  %1989 = vmatprep.subr.bf16.mxu0 0
  %1990 = vmatpush1.bf16.msra.mxu0 %v1486
  %1991 = vmatprep.subr.bf16.mxu0 0
  %1992 = vmatpush1.bf16.msra.mxu0 %v1485
  %1993 = vmatprep.subr.bf16.mxu0 0
  %1994 = vmatpush1.bf16.msra.mxu0 %v1484
  %1995 = vmatprep.subr.bf16.mxu0 0
  %1996 = vmatpush1.bf16.msra.mxu0 %v1483
  %1997 = vmatprep.subr.bf16.mxu0 0
  %1998 = vmatpush1.bf16.msra.mxu0 %v1482
  %1999 = vmatprep.subr.bf16.mxu0 0
  %2000 = vmatpush1.bf16.msra.mxu0 %v1481
  %2001 = vmatprep.subr.bf16.mxu0 0
  %2002 = vmatpush2.bf16.msra.mxu0 %v1496
  %2003 = vmatprep.subr.bf16.mxu0 0
  %2004 = vmatpush2.bf16.msra.mxu0 %v1495
  %2005 = vmatprep.subr.bf16.mxu0 0
  %2006 = vmatpush2.bf16.msra.mxu0 %v1494
  %2007 = vmatprep.subr.bf16.mxu0 0
  %2008 = vmatpush2.bf16.msra.mxu0 %v1493
  %2009 = vmatprep.subr.bf16.mxu0 0
  %2010 = vmatpush2.bf16.msra.mxu0 %v1492
  %2011 = vmatprep.subr.bf16.mxu0 0
  %2012 = vmatpush2.bf16.msra.mxu0 %v1491
  %2013 = vmatprep.subr.bf16.mxu0 0
  %2014 = vmatpush2.bf16.msra.mxu0 %v1490
  %2015 = vmatprep.subr.bf16.mxu0 0
  %2016 = vmatpush2.bf16.msra.mxu0 %v1489
  %2017 = vmatprep.mubr.bf16.mxu0 %v522
  %2018 = vmatmul.mubr.bf16.gmra.mxu0 %v521
  %v2019 = vpop.f32.mrf.mxu0
  %v2020 = vadd.f32 %v1980, %v2019
  %v2021 = vpop.f32.mrf.mxu0
  %v2022 = vpop.f32.mrf.mxu0
  %v2023 = vpop.f32.mrf.mxu0
  %2024 = vdwg.mxu0
  %2025 = vmatprep.subr.bf16.mxu0 0
  %2026 = vmatpush1.bf16.msra.mxu0 %v1504
  %2027 = vmatprep.subr.bf16.mxu0 0
  %2028 = vmatpush1.bf16.msra.mxu0 %v1503
  %2029 = vmatprep.subr.bf16.mxu0 0
  %2030 = vmatpush1.bf16.msra.mxu0 %v1502
  %2031 = vmatprep.subr.bf16.mxu0 0
  %2032 = vmatpush1.bf16.msra.mxu0 %v1501
  %2033 = vmatprep.subr.bf16.mxu0 0
  %2034 = vmatpush1.bf16.msra.mxu0 %v1500
  %2035 = vmatprep.subr.bf16.mxu0 0
  %2036 = vmatpush1.bf16.msra.mxu0 %v1499
  %2037 = vmatprep.subr.bf16.mxu0 0
  %2038 = vmatpush1.bf16.msra.mxu0 %v1498
  %2039 = vmatprep.subr.bf16.mxu0 0
  %2040 = vmatpush1.bf16.msra.mxu0 %v1497
  %2041 = vmatprep.subr.bf16.mxu0 0
  %2042 = vmatpush2.bf16.msra.mxu0 %v1512
  %2043 = vmatprep.subr.bf16.mxu0 0
  %2044 = vmatpush2.bf16.msra.mxu0 %v1511
  %2045 = vmatprep.subr.bf16.mxu0 0
  %2046 = vmatpush2.bf16.msra.mxu0 %v1510
  %2047 = vmatprep.subr.bf16.mxu0 0
  %2048 = vmatpush2.bf16.msra.mxu0 %v1509
  %2049 = vmatprep.subr.bf16.mxu0 0
  %2050 = vmatpush2.bf16.msra.mxu0 %v1508
  %2051 = vmatprep.subr.bf16.mxu0 0
  %2052 = vmatpush2.bf16.msra.mxu0 %v1507
  %2053 = vmatprep.subr.bf16.mxu0 0
  %2054 = vmatpush2.bf16.msra.mxu0 %v1506
  %2055 = vmatprep.subr.bf16.mxu0 0
  %2056 = vmatpush2.bf16.msra.mxu0 %v1505
  %2057 = vmatprep.mubr.bf16.mxu0 %v524
  %2058 = vmatmul.mubr.bf16.gmra.mxu0 %v523
  %v2059 = vpop.f32.mrf.mxu0
  %v2060 = vadd.f32 %v2020, %v2059
  %v2061 = vpop.f32.mrf.mxu0
  %v2062 = vpop.f32.mrf.mxu0
  %v2063 = vpop.f32.mrf.mxu0
  %2064 = vdwg.mxu0
  %2065 = vmatprep.subr.bf16.mxu0 0
  %2066 = vmatpush1.bf16.msra.mxu0 %v1520
  %2067 = vmatprep.subr.bf16.mxu0 0
  %2068 = vmatpush1.bf16.msra.mxu0 %v1519
  %2069 = vmatprep.subr.bf16.mxu0 0
  %2070 = vmatpush1.bf16.msra.mxu0 %v1518
  %2071 = vmatprep.subr.bf16.mxu0 0
  %2072 = vmatpush1.bf16.msra.mxu0 %v1517
  %2073 = vmatprep.subr.bf16.mxu0 0
  %2074 = vmatpush1.bf16.msra.mxu0 %v1516
  %2075 = vmatprep.subr.bf16.mxu0 0
  %2076 = vmatpush1.bf16.msra.mxu0 %v1515
  %2077 = vmatprep.subr.bf16.mxu0 0
  %2078 = vmatpush1.bf16.msra.mxu0 %v1514
  %2079 = vmatprep.subr.bf16.mxu0 0
  %2080 = vmatpush1.bf16.msra.mxu0 %v1513
  %2081 = vmatprep.subr.bf16.mxu0 0
  %2082 = vmatpush2.bf16.msra.mxu0 %v1528
  %2083 = vmatprep.subr.bf16.mxu0 0
  %2084 = vmatpush2.bf16.msra.mxu0 %v1527
  %2085 = vmatprep.subr.bf16.mxu0 0
  %2086 = vmatpush2.bf16.msra.mxu0 %v1526
  %2087 = vmatprep.subr.bf16.mxu0 0
  %2088 = vmatpush2.bf16.msra.mxu0 %v1525
  %2089 = vmatprep.subr.bf16.mxu0 0
  %2090 = vmatpush2.bf16.msra.mxu0 %v1524
  %2091 = vmatprep.subr.bf16.mxu0 0
  %2092 = vmatpush2.bf16.msra.mxu0 %v1523
  %2093 = vmatprep.subr.bf16.mxu0 0
  %2094 = vmatpush2.bf16.msra.mxu0 %v1522
  %2095 = vmatprep.subr.bf16.mxu0 0
  %2096 = vmatpush2.bf16.msra.mxu0 %v1521
  %2097 = vmatprep.mubr.bf16.mxu0 %v526
  %2098 = vmatmul.mubr.bf16.gmra.mxu0 %v525
  %v2099 = vpop.f32.mrf.mxu0
  %v2100 = vadd.f32 %v2060, %v2099
  %v2101 = vpop.f32.mrf.mxu0
  %v2102 = vpop.f32.mrf.mxu0
  %v2103 = vpop.f32.mrf.mxu0
  %2104 = vdwg.mxu0
  %2105 = vmatprep.subr.bf16.mxu0 0
  %2106 = vmatpush1.bf16.msra.mxu0 %v1536
  %2107 = vmatprep.subr.bf16.mxu0 0
  %2108 = vmatpush1.bf16.msra.mxu0 %v1535
  %2109 = vmatprep.subr.bf16.mxu0 0
  %2110 = vmatpush1.bf16.msra.mxu0 %v1534
  %2111 = vmatprep.subr.bf16.mxu0 0
  %2112 = vmatpush1.bf16.msra.mxu0 %v1533
  %2113 = vmatprep.subr.bf16.mxu0 0
  %2114 = vmatpush1.bf16.msra.mxu0 %v1532
  %2115 = vmatprep.subr.bf16.mxu0 0
  %2116 = vmatpush1.bf16.msra.mxu0 %v1531
  %2117 = vmatprep.subr.bf16.mxu0 0
  %2118 = vmatpush1.bf16.msra.mxu0 %v1530
  %2119 = vmatprep.subr.bf16.mxu0 0
  %2120 = vmatpush1.bf16.msra.mxu0 %v1529
  %2121 = vmatprep.subr.bf16.mxu0 0
  %2122 = vmatpush2.bf16.msra.mxu0 %v1544
  %2123 = vmatprep.subr.bf16.mxu0 0
  %2124 = vmatpush2.bf16.msra.mxu0 %v1543
  %2125 = vmatprep.subr.bf16.mxu0 0
  %2126 = vmatpush2.bf16.msra.mxu0 %v1542
  %2127 = vmatprep.subr.bf16.mxu0 0
  %2128 = vmatpush2.bf16.msra.mxu0 %v1541
  %2129 = vmatprep.subr.bf16.mxu0 0
  %2130 = vmatpush2.bf16.msra.mxu0 %v1540
  %2131 = vmatprep.subr.bf16.mxu0 0
  %2132 = vmatpush2.bf16.msra.mxu0 %v1539
  %2133 = vmatprep.subr.bf16.mxu0 0
  %2134 = vmatpush2.bf16.msra.mxu0 %v1538
  %2135 = vmatprep.subr.bf16.mxu0 0
  %2136 = vmatpush2.bf16.msra.mxu0 %v1537
  %2137 = vmatprep.mubr.bf16.mxu0 %v528
  %2138 = vmatmul.mubr.bf16.gmra.mxu0 %v527
  %v2139 = vpop.f32.mrf.mxu0
  %v2140 = vadd.f32 %v2100, %v2139
  %v2141 = vpop.f32.mrf.mxu0
  %v2142 = vpop.f32.mrf.mxu0
  %v2143 = vpop.f32.mrf.mxu0
  %2144 = vdwg.mxu0
  %2145 = vmatprep.subr.bf16.mxu0 0
  %2146 = vmatpush1.bf16.msra.mxu0 %v1552
  %2147 = vmatprep.subr.bf16.mxu0 0
  %2148 = vmatpush1.bf16.msra.mxu0 %v1551
  %2149 = vmatprep.subr.bf16.mxu0 0
  %2150 = vmatpush1.bf16.msra.mxu0 %v1550
  %2151 = vmatprep.subr.bf16.mxu0 0
  %2152 = vmatpush1.bf16.msra.mxu0 %v1549
  %2153 = vmatprep.subr.bf16.mxu0 0
  %2154 = vmatpush1.bf16.msra.mxu0 %v1548
  %2155 = vmatprep.subr.bf16.mxu0 0
  %2156 = vmatpush1.bf16.msra.mxu0 %v1547
  %2157 = vmatprep.subr.bf16.mxu0 0
  %2158 = vmatpush1.bf16.msra.mxu0 %v1546
  %2159 = vmatprep.subr.bf16.mxu0 0
  %2160 = vmatpush1.bf16.msra.mxu0 %v1545
  %2161 = vmatprep.subr.bf16.mxu0 0
  %2162 = vmatpush2.bf16.msra.mxu0 %v1560
  %2163 = vmatprep.subr.bf16.mxu0 0
  %2164 = vmatpush2.bf16.msra.mxu0 %v1559
  %2165 = vmatprep.subr.bf16.mxu0 0
  %2166 = vmatpush2.bf16.msra.mxu0 %v1558
  %2167 = vmatprep.subr.bf16.mxu0 0
  %2168 = vmatpush2.bf16.msra.mxu0 %v1557
  %2169 = vmatprep.subr.bf16.mxu0 0
  %2170 = vmatpush2.bf16.msra.mxu0 %v1556
  %2171 = vmatprep.subr.bf16.mxu0 0
  %2172 = vmatpush2.bf16.msra.mxu0 %v1555
  %2173 = vmatprep.subr.bf16.mxu0 0
  %2174 = vmatpush2.bf16.msra.mxu0 %v1554
  %2175 = vmatprep.subr.bf16.mxu0 0
  %2176 = vmatpush2.bf16.msra.mxu0 %v1553
  %2177 = vmatprep.mubr.bf16.mxu0 %v530
  %2178 = vmatmul.mubr.bf16.gmra.mxu0 %v529
  %v2179 = vpop.f32.mrf.mxu0
  %v2180 = vadd.f32 %v2140, %v2179
  %v2181 = vpop.f32.mrf.mxu0
  %v2182 = vpop.f32.mrf.mxu0
  %v2183 = vpop.f32.mrf.mxu0
  %2184 = vdwg.mxu0
  %2185 = vmatprep.subr.bf16.mxu0 0
  %2186 = vmatpush1.bf16.msra.mxu0 %v1568
  %2187 = vmatprep.subr.bf16.mxu0 0
  %2188 = vmatpush1.bf16.msra.mxu0 %v1567
  %2189 = vmatprep.subr.bf16.mxu0 0
  %2190 = vmatpush1.bf16.msra.mxu0 %v1566
  %2191 = vmatprep.subr.bf16.mxu0 0
  %2192 = vmatpush1.bf16.msra.mxu0 %v1565
  %2193 = vmatprep.subr.bf16.mxu0 0
  %2194 = vmatpush1.bf16.msra.mxu0 %v1564
  %2195 = vmatprep.subr.bf16.mxu0 0
  %2196 = vmatpush1.bf16.msra.mxu0 %v1563
  %2197 = vmatprep.subr.bf16.mxu0 0
  %2198 = vmatpush1.bf16.msra.mxu0 %v1562
  %2199 = vmatprep.subr.bf16.mxu0 0
  %2200 = vmatpush1.bf16.msra.mxu0 %v1561
  %2201 = vmatprep.subr.bf16.mxu0 0
  %2202 = vmatpush2.bf16.msra.mxu0 %v1576
  %2203 = vmatprep.subr.bf16.mxu0 0
  %2204 = vmatpush2.bf16.msra.mxu0 %v1575
  %2205 = vmatprep.subr.bf16.mxu0 0
  %2206 = vmatpush2.bf16.msra.mxu0 %v1574
  %2207 = vmatprep.subr.bf16.mxu0 0
  %2208 = vmatpush2.bf16.msra.mxu0 %v1573
  %2209 = vmatprep.subr.bf16.mxu0 0
  %2210 = vmatpush2.bf16.msra.mxu0 %v1572
  %2211 = vmatprep.subr.bf16.mxu0 0
  %2212 = vmatpush2.bf16.msra.mxu0 %v1571
  %2213 = vmatprep.subr.bf16.mxu0 0
  %2214 = vmatpush2.bf16.msra.mxu0 %v1570
  %2215 = vmatprep.subr.bf16.mxu0 0
  %2216 = vmatpush2.bf16.msra.mxu0 %v1569
  %2217 = vmatprep.mubr.bf16.mxu0 %v532
  %2218 = vmatmul.mubr.bf16.gmra.mxu0 %v531
  %v2219 = vpop.f32.mrf.mxu0
  %v2220 = vadd.f32 %v2180, %v2219
  %v2221 = vpop.f32.mrf.mxu0
  %v2222 = vpop.f32.mrf.mxu0
  %v2223 = vpop.f32.mrf.mxu0
  %2224 = vdwg.mxu0
  %2225 = vmatprep.subr.bf16.mxu0 0
  %2226 = vmatpush1.bf16.msra.mxu0 %v1584
  %2227 = vmatprep.subr.bf16.mxu0 0
  %2228 = vmatpush1.bf16.msra.mxu0 %v1583
  %2229 = vmatprep.subr.bf16.mxu0 0
  %2230 = vmatpush1.bf16.msra.mxu0 %v1582
  %2231 = vmatprep.subr.bf16.mxu0 0
  %2232 = vmatpush1.bf16.msra.mxu0 %v1581
  %2233 = vmatprep.subr.bf16.mxu0 0
  %2234 = vmatpush1.bf16.msra.mxu0 %v1580
  %2235 = vmatprep.subr.bf16.mxu0 0
  %2236 = vmatpush1.bf16.msra.mxu0 %v1579
  %2237 = vmatprep.subr.bf16.mxu0 0
  %2238 = vmatpush1.bf16.msra.mxu0 %v1578
  %2239 = vmatprep.subr.bf16.mxu0 0
  %2240 = vmatpush1.bf16.msra.mxu0 %v1577
  %2241 = vmatprep.subr.bf16.mxu0 0
  %2242 = vmatpush2.bf16.msra.mxu0 %v1592
  %2243 = vmatprep.subr.bf16.mxu0 0
  %2244 = vmatpush2.bf16.msra.mxu0 %v1591
  %2245 = vmatprep.subr.bf16.mxu0 0
  %2246 = vmatpush2.bf16.msra.mxu0 %v1590
  %2247 = vmatprep.subr.bf16.mxu0 0
  %2248 = vmatpush2.bf16.msra.mxu0 %v1589
  %2249 = vmatprep.subr.bf16.mxu0 0
  %2250 = vmatpush2.bf16.msra.mxu0 %v1588
  %2251 = vmatprep.subr.bf16.mxu0 0
  %2252 = vmatpush2.bf16.msra.mxu0 %v1587
  %2253 = vmatprep.subr.bf16.mxu0 0
  %2254 = vmatpush2.bf16.msra.mxu0 %v1586
  %2255 = vmatprep.subr.bf16.mxu0 0
  %2256 = vmatpush2.bf16.msra.mxu0 %v1585
  %2257 = vmatprep.mubr.bf16.mxu0 %v534
  %2258 = vmatmul.mubr.bf16.gmra.mxu0 %v533
  %v2259 = vpop.f32.mrf.mxu0
  %v2260 = vadd.f32 %v2220, %v2259
  %v2261 = vpop.f32.mrf.mxu0
  %v2262 = vpop.f32.mrf.mxu0
  %v2263 = vpop.f32.mrf.mxu0
  %2264 = vdwg.mxu0
  %2265 = vmatprep.subr.bf16.mxu0 0
  %2266 = vmatpush1.bf16.msra.mxu0 %v1600
  %2267 = vmatprep.subr.bf16.mxu0 0
  %2268 = vmatpush1.bf16.msra.mxu0 %v1599
  %2269 = vmatprep.subr.bf16.mxu0 0
  %2270 = vmatpush1.bf16.msra.mxu0 %v1598
  %2271 = vmatprep.subr.bf16.mxu0 0
  %2272 = vmatpush1.bf16.msra.mxu0 %v1597
  %2273 = vmatprep.subr.bf16.mxu0 0
  %2274 = vmatpush1.bf16.msra.mxu0 %v1596
  %2275 = vmatprep.subr.bf16.mxu0 0
  %2276 = vmatpush1.bf16.msra.mxu0 %v1595
  %2277 = vmatprep.subr.bf16.mxu0 0
  %2278 = vmatpush1.bf16.msra.mxu0 %v1594
  %2279 = vmatprep.subr.bf16.mxu0 0
  %2280 = vmatpush1.bf16.msra.mxu0 %v1593
  %2281 = vmatprep.subr.bf16.mxu0 0
  %2282 = vmatpush2.bf16.msra.mxu0 %v1608
  %2283 = vmatprep.subr.bf16.mxu0 0
  %2284 = vmatpush2.bf16.msra.mxu0 %v1607
  %2285 = vmatprep.subr.bf16.mxu0 0
  %2286 = vmatpush2.bf16.msra.mxu0 %v1606
  %2287 = vmatprep.subr.bf16.mxu0 0
  %2288 = vmatpush2.bf16.msra.mxu0 %v1605
  %2289 = vmatprep.subr.bf16.mxu0 0
  %2290 = vmatpush2.bf16.msra.mxu0 %v1604
  %2291 = vmatprep.subr.bf16.mxu0 0
  %2292 = vmatpush2.bf16.msra.mxu0 %v1603
  %2293 = vmatprep.subr.bf16.mxu0 0
  %2294 = vmatpush2.bf16.msra.mxu0 %v1602
  %2295 = vmatprep.subr.bf16.mxu0 0
  %2296 = vmatpush2.bf16.msra.mxu0 %v1601
  %2297 = vmatprep.mubr.bf16.mxu0 %v536
  %2298 = vmatmul.mubr.bf16.gmra.mxu0 %v535
  %v2299 = vpop.f32.mrf.mxu0
  %v2300 = vadd.f32 %v2260, %v2299
  %v2301 = vpop.f32.mrf.mxu0
  %v2302 = vpop.f32.mrf.mxu0
  %v2303 = vpop.f32.mrf.mxu0
  %2304 = vdwg.mxu0
  %2305 = vmatprep.subr.bf16.mxu0 0
  %2306 = vmatpush1.bf16.msra.mxu0 %v1616
  %2307 = vmatprep.subr.bf16.mxu0 0
  %2308 = vmatpush1.bf16.msra.mxu0 %v1615
  %2309 = vmatprep.subr.bf16.mxu0 0
  %2310 = vmatpush1.bf16.msra.mxu0 %v1614
  %2311 = vmatprep.subr.bf16.mxu0 0
  %2312 = vmatpush1.bf16.msra.mxu0 %v1613
  %2313 = vmatprep.subr.bf16.mxu0 0
  %2314 = vmatpush1.bf16.msra.mxu0 %v1612
  %2315 = vmatprep.subr.bf16.mxu0 0
  %2316 = vmatpush1.bf16.msra.mxu0 %v1611
  %2317 = vmatprep.subr.bf16.mxu0 0
  %2318 = vmatpush1.bf16.msra.mxu0 %v1610
  %2319 = vmatprep.subr.bf16.mxu0 0
  %2320 = vmatpush1.bf16.msra.mxu0 %v1609
  %2321 = vmatprep.subr.bf16.mxu0 0
  %2322 = vmatpush2.bf16.msra.mxu0 %v1624
  %2323 = vmatprep.subr.bf16.mxu0 0
  %2324 = vmatpush2.bf16.msra.mxu0 %v1623
  %2325 = vmatprep.subr.bf16.mxu0 0
  %2326 = vmatpush2.bf16.msra.mxu0 %v1622
  %2327 = vmatprep.subr.bf16.mxu0 0
  %2328 = vmatpush2.bf16.msra.mxu0 %v1621
  %2329 = vmatprep.subr.bf16.mxu0 0
  %2330 = vmatpush2.bf16.msra.mxu0 %v1620
  %2331 = vmatprep.subr.bf16.mxu0 0
  %2332 = vmatpush2.bf16.msra.mxu0 %v1619
  %2333 = vmatprep.subr.bf16.mxu0 0
  %2334 = vmatpush2.bf16.msra.mxu0 %v1618
  %2335 = vmatprep.subr.bf16.mxu0 0
  %2336 = vmatpush2.bf16.msra.mxu0 %v1617
  %2337 = vmatprep.mubr.bf16.mxu0 %v538
  %2338 = vmatmul.mubr.bf16.gmra.mxu0 %v537
  %v2339 = vpop.f32.mrf.mxu0
  %v2340 = vadd.f32 %v2300, %v2339
  %v2341 = vpop.f32.mrf.mxu0
  %v2342 = vpop.f32.mrf.mxu0
  %v2343 = vpop.f32.mrf.mxu0
  %2344 = vdwg.mxu0
  %2345 = vmatprep.subr.bf16.mxu0 0
  %2346 = vmatpush1.bf16.msra.mxu0 %v1632
  %2347 = vmatprep.subr.bf16.mxu0 0
  %2348 = vmatpush1.bf16.msra.mxu0 %v1631
  %2349 = vmatprep.subr.bf16.mxu0 0
  %2350 = vmatpush1.bf16.msra.mxu0 %v1630
  %2351 = vmatprep.subr.bf16.mxu0 0
  %2352 = vmatpush1.bf16.msra.mxu0 %v1629
  %2353 = vmatprep.subr.bf16.mxu0 0
  %2354 = vmatpush1.bf16.msra.mxu0 %v1628
  %2355 = vmatprep.subr.bf16.mxu0 0
  %2356 = vmatpush1.bf16.msra.mxu0 %v1627
  %2357 = vmatprep.subr.bf16.mxu0 0
  %2358 = vmatpush1.bf16.msra.mxu0 %v1626
  %2359 = vmatprep.subr.bf16.mxu0 0
  %2360 = vmatpush1.bf16.msra.mxu0 %v1625
  %2361 = vmatprep.subr.bf16.mxu0 0
  %2362 = vmatpush2.bf16.msra.mxu0 %v1640
  %2363 = vmatprep.subr.bf16.mxu0 0
  %2364 = vmatpush2.bf16.msra.mxu0 %v1639
  %2365 = vmatprep.subr.bf16.mxu0 0
  %2366 = vmatpush2.bf16.msra.mxu0 %v1638
  %2367 = vmatprep.subr.bf16.mxu0 0
  %2368 = vmatpush2.bf16.msra.mxu0 %v1637
  %2369 = vmatprep.subr.bf16.mxu0 0
  %2370 = vmatpush2.bf16.msra.mxu0 %v1636
  %2371 = vmatprep.subr.bf16.mxu0 0
  %2372 = vmatpush2.bf16.msra.mxu0 %v1635
  %2373 = vmatprep.subr.bf16.mxu0 0
  %2374 = vmatpush2.bf16.msra.mxu0 %v1634
  %2375 = vmatprep.subr.bf16.mxu0 0
  %2376 = vmatpush2.bf16.msra.mxu0 %v1633
  %2377 = vmatprep.mubr.bf16.mxu0 %v540
  %2378 = vmatmul.mubr.bf16.gmra.mxu0 %v539
  %v2379 = vpop.f32.mrf.mxu0
  %v2380 = vadd.f32 %v2340, %v2379
  %v2381 = vpop.f32.mrf.mxu0
  %v2382 = vpop.f32.mrf.mxu0
  %v2383 = vpop.f32.mrf.mxu0
  %2384 = vdwg.mxu0
  %2385 = vmatprep.subr.bf16.mxu0 0
  %2386 = vmatpush1.bf16.msra.mxu0 %v1648
  %2387 = vmatprep.subr.bf16.mxu0 0
  %2388 = vmatpush1.bf16.msra.mxu0 %v1647
  %2389 = vmatprep.subr.bf16.mxu0 0
  %2390 = vmatpush1.bf16.msra.mxu0 %v1646
  %2391 = vmatprep.subr.bf16.mxu0 0
  %2392 = vmatpush1.bf16.msra.mxu0 %v1645
  %2393 = vmatprep.subr.bf16.mxu0 0
  %2394 = vmatpush1.bf16.msra.mxu0 %v1644
  %2395 = vmatprep.subr.bf16.mxu0 0
  %2396 = vmatpush1.bf16.msra.mxu0 %v1643
  %2397 = vmatprep.subr.bf16.mxu0 0
  %2398 = vmatpush1.bf16.msra.mxu0 %v1642
  %2399 = vmatprep.subr.bf16.mxu0 0
  %2400 = vmatpush1.bf16.msra.mxu0 %v1641
  %2401 = vmatprep.subr.bf16.mxu0 0
  %2402 = vmatpush2.bf16.msra.mxu0 0
  %2403 = vmatprep.subr.bf16.mxu0 0
  %2404 = vmatpush2.bf16.msra.mxu0 0
  %2405 = vmatprep.subr.bf16.mxu0 0
  %2406 = vmatpush2.bf16.msra.mxu0 0
  %2407 = vmatprep.subr.bf16.mxu0 0
  %2408 = vmatpush2.bf16.msra.mxu0 0
  %2409 = vmatprep.subr.bf16.mxu0 0
  %2410 = vmatpush2.bf16.msra.mxu0 0
  %2411 = vmatprep.subr.bf16.mxu0 0
  %2412 = vmatpush2.bf16.msra.mxu0 0
  %2413 = vmatprep.subr.bf16.mxu0 0
  %2414 = vmatpush2.bf16.msra.mxu0 0
  %2415 = vmatprep.subr.bf16.mxu0 0
  %2416 = vmatpush2.bf16.msra.mxu0 0
  %2417 = vmatprep.mubr.bf16.mxu0 0
  %2418 = vmatmul.mubr.bf16.gmra.mxu0 %v541
  %v2419 = vpop.f32.mrf.mxu0
  %v2420 = vadd.f32 %v2380, %v2419
  %v2421 = vpop.f32.mrf.mxu0
  %v2422 = vpop.f32.mrf.mxu0
  %v2423 = vpop.f32.mrf.mxu0
  %2424 = vdwg.mxu0
  %v2425 = vmax.f32 %v2420, 0.0
  %v2426 = vrot.slane %v2425, 4
  %v2427 = vadd.f32 %v2425, %v2426
  %v2428 = vrot.slane %v2427, 2
  %v2429 = vadd.f32 %v2427, %v2428
  %v2430 = vrot.slane %v2429, 1
  %v2431 = vadd.f32 %v2429, %v2430
  %v2432 = vmul.f32 %v2431, 0.125
  %v2433 = vsub.f32 %v2425, %v2432
  %v2434 = vmul.f32 %v2433, %v2433
  %v2435 = vrot.slane %v2434, 4
  %v2436 = vadd.f32 %v2434, %v2435
  %v2437 = vrot.slane %v2436, 2
  %v2438 = vadd.f32 %v2436, %v2437
  %v2439 = vrot.slane %v2438, 1
  %v2440 = vadd.f32 %v2438, %v2439
  %v2441 = vmul.f32 %v2440, 0.125
  %v2442 = vld [vmem:[%s3] sm:$0x1]
  %v2443 = vadd.f32 %v2441, 1e-05
  %v2444 = vrsqrt.pop %v2443
  %v2445 = vmul.f32 %v2442, %v2444
  %v2447 = vlaneseq
  %v2448 = vshrl.u32 %v2447, 7
  %v2449 = vsub.s32 0, %v2448
  %v2450 = vrot.slane %v2445, %v2449
  %v2452 = vmul.f32 %v2433, %v2450
  %v2453 = vld [vmem:[%s4] sm:$0x1]
  %v2455 = vlaneseq
  %v2456 = vshrl.u32 %v2455, 7
  %v2457 = vsub.s32 0, %v2456
  %v2458 = vrot.slane %v2453, %v2457
  %v2460 = vadd.f32 %v2452, %v2458
  %2461 = vst [vmem:[%s5] sm:$0xff] %v2460
  // Predicated region
  $region22: #{unet_forward.16} parent=0 // pred_check
    _
  $region23: #{unet_forward.16} parent=0 // pred_check_branch
    %2463 = sbr.rel (0) target = $region25
  $region24: #{unet_forward.16} parent=0 // pred_region
    _
  $region25: #{unet_forward.16} parent=0 // pred_fallthru
    _
  // Predicated region
  $region26: #{unet_forward.16} parent=0 // pred_check
    _
  $region27: #{unet_forward.16} parent=0 // pred_check_branch
    %2465 = sbr.rel (0) target = $region29
  $region28: #{unet_forward.16} parent=0 // pred_region
    _
  $region29: #{unet_forward.16} parent=0 // pred_fallthru
    _

// kernel: unet_forward.19
$region0: #{unet_forward.19}
  #allocation0 [shape = 'u32[]', space=smem, size = 0x4, offset = 0x4, fixed_abs, tag = 'smem constant byte address 0x4 - core index']
  #allocation1 [shape = 'u32[144,128]{1,0:T(1,128)}', space=vmem, size = 0x12000, scoped, tag = 'internal scratch']
  %s0 = inlined_call_operand.vmem [shape: f32[64,16], index: 0, kind: input, shape index: {}]
  %s1 = inlined_call_operand.vmem [shape: f32[2,16,64], index: 1, kind: input, shape index: {}]
  %s2 = inlined_call_operand.vmem [shape: f32[2,64,64], index: 2, kind: output, shape index: {}]
  %s3 = sld [smem:[#allocation0]]
  $region18: #{unet_forward.19} parent=0
    _
  %s5 = ssub.s32 1, %s3
  %s6 = scalar_select 0, %s5, %s3
  // Predicated region
  $region2: #{unet_forward.19} parent=0 // pred_check
    _
  $region3: #{unet_forward.19} parent=0 // pred_check_branch
    %8 = sbr.rel (0) target = $region5
  $region4: #{unet_forward.19} parent=0 // pred_region
    _
  $region5: #{unet_forward.19} parent=0 // pred_fallthru
    _
  // Predicated region
  $region6: #{unet_forward.19} parent=0 // pred_check
    _
  $region7: #{unet_forward.19} parent=0 // pred_check_branch
    %10 = sbr.rel (0) target = $region9
  $region8: #{unet_forward.19} parent=0 // pred_region
    _
  $region9: #{unet_forward.19} parent=0 // pred_fallthru
    _
  %v11 = vld [vmem:[%s0] sm:$0xff]
  %v12 = vld [vmem:[%s0 + $0x8] sm:$0xff]
  %v13 = vld [vmem:[%s0 + $0x10] sm:$0xff]
  %v14 = vld [vmem:[%s0 + $0x18] sm:$0xff]
  %v15 = vld [vmem:[%s0 + $0x20] sm:$0xff]
  %v16 = vld [vmem:[%s0 + $0x28] sm:$0xff]
  %v17 = vld [vmem:[%s0 + $0x30] sm:$0xff]
  %v18 = vld [vmem:[%s0 + $0x38] sm:$0xff]
  %v19 = vld [vmem:[%s1] sm:$0xff]
  %v20 = vld [vmem:[%s1 + $0x8] sm:$0xff]
  %vm21 = vcmask 130048
  %v23 = vsel %vm21, %v11, 0
  %v26 = vsel %vm21, %v12, 0
  %v29 = vsel %vm21, %v13, 0
  %v32 = vsel %vm21, %v14, 0
  %v35 = vsel %vm21, %v15, 0
  %v38 = vsel %vm21, %v16, 0
  %v41 = vsel %vm21, %v17, 0
  %v44 = vsel %vm21, %v18, 0
  %46 = vmatprep.subr.mxu0 0.0
  %47 = vmatpush1.msra.mxu0 0.0
  %48 = vmatprep.subr.mxu0 0.0
  %49 = vmatpush1.msra.mxu0 0.0
  %50 = vmatprep.subr.mxu0 0.0
  %51 = vmatpush1.msra.mxu0 0.0
  %52 = vmatprep.subr.mxu0 0.0
  %53 = vmatpush1.msra.mxu0 0.0
  %54 = vmatprep.subr.mxu0 0.0
  %55 = vmatpush1.msra.mxu0 0.0
  %56 = vmatprep.subr.mxu0 0.0
  %57 = vmatpush1.msra.mxu0 0.0
  %58 = vmatprep.subr.mxu0 0.0
  %59 = vmatpush1.msra.mxu0 0.0
  %60 = vmatprep.subr.mxu0 0.0
  %61 = vmatpush1.msra.mxu0 0.0
  %62 = vmatprep.subr.mxu0 0.0
  %63 = vmatpush1.msra.mxu0 0.0
  %64 = vmatprep.subr.mxu0 0.0
  %65 = vmatpush1.msra.mxu0 0.0
  %66 = vmatprep.subr.mxu0 0.0
  %67 = vmatpush1.msra.mxu0 0.0
  %68 = vmatprep.subr.mxu0 0.0
  %69 = vmatpush1.msra.mxu0 0.0
  %70 = vmatprep.subr.mxu0 0.0
  %71 = vmatpush1.msra.mxu0 0.0
  %72 = vmatprep.subr.mxu0 0.0
  %73 = vmatpush1.msra.mxu0 0.0
  %74 = vmatprep.subr.mxu0 0.0
  %75 = vmatpush1.msra.mxu0 %v20
  %76 = vmatprep.subr.mxu0 0.0
  %77 = vmatpush1.msra.mxu0 %v19
  %78 = vmatprep.subr.mxu0 0.0
  %79 = vmatpush2.msra.mxu0 0.0
  %80 = vmatprep.subr.mxu0 0.0
  %81 = vmatpush2.msra.mxu0 0.0
  %82 = vmatprep.subr.mxu0 0.0
  %83 = vmatpush2.msra.mxu0 0.0
  %84 = vmatprep.subr.mxu0 0.0
  %85 = vmatpush2.msra.mxu0 0.0
  %86 = vmatprep.subr.mxu0 0.0
  %87 = vmatpush2.msra.mxu0 0.0
  %88 = vmatprep.subr.mxu0 0.0
  %89 = vmatpush2.msra.mxu0 0.0
  %90 = vmatprep.subr.mxu0 0.0
  %91 = vmatpush2.msra.mxu0 0.0
  %92 = vmatprep.subr.mxu0 0.0
  %93 = vmatpush2.msra.mxu0 0.0
  %94 = vmatprep.subr.mxu0 0.0
  %95 = vmatpush2.msra.mxu0 0.0
  %96 = vmatprep.subr.mxu0 0.0
  %97 = vmatpush2.msra.mxu0 0.0
  %98 = vmatprep.subr.mxu0 0.0
  %99 = vmatpush2.msra.mxu0 0.0
  %100 = vmatprep.subr.mxu0 0.0
  %101 = vmatpush2.msra.mxu0 0.0
  %102 = vmatprep.subr.mxu0 0.0
  %103 = vmatpush2.msra.mxu0 0.0
  %104 = vmatprep.subr.mxu0 0.0
  %105 = vmatpush2.msra.mxu0 0.0
  %106 = vmatprep.subr.mxu0 0.0
  %107 = vmatpush2.msra.mxu0 0.0
  %108 = vmatprep.subr.mxu0 0.0
  %109 = vmatpush2.msra.mxu0 0.0
  %110 = vmatprep.mubr.f32.mxu0 0.0
  %111 = vmatmul.mubr.f32.gmra.mxu0 %v23
  %v112 = vpop.f32.mrf.mxu0
  %v113 = vadd.f32 0.0, %v112
  %v114 = vpop.f32.mrf.mxu0
  %115 = vmatprep.mubr.f32.mxu0 0.0
  %116 = vmatmul.mubr.f32.gmra.mxu0 %v26
  %v117 = vpop.f32.mrf.mxu0
  %v118 = vadd.f32 0.0, %v117
  %v119 = vpop.f32.mrf.mxu0
  %120 = vmatprep.mubr.f32.mxu0 0.0
  %121 = vmatmul.mubr.f32.gmra.mxu0 %v29
  %v122 = vpop.f32.mrf.mxu0
  %v123 = vadd.f32 0.0, %v122
  %v124 = vpop.f32.mrf.mxu0
  %125 = vmatprep.mubr.f32.mxu0 0.0
  %126 = vmatmul.mubr.f32.gmra.mxu0 %v32
  %v127 = vpop.f32.mrf.mxu0
  %v128 = vadd.f32 0.0, %v127
  %v129 = vpop.f32.mrf.mxu0
  %130 = vmatprep.mubr.f32.mxu0 0.0
  %131 = vmatmul.mubr.f32.gmra.mxu0 %v35
  %v132 = vpop.f32.mrf.mxu0
  %v133 = vadd.f32 0.0, %v132
  %v134 = vpop.f32.mrf.mxu0
  %135 = vmatprep.mubr.f32.mxu0 0.0
  %136 = vmatmul.mubr.f32.gmra.mxu0 %v38
  %v137 = vpop.f32.mrf.mxu0
  %v138 = vadd.f32 0.0, %v137
  %v139 = vpop.f32.mrf.mxu0
  %140 = vmatprep.mubr.f32.mxu0 0.0
  %141 = vmatmul.mubr.f32.gmra.mxu0 %v41
  %v142 = vpop.f32.mrf.mxu0
  %v143 = vadd.f32 0.0, %v142
  %v144 = vpop.f32.mrf.mxu0
  %145 = vmatprep.mubr.f32.mxu0 0.0
  %146 = vmatmul.mubr.f32.gmra.mxu0 %v44
  %v147 = vpop.f32.mrf.mxu0
  %v148 = vadd.f32 0.0, %v147
  %v149 = vpop.f32.mrf.mxu0
  %150 = vdwg.mxu0
  %vm151 = vcmask 523264
  %152 = vst.msk [vmem:[%s2] sm:$0xff] %vm151, %v113
  %153 = vst.msk [vmem:[%s2 + $0x8] sm:$0xff] %vm151, %v118
  %154 = vst.msk [vmem:[%s2 + $0x10] sm:$0xff] %vm151, %v123
  %155 = vst.msk [vmem:[%s2 + $0x18] sm:$0xff] %vm151, %v128
  %156 = vst.msk [vmem:[%s2 + $0x20] sm:$0xff] %vm151, %v133
  %157 = vst.msk [vmem:[%s2 + $0x28] sm:$0xff] %vm151, %v138
  %158 = vst.msk [vmem:[%s2 + $0x30] sm:$0xff] %vm151, %v143
  %159 = vst.msk [vmem:[%s2 + $0x38] sm:$0xff] %vm151, %v148
  %v160 = vld [vmem:[%s0] sm:$0xff]
  %v161 = vld [vmem:[%s0 + $0x8] sm:$0xff]
  %v162 = vld [vmem:[%s0 + $0x10] sm:$0xff]
  %v163 = vld [vmem:[%s0 + $0x18] sm:$0xff]
  %v164 = vld [vmem:[%s0 + $0x20] sm:$0xff]
  %v165 = vld [vmem:[%s0 + $0x28] sm:$0xff]
  %v166 = vld [vmem:[%s0 + $0x30] sm:$0xff]
  %v167 = vld [vmem:[%s0 + $0x38] sm:$0xff]
  %s168 = scalar_lea.vmem %s1, 16
  %v169 = vld [vmem:[%s168] sm:$0xff]
  %v170 = vld [vmem:[%s168 + $0x8] sm:$0xff]
  %v172 = vsel %vm21, %v160, 0
  %v175 = vsel %vm21, %v161, 0
  %v178 = vsel %vm21, %v162, 0
  %v181 = vsel %vm21, %v163, 0
  %v184 = vsel %vm21, %v164, 0
  %v187 = vsel %vm21, %v165, 0
  %v190 = vsel %vm21, %v166, 0
  %v193 = vsel %vm21, %v167, 0
  %195 = vmatprep.subr.mxu0 0.0
  %196 = vmatpush1.msra.mxu0 0.0
  %197 = vmatprep.subr.mxu0 0.0
  %198 = vmatpush1.msra.mxu0 0.0
  %199 = vmatprep.subr.mxu0 0.0
  %200 = vmatpush1.msra.mxu0 0.0
  %201 = vmatprep.subr.mxu0 0.0
  %202 = vmatpush1.msra.mxu0 0.0
  %203 = vmatprep.subr.mxu0 0.0
  %204 = vmatpush1.msra.mxu0 0.0
  %205 = vmatprep.subr.mxu0 0.0
  %206 = vmatpush1.msra.mxu0 0.0
  %207 = vmatprep.subr.mxu0 0.0
  %208 = vmatpush1.msra.mxu0 0.0
  %209 = vmatprep.subr.mxu0 0.0
  %210 = vmatpush1.msra.mxu0 0.0
  %211 = vmatprep.subr.mxu0 0.0
  %212 = vmatpush1.msra.mxu0 0.0
  %213 = vmatprep.subr.mxu0 0.0
  %214 = vmatpush1.msra.mxu0 0.0
  %215 = vmatprep.subr.mxu0 0.0
  %216 = vmatpush1.msra.mxu0 0.0
  %217 = vmatprep.subr.mxu0 0.0
  %218 = vmatpush1.msra.mxu0 0.0
  %219 = vmatprep.subr.mxu0 0.0
  %220 = vmatpush1.msra.mxu0 0.0
  %221 = vmatprep.subr.mxu0 0.0
  %222 = vmatpush1.msra.mxu0 0.0
  %223 = vmatprep.subr.mxu0 0.0
  %224 = vmatpush1.msra.mxu0 %v170
  %225 = vmatprep.subr.mxu0 0.0
  %226 = vmatpush1.msra.mxu0 %v169
  %227 = vmatprep.subr.mxu0 0.0
  %228 = vmatpush2.msra.mxu0 0.0
  %229 = vmatprep.subr.mxu0 0.0
  %230 = vmatpush2.msra.mxu0 0.0
  %231 = vmatprep.subr.mxu0 0.0
  %232 = vmatpush2.msra.mxu0 0.0
  %233 = vmatprep.subr.mxu0 0.0
  %234 = vmatpush2.msra.mxu0 0.0
  %235 = vmatprep.subr.mxu0 0.0
  %236 = vmatpush2.msra.mxu0 0.0
  %237 = vmatprep.subr.mxu0 0.0
  %238 = vmatpush2.msra.mxu0 0.0
  %239 = vmatprep.subr.mxu0 0.0
  %240 = vmatpush2.msra.mxu0 0.0
  %241 = vmatprep.subr.mxu0 0.0
  %242 = vmatpush2.msra.mxu0 0.0
  %243 = vmatprep.subr.mxu0 0.0
  %244 = vmatpush2.msra.mxu0 0.0
  %245 = vmatprep.subr.mxu0 0.0
  %246 = vmatpush2.msra.mxu0 0.0
  %247 = vmatprep.subr.mxu0 0.0
  %248 = vmatpush2.msra.mxu0 0.0
  %249 = vmatprep.subr.mxu0 0.0
  %250 = vmatpush2.msra.mxu0 0.0
  %251 = vmatprep.subr.mxu0 0.0
  %252 = vmatpush2.msra.mxu0 0.0
  %253 = vmatprep.subr.mxu0 0.0
  %254 = vmatpush2.msra.mxu0 0.0
  %255 = vmatprep.subr.mxu0 0.0
  %256 = vmatpush2.msra.mxu0 0.0
  %257 = vmatprep.subr.mxu0 0.0
  %258 = vmatpush2.msra.mxu0 0.0
  %259 = vmatprep.mubr.f32.mxu0 0.0
  %260 = vmatmul.mubr.f32.gmra.mxu0 %v172
  %v261 = vpop.f32.mrf.mxu0
  %v262 = vadd.f32 0.0, %v261
  %v263 = vpop.f32.mrf.mxu0
  %264 = vmatprep.mubr.f32.mxu0 0.0
  %265 = vmatmul.mubr.f32.gmra.mxu0 %v175
  %v266 = vpop.f32.mrf.mxu0
  %v267 = vadd.f32 0.0, %v266
  %v268 = vpop.f32.mrf.mxu0
  %269 = vmatprep.mubr.f32.mxu0 0.0
  %270 = vmatmul.mubr.f32.gmra.mxu0 %v178
  %v271 = vpop.f32.mrf.mxu0
  %v272 = vadd.f32 0.0, %v271
  %v273 = vpop.f32.mrf.mxu0
  %274 = vmatprep.mubr.f32.mxu0 0.0
  %275 = vmatmul.mubr.f32.gmra.mxu0 %v181
  %v276 = vpop.f32.mrf.mxu0
  %v277 = vadd.f32 0.0, %v276
  %v278 = vpop.f32.mrf.mxu0
  %279 = vmatprep.mubr.f32.mxu0 0.0
  %280 = vmatmul.mubr.f32.gmra.mxu0 %v184
  %v281 = vpop.f32.mrf.mxu0
  %v282 = vadd.f32 0.0, %v281
  %v283 = vpop.f32.mrf.mxu0
  %284 = vmatprep.mubr.f32.mxu0 0.0
  %285 = vmatmul.mubr.f32.gmra.mxu0 %v187
  %v286 = vpop.f32.mrf.mxu0
  %v287 = vadd.f32 0.0, %v286
  %v288 = vpop.f32.mrf.mxu0
  %289 = vmatprep.mubr.f32.mxu0 0.0
  %290 = vmatmul.mubr.f32.gmra.mxu0 %v190
  %v291 = vpop.f32.mrf.mxu0
  %v292 = vadd.f32 0.0, %v291
  %v293 = vpop.f32.mrf.mxu0
  %294 = vmatprep.mubr.f32.mxu0 0.0
  %295 = vmatmul.mubr.f32.gmra.mxu0 %v193
  %v296 = vpop.f32.mrf.mxu0
  %v297 = vadd.f32 0.0, %v296
  %v298 = vpop.f32.mrf.mxu0
  %299 = vdwg.mxu0
  %s300 = scalar_lea.vmem %s2, 64
  %301 = vst.msk [vmem:[%s300] sm:$0xff] %vm151, %v262
  %302 = vst.msk [vmem:[%s300 + $0x8] sm:$0xff] %vm151, %v267
  %303 = vst.msk [vmem:[%s300 + $0x10] sm:$0xff] %vm151, %v272
  %304 = vst.msk [vmem:[%s300 + $0x18] sm:$0xff] %vm151, %v277
  %305 = vst.msk [vmem:[%s300 + $0x20] sm:$0xff] %vm151, %v282
  %306 = vst.msk [vmem:[%s300 + $0x28] sm:$0xff] %vm151, %v287
  %307 = vst.msk [vmem:[%s300 + $0x30] sm:$0xff] %vm151, %v292
  %308 = vst.msk [vmem:[%s300 + $0x38] sm:$0xff] %vm151, %v297
  // Predicated region
  $region10: #{unet_forward.19} parent=0 // pred_check
    _
  $region11: #{unet_forward.19} parent=0 // pred_check_branch
    %310 = sbr.rel (0) target = $region13
  $region12: #{unet_forward.19} parent=0 // pred_region
    _
  $region13: #{unet_forward.19} parent=0 // pred_fallthru
    _
  // Predicated region
  $region14: #{unet_forward.19} parent=0 // pred_check
    _
  $region15: #{unet_forward.19} parent=0 // pred_check_branch
    %312 = sbr.rel (0) target = $region17
  $region16: #{unet_forward.19} parent=0 // pred_region
    _
  $region17: #{unet_forward.19} parent=0 // pred_fallthru
    _

// kernel: unet_forward.18
$region0: #{unet_forward.18}
  #allocation0 [shape = 'u32[]', space=smem, size = 0x4, offset = 0x4, fixed_abs, tag = 'smem constant byte address 0x4 - core index']
  #allocation1 [shape = 'u32[144,128]{1,0:T(1,128)}', space=vmem, size = 0x12000, scoped, tag = 'internal scratch']
  %s0 = inlined_call_operand.vmem [shape: bf16[32,1728], index: 0, kind: input, shape index: {}]
  %s1 = inlined_call_operand.vmem [shape: bf16[1728,64], index: 1, kind: input, shape index: {}]
  %s2 = inlined_call_operand.vmem [shape: f32[1,64], index: 2, kind: input, shape index: {}]
  %s3 = inlined_call_operand.vmem [shape: f32[1,64], index: 3, kind: input, shape index: {}]
  %s4 = inlined_call_operand.vmem [shape: f32[1,64], index: 4, kind: input, shape index: {}]
  %s5 = inlined_call_operand.vmem [shape: f32[32,64], index: 5, kind: output, shape index: {}]
  %s6 = sld [smem:[#allocation0]]
  $region30: #{unet_forward.18} parent=0
    _
  %s8 = ssub.s32 1, %s6
  %s9 = scalar_select 0, %s8, %s6
  // Predicated region
  $region2: #{unet_forward.18} parent=0 // pred_check
    _
  $region3: #{unet_forward.18} parent=0 // pred_check_branch
    %11 = sbr.rel (0) target = $region5
  $region4: #{unet_forward.18} parent=0 // pred_region
    _
  $region5: #{unet_forward.18} parent=0 // pred_fallthru
    _
  // Predicated region
  $region6: #{unet_forward.18} parent=0 // pred_check
    _
  $region7: #{unet_forward.18} parent=0 // pred_check_branch
    %13 = sbr.rel (0) target = $region9
  $region8: #{unet_forward.18} parent=0 // pred_region
    _
  $region9: #{unet_forward.18} parent=0 // pred_fallthru
    _
  // Predicated region
  $region10: #{unet_forward.18} parent=0 // pred_check
    _
  $region11: #{unet_forward.18} parent=0 // pred_check_branch
    %15 = sbr.rel (0) target = $region13
  $region12: #{unet_forward.18} parent=0 // pred_region
    _
  $region13: #{unet_forward.18} parent=0 // pred_fallthru
    _
  // Predicated region
  $region14: #{unet_forward.18} parent=0 // pred_check
    _
  $region15: #{unet_forward.18} parent=0 // pred_check_branch
    %17 = sbr.rel (0) target = $region17
  $region16: #{unet_forward.18} parent=0 // pred_region
    _
  $region17: #{unet_forward.18} parent=0 // pred_fallthru
    _
  // Predicated region
  $region18: #{unet_forward.18} parent=0 // pred_check
    _
  $region19: #{unet_forward.18} parent=0 // pred_check_branch
    %19 = sbr.rel (0) target = $region21
  $region20: #{unet_forward.18} parent=0 // pred_region
    _
  $region21: #{unet_forward.18} parent=0 // pred_fallthru
    _
  %v21 = vld [vmem:[%s0] sm:$0xff]
  %v22 = vld [vmem:[%s0 + $0x8] sm:$0xff]
  %v23 = vld [vmem:[%s0 + $0x10] sm:$0xff]
  %v24 = vld [vmem:[%s0 + $0x18] sm:$0xff]
  %v25 = vld [vmem:[%s0 + $0x20] sm:$0xff]
  %v26 = vld [vmem:[%s0 + $0x28] sm:$0xff]
  %v27 = vld [vmem:[%s0 + $0x30] sm:$0xff]
  %v28 = vld [vmem:[%s0 + $0x38] sm:$0xff]
  %v29 = vld [vmem:[%s0 + $0x40] sm:$0xff]
  %v30 = vld [vmem:[%s0 + $0x48] sm:$0xff]
  %v31 = vld [vmem:[%s0 + $0x50] sm:$0xff]
  %v32 = vld [vmem:[%s0 + $0x58] sm:$0xff]
  %v33 = vld [vmem:[%s0 + $0x60] sm:$0xff]
  %v34 = vld [vmem:[%s0 + $0x68] sm:$0xff]
  %v35 = vld [vmem:[%s0 + $0x70] sm:$0xff]
  %v36 = vld [vmem:[%s0 + $0x78] sm:$0xff]
  %v37 = vld [vmem:[%s0 + $0x80] sm:$0xff]
  %v38 = vld [vmem:[%s0 + $0x88] sm:$0xff]
  %v39 = vld [vmem:[%s0 + $0x90] sm:$0xff]
  %v40 = vld [vmem:[%s0 + $0x98] sm:$0xff]
  %v41 = vld [vmem:[%s0 + $0xa0] sm:$0xff]
  %v42 = vld [vmem:[%s0 + $0xa8] sm:$0xff]
  %v43 = vld [vmem:[%s0 + $0xb0] sm:$0xff]
  %v44 = vld [vmem:[%s0 + $0xb8] sm:$0xff]
  %v45 = vld [vmem:[%s0 + $0xc0] sm:$0xff]
  %v46 = vld [vmem:[%s0 + $0xc8] sm:$0xff]
  %v47 = vld [vmem:[%s0 + $0xd0] sm:$0xff]
  %v48 = vld [vmem:[%s0 + $0xd8] sm:$0xff]
  %v49 = vld [vmem:[%s1] sm:$0xf]
  %v50 = vld [vmem:[%s1 + $0x4] sm:$0xf]
  %v51 = vld [vmem:[%s1 + $0x8] sm:$0xf]
  %v52 = vld [vmem:[%s1 + $0xc] sm:$0xf]
  %v53 = vld [vmem:[%s1 + $0x10] sm:$0xf]
  %v54 = vld [vmem:[%s1 + $0x14] sm:$0xf]
  %v55 = vld [vmem:[%s1 + $0x18] sm:$0xf]
  %v56 = vld [vmem:[%s1 + $0x1c] sm:$0xf]
  %v57 = vld [vmem:[%s1 + $0x20] sm:$0xf]
  %v58 = vld [vmem:[%s1 + $0x24] sm:$0xf]
  %v59 = vld [vmem:[%s1 + $0x28] sm:$0xf]
  %v60 = vld [vmem:[%s1 + $0x2c] sm:$0xf]
  %v61 = vld [vmem:[%s1 + $0x30] sm:$0xf]
  %v62 = vld [vmem:[%s1 + $0x34] sm:$0xf]
  %v63 = vld [vmem:[%s1 + $0x38] sm:$0xf]
  %v64 = vld [vmem:[%s1 + $0x3c] sm:$0xf]
  %v65 = vld [vmem:[%s1 + $0x40] sm:$0xf]
  %v66 = vld [vmem:[%s1 + $0x44] sm:$0xf]
  %v67 = vld [vmem:[%s1 + $0x48] sm:$0xf]
  %v68 = vld [vmem:[%s1 + $0x4c] sm:$0xf]
  %v69 = vld [vmem:[%s1 + $0x50] sm:$0xf]
  %v70 = vld [vmem:[%s1 + $0x54] sm:$0xf]
  %v71 = vld [vmem:[%s1 + $0x58] sm:$0xf]
  %v72 = vld [vmem:[%s1 + $0x5c] sm:$0xf]
  %v73 = vld [vmem:[%s1 + $0x60] sm:$0xf]
  %v74 = vld [vmem:[%s1 + $0x64] sm:$0xf]
  %v75 = vld [vmem:[%s1 + $0x68] sm:$0xf]
  %v76 = vld [vmem:[%s1 + $0x6c] sm:$0xf]
  %v77 = vld [vmem:[%s1 + $0x70] sm:$0xf]
  %v78 = vld [vmem:[%s1 + $0x74] sm:$0xf]
  %v79 = vld [vmem:[%s1 + $0x78] sm:$0xf]
  %v80 = vld [vmem:[%s1 + $0x7c] sm:$0xf]
  %v81 = vld [vmem:[%s1 + $0x80] sm:$0xf]
  %v82 = vld [vmem:[%s1 + $0x84] sm:$0xf]
  %v83 = vld [vmem:[%s1 + $0x88] sm:$0xf]
  %v84 = vld [vmem:[%s1 + $0x8c] sm:$0xf]
  %v85 = vld [vmem:[%s1 + $0x90] sm:$0xf]
  %v86 = vld [vmem:[%s1 + $0x94] sm:$0xf]
  %v87 = vld [vmem:[%s1 + $0x98] sm:$0xf]
  %v88 = vld [vmem:[%s1 + $0x9c] sm:$0xf]
  %v89 = vld [vmem:[%s1 + $0xa0] sm:$0xf]
  %v90 = vld [vmem:[%s1 + $0xa4] sm:$0xf]
  %v91 = vld [vmem:[%s1 + $0xa8] sm:$0xf]
  %v92 = vld [vmem:[%s1 + $0xac] sm:$0xf]
  %v93 = vld [vmem:[%s1 + $0xb0] sm:$0xf]
  %v94 = vld [vmem:[%s1 + $0xb4] sm:$0xf]
  %v95 = vld [vmem:[%s1 + $0xb8] sm:$0xf]
  %v96 = vld [vmem:[%s1 + $0xbc] sm:$0xf]
  %v97 = vld [vmem:[%s1 + $0xc0] sm:$0xf]
  %v98 = vld [vmem:[%s1 + $0xc4] sm:$0xf]
  %v99 = vld [vmem:[%s1 + $0xc8] sm:$0xf]
  %v100 = vld [vmem:[%s1 + $0xcc] sm:$0xf]
  %v101 = vld [vmem:[%s1 + $0xd0] sm:$0xf]
  %v102 = vld [vmem:[%s1 + $0xd4] sm:$0xf]
  %v103 = vld [vmem:[%s1 + $0xd8] sm:$0xf]
  %v104 = vld [vmem:[%s1 + $0xdc] sm:$0xf]
  %v105 = vld [vmem:[%s1 + $0xe0] sm:$0xf]
  %v106 = vld [vmem:[%s1 + $0xe4] sm:$0xf]
  %v107 = vld [vmem:[%s1 + $0xe8] sm:$0xf]
  %v108 = vld [vmem:[%s1 + $0xec] sm:$0xf]
  %v109 = vld [vmem:[%s1 + $0xf0] sm:$0xf]
  %v110 = vld [vmem:[%s1 + $0xf4] sm:$0xf]
  %v111 = vld [vmem:[%s1 + $0xf8] sm:$0xf]
  %v112 = vld [vmem:[%s1 + $0xfc] sm:$0xf]
  %v113 = vld [vmem:[%s1 + $0x100] sm:$0xf]
  %v114 = vld [vmem:[%s1 + $0x104] sm:$0xf]
  %v115 = vld [vmem:[%s1 + $0x108] sm:$0xf]
  %v116 = vld [vmem:[%s1 + $0x10c] sm:$0xf]
  %v117 = vld [vmem:[%s1 + $0x110] sm:$0xf]
  %v118 = vld [vmem:[%s1 + $0x114] sm:$0xf]
  %v119 = vld [vmem:[%s1 + $0x118] sm:$0xf]
  %v120 = vld [vmem:[%s1 + $0x11c] sm:$0xf]
  %v121 = vld [vmem:[%s1 + $0x120] sm:$0xf]
  %v122 = vld [vmem:[%s1 + $0x124] sm:$0xf]
  %v123 = vld [vmem:[%s1 + $0x128] sm:$0xf]
  %v124 = vld [vmem:[%s1 + $0x12c] sm:$0xf]
  %v125 = vld [vmem:[%s1 + $0x130] sm:$0xf]
  %v126 = vld [vmem:[%s1 + $0x134] sm:$0xf]
  %v127 = vld [vmem:[%s1 + $0x138] sm:$0xf]
  %v128 = vld [vmem:[%s1 + $0x13c] sm:$0xf]
  %v129 = vld [vmem:[%s1 + $0x140] sm:$0xf]
  %v130 = vld [vmem:[%s1 + $0x144] sm:$0xf]
  %v131 = vld [vmem:[%s1 + $0x148] sm:$0xf]
  %v132 = vld [vmem:[%s1 + $0x14c] sm:$0xf]
  %v133 = vld [vmem:[%s1 + $0x150] sm:$0xf]
  %v134 = vld [vmem:[%s1 + $0x154] sm:$0xf]
  %v135 = vld [vmem:[%s1 + $0x158] sm:$0xf]
  %v136 = vld [vmem:[%s1 + $0x15c] sm:$0xf]
  %v137 = vld [vmem:[%s1 + $0x160] sm:$0xf]
  %v138 = vld [vmem:[%s1 + $0x164] sm:$0xf]
  %v139 = vld [vmem:[%s1 + $0x168] sm:$0xf]
  %v140 = vld [vmem:[%s1 + $0x16c] sm:$0xf]
  %v141 = vld [vmem:[%s1 + $0x170] sm:$0xf]
  %v142 = vld [vmem:[%s1 + $0x174] sm:$0xf]
  %v143 = vld [vmem:[%s1 + $0x178] sm:$0xf]
  %v144 = vld [vmem:[%s1 + $0x17c] sm:$0xf]
  %v145 = vld [vmem:[%s1 + $0x180] sm:$0xf]
  %v146 = vld [vmem:[%s1 + $0x184] sm:$0xf]
  %v147 = vld [vmem:[%s1 + $0x188] sm:$0xf]
  %v148 = vld [vmem:[%s1 + $0x18c] sm:$0xf]
  %v149 = vld [vmem:[%s1 + $0x190] sm:$0xf]
  %v150 = vld [vmem:[%s1 + $0x194] sm:$0xf]
  %v151 = vld [vmem:[%s1 + $0x198] sm:$0xf]
  %v152 = vld [vmem:[%s1 + $0x19c] sm:$0xf]
  %v153 = vld [vmem:[%s1 + $0x1a0] sm:$0xf]
  %v154 = vld [vmem:[%s1 + $0x1a4] sm:$0xf]
  %v155 = vld [vmem:[%s1 + $0x1a8] sm:$0xf]
  %v156 = vld [vmem:[%s1 + $0x1ac] sm:$0xf]
  %v157 = vld [vmem:[%s1 + $0x1b0] sm:$0xf]
  %v158 = vld [vmem:[%s1 + $0x1b4] sm:$0xf]
  %v159 = vld [vmem:[%s1 + $0x1b8] sm:$0xf]
  %v160 = vld [vmem:[%s1 + $0x1bc] sm:$0xf]
  %v161 = vld [vmem:[%s1 + $0x1c0] sm:$0xf]
  %v162 = vld [vmem:[%s1 + $0x1c4] sm:$0xf]
  %v163 = vld [vmem:[%s1 + $0x1c8] sm:$0xf]
  %v164 = vld [vmem:[%s1 + $0x1cc] sm:$0xf]
  %v165 = vld [vmem:[%s1 + $0x1d0] sm:$0xf]
  %v166 = vld [vmem:[%s1 + $0x1d4] sm:$0xf]
  %v167 = vld [vmem:[%s1 + $0x1d8] sm:$0xf]
  %v168 = vld [vmem:[%s1 + $0x1dc] sm:$0xf]
  %v169 = vld [vmem:[%s1 + $0x1e0] sm:$0xf]
  %v170 = vld [vmem:[%s1 + $0x1e4] sm:$0xf]
  %v171 = vld [vmem:[%s1 + $0x1e8] sm:$0xf]
  %v172 = vld [vmem:[%s1 + $0x1ec] sm:$0xf]
  %v173 = vld [vmem:[%s1 + $0x1f0] sm:$0xf]
  %v174 = vld [vmem:[%s1 + $0x1f4] sm:$0xf]
  %v175 = vld [vmem:[%s1 + $0x1f8] sm:$0xf]
  %v176 = vld [vmem:[%s1 + $0x1fc] sm:$0xf]
  %v177 = vld [vmem:[%s1 + $0x200] sm:$0xf]
  %v178 = vld [vmem:[%s1 + $0x204] sm:$0xf]
  %v179 = vld [vmem:[%s1 + $0x208] sm:$0xf]
  %v180 = vld [vmem:[%s1 + $0x20c] sm:$0xf]
  %v181 = vld [vmem:[%s1 + $0x210] sm:$0xf]
  %v182 = vld [vmem:[%s1 + $0x214] sm:$0xf]
  %v183 = vld [vmem:[%s1 + $0x218] sm:$0xf]
  %v184 = vld [vmem:[%s1 + $0x21c] sm:$0xf]
  %v185 = vld [vmem:[%s1 + $0x220] sm:$0xf]
  %v186 = vld [vmem:[%s1 + $0x224] sm:$0xf]
  %v187 = vld [vmem:[%s1 + $0x228] sm:$0xf]
  %v188 = vld [vmem:[%s1 + $0x22c] sm:$0xf]
  %v189 = vld [vmem:[%s1 + $0x230] sm:$0xf]
  %v190 = vld [vmem:[%s1 + $0x234] sm:$0xf]
  %v191 = vld [vmem:[%s1 + $0x238] sm:$0xf]
  %v192 = vld [vmem:[%s1 + $0x23c] sm:$0xf]
  %v193 = vld [vmem:[%s1 + $0x240] sm:$0xf]
  %v194 = vld [vmem:[%s1 + $0x244] sm:$0xf]
  %v195 = vld [vmem:[%s1 + $0x248] sm:$0xf]
  %v196 = vld [vmem:[%s1 + $0x24c] sm:$0xf]
  %v197 = vld [vmem:[%s1 + $0x250] sm:$0xf]
  %v198 = vld [vmem:[%s1 + $0x254] sm:$0xf]
  %v199 = vld [vmem:[%s1 + $0x258] sm:$0xf]
  %v200 = vld [vmem:[%s1 + $0x25c] sm:$0xf]
  %v201 = vld [vmem:[%s1 + $0x260] sm:$0xf]
  %v202 = vld [vmem:[%s1 + $0x264] sm:$0xf]
  %v203 = vld [vmem:[%s1 + $0x268] sm:$0xf]
  %v204 = vld [vmem:[%s1 + $0x26c] sm:$0xf]
  %v205 = vld [vmem:[%s1 + $0x270] sm:$0xf]
  %v206 = vld [vmem:[%s1 + $0x274] sm:$0xf]
  %v207 = vld [vmem:[%s1 + $0x278] sm:$0xf]
  %v208 = vld [vmem:[%s1 + $0x27c] sm:$0xf]
  %v209 = vld [vmem:[%s1 + $0x280] sm:$0xf]
  %v210 = vld [vmem:[%s1 + $0x284] sm:$0xf]
  %v211 = vld [vmem:[%s1 + $0x288] sm:$0xf]
  %v212 = vld [vmem:[%s1 + $0x28c] sm:$0xf]
  %v213 = vld [vmem:[%s1 + $0x290] sm:$0xf]
  %v214 = vld [vmem:[%s1 + $0x294] sm:$0xf]
  %v215 = vld [vmem:[%s1 + $0x298] sm:$0xf]
  %v216 = vld [vmem:[%s1 + $0x29c] sm:$0xf]
  %v217 = vld [vmem:[%s1 + $0x2a0] sm:$0xf]
  %v218 = vld [vmem:[%s1 + $0x2a4] sm:$0xf]
  %v219 = vld [vmem:[%s1 + $0x2a8] sm:$0xf]
  %v220 = vld [vmem:[%s1 + $0x2ac] sm:$0xf]
  %v221 = vld [vmem:[%s1 + $0x2b0] sm:$0xf]
  %v222 = vld [vmem:[%s1 + $0x2b4] sm:$0xf]
  %v223 = vld [vmem:[%s1 + $0x2b8] sm:$0xf]
  %v224 = vld [vmem:[%s1 + $0x2bc] sm:$0xf]
  %v225 = vld [vmem:[%s1 + $0x2c0] sm:$0xf]
  %v226 = vld [vmem:[%s1 + $0x2c4] sm:$0xf]
  %v227 = vld [vmem:[%s1 + $0x2c8] sm:$0xf]
  %v228 = vld [vmem:[%s1 + $0x2cc] sm:$0xf]
  %v229 = vld [vmem:[%s1 + $0x2d0] sm:$0xf]
  %v230 = vld [vmem:[%s1 + $0x2d4] sm:$0xf]
  %v231 = vld [vmem:[%s1 + $0x2d8] sm:$0xf]
  %v232 = vld [vmem:[%s1 + $0x2dc] sm:$0xf]
  %v233 = vld [vmem:[%s1 + $0x2e0] sm:$0xf]
  %v234 = vld [vmem:[%s1 + $0x2e4] sm:$0xf]
  %v235 = vld [vmem:[%s1 + $0x2e8] sm:$0xf]
  %v236 = vld [vmem:[%s1 + $0x2ec] sm:$0xf]
  %v237 = vld [vmem:[%s1 + $0x2f0] sm:$0xf]
  %v238 = vld [vmem:[%s1 + $0x2f4] sm:$0xf]
  %v239 = vld [vmem:[%s1 + $0x2f8] sm:$0xf]
  %v240 = vld [vmem:[%s1 + $0x2fc] sm:$0xf]
  %v241 = vld [vmem:[%s1 + $0x300] sm:$0xf]
  %v242 = vld [vmem:[%s1 + $0x304] sm:$0xf]
  %v243 = vld [vmem:[%s1 + $0x308] sm:$0xf]
  %v244 = vld [vmem:[%s1 + $0x30c] sm:$0xf]
  %v245 = vld [vmem:[%s1 + $0x310] sm:$0xf]
  %v246 = vld [vmem:[%s1 + $0x314] sm:$0xf]
  %v247 = vld [vmem:[%s1 + $0x318] sm:$0xf]
  %v248 = vld [vmem:[%s1 + $0x31c] sm:$0xf]
  %v249 = vld [vmem:[%s1 + $0x320] sm:$0xf]
  %v250 = vld [vmem:[%s1 + $0x324] sm:$0xf]
  %v251 = vld [vmem:[%s1 + $0x328] sm:$0xf]
  %v252 = vld [vmem:[%s1 + $0x32c] sm:$0xf]
  %v253 = vld [vmem:[%s1 + $0x330] sm:$0xf]
  %v254 = vld [vmem:[%s1 + $0x334] sm:$0xf]
  %v255 = vld [vmem:[%s1 + $0x338] sm:$0xf]
  %v256 = vld [vmem:[%s1 + $0x33c] sm:$0xf]
  %v257 = vld [vmem:[%s1 + $0x340] sm:$0xf]
  %v258 = vld [vmem:[%s1 + $0x344] sm:$0xf]
  %v259 = vld [vmem:[%s1 + $0x348] sm:$0xf]
  %v260 = vld [vmem:[%s1 + $0x34c] sm:$0xf]
  %v261 = vld [vmem:[%s1 + $0x350] sm:$0xf]
  %v262 = vld [vmem:[%s1 + $0x354] sm:$0xf]
  %v263 = vld [vmem:[%s1 + $0x358] sm:$0xf]
  %v264 = vld [vmem:[%s1 + $0x35c] sm:$0xf]
  %v265 = vld [vmem:[%s2] sm:$0x1]
  %v267 = vlaneseq
  %v268 = vshrl.u32 %v267, 7
  %v269 = vsub.s32 0, %v268
  %v270 = vrot.slane %v265, %v269
  %v300 = vunpack.c.l.b16 %v21
  %v301 = vunpack.c.h.b16 %v21
  %v302 = vunpack.c.l.b16 %v22
  %v303 = vunpack.c.h.b16 %v22
  %v304 = vunpack.c.l.b16 %v23
  %v305 = vunpack.c.h.b16 %v23
  %v306 = vunpack.c.l.b16 %v24
  %v307 = vunpack.c.h.b16 %v24
  %v308 = vunpack.c.l.b16 %v25
  %v309 = vunpack.c.h.b16 %v25
  %v310 = vunpack.c.l.b16 %v26
  %v311 = vunpack.c.h.b16 %v26
  %v312 = vunpack.c.l.b16 %v27
  %v313 = vunpack.c.h.b16 %v27
  %v314 = vunpack.c.l.b16 %v28
  %v315 = vunpack.c.h.b16 %v28
  %v316 = vunpack.c.l.b16 %v29
  %v317 = vunpack.c.h.b16 %v29
  %v318 = vunpack.c.l.b16 %v30
  %v319 = vunpack.c.h.b16 %v30
  %v320 = vunpack.c.l.b16 %v31
  %v321 = vunpack.c.h.b16 %v31
  %v322 = vunpack.c.l.b16 %v32
  %v323 = vunpack.c.h.b16 %v32
  %v324 = vunpack.c.l.b16 %v33
  %v325 = vunpack.c.h.b16 %v33
  %v326 = vunpack.c.l.b16 %v34
  %v327 = vunpack.c.h.b16 %v34
  %v328 = vunpack.c.l.b16 %v35
  %v329 = vunpack.c.h.b16 %v35
  %v330 = vunpack.c.l.b16 %v36
  %v331 = vunpack.c.h.b16 %v36
  %v332 = vunpack.c.l.b16 %v37
  %v333 = vunpack.c.h.b16 %v37
  %v334 = vunpack.c.l.b16 %v38
  %v335 = vunpack.c.h.b16 %v38
  %v336 = vunpack.c.l.b16 %v39
  %v337 = vunpack.c.h.b16 %v39
  %v338 = vunpack.c.l.b16 %v40
  %v339 = vunpack.c.h.b16 %v40
  %v340 = vunpack.c.l.b16 %v41
  %v341 = vunpack.c.h.b16 %v41
  %v342 = vunpack.c.l.b16 %v42
  %v343 = vunpack.c.h.b16 %v42
  %v344 = vunpack.c.l.b16 %v43
  %v345 = vunpack.c.h.b16 %v43
  %v346 = vunpack.c.l.b16 %v44
  %v347 = vunpack.c.h.b16 %v44
  %v348 = vunpack.c.l.b16 %v45
  %v349 = vunpack.c.h.b16 %v45
  %v350 = vunpack.c.l.b16 %v46
  %v351 = vunpack.c.h.b16 %v46
  %v352 = vunpack.c.l.b16 %v47
  %v353 = vunpack.c.h.b16 %v47
  %v354 = vunpack.c.l.b16 %v48
  %v355 = vunpack.c.h.b16 %v48
  %v356 = vpack.c.b16 %v314, %v300
  %v357 = vpack.c.b16 %v315, %v301
  %v358 = vpack.c.b16 %v316, %v302
  %v359 = vpack.c.b16 %v317, %v303
  %v360 = vpack.c.b16 %v318, %v304
  %v361 = vpack.c.b16 %v319, %v305
  %v362 = vpack.c.b16 %v320, %v306
  %v363 = vpack.c.b16 %v321, %v307
  %v364 = vpack.c.b16 %v322, %v308
  %v365 = vpack.c.b16 %v323, %v309
  %v366 = vpack.c.b16 %v324, %v310
  %v367 = vpack.c.b16 %v325, %v311
  %v368 = vpack.c.b16 %v326, %v312
  %v369 = vpack.c.b16 %v327, %v313
  %v370 = vpack.c.b16 %v342, %v328
  %v371 = vpack.c.b16 %v343, %v329
  %v372 = vpack.c.b16 %v344, %v330
  %v373 = vpack.c.b16 %v345, %v331
  %v374 = vpack.c.b16 %v346, %v332
  %v375 = vpack.c.b16 %v347, %v333
  %v376 = vpack.c.b16 %v348, %v334
  %v377 = vpack.c.b16 %v349, %v335
  %v378 = vpack.c.b16 %v350, %v336
  %v379 = vpack.c.b16 %v351, %v337
  %v380 = vpack.c.b16 %v352, %v338
  %v381 = vpack.c.b16 %v353, %v339
  %v382 = vpack.c.b16 %v354, %v340
  %v383 = vpack.c.b16 %v355, %v341
  %v626 = vunpack.c.l.b16 %v49
  %v627 = vunpack.c.l.b16 %v50
  %v628 = vunpack.c.l.b16 %v51
  %v629 = vunpack.c.l.b16 %v52
  %v630 = vunpack.c.l.b16 %v53
  %v631 = vunpack.c.l.b16 %v54
  %v632 = vunpack.c.l.b16 %v55
  %v633 = vunpack.c.l.b16 %v56
  %v634 = vunpack.c.l.b16 %v57
  %v635 = vunpack.c.l.b16 %v58
  %v636 = vunpack.c.l.b16 %v59
  %v637 = vunpack.c.l.b16 %v60
  %v638 = vunpack.c.l.b16 %v61
  %v639 = vunpack.c.l.b16 %v62
  %v640 = vunpack.c.l.b16 %v63
  %v641 = vunpack.c.l.b16 %v64
  %v642 = vunpack.c.l.b16 %v65
  %v643 = vunpack.c.l.b16 %v66
  %v644 = vunpack.c.l.b16 %v67
  %v645 = vunpack.c.l.b16 %v68
  %v646 = vunpack.c.l.b16 %v69
  %v647 = vunpack.c.l.b16 %v70
  %v648 = vunpack.c.l.b16 %v71
  %v649 = vunpack.c.l.b16 %v72
  %v650 = vunpack.c.l.b16 %v73
  %v651 = vunpack.c.l.b16 %v74
  %v652 = vunpack.c.l.b16 %v75
  %v653 = vunpack.c.l.b16 %v76
  %v654 = vunpack.c.l.b16 %v77
  %v655 = vunpack.c.l.b16 %v78
  %v656 = vunpack.c.l.b16 %v79
  %v657 = vunpack.c.l.b16 %v80
  %v658 = vunpack.c.l.b16 %v81
  %v659 = vunpack.c.l.b16 %v82
  %v660 = vunpack.c.l.b16 %v83
  %v661 = vunpack.c.l.b16 %v84
  %v662 = vunpack.c.l.b16 %v85
  %v663 = vunpack.c.l.b16 %v86
  %v664 = vunpack.c.l.b16 %v87
  %v665 = vunpack.c.l.b16 %v88
  %v666 = vunpack.c.l.b16 %v89
  %v667 = vunpack.c.l.b16 %v90
  %v668 = vunpack.c.l.b16 %v91
  %v669 = vunpack.c.l.b16 %v92
  %v670 = vunpack.c.l.b16 %v93
  %v671 = vunpack.c.l.b16 %v94
  %v672 = vunpack.c.l.b16 %v95
  %v673 = vunpack.c.l.b16 %v96
  %v674 = vunpack.c.l.b16 %v97
  %v675 = vunpack.c.l.b16 %v98
  %v676 = vunpack.c.l.b16 %v99
  %v677 = vunpack.c.l.b16 %v100
  %v678 = vunpack.c.l.b16 %v101
  %v679 = vunpack.c.l.b16 %v102
  %v680 = vunpack.c.l.b16 %v103
  %v681 = vunpack.c.l.b16 %v104
  %v682 = vunpack.c.l.b16 %v105
  %v683 = vunpack.c.l.b16 %v106
  %v684 = vunpack.c.l.b16 %v107
  %v685 = vunpack.c.l.b16 %v108
  %v686 = vunpack.c.l.b16 %v109
  %v687 = vunpack.c.l.b16 %v110
  %v688 = vunpack.c.l.b16 %v111
  %v689 = vunpack.c.l.b16 %v112
  %v690 = vunpack.c.l.b16 %v113
  %v691 = vunpack.c.l.b16 %v114
  %v692 = vunpack.c.l.b16 %v115
  %v693 = vunpack.c.l.b16 %v116
  %v694 = vunpack.c.l.b16 %v117
  %v695 = vunpack.c.l.b16 %v118
  %v696 = vunpack.c.l.b16 %v119
  %v697 = vunpack.c.l.b16 %v120
  %v698 = vunpack.c.l.b16 %v121
  %v699 = vunpack.c.l.b16 %v122
  %v700 = vunpack.c.l.b16 %v123
  %v701 = vunpack.c.l.b16 %v124
  %v702 = vunpack.c.l.b16 %v125
  %v703 = vunpack.c.l.b16 %v126
  %v704 = vunpack.c.l.b16 %v127
  %v705 = vunpack.c.l.b16 %v128
  %v706 = vunpack.c.l.b16 %v129
  %v707 = vunpack.c.l.b16 %v130
  %v708 = vunpack.c.l.b16 %v131
  %v709 = vunpack.c.l.b16 %v132
  %v710 = vunpack.c.l.b16 %v133
  %v711 = vunpack.c.l.b16 %v134
  %v712 = vunpack.c.l.b16 %v135
  %v713 = vunpack.c.l.b16 %v136
  %v714 = vunpack.c.l.b16 %v137
  %v715 = vunpack.c.l.b16 %v138
  %v716 = vunpack.c.l.b16 %v139
  %v717 = vunpack.c.l.b16 %v140
  %v718 = vunpack.c.l.b16 %v141
  %v719 = vunpack.c.l.b16 %v142
  %v720 = vunpack.c.l.b16 %v143
  %v721 = vunpack.c.l.b16 %v144
  %v722 = vunpack.c.l.b16 %v145
  %v723 = vunpack.c.l.b16 %v146
  %v724 = vunpack.c.l.b16 %v147
  %v725 = vunpack.c.l.b16 %v148
  %v726 = vunpack.c.l.b16 %v149
  %v727 = vunpack.c.l.b16 %v150
  %v728 = vunpack.c.l.b16 %v151
  %v729 = vunpack.c.l.b16 %v152
  %v730 = vunpack.c.l.b16 %v153
  %v731 = vunpack.c.l.b16 %v154
  %v732 = vunpack.c.l.b16 %v155
  %v733 = vunpack.c.l.b16 %v156
  %v734 = vunpack.c.l.b16 %v157
  %v735 = vunpack.c.l.b16 %v158
  %v736 = vunpack.c.l.b16 %v159
  %v737 = vunpack.c.l.b16 %v160
  %v738 = vunpack.c.l.b16 %v161
  %v739 = vunpack.c.l.b16 %v162
  %v740 = vunpack.c.l.b16 %v163
  %v741 = vunpack.c.l.b16 %v164
  %v742 = vunpack.c.l.b16 %v165
  %v743 = vunpack.c.l.b16 %v166
  %v744 = vunpack.c.l.b16 %v167
  %v745 = vunpack.c.l.b16 %v168
  %v746 = vunpack.c.l.b16 %v169
  %v747 = vunpack.c.l.b16 %v170
  %v748 = vunpack.c.l.b16 %v171
  %v749 = vunpack.c.l.b16 %v172
  %v750 = vunpack.c.l.b16 %v173
  %v751 = vunpack.c.l.b16 %v174
  %v752 = vunpack.c.l.b16 %v175
  %v753 = vunpack.c.l.b16 %v176
  %v754 = vunpack.c.l.b16 %v177
  %v755 = vunpack.c.l.b16 %v178
  %v756 = vunpack.c.l.b16 %v179
  %v757 = vunpack.c.l.b16 %v180
  %v758 = vunpack.c.l.b16 %v181
  %v759 = vunpack.c.l.b16 %v182
  %v760 = vunpack.c.l.b16 %v183
  %v761 = vunpack.c.l.b16 %v184
  %v762 = vunpack.c.l.b16 %v185
  %v763 = vunpack.c.l.b16 %v186
  %v764 = vunpack.c.l.b16 %v187
  %v765 = vunpack.c.l.b16 %v188
  %v766 = vunpack.c.l.b16 %v189
  %v767 = vunpack.c.l.b16 %v190
  %v768 = vunpack.c.l.b16 %v191
  %v769 = vunpack.c.l.b16 %v192
  %v770 = vunpack.c.l.b16 %v193
  %v771 = vunpack.c.l.b16 %v194
  %v772 = vunpack.c.l.b16 %v195
  %v773 = vunpack.c.l.b16 %v196
  %v774 = vunpack.c.l.b16 %v197
  %v775 = vunpack.c.l.b16 %v198
  %v776 = vunpack.c.l.b16 %v199
  %v777 = vunpack.c.l.b16 %v200
  %v778 = vunpack.c.l.b16 %v201
  %v779 = vunpack.c.l.b16 %v202
  %v780 = vunpack.c.l.b16 %v203
  %v781 = vunpack.c.l.b16 %v204
  %v782 = vunpack.c.l.b16 %v205
  %v783 = vunpack.c.l.b16 %v206
  %v784 = vunpack.c.l.b16 %v207
  %v785 = vunpack.c.l.b16 %v208
  %v786 = vunpack.c.l.b16 %v209
  %v787 = vunpack.c.l.b16 %v210
  %v788 = vunpack.c.l.b16 %v211
  %v789 = vunpack.c.l.b16 %v212
  %v790 = vunpack.c.l.b16 %v213
  %v791 = vunpack.c.l.b16 %v214
  %v792 = vunpack.c.l.b16 %v215
  %v793 = vunpack.c.l.b16 %v216
  %v794 = vunpack.c.l.b16 %v217
  %v795 = vunpack.c.l.b16 %v218
  %v796 = vunpack.c.l.b16 %v219
  %v797 = vunpack.c.l.b16 %v220
  %v798 = vunpack.c.l.b16 %v221
  %v799 = vunpack.c.l.b16 %v222
  %v800 = vunpack.c.l.b16 %v223
  %v801 = vunpack.c.l.b16 %v224
  %v802 = vunpack.c.l.b16 %v225
  %v803 = vunpack.c.l.b16 %v226
  %v804 = vunpack.c.l.b16 %v227
  %v805 = vunpack.c.l.b16 %v228
  %v806 = vunpack.c.l.b16 %v229
  %v807 = vunpack.c.l.b16 %v230
  %v808 = vunpack.c.l.b16 %v231
  %v809 = vunpack.c.l.b16 %v232
  %v810 = vunpack.c.l.b16 %v233
  %v811 = vunpack.c.l.b16 %v234
  %v812 = vunpack.c.l.b16 %v235
  %v813 = vunpack.c.l.b16 %v236
  %v814 = vunpack.c.l.b16 %v237
  %v815 = vunpack.c.l.b16 %v238
  %v816 = vunpack.c.l.b16 %v239
  %v817 = vunpack.c.l.b16 %v240
  %v818 = vunpack.c.l.b16 %v241
  %v819 = vunpack.c.l.b16 %v242
  %v820 = vunpack.c.l.b16 %v243
  %v821 = vunpack.c.l.b16 %v244
  %v822 = vunpack.c.l.b16 %v245
  %v823 = vunpack.c.l.b16 %v246
  %v824 = vunpack.c.l.b16 %v247
  %v825 = vunpack.c.l.b16 %v248
  %v826 = vunpack.c.l.b16 %v249
  %v827 = vunpack.c.l.b16 %v250
  %v828 = vunpack.c.l.b16 %v251
  %v829 = vunpack.c.l.b16 %v252
  %v830 = vunpack.c.l.b16 %v253
  %v831 = vunpack.c.l.b16 %v254
  %v832 = vunpack.c.l.b16 %v255
  %v833 = vunpack.c.l.b16 %v256
  %v834 = vunpack.c.l.b16 %v257
  %v835 = vunpack.c.l.b16 %v258
  %v836 = vunpack.c.l.b16 %v259
  %v837 = vunpack.c.l.b16 %v260
  %v838 = vunpack.c.l.b16 %v261
  %v839 = vunpack.c.l.b16 %v262
  %v840 = vunpack.c.l.b16 %v263
  %v841 = vunpack.c.l.b16 %v264
  %v842 = vpack.c.b16 %v627, %v626
  %v843 = vpack.c.b16 %v629, %v628
  %v844 = vpack.c.b16 %v631, %v630
  %v845 = vpack.c.b16 %v633, %v632
  %v846 = vpack.c.b16 %v635, %v634
  %v847 = vpack.c.b16 %v637, %v636
  %v848 = vpack.c.b16 %v639, %v638
  %v849 = vpack.c.b16 %v641, %v640
  %v850 = vpack.c.b16 %v643, %v642
  %v851 = vpack.c.b16 %v645, %v644
  %v852 = vpack.c.b16 %v647, %v646
  %v853 = vpack.c.b16 %v649, %v648
  %v854 = vpack.c.b16 %v651, %v650
  %v855 = vpack.c.b16 %v653, %v652
  %v856 = vpack.c.b16 %v655, %v654
  %v857 = vpack.c.b16 %v657, %v656
  %v858 = vpack.c.b16 %v659, %v658
  %v859 = vpack.c.b16 %v661, %v660
  %v860 = vpack.c.b16 %v663, %v662
  %v861 = vpack.c.b16 %v665, %v664
  %v862 = vpack.c.b16 %v667, %v666
  %v863 = vpack.c.b16 %v669, %v668
  %v864 = vpack.c.b16 %v671, %v670
  %v865 = vpack.c.b16 %v673, %v672
  %v866 = vpack.c.b16 %v675, %v674
  %v867 = vpack.c.b16 %v677, %v676
  %v868 = vpack.c.b16 %v679, %v678
  %v869 = vpack.c.b16 %v681, %v680
  %v870 = vpack.c.b16 %v683, %v682
  %v871 = vpack.c.b16 %v685, %v684
  %v872 = vpack.c.b16 %v687, %v686
  %v873 = vpack.c.b16 %v689, %v688
  %v874 = vpack.c.b16 %v691, %v690
  %v875 = vpack.c.b16 %v693, %v692
  %v876 = vpack.c.b16 %v695, %v694
  %v877 = vpack.c.b16 %v697, %v696
  %v878 = vpack.c.b16 %v699, %v698
  %v879 = vpack.c.b16 %v701, %v700
  %v880 = vpack.c.b16 %v703, %v702
  %v881 = vpack.c.b16 %v705, %v704
  %v882 = vpack.c.b16 %v707, %v706
  %v883 = vpack.c.b16 %v709, %v708
  %v884 = vpack.c.b16 %v711, %v710
  %v885 = vpack.c.b16 %v713, %v712
  %v886 = vpack.c.b16 %v715, %v714
  %v887 = vpack.c.b16 %v717, %v716
  %v888 = vpack.c.b16 %v719, %v718
  %v889 = vpack.c.b16 %v721, %v720
  %v890 = vpack.c.b16 %v723, %v722
  %v891 = vpack.c.b16 %v725, %v724
  %v892 = vpack.c.b16 %v727, %v726
  %v893 = vpack.c.b16 %v729, %v728
  %v894 = vpack.c.b16 %v731, %v730
  %v895 = vpack.c.b16 %v733, %v732
  %v896 = vpack.c.b16 %v735, %v734
  %v897 = vpack.c.b16 %v737, %v736
  %v898 = vpack.c.b16 %v739, %v738
  %v899 = vpack.c.b16 %v741, %v740
  %v900 = vpack.c.b16 %v743, %v742
  %v901 = vpack.c.b16 %v745, %v744
  %v902 = vpack.c.b16 %v747, %v746
  %v903 = vpack.c.b16 %v749, %v748
  %v904 = vpack.c.b16 %v751, %v750
  %v905 = vpack.c.b16 %v753, %v752
  %v906 = vpack.c.b16 %v755, %v754
  %v907 = vpack.c.b16 %v757, %v756
  %v908 = vpack.c.b16 %v759, %v758
  %v909 = vpack.c.b16 %v761, %v760
  %v910 = vpack.c.b16 %v763, %v762
  %v911 = vpack.c.b16 %v765, %v764
  %v912 = vpack.c.b16 %v767, %v766
  %v913 = vpack.c.b16 %v769, %v768
  %v914 = vpack.c.b16 %v771, %v770
  %v915 = vpack.c.b16 %v773, %v772
  %v916 = vpack.c.b16 %v775, %v774
  %v917 = vpack.c.b16 %v777, %v776
  %v918 = vpack.c.b16 %v779, %v778
  %v919 = vpack.c.b16 %v781, %v780
  %v920 = vpack.c.b16 %v783, %v782
  %v921 = vpack.c.b16 %v785, %v784
  %v922 = vpack.c.b16 %v787, %v786
  %v923 = vpack.c.b16 %v789, %v788
  %v924 = vpack.c.b16 %v791, %v790
  %v925 = vpack.c.b16 %v793, %v792
  %v926 = vpack.c.b16 %v795, %v794
  %v927 = vpack.c.b16 %v797, %v796
  %v928 = vpack.c.b16 %v799, %v798
  %v929 = vpack.c.b16 %v801, %v800
  %v930 = vpack.c.b16 %v803, %v802
  %v931 = vpack.c.b16 %v805, %v804
  %v932 = vpack.c.b16 %v807, %v806
  %v933 = vpack.c.b16 %v809, %v808
  %v934 = vpack.c.b16 %v811, %v810
  %v935 = vpack.c.b16 %v813, %v812
  %v936 = vpack.c.b16 %v815, %v814
  %v937 = vpack.c.b16 %v817, %v816
  %v938 = vpack.c.b16 %v819, %v818
  %v939 = vpack.c.b16 %v821, %v820
  %v940 = vpack.c.b16 %v823, %v822
  %v941 = vpack.c.b16 %v825, %v824
  %v942 = vpack.c.b16 %v827, %v826
  %v943 = vpack.c.b16 %v829, %v828
  %v944 = vpack.c.b16 %v831, %v830
  %v945 = vpack.c.b16 %v833, %v832
  %v946 = vpack.c.b16 %v835, %v834
  %v947 = vpack.c.b16 %v837, %v836
  %v948 = vpack.c.b16 %v839, %v838
  %v949 = vpack.c.b16 %v841, %v840
  %vm1058 = vcmask 523264
  %v1060 = vsel %vm1058, %v369, 0
  %v1063 = vsel %vm1058, %v383, 0
  %1065 = vmatprep.subr.bf16.mxu0 0
  %1066 = vmatpush1.bf16.msra.mxu0 %v849
  %1067 = vmatprep.subr.bf16.mxu0 0
  %1068 = vmatpush1.bf16.msra.mxu0 %v848
  %1069 = vmatprep.subr.bf16.mxu0 0
  %1070 = vmatpush1.bf16.msra.mxu0 %v847
  %1071 = vmatprep.subr.bf16.mxu0 0
  %1072 = vmatpush1.bf16.msra.mxu0 %v846
  %1073 = vmatprep.subr.bf16.mxu0 0
  %1074 = vmatpush1.bf16.msra.mxu0 %v845
  %1075 = vmatprep.subr.bf16.mxu0 0
  %1076 = vmatpush1.bf16.msra.mxu0 %v844
  %1077 = vmatprep.subr.bf16.mxu0 0
  %1078 = vmatpush1.bf16.msra.mxu0 %v843
  %1079 = vmatprep.subr.bf16.mxu0 0
  %1080 = vmatpush1.bf16.msra.mxu0 %v842
  %1081 = vmatprep.subr.bf16.mxu0 0
  %1082 = vmatpush2.bf16.msra.mxu0 %v857
  %1083 = vmatprep.subr.bf16.mxu0 0
  %1084 = vmatpush2.bf16.msra.mxu0 %v856
  %1085 = vmatprep.subr.bf16.mxu0 0
  %1086 = vmatpush2.bf16.msra.mxu0 %v855
  %1087 = vmatprep.subr.bf16.mxu0 0
  %1088 = vmatpush2.bf16.msra.mxu0 %v854
  %1089 = vmatprep.subr.bf16.mxu0 0
  %1090 = vmatpush2.bf16.msra.mxu0 %v853
  %1091 = vmatprep.subr.bf16.mxu0 0
  %1092 = vmatpush2.bf16.msra.mxu0 %v852
  %1093 = vmatprep.subr.bf16.mxu0 0
  %1094 = vmatpush2.bf16.msra.mxu0 %v851
  %1095 = vmatprep.subr.bf16.mxu0 0
  %1096 = vmatpush2.bf16.msra.mxu0 %v850
  %1097 = vmatprep.mubr.bf16.mxu0 %v357
  %1098 = vmatmul.mubr.bf16.gmra.mxu0 %v356
  %v1099 = vpop.f32.mrf.mxu0
  %v1100 = vadd.f32 %v270, %v1099
  %v1101 = vpop.f32.mrf.mxu0
  %v1102 = vpop.f32.mrf.mxu0
  %v1103 = vadd.f32 %v270, %v1102
  %v1104 = vpop.f32.mrf.mxu0
  %1105 = vmatprep.mubr.bf16.mxu0 %v371
  %1106 = vmatmul.mubr.bf16.gmra.mxu0 %v370
  %v1107 = vpop.f32.mrf.mxu0
  %v1108 = vadd.f32 %v270, %v1107
  %v1109 = vpop.f32.mrf.mxu0
  %v1110 = vpop.f32.mrf.mxu0
  %v1111 = vadd.f32 %v270, %v1110
  %v1112 = vpop.f32.mrf.mxu0
  %1113 = vdwg.mxu0
  %1114 = vmatprep.subr.bf16.mxu0 0
  %1115 = vmatpush1.bf16.msra.mxu0 %v865
  %1116 = vmatprep.subr.bf16.mxu0 0
  %1117 = vmatpush1.bf16.msra.mxu0 %v864
  %1118 = vmatprep.subr.bf16.mxu0 0
  %1119 = vmatpush1.bf16.msra.mxu0 %v863
  %1120 = vmatprep.subr.bf16.mxu0 0
  %1121 = vmatpush1.bf16.msra.mxu0 %v862
  %1122 = vmatprep.subr.bf16.mxu0 0
  %1123 = vmatpush1.bf16.msra.mxu0 %v861
  %1124 = vmatprep.subr.bf16.mxu0 0
  %1125 = vmatpush1.bf16.msra.mxu0 %v860
  %1126 = vmatprep.subr.bf16.mxu0 0
  %1127 = vmatpush1.bf16.msra.mxu0 %v859
  %1128 = vmatprep.subr.bf16.mxu0 0
  %1129 = vmatpush1.bf16.msra.mxu0 %v858
  %1130 = vmatprep.subr.bf16.mxu0 0
  %1131 = vmatpush2.bf16.msra.mxu0 %v873
  %1132 = vmatprep.subr.bf16.mxu0 0
  %1133 = vmatpush2.bf16.msra.mxu0 %v872
  %1134 = vmatprep.subr.bf16.mxu0 0
  %1135 = vmatpush2.bf16.msra.mxu0 %v871
  %1136 = vmatprep.subr.bf16.mxu0 0
  %1137 = vmatpush2.bf16.msra.mxu0 %v870
  %1138 = vmatprep.subr.bf16.mxu0 0
  %1139 = vmatpush2.bf16.msra.mxu0 %v869
  %1140 = vmatprep.subr.bf16.mxu0 0
  %1141 = vmatpush2.bf16.msra.mxu0 %v868
  %1142 = vmatprep.subr.bf16.mxu0 0
  %1143 = vmatpush2.bf16.msra.mxu0 %v867
  %1144 = vmatprep.subr.bf16.mxu0 0
  %1145 = vmatpush2.bf16.msra.mxu0 %v866
  %1146 = vmatprep.mubr.bf16.mxu0 %v359
  %1147 = vmatmul.mubr.bf16.gmra.mxu0 %v358
  %v1148 = vpop.f32.mrf.mxu0
  %v1149 = vadd.f32 %v1100, %v1148
  %v1150 = vpop.f32.mrf.mxu0
  %v1151 = vpop.f32.mrf.mxu0
  %v1152 = vadd.f32 %v1103, %v1151
  %v1153 = vpop.f32.mrf.mxu0
  %1154 = vmatprep.mubr.bf16.mxu0 %v373
  %1155 = vmatmul.mubr.bf16.gmra.mxu0 %v372
  %v1156 = vpop.f32.mrf.mxu0
  %v1157 = vadd.f32 %v1108, %v1156
  %v1158 = vpop.f32.mrf.mxu0
  %v1159 = vpop.f32.mrf.mxu0
  %v1160 = vadd.f32 %v1111, %v1159
  %v1161 = vpop.f32.mrf.mxu0
  %1162 = vdwg.mxu0
  %1163 = vmatprep.subr.bf16.mxu0 0
  %1164 = vmatpush1.bf16.msra.mxu0 %v881
  %1165 = vmatprep.subr.bf16.mxu0 0
  %1166 = vmatpush1.bf16.msra.mxu0 %v880
  %1167 = vmatprep.subr.bf16.mxu0 0
  %1168 = vmatpush1.bf16.msra.mxu0 %v879
  %1169 = vmatprep.subr.bf16.mxu0 0
  %1170 = vmatpush1.bf16.msra.mxu0 %v878
  %1171 = vmatprep.subr.bf16.mxu0 0
  %1172 = vmatpush1.bf16.msra.mxu0 %v877
  %1173 = vmatprep.subr.bf16.mxu0 0
  %1174 = vmatpush1.bf16.msra.mxu0 %v876
  %1175 = vmatprep.subr.bf16.mxu0 0
  %1176 = vmatpush1.bf16.msra.mxu0 %v875
  %1177 = vmatprep.subr.bf16.mxu0 0
  %1178 = vmatpush1.bf16.msra.mxu0 %v874
  %1179 = vmatprep.subr.bf16.mxu0 0
  %1180 = vmatpush2.bf16.msra.mxu0 %v889
  %1181 = vmatprep.subr.bf16.mxu0 0
  %1182 = vmatpush2.bf16.msra.mxu0 %v888
  %1183 = vmatprep.subr.bf16.mxu0 0
  %1184 = vmatpush2.bf16.msra.mxu0 %v887
  %1185 = vmatprep.subr.bf16.mxu0 0
  %1186 = vmatpush2.bf16.msra.mxu0 %v886
  %1187 = vmatprep.subr.bf16.mxu0 0
  %1188 = vmatpush2.bf16.msra.mxu0 %v885
  %1189 = vmatprep.subr.bf16.mxu0 0
  %1190 = vmatpush2.bf16.msra.mxu0 %v884
  %1191 = vmatprep.subr.bf16.mxu0 0
  %1192 = vmatpush2.bf16.msra.mxu0 %v883
  %1193 = vmatprep.subr.bf16.mxu0 0
  %1194 = vmatpush2.bf16.msra.mxu0 %v882
  %1195 = vmatprep.mubr.bf16.mxu0 %v361
  %1196 = vmatmul.mubr.bf16.gmra.mxu0 %v360
  %v1197 = vpop.f32.mrf.mxu0
  %v1198 = vadd.f32 %v1149, %v1197
  %v1199 = vpop.f32.mrf.mxu0
  %v1200 = vpop.f32.mrf.mxu0
  %v1201 = vadd.f32 %v1152, %v1200
  %v1202 = vpop.f32.mrf.mxu0
  %1203 = vmatprep.mubr.bf16.mxu0 %v375
  %1204 = vmatmul.mubr.bf16.gmra.mxu0 %v374
  %v1205 = vpop.f32.mrf.mxu0
  %v1206 = vadd.f32 %v1157, %v1205
  %v1207 = vpop.f32.mrf.mxu0
  %v1208 = vpop.f32.mrf.mxu0
  %v1209 = vadd.f32 %v1160, %v1208
  %v1210 = vpop.f32.mrf.mxu0
  %1211 = vdwg.mxu0
  %1212 = vmatprep.subr.bf16.mxu0 0
  %1213 = vmatpush1.bf16.msra.mxu0 %v897
  %1214 = vmatprep.subr.bf16.mxu0 0
  %1215 = vmatpush1.bf16.msra.mxu0 %v896
  %1216 = vmatprep.subr.bf16.mxu0 0
  %1217 = vmatpush1.bf16.msra.mxu0 %v895
  %1218 = vmatprep.subr.bf16.mxu0 0
  %1219 = vmatpush1.bf16.msra.mxu0 %v894
  %1220 = vmatprep.subr.bf16.mxu0 0
  %1221 = vmatpush1.bf16.msra.mxu0 %v893
  %1222 = vmatprep.subr.bf16.mxu0 0
  %1223 = vmatpush1.bf16.msra.mxu0 %v892
  %1224 = vmatprep.subr.bf16.mxu0 0
  %1225 = vmatpush1.bf16.msra.mxu0 %v891
  %1226 = vmatprep.subr.bf16.mxu0 0
  %1227 = vmatpush1.bf16.msra.mxu0 %v890
  %1228 = vmatprep.subr.bf16.mxu0 0
  %1229 = vmatpush2.bf16.msra.mxu0 %v905
  %1230 = vmatprep.subr.bf16.mxu0 0
  %1231 = vmatpush2.bf16.msra.mxu0 %v904
  %1232 = vmatprep.subr.bf16.mxu0 0
  %1233 = vmatpush2.bf16.msra.mxu0 %v903
  %1234 = vmatprep.subr.bf16.mxu0 0
  %1235 = vmatpush2.bf16.msra.mxu0 %v902
  %1236 = vmatprep.subr.bf16.mxu0 0
  %1237 = vmatpush2.bf16.msra.mxu0 %v901
  %1238 = vmatprep.subr.bf16.mxu0 0
  %1239 = vmatpush2.bf16.msra.mxu0 %v900
  %1240 = vmatprep.subr.bf16.mxu0 0
  %1241 = vmatpush2.bf16.msra.mxu0 %v899
  %1242 = vmatprep.subr.bf16.mxu0 0
  %1243 = vmatpush2.bf16.msra.mxu0 %v898
  %1244 = vmatprep.mubr.bf16.mxu0 %v363
  %1245 = vmatmul.mubr.bf16.gmra.mxu0 %v362
  %v1246 = vpop.f32.mrf.mxu0
  %v1247 = vadd.f32 %v1198, %v1246
  %v1248 = vpop.f32.mrf.mxu0
  %v1249 = vpop.f32.mrf.mxu0
  %v1250 = vadd.f32 %v1201, %v1249
  %v1251 = vpop.f32.mrf.mxu0
  %1252 = vmatprep.mubr.bf16.mxu0 %v377
  %1253 = vmatmul.mubr.bf16.gmra.mxu0 %v376
  %v1254 = vpop.f32.mrf.mxu0
  %v1255 = vadd.f32 %v1206, %v1254
  %v1256 = vpop.f32.mrf.mxu0
  %v1257 = vpop.f32.mrf.mxu0
  %v1258 = vadd.f32 %v1209, %v1257
  %v1259 = vpop.f32.mrf.mxu0
  %1260 = vdwg.mxu0
  %1261 = vmatprep.subr.bf16.mxu0 0
  %1262 = vmatpush1.bf16.msra.mxu0 %v913
  %1263 = vmatprep.subr.bf16.mxu0 0
  %1264 = vmatpush1.bf16.msra.mxu0 %v912
  %1265 = vmatprep.subr.bf16.mxu0 0
  %1266 = vmatpush1.bf16.msra.mxu0 %v911
  %1267 = vmatprep.subr.bf16.mxu0 0
  %1268 = vmatpush1.bf16.msra.mxu0 %v910
  %1269 = vmatprep.subr.bf16.mxu0 0
  %1270 = vmatpush1.bf16.msra.mxu0 %v909
  %1271 = vmatprep.subr.bf16.mxu0 0
  %1272 = vmatpush1.bf16.msra.mxu0 %v908
  %1273 = vmatprep.subr.bf16.mxu0 0
  %1274 = vmatpush1.bf16.msra.mxu0 %v907
  %1275 = vmatprep.subr.bf16.mxu0 0
  %1276 = vmatpush1.bf16.msra.mxu0 %v906
  %1277 = vmatprep.subr.bf16.mxu0 0
  %1278 = vmatpush2.bf16.msra.mxu0 %v921
  %1279 = vmatprep.subr.bf16.mxu0 0
  %1280 = vmatpush2.bf16.msra.mxu0 %v920
  %1281 = vmatprep.subr.bf16.mxu0 0
  %1282 = vmatpush2.bf16.msra.mxu0 %v919
  %1283 = vmatprep.subr.bf16.mxu0 0
  %1284 = vmatpush2.bf16.msra.mxu0 %v918
  %1285 = vmatprep.subr.bf16.mxu0 0
  %1286 = vmatpush2.bf16.msra.mxu0 %v917
  %1287 = vmatprep.subr.bf16.mxu0 0
  %1288 = vmatpush2.bf16.msra.mxu0 %v916
  %1289 = vmatprep.subr.bf16.mxu0 0
  %1290 = vmatpush2.bf16.msra.mxu0 %v915
  %1291 = vmatprep.subr.bf16.mxu0 0
  %1292 = vmatpush2.bf16.msra.mxu0 %v914
  %1293 = vmatprep.mubr.bf16.mxu0 %v365
  %1294 = vmatmul.mubr.bf16.gmra.mxu0 %v364
  %v1295 = vpop.f32.mrf.mxu0
  %v1296 = vadd.f32 %v1247, %v1295
  %v1297 = vpop.f32.mrf.mxu0
  %v1298 = vpop.f32.mrf.mxu0
  %v1299 = vadd.f32 %v1250, %v1298
  %v1300 = vpop.f32.mrf.mxu0
  %1301 = vmatprep.mubr.bf16.mxu0 %v379
  %1302 = vmatmul.mubr.bf16.gmra.mxu0 %v378
  %v1303 = vpop.f32.mrf.mxu0
  %v1304 = vadd.f32 %v1255, %v1303
  %v1305 = vpop.f32.mrf.mxu0
  %v1306 = vpop.f32.mrf.mxu0
  %v1307 = vadd.f32 %v1258, %v1306
  %v1308 = vpop.f32.mrf.mxu0
  %1309 = vdwg.mxu0
  %1310 = vmatprep.subr.bf16.mxu0 0
  %1311 = vmatpush1.bf16.msra.mxu0 %v929
  %1312 = vmatprep.subr.bf16.mxu0 0
  %1313 = vmatpush1.bf16.msra.mxu0 %v928
  %1314 = vmatprep.subr.bf16.mxu0 0
  %1315 = vmatpush1.bf16.msra.mxu0 %v927
  %1316 = vmatprep.subr.bf16.mxu0 0
  %1317 = vmatpush1.bf16.msra.mxu0 %v926
  %1318 = vmatprep.subr.bf16.mxu0 0
  %1319 = vmatpush1.bf16.msra.mxu0 %v925
  %1320 = vmatprep.subr.bf16.mxu0 0
  %1321 = vmatpush1.bf16.msra.mxu0 %v924
  %1322 = vmatprep.subr.bf16.mxu0 0
  %1323 = vmatpush1.bf16.msra.mxu0 %v923
  %1324 = vmatprep.subr.bf16.mxu0 0
  %1325 = vmatpush1.bf16.msra.mxu0 %v922
  %1326 = vmatprep.subr.bf16.mxu0 0
  %1327 = vmatpush2.bf16.msra.mxu0 %v937
  %1328 = vmatprep.subr.bf16.mxu0 0
  %1329 = vmatpush2.bf16.msra.mxu0 %v936
  %1330 = vmatprep.subr.bf16.mxu0 0
  %1331 = vmatpush2.bf16.msra.mxu0 %v935
  %1332 = vmatprep.subr.bf16.mxu0 0
  %1333 = vmatpush2.bf16.msra.mxu0 %v934
  %1334 = vmatprep.subr.bf16.mxu0 0
  %1335 = vmatpush2.bf16.msra.mxu0 %v933
  %1336 = vmatprep.subr.bf16.mxu0 0
  %1337 = vmatpush2.bf16.msra.mxu0 %v932
  %1338 = vmatprep.subr.bf16.mxu0 0
  %1339 = vmatpush2.bf16.msra.mxu0 %v931
  %1340 = vmatprep.subr.bf16.mxu0 0
  %1341 = vmatpush2.bf16.msra.mxu0 %v930
  %1342 = vmatprep.mubr.bf16.mxu0 %v367
  %1343 = vmatmul.mubr.bf16.gmra.mxu0 %v366
  %v1344 = vpop.f32.mrf.mxu0
  %v1345 = vadd.f32 %v1296, %v1344
  %v1346 = vpop.f32.mrf.mxu0
  %v1347 = vpop.f32.mrf.mxu0
  %v1348 = vadd.f32 %v1299, %v1347
  %v1349 = vpop.f32.mrf.mxu0
  %1350 = vmatprep.mubr.bf16.mxu0 %v381
  %1351 = vmatmul.mubr.bf16.gmra.mxu0 %v380
  %v1352 = vpop.f32.mrf.mxu0
  %v1353 = vadd.f32 %v1304, %v1352
  %v1354 = vpop.f32.mrf.mxu0
  %v1355 = vpop.f32.mrf.mxu0
  %v1356 = vadd.f32 %v1307, %v1355
  %v1357 = vpop.f32.mrf.mxu0
  %1358 = vdwg.mxu0
  %1359 = vmatprep.subr.bf16.mxu0 0
  %1360 = vmatpush1.bf16.msra.mxu0 %v945
  %1361 = vmatprep.subr.bf16.mxu0 0
  %1362 = vmatpush1.bf16.msra.mxu0 %v944
  %1363 = vmatprep.subr.bf16.mxu0 0
  %1364 = vmatpush1.bf16.msra.mxu0 %v943
  %1365 = vmatprep.subr.bf16.mxu0 0
  %1366 = vmatpush1.bf16.msra.mxu0 %v942
  %1367 = vmatprep.subr.bf16.mxu0 0
  %1368 = vmatpush1.bf16.msra.mxu0 %v941
  %1369 = vmatprep.subr.bf16.mxu0 0
  %1370 = vmatpush1.bf16.msra.mxu0 %v940
  %1371 = vmatprep.subr.bf16.mxu0 0
  %1372 = vmatpush1.bf16.msra.mxu0 %v939
  %1373 = vmatprep.subr.bf16.mxu0 0
  %1374 = vmatpush1.bf16.msra.mxu0 %v938
  %1375 = vmatprep.subr.bf16.mxu0 0
  %1376 = vmatpush2.bf16.msra.mxu0 0
  %1377 = vmatprep.subr.bf16.mxu0 0
  %1378 = vmatpush2.bf16.msra.mxu0 0
  %1379 = vmatprep.subr.bf16.mxu0 0
  %1380 = vmatpush2.bf16.msra.mxu0 0
  %1381 = vmatprep.subr.bf16.mxu0 0
  %1382 = vmatpush2.bf16.msra.mxu0 0
  %1383 = vmatprep.subr.bf16.mxu0 0
  %1384 = vmatpush2.bf16.msra.mxu0 %v949
  %1385 = vmatprep.subr.bf16.mxu0 0
  %1386 = vmatpush2.bf16.msra.mxu0 %v948
  %1387 = vmatprep.subr.bf16.mxu0 0
  %1388 = vmatpush2.bf16.msra.mxu0 %v947
  %1389 = vmatprep.subr.bf16.mxu0 0
  %1390 = vmatpush2.bf16.msra.mxu0 %v946
  %1391 = vmatprep.mubr.bf16.mxu0 %v1060
  %1392 = vmatmul.mubr.bf16.gmra.mxu0 %v368
  %v1393 = vpop.f32.mrf.mxu0
  %v1394 = vadd.f32 %v1345, %v1393
  %v1395 = vpop.f32.mrf.mxu0
  %v1396 = vpop.f32.mrf.mxu0
  %v1397 = vadd.f32 %v1348, %v1396
  %v1398 = vpop.f32.mrf.mxu0
  %1399 = vmatprep.mubr.bf16.mxu0 %v1063
  %1400 = vmatmul.mubr.bf16.gmra.mxu0 %v382
  %v1401 = vpop.f32.mrf.mxu0
  %v1402 = vadd.f32 %v1353, %v1401
  %v1403 = vpop.f32.mrf.mxu0
  %v1404 = vpop.f32.mrf.mxu0
  %v1405 = vadd.f32 %v1356, %v1404
  %v1406 = vpop.f32.mrf.mxu0
  %1407 = vdwg.mxu0
  %v1408 = vmax.f32 %v1394, 0.0
  %v1409 = vmax.f32 %v1397, 0.0
  %v1410 = vmax.f32 %v1402, 0.0
  %v1411 = vmax.f32 %v1405, 0.0
  %v1412 = vsel %vm1058, %v1408, 0.0
  %v1413 = vsel %vm1058, %v1409, 0.0
  %v1414 = vadd.f32 %v1412, %v1413
  %v1415 = vsel %vm1058, %v1410, 0.0
  %v1416 = vadd.f32 %v1414, %v1415
  %v1417 = vsel %vm1058, %v1411, 0.0
  %v1418 = vadd.f32 %v1416, %v1417
  %v1419 = vrot.slane %v1418, 4
  %v1420 = vadd.f32 %v1418, %v1419
  %v1421 = vrot.slane %v1420, 2
  %v1422 = vadd.f32 %v1420, %v1421
  %v1423 = vrot.slane %v1422, 1
  %v1424 = vadd.f32 %v1422, %v1423
  %v1425 = vmul.f32 %v1424, 0.03125
  %v1426 = vsub.f32 %v1408, %v1425
  %v1427 = vsub.f32 %v1409, %v1425
  %v1428 = vsub.f32 %v1410, %v1425
  %v1429 = vsub.f32 %v1411, %v1425
  %v1430 = vmul.f32 %v1426, %v1426
  %v1431 = vmul.f32 %v1427, %v1427
  %v1432 = vmul.f32 %v1428, %v1428
  %v1433 = vmul.f32 %v1429, %v1429
  %v1434 = vsel %vm1058, %v1430, 0.0
  %v1435 = vsel %vm1058, %v1431, 0.0
  %v1436 = vadd.f32 %v1434, %v1435
  %v1437 = vsel %vm1058, %v1432, 0.0
  %v1438 = vadd.f32 %v1436, %v1437
  %v1439 = vsel %vm1058, %v1433, 0.0
  %v1440 = vadd.f32 %v1438, %v1439
  %v1441 = vrot.slane %v1440, 4
  %v1442 = vadd.f32 %v1440, %v1441
  %v1443 = vrot.slane %v1442, 2
  %v1444 = vadd.f32 %v1442, %v1443
  %v1445 = vrot.slane %v1444, 1
  %v1446 = vadd.f32 %v1444, %v1445
  %v1447 = vmul.f32 %v1446, 0.03125
  %v1448 = vld [vmem:[%s3] sm:$0x1]
  %v1449 = vadd.f32 %v1447, 1e-05
  %v1450 = vrsqrt.pop %v1449
  %v1451 = vmul.f32 %v1448, %v1450
  %v1453 = vlaneseq
  %v1454 = vshrl.u32 %v1453, 7
  %v1455 = vsub.s32 0, %v1454
  %v1456 = vrot.slane %v1451, %v1455
  %v1458 = vmul.f32 %v1426, %v1456
  %v1459 = vmul.f32 %v1427, %v1456
  %v1460 = vmul.f32 %v1428, %v1456
  %v1461 = vmul.f32 %v1429, %v1456
  %v1462 = vld [vmem:[%s4] sm:$0x1]
  %v1464 = vlaneseq
  %v1465 = vshrl.u32 %v1464, 7
  %v1466 = vsub.s32 0, %v1465
  %v1467 = vrot.slane %v1462, %v1466
  %v1469 = vadd.f32 %v1458, %v1467
  %v1470 = vadd.f32 %v1459, %v1467
  %v1471 = vadd.f32 %v1460, %v1467
  %v1472 = vadd.f32 %v1461, %v1467
  %1473 = vst.msk [vmem:[%s5] sm:$0xff] %vm1058, %v1469
  %1474 = vst.msk [vmem:[%s5 + $0x8] sm:$0xff] %vm1058, %v1470
  %1475 = vst.msk [vmem:[%s5 + $0x10] sm:$0xff] %vm1058, %v1471
  %1476 = vst.msk [vmem:[%s5 + $0x18] sm:$0xff] %vm1058, %v1472
  // Predicated region
  $region22: #{unet_forward.18} parent=0 // pred_check
    _
  $region23: #{unet_forward.18} parent=0 // pred_check_branch
    %1478 = sbr.rel (0) target = $region25
  $region24: #{unet_forward.18} parent=0 // pred_region
    _
  $region25: #{unet_forward.18} parent=0 // pred_fallthru
    _
  // Predicated region
  $region26: #{unet_forward.18} parent=0 // pred_check
    _
  $region27: #{unet_forward.18} parent=0 // pred_check_branch
    %1480 = sbr.rel (0) target = $region29
  $region28: #{unet_forward.18} parent=0 // pred_region
    _
  $region29: #{unet_forward.18} parent=0 // pred_fallthru
    _

// kernel: unet_forward.20
$region0: #{unet_forward.20}
  #allocation0 [shape = 'u32[]', space=smem, size = 0x4, offset = 0x4, fixed_abs, tag = 'smem constant byte address 0x4 - core index']
  #allocation1 [shape = 'u32[144,128]{1,0:T(1,128)}', space=vmem, size = 0x12000, scoped, tag = 'internal scratch']
  %s0 = inlined_call_operand.vmem [shape: bf16[128,864], index: 0, kind: input, shape index: {}]
  %s1 = inlined_call_operand.vmem [shape: bf16[864,32], index: 1, kind: input, shape index: {}]
  %s2 = inlined_call_operand.vmem [shape: f32[1,32], index: 2, kind: input, shape index: {}]
  %s3 = inlined_call_operand.vmem [shape: f32[1,32], index: 3, kind: input, shape index: {}]
  %s4 = inlined_call_operand.vmem [shape: f32[1,32], index: 4, kind: input, shape index: {}]
  %s5 = inlined_call_operand.vmem [shape: f32[128,32], index: 5, kind: output, shape index: {}]
  %s6 = sld [smem:[#allocation0]]
  $region30: #{unet_forward.20} parent=0
    _
  %s8 = ssub.s32 1, %s6
  %s9 = scalar_select 0, %s8, %s6
  // Predicated region
  $region2: #{unet_forward.20} parent=0 // pred_check
    _
  $region3: #{unet_forward.20} parent=0 // pred_check_branch
    %11 = sbr.rel (0) target = $region5
  $region4: #{unet_forward.20} parent=0 // pred_region
    _
  $region5: #{unet_forward.20} parent=0 // pred_fallthru
    _
  // Predicated region
  $region6: #{unet_forward.20} parent=0 // pred_check
    _
  $region7: #{unet_forward.20} parent=0 // pred_check_branch
    %13 = sbr.rel (0) target = $region9
  $region8: #{unet_forward.20} parent=0 // pred_region
    _
  $region9: #{unet_forward.20} parent=0 // pred_fallthru
    _
  // Predicated region
  $region10: #{unet_forward.20} parent=0 // pred_check
    _
  $region11: #{unet_forward.20} parent=0 // pred_check_branch
    %15 = sbr.rel (0) target = $region13
  $region12: #{unet_forward.20} parent=0 // pred_region
    _
  $region13: #{unet_forward.20} parent=0 // pred_fallthru
    _
  // Predicated region
  $region14: #{unet_forward.20} parent=0 // pred_check
    _
  $region15: #{unet_forward.20} parent=0 // pred_check_branch
    %17 = sbr.rel (0) target = $region17
  $region16: #{unet_forward.20} parent=0 // pred_region
    _
  $region17: #{unet_forward.20} parent=0 // pred_fallthru
    _
  // Predicated region
  $region18: #{unet_forward.20} parent=0 // pred_check
    _
  $region19: #{unet_forward.20} parent=0 // pred_check_branch
    %19 = sbr.rel (0) target = $region21
  $region20: #{unet_forward.20} parent=0 // pred_region
    _
  $region21: #{unet_forward.20} parent=0 // pred_fallthru
    _
  %v21 = vld [vmem:[%s0] sm:$0xff]
  %v22 = vld [vmem:[%s0 + $0x8] sm:$0xff]
  %v23 = vld [vmem:[%s0 + $0x10] sm:$0xff]
  %v24 = vld [vmem:[%s0 + $0x18] sm:$0xf]
  %v25 = vld [vmem:[%s0 + $0x1c] sm:$0xff]
  %v26 = vld [vmem:[%s0 + $0x24] sm:$0xff]
  %v27 = vld [vmem:[%s0 + $0x2c] sm:$0xff]
  %v28 = vld [vmem:[%s0 + $0x34] sm:$0xf]
  %v29 = vld [vmem:[%s0 + $0x38] sm:$0xff]
  %v30 = vld [vmem:[%s0 + $0x40] sm:$0xff]
  %v31 = vld [vmem:[%s0 + $0x48] sm:$0xff]
  %v32 = vld [vmem:[%s0 + $0x50] sm:$0xf]
  %v33 = vld [vmem:[%s0 + $0x54] sm:$0xff]
  %v34 = vld [vmem:[%s0 + $0x5c] sm:$0xff]
  %v35 = vld [vmem:[%s0 + $0x64] sm:$0xff]
  %v36 = vld [vmem:[%s0 + $0x6c] sm:$0xf]
  %v37 = vld [vmem:[%s0 + $0x70] sm:$0xff]
  %v38 = vld [vmem:[%s0 + $0x78] sm:$0xff]
  %v39 = vld [vmem:[%s0 + $0x80] sm:$0xff]
  %v40 = vld [vmem:[%s0 + $0x88] sm:$0xf]
  %v41 = vld [vmem:[%s0 + $0x8c] sm:$0xff]
  %v42 = vld [vmem:[%s0 + $0x94] sm:$0xff]
  %v43 = vld [vmem:[%s0 + $0x9c] sm:$0xff]
  %v44 = vld [vmem:[%s0 + $0xa4] sm:$0xf]
  %v45 = vld [vmem:[%s0 + $0xa8] sm:$0xff]
  %v46 = vld [vmem:[%s0 + $0xb0] sm:$0xff]
  %v47 = vld [vmem:[%s0 + $0xb8] sm:$0xff]
  %v48 = vld [vmem:[%s0 + $0xc0] sm:$0xf]
  %v49 = vld [vmem:[%s0 + $0xc4] sm:$0xff]
  %v50 = vld [vmem:[%s0 + $0xcc] sm:$0xff]
  %v51 = vld [vmem:[%s0 + $0xd4] sm:$0xff]
  %v52 = vld [vmem:[%s0 + $0xdc] sm:$0xf]
  %v53 = vld [vmem:[%s0 + $0xe0] sm:$0xff]
  %v54 = vld [vmem:[%s0 + $0xe8] sm:$0xff]
  %v55 = vld [vmem:[%s0 + $0xf0] sm:$0xff]
  %v56 = vld [vmem:[%s0 + $0xf8] sm:$0xf]
  %v57 = vld [vmem:[%s0 + $0xfc] sm:$0xff]
  %v58 = vld [vmem:[%s0 + $0x104] sm:$0xff]
  %v59 = vld [vmem:[%s0 + $0x10c] sm:$0xff]
  %v60 = vld [vmem:[%s0 + $0x114] sm:$0xf]
  %v61 = vld [vmem:[%s0 + $0x118] sm:$0xff]
  %v62 = vld [vmem:[%s0 + $0x120] sm:$0xff]
  %v63 = vld [vmem:[%s0 + $0x128] sm:$0xff]
  %v64 = vld [vmem:[%s0 + $0x130] sm:$0xf]
  %v65 = vld [vmem:[%s0 + $0x134] sm:$0xff]
  %v66 = vld [vmem:[%s0 + $0x13c] sm:$0xff]
  %v67 = vld [vmem:[%s0 + $0x144] sm:$0xff]
  %v68 = vld [vmem:[%s0 + $0x14c] sm:$0xf]
  %v69 = vld [vmem:[%s0 + $0x150] sm:$0xff]
  %v70 = vld [vmem:[%s0 + $0x158] sm:$0xff]
  %v71 = vld [vmem:[%s0 + $0x160] sm:$0xff]
  %v72 = vld [vmem:[%s0 + $0x168] sm:$0xf]
  %v73 = vld [vmem:[%s0 + $0x16c] sm:$0xff]
  %v74 = vld [vmem:[%s0 + $0x174] sm:$0xff]
  %v75 = vld [vmem:[%s0 + $0x17c] sm:$0xff]
  %v76 = vld [vmem:[%s0 + $0x184] sm:$0xf]
  %v77 = vld [vmem:[%s0 + $0x188] sm:$0xff]
  %v78 = vld [vmem:[%s0 + $0x190] sm:$0xff]
  %v79 = vld [vmem:[%s0 + $0x198] sm:$0xff]
  %v80 = vld [vmem:[%s0 + $0x1a0] sm:$0xf]
  %v81 = vld [vmem:[%s0 + $0x1a4] sm:$0xff]
  %v82 = vld [vmem:[%s0 + $0x1ac] sm:$0xff]
  %v83 = vld [vmem:[%s0 + $0x1b4] sm:$0xff]
  %v84 = vld [vmem:[%s0 + $0x1bc] sm:$0xf]
  %v85 = vld [vmem:[%s1] sm:$0xf]
  %v86 = vld [vmem:[%s1 + $0x4] sm:$0xf]
  %v87 = vld [vmem:[%s1 + $0x8] sm:$0xf]
  %v88 = vld [vmem:[%s1 + $0xc] sm:$0xf]
  %v89 = vld [vmem:[%s1 + $0x10] sm:$0xf]
  %v90 = vld [vmem:[%s1 + $0x14] sm:$0xf]
  %v91 = vld [vmem:[%s1 + $0x18] sm:$0xf]
  %v92 = vld [vmem:[%s1 + $0x1c] sm:$0xf]
  %v93 = vld [vmem:[%s1 + $0x20] sm:$0xf]
  %v94 = vld [vmem:[%s1 + $0x24] sm:$0xf]
  %v95 = vld [vmem:[%s1 + $0x28] sm:$0xf]
  %v96 = vld [vmem:[%s1 + $0x2c] sm:$0xf]
  %v97 = vld [vmem:[%s1 + $0x30] sm:$0xf]
  %v98 = vld [vmem:[%s1 + $0x34] sm:$0xf]
  %v99 = vld [vmem:[%s1 + $0x38] sm:$0xf]
  %v100 = vld [vmem:[%s1 + $0x3c] sm:$0xf]
  %v101 = vld [vmem:[%s1 + $0x40] sm:$0xf]
  %v102 = vld [vmem:[%s1 + $0x44] sm:$0xf]
  %v103 = vld [vmem:[%s1 + $0x48] sm:$0xf]
  %v104 = vld [vmem:[%s1 + $0x4c] sm:$0xf]
  %v105 = vld [vmem:[%s1 + $0x50] sm:$0xf]
  %v106 = vld [vmem:[%s1 + $0x54] sm:$0xf]
  %v107 = vld [vmem:[%s1 + $0x58] sm:$0xf]
  %v108 = vld [vmem:[%s1 + $0x5c] sm:$0xf]
  %v109 = vld [vmem:[%s1 + $0x60] sm:$0xf]
  %v110 = vld [vmem:[%s1 + $0x64] sm:$0xf]
  %v111 = vld [vmem:[%s1 + $0x68] sm:$0xf]
  %v112 = vld [vmem:[%s1 + $0x6c] sm:$0xf]
  %v113 = vld [vmem:[%s1 + $0x70] sm:$0xf]
  %v114 = vld [vmem:[%s1 + $0x74] sm:$0xf]
  %v115 = vld [vmem:[%s1 + $0x78] sm:$0xf]
  %v116 = vld [vmem:[%s1 + $0x7c] sm:$0xf]
  %v117 = vld [vmem:[%s1 + $0x80] sm:$0xf]
  %v118 = vld [vmem:[%s1 + $0x84] sm:$0xf]
  %v119 = vld [vmem:[%s1 + $0x88] sm:$0xf]
  %v120 = vld [vmem:[%s1 + $0x8c] sm:$0xf]
  %v121 = vld [vmem:[%s1 + $0x90] sm:$0xf]
  %v122 = vld [vmem:[%s1 + $0x94] sm:$0xf]
  %v123 = vld [vmem:[%s1 + $0x98] sm:$0xf]
  %v124 = vld [vmem:[%s1 + $0x9c] sm:$0xf]
  %v125 = vld [vmem:[%s1 + $0xa0] sm:$0xf]
  %v126 = vld [vmem:[%s1 + $0xa4] sm:$0xf]
  %v127 = vld [vmem:[%s1 + $0xa8] sm:$0xf]
  %v128 = vld [vmem:[%s1 + $0xac] sm:$0xf]
  %v129 = vld [vmem:[%s1 + $0xb0] sm:$0xf]
  %v130 = vld [vmem:[%s1 + $0xb4] sm:$0xf]
  %v131 = vld [vmem:[%s1 + $0xb8] sm:$0xf]
  %v132 = vld [vmem:[%s1 + $0xbc] sm:$0xf]
  %v133 = vld [vmem:[%s1 + $0xc0] sm:$0xf]
  %v134 = vld [vmem:[%s1 + $0xc4] sm:$0xf]
  %v135 = vld [vmem:[%s1 + $0xc8] sm:$0xf]
  %v136 = vld [vmem:[%s1 + $0xcc] sm:$0xf]
  %v137 = vld [vmem:[%s1 + $0xd0] sm:$0xf]
  %v138 = vld [vmem:[%s1 + $0xd4] sm:$0xf]
  %v139 = vld [vmem:[%s1 + $0xd8] sm:$0xf]
  %v140 = vld [vmem:[%s1 + $0xdc] sm:$0xf]
  %v141 = vld [vmem:[%s1 + $0xe0] sm:$0xf]
  %v142 = vld [vmem:[%s1 + $0xe4] sm:$0xf]
  %v143 = vld [vmem:[%s1 + $0xe8] sm:$0xf]
  %v144 = vld [vmem:[%s1 + $0xec] sm:$0xf]
  %v145 = vld [vmem:[%s1 + $0xf0] sm:$0xf]
  %v146 = vld [vmem:[%s1 + $0xf4] sm:$0xf]
  %v147 = vld [vmem:[%s1 + $0xf8] sm:$0xf]
  %v148 = vld [vmem:[%s1 + $0xfc] sm:$0xf]
  %v149 = vld [vmem:[%s1 + $0x100] sm:$0xf]
  %v150 = vld [vmem:[%s1 + $0x104] sm:$0xf]
  %v151 = vld [vmem:[%s1 + $0x108] sm:$0xf]
  %v152 = vld [vmem:[%s1 + $0x10c] sm:$0xf]
  %v153 = vld [vmem:[%s1 + $0x110] sm:$0xf]
  %v154 = vld [vmem:[%s1 + $0x114] sm:$0xf]
  %v155 = vld [vmem:[%s1 + $0x118] sm:$0xf]
  %v156 = vld [vmem:[%s1 + $0x11c] sm:$0xf]
  %v157 = vld [vmem:[%s1 + $0x120] sm:$0xf]
  %v158 = vld [vmem:[%s1 + $0x124] sm:$0xf]
  %v159 = vld [vmem:[%s1 + $0x128] sm:$0xf]
  %v160 = vld [vmem:[%s1 + $0x12c] sm:$0xf]
  %v161 = vld [vmem:[%s1 + $0x130] sm:$0xf]
  %v162 = vld [vmem:[%s1 + $0x134] sm:$0xf]
  %v163 = vld [vmem:[%s1 + $0x138] sm:$0xf]
  %v164 = vld [vmem:[%s1 + $0x13c] sm:$0xf]
  %v165 = vld [vmem:[%s1 + $0x140] sm:$0xf]
  %v166 = vld [vmem:[%s1 + $0x144] sm:$0xf]
  %v167 = vld [vmem:[%s1 + $0x148] sm:$0xf]
  %v168 = vld [vmem:[%s1 + $0x14c] sm:$0xf]
  %v169 = vld [vmem:[%s1 + $0x150] sm:$0xf]
  %v170 = vld [vmem:[%s1 + $0x154] sm:$0xf]
  %v171 = vld [vmem:[%s1 + $0x158] sm:$0xf]
  %v172 = vld [vmem:[%s1 + $0x15c] sm:$0xf]
  %v173 = vld [vmem:[%s1 + $0x160] sm:$0xf]
  %v174 = vld [vmem:[%s1 + $0x164] sm:$0xf]
  %v175 = vld [vmem:[%s1 + $0x168] sm:$0xf]
  %v176 = vld [vmem:[%s1 + $0x16c] sm:$0xf]
  %v177 = vld [vmem:[%s1 + $0x170] sm:$0xf]
  %v178 = vld [vmem:[%s1 + $0x174] sm:$0xf]
  %v179 = vld [vmem:[%s1 + $0x178] sm:$0xf]
  %v180 = vld [vmem:[%s1 + $0x17c] sm:$0xf]
  %v181 = vld [vmem:[%s1 + $0x180] sm:$0xf]
  %v182 = vld [vmem:[%s1 + $0x184] sm:$0xf]
  %v183 = vld [vmem:[%s1 + $0x188] sm:$0xf]
  %v184 = vld [vmem:[%s1 + $0x18c] sm:$0xf]
  %v185 = vld [vmem:[%s1 + $0x190] sm:$0xf]
  %v186 = vld [vmem:[%s1 + $0x194] sm:$0xf]
  %v187 = vld [vmem:[%s1 + $0x198] sm:$0xf]
  %v188 = vld [vmem:[%s1 + $0x19c] sm:$0xf]
  %v189 = vld [vmem:[%s1 + $0x1a0] sm:$0xf]
  %v190 = vld [vmem:[%s1 + $0x1a4] sm:$0xf]
  %v191 = vld [vmem:[%s1 + $0x1a8] sm:$0xf]
  %v192 = vld [vmem:[%s1 + $0x1ac] sm:$0xf]
  %v193 = vld [vmem:[%s2] sm:$0x1]
  %v195 = vlaneseq
  %v196 = vshrl.u32 %v195, 7
  %v197 = vsub.s32 0, %v196
  %v198 = vrot.slane %v193, %v197
  %v264 = vunpack.c.l.b16 %v21
  %v265 = vunpack.c.h.b16 %v21
  %v266 = vunpack.c.l.b16 %v22
  %v267 = vunpack.c.h.b16 %v22
  %v268 = vunpack.c.l.b16 %v23
  %v269 = vunpack.c.h.b16 %v23
  %v270 = vunpack.c.l.b16 %v24
  %v271 = vunpack.c.l.b16 %v25
  %v272 = vunpack.c.h.b16 %v25
  %v273 = vunpack.c.l.b16 %v26
  %v274 = vunpack.c.h.b16 %v26
  %v275 = vunpack.c.l.b16 %v27
  %v276 = vunpack.c.h.b16 %v27
  %v277 = vunpack.c.l.b16 %v28
  %v278 = vunpack.c.l.b16 %v29
  %v279 = vunpack.c.h.b16 %v29
  %v280 = vunpack.c.l.b16 %v30
  %v281 = vunpack.c.h.b16 %v30
  %v282 = vunpack.c.l.b16 %v31
  %v283 = vunpack.c.h.b16 %v31
  %v284 = vunpack.c.l.b16 %v32
  %v285 = vunpack.c.l.b16 %v33
  %v286 = vunpack.c.h.b16 %v33
  %v287 = vunpack.c.l.b16 %v34
  %v288 = vunpack.c.h.b16 %v34
  %v289 = vunpack.c.l.b16 %v35
  %v290 = vunpack.c.h.b16 %v35
  %v291 = vunpack.c.l.b16 %v36
  %v292 = vunpack.c.l.b16 %v37
  %v293 = vunpack.c.h.b16 %v37
  %v294 = vunpack.c.l.b16 %v38
  %v295 = vunpack.c.h.b16 %v38
  %v296 = vunpack.c.l.b16 %v39
  %v297 = vunpack.c.h.b16 %v39
  %v298 = vunpack.c.l.b16 %v40
  %v299 = vunpack.c.l.b16 %v41
  %v300 = vunpack.c.h.b16 %v41
  %v301 = vunpack.c.l.b16 %v42
  %v302 = vunpack.c.h.b16 %v42
  %v303 = vunpack.c.l.b16 %v43
  %v304 = vunpack.c.h.b16 %v43
  %v305 = vunpack.c.l.b16 %v44
  %v306 = vunpack.c.l.b16 %v45
  %v307 = vunpack.c.h.b16 %v45
  %v308 = vunpack.c.l.b16 %v46
  %v309 = vunpack.c.h.b16 %v46
  %v310 = vunpack.c.l.b16 %v47
  %v311 = vunpack.c.h.b16 %v47
  %v312 = vunpack.c.l.b16 %v48
  %v313 = vunpack.c.l.b16 %v49
  %v314 = vunpack.c.h.b16 %v49
  %v315 = vunpack.c.l.b16 %v50
  %v316 = vunpack.c.h.b16 %v50
  %v317 = vunpack.c.l.b16 %v51
  %v318 = vunpack.c.h.b16 %v51
  %v319 = vunpack.c.l.b16 %v52
  %v320 = vunpack.c.l.b16 %v53
  %v321 = vunpack.c.h.b16 %v53
  %v322 = vunpack.c.l.b16 %v54
  %v323 = vunpack.c.h.b16 %v54
  %v324 = vunpack.c.l.b16 %v55
  %v325 = vunpack.c.h.b16 %v55
  %v326 = vunpack.c.l.b16 %v56
  %v327 = vunpack.c.l.b16 %v57
  %v328 = vunpack.c.h.b16 %v57
  %v329 = vunpack.c.l.b16 %v58
  %v330 = vunpack.c.h.b16 %v58
  %v331 = vunpack.c.l.b16 %v59
  %v332 = vunpack.c.h.b16 %v59
  %v333 = vunpack.c.l.b16 %v60
  %v334 = vunpack.c.l.b16 %v61
  %v335 = vunpack.c.h.b16 %v61
  %v336 = vunpack.c.l.b16 %v62
  %v337 = vunpack.c.h.b16 %v62
  %v338 = vunpack.c.l.b16 %v63
  %v339 = vunpack.c.h.b16 %v63
  %v340 = vunpack.c.l.b16 %v64
  %v341 = vunpack.c.l.b16 %v65
  %v342 = vunpack.c.h.b16 %v65
  %v343 = vunpack.c.l.b16 %v66
  %v344 = vunpack.c.h.b16 %v66
  %v345 = vunpack.c.l.b16 %v67
  %v346 = vunpack.c.h.b16 %v67
  %v347 = vunpack.c.l.b16 %v68
  %v348 = vunpack.c.l.b16 %v69
  %v349 = vunpack.c.h.b16 %v69
  %v350 = vunpack.c.l.b16 %v70
  %v351 = vunpack.c.h.b16 %v70
  %v352 = vunpack.c.l.b16 %v71
  %v353 = vunpack.c.h.b16 %v71
  %v354 = vunpack.c.l.b16 %v72
  %v355 = vunpack.c.l.b16 %v73
  %v356 = vunpack.c.h.b16 %v73
  %v357 = vunpack.c.l.b16 %v74
  %v358 = vunpack.c.h.b16 %v74
  %v359 = vunpack.c.l.b16 %v75
  %v360 = vunpack.c.h.b16 %v75
  %v361 = vunpack.c.l.b16 %v76
  %v362 = vunpack.c.l.b16 %v77
  %v363 = vunpack.c.h.b16 %v77
  %v364 = vunpack.c.l.b16 %v78
  %v365 = vunpack.c.h.b16 %v78
  %v366 = vunpack.c.l.b16 %v79
  %v367 = vunpack.c.h.b16 %v79
  %v368 = vunpack.c.l.b16 %v80
  %v369 = vunpack.c.l.b16 %v81
  %v370 = vunpack.c.h.b16 %v81
  %v371 = vunpack.c.l.b16 %v82
  %v372 = vunpack.c.h.b16 %v82
  %v373 = vunpack.c.l.b16 %v83
  %v374 = vunpack.c.h.b16 %v83
  %v375 = vunpack.c.l.b16 %v84
  %v376 = vpack.c.b16 %v271, %v264
  %v377 = vpack.c.b16 %v272, %v265
  %v378 = vpack.c.b16 %v273, %v266
  %v379 = vpack.c.b16 %v274, %v267
  %v380 = vpack.c.b16 %v275, %v268
  %v381 = vpack.c.b16 %v276, %v269
  %v382 = vpack.c.b16 %v277, %v270
  %v383 = vpack.c.b16 %v285, %v278
  %v384 = vpack.c.b16 %v286, %v279
  %v385 = vpack.c.b16 %v287, %v280
  %v386 = vpack.c.b16 %v288, %v281
  %v387 = vpack.c.b16 %v289, %v282
  %v388 = vpack.c.b16 %v290, %v283
  %v389 = vpack.c.b16 %v291, %v284
  %v390 = vpack.c.b16 %v299, %v292
  %v391 = vpack.c.b16 %v300, %v293
  %v392 = vpack.c.b16 %v301, %v294
  %v393 = vpack.c.b16 %v302, %v295
  %v394 = vpack.c.b16 %v303, %v296
  %v395 = vpack.c.b16 %v304, %v297
  %v396 = vpack.c.b16 %v305, %v298
  %v397 = vpack.c.b16 %v313, %v306
  %v398 = vpack.c.b16 %v314, %v307
  %v399 = vpack.c.b16 %v315, %v308
  %v400 = vpack.c.b16 %v316, %v309
  %v401 = vpack.c.b16 %v317, %v310
  %v402 = vpack.c.b16 %v318, %v311
  %v403 = vpack.c.b16 %v319, %v312
  %v404 = vpack.c.b16 %v327, %v320
  %v405 = vpack.c.b16 %v328, %v321
  %v406 = vpack.c.b16 %v329, %v322
  %v407 = vpack.c.b16 %v330, %v323
  %v408 = vpack.c.b16 %v331, %v324
  %v409 = vpack.c.b16 %v332, %v325
  %v410 = vpack.c.b16 %v333, %v326
  %v411 = vpack.c.b16 %v341, %v334
  %v412 = vpack.c.b16 %v342, %v335
  %v413 = vpack.c.b16 %v343, %v336
  %v414 = vpack.c.b16 %v344, %v337
  %v415 = vpack.c.b16 %v345, %v338
  %v416 = vpack.c.b16 %v346, %v339
  %v417 = vpack.c.b16 %v347, %v340
  %v418 = vpack.c.b16 %v355, %v348
  %v419 = vpack.c.b16 %v356, %v349
  %v420 = vpack.c.b16 %v357, %v350
  %v421 = vpack.c.b16 %v358, %v351
  %v422 = vpack.c.b16 %v359, %v352
  %v423 = vpack.c.b16 %v360, %v353
  %v424 = vpack.c.b16 %v361, %v354
  %v425 = vpack.c.b16 %v369, %v362
  %v426 = vpack.c.b16 %v370, %v363
  %v427 = vpack.c.b16 %v371, %v364
  %v428 = vpack.c.b16 %v372, %v365
  %v429 = vpack.c.b16 %v373, %v366
  %v430 = vpack.c.b16 %v374, %v367
  %v431 = vpack.c.b16 %v375, %v368
  %v588 = vunpack.c.l.b16 %v85
  %v589 = vunpack.c.l.b16 %v86
  %v590 = vunpack.c.l.b16 %v87
  %v591 = vunpack.c.l.b16 %v88
  %v592 = vunpack.c.l.b16 %v89
  %v593 = vunpack.c.l.b16 %v90
  %v594 = vunpack.c.l.b16 %v91
  %v595 = vunpack.c.l.b16 %v92
  %v596 = vunpack.c.l.b16 %v93
  %v597 = vunpack.c.l.b16 %v94
  %v598 = vunpack.c.l.b16 %v95
  %v599 = vunpack.c.l.b16 %v96
  %v600 = vunpack.c.l.b16 %v97
  %v601 = vunpack.c.l.b16 %v98
  %v602 = vunpack.c.l.b16 %v99
  %v603 = vunpack.c.l.b16 %v100
  %v604 = vunpack.c.l.b16 %v101
  %v605 = vunpack.c.l.b16 %v102
  %v606 = vunpack.c.l.b16 %v103
  %v607 = vunpack.c.l.b16 %v104
  %v608 = vunpack.c.l.b16 %v105
  %v609 = vunpack.c.l.b16 %v106
  %v610 = vunpack.c.l.b16 %v107
  %v611 = vunpack.c.l.b16 %v108
  %v612 = vunpack.c.l.b16 %v109
  %v613 = vunpack.c.l.b16 %v110
  %v614 = vunpack.c.l.b16 %v111
  %v615 = vunpack.c.l.b16 %v112
  %v616 = vunpack.c.l.b16 %v113
  %v617 = vunpack.c.l.b16 %v114
  %v618 = vunpack.c.l.b16 %v115
  %v619 = vunpack.c.l.b16 %v116
  %v620 = vunpack.c.l.b16 %v117
  %v621 = vunpack.c.l.b16 %v118
  %v622 = vunpack.c.l.b16 %v119
  %v623 = vunpack.c.l.b16 %v120
  %v624 = vunpack.c.l.b16 %v121
  %v625 = vunpack.c.l.b16 %v122
  %v626 = vunpack.c.l.b16 %v123
  %v627 = vunpack.c.l.b16 %v124
  %v628 = vunpack.c.l.b16 %v125
  %v629 = vunpack.c.l.b16 %v126
  %v630 = vunpack.c.l.b16 %v127
  %v631 = vunpack.c.l.b16 %v128
  %v632 = vunpack.c.l.b16 %v129
  %v633 = vunpack.c.l.b16 %v130
  %v634 = vunpack.c.l.b16 %v131
  %v635 = vunpack.c.l.b16 %v132
  %v636 = vunpack.c.l.b16 %v133
  %v637 = vunpack.c.l.b16 %v134
  %v638 = vunpack.c.l.b16 %v135
  %v639 = vunpack.c.l.b16 %v136
  %v640 = vunpack.c.l.b16 %v137
  %v641 = vunpack.c.l.b16 %v138
  %v642 = vunpack.c.l.b16 %v139
  %v643 = vunpack.c.l.b16 %v140
  %v644 = vunpack.c.l.b16 %v141
  %v645 = vunpack.c.l.b16 %v142
  %v646 = vunpack.c.l.b16 %v143
  %v647 = vunpack.c.l.b16 %v144
  %v648 = vunpack.c.l.b16 %v145
  %v649 = vunpack.c.l.b16 %v146
  %v650 = vunpack.c.l.b16 %v147
  %v651 = vunpack.c.l.b16 %v148
  %v652 = vunpack.c.l.b16 %v149
  %v653 = vunpack.c.l.b16 %v150
  %v654 = vunpack.c.l.b16 %v151
  %v655 = vunpack.c.l.b16 %v152
  %v656 = vunpack.c.l.b16 %v153
  %v657 = vunpack.c.l.b16 %v154
  %v658 = vunpack.c.l.b16 %v155
  %v659 = vunpack.c.l.b16 %v156
  %v660 = vunpack.c.l.b16 %v157
  %v661 = vunpack.c.l.b16 %v158
  %v662 = vunpack.c.l.b16 %v159
  %v663 = vunpack.c.l.b16 %v160
  %v664 = vunpack.c.l.b16 %v161
  %v665 = vunpack.c.l.b16 %v162
  %v666 = vunpack.c.l.b16 %v163
  %v667 = vunpack.c.l.b16 %v164
  %v668 = vunpack.c.l.b16 %v165
  %v669 = vunpack.c.l.b16 %v166
  %v670 = vunpack.c.l.b16 %v167
  %v671 = vunpack.c.l.b16 %v168
  %v672 = vunpack.c.l.b16 %v169
  %v673 = vunpack.c.l.b16 %v170
  %v674 = vunpack.c.l.b16 %v171
  %v675 = vunpack.c.l.b16 %v172
  %v676 = vunpack.c.l.b16 %v173
  %v677 = vunpack.c.l.b16 %v174
  %v678 = vunpack.c.l.b16 %v175
  %v679 = vunpack.c.l.b16 %v176
  %v680 = vunpack.c.l.b16 %v177
  %v681 = vunpack.c.l.b16 %v178
  %v682 = vunpack.c.l.b16 %v179
  %v683 = vunpack.c.l.b16 %v180
  %v684 = vunpack.c.l.b16 %v181
  %v685 = vunpack.c.l.b16 %v182
  %v686 = vunpack.c.l.b16 %v183
  %v687 = vunpack.c.l.b16 %v184
  %v688 = vunpack.c.l.b16 %v185
  %v689 = vunpack.c.l.b16 %v186
  %v690 = vunpack.c.l.b16 %v187
  %v691 = vunpack.c.l.b16 %v188
  %v692 = vunpack.c.l.b16 %v189
  %v693 = vunpack.c.l.b16 %v190
  %v694 = vunpack.c.l.b16 %v191
  %v695 = vunpack.c.l.b16 %v192
  %v696 = vpack.c.b16 %v589, %v588
  %v697 = vpack.c.b16 %v591, %v590
  %v698 = vpack.c.b16 %v593, %v592
  %v699 = vpack.c.b16 %v595, %v594
  %v700 = vpack.c.b16 %v597, %v596
  %v701 = vpack.c.b16 %v599, %v598
  %v702 = vpack.c.b16 %v601, %v600
  %v703 = vpack.c.b16 %v603, %v602
  %v704 = vpack.c.b16 %v605, %v604
  %v705 = vpack.c.b16 %v607, %v606
  %v706 = vpack.c.b16 %v609, %v608
  %v707 = vpack.c.b16 %v611, %v610
  %v708 = vpack.c.b16 %v613, %v612
  %v709 = vpack.c.b16 %v615, %v614
  %v710 = vpack.c.b16 %v617, %v616
  %v711 = vpack.c.b16 %v619, %v618
  %v712 = vpack.c.b16 %v621, %v620
  %v713 = vpack.c.b16 %v623, %v622
  %v714 = vpack.c.b16 %v625, %v624
  %v715 = vpack.c.b16 %v627, %v626
  %v716 = vpack.c.b16 %v629, %v628
  %v717 = vpack.c.b16 %v631, %v630
  %v718 = vpack.c.b16 %v633, %v632
  %v719 = vpack.c.b16 %v635, %v634
  %v720 = vpack.c.b16 %v637, %v636
  %v721 = vpack.c.b16 %v639, %v638
  %v722 = vpack.c.b16 %v641, %v640
  %v723 = vpack.c.b16 %v643, %v642
  %v724 = vpack.c.b16 %v645, %v644
  %v725 = vpack.c.b16 %v647, %v646
  %v726 = vpack.c.b16 %v649, %v648
  %v727 = vpack.c.b16 %v651, %v650
  %v728 = vpack.c.b16 %v653, %v652
  %v729 = vpack.c.b16 %v655, %v654
  %v730 = vpack.c.b16 %v657, %v656
  %v731 = vpack.c.b16 %v659, %v658
  %v732 = vpack.c.b16 %v661, %v660
  %v733 = vpack.c.b16 %v663, %v662
  %v734 = vpack.c.b16 %v665, %v664
  %v735 = vpack.c.b16 %v667, %v666
  %v736 = vpack.c.b16 %v669, %v668
  %v737 = vpack.c.b16 %v671, %v670
  %v738 = vpack.c.b16 %v673, %v672
  %v739 = vpack.c.b16 %v675, %v674
  %v740 = vpack.c.b16 %v677, %v676
  %v741 = vpack.c.b16 %v679, %v678
  %v742 = vpack.c.b16 %v681, %v680
  %v743 = vpack.c.b16 %v683, %v682
  %v744 = vpack.c.b16 %v685, %v684
  %v745 = vpack.c.b16 %v687, %v686
  %v746 = vpack.c.b16 %v689, %v688
  %v747 = vpack.c.b16 %v691, %v690
  %v748 = vpack.c.b16 %v693, %v692
  %v749 = vpack.c.b16 %v695, %v694
  %vm804 = vcmask 785408
  %v806 = vsel %vm804, %v382, 0
  %v809 = vsel %vm804, %v389, 0
  %v812 = vsel %vm804, %v396, 0
  %v815 = vsel %vm804, %v403, 0
  %v818 = vsel %vm804, %v410, 0
  %v821 = vsel %vm804, %v417, 0
  %v824 = vsel %vm804, %v424, 0
  %v827 = vsel %vm804, %v431, 0
  %829 = vmatprep.subr.bf16.mxu0 0
  %830 = vmatpush1.bf16.msra.mxu0 %v703
  %831 = vmatprep.subr.bf16.mxu0 0
  %832 = vmatpush1.bf16.msra.mxu0 %v702
  %833 = vmatprep.subr.bf16.mxu0 0
  %834 = vmatpush1.bf16.msra.mxu0 %v701
  %835 = vmatprep.subr.bf16.mxu0 0
  %836 = vmatpush1.bf16.msra.mxu0 %v700
  %837 = vmatprep.subr.bf16.mxu0 0
  %838 = vmatpush1.bf16.msra.mxu0 %v699
  %839 = vmatprep.subr.bf16.mxu0 0
  %840 = vmatpush1.bf16.msra.mxu0 %v698
  %841 = vmatprep.subr.bf16.mxu0 0
  %842 = vmatpush1.bf16.msra.mxu0 %v697
  %843 = vmatprep.subr.bf16.mxu0 0
  %844 = vmatpush1.bf16.msra.mxu0 %v696
  %845 = vmatprep.subr.bf16.mxu0 0
  %846 = vmatpush2.bf16.msra.mxu0 %v711
  %847 = vmatprep.subr.bf16.mxu0 0
  %848 = vmatpush2.bf16.msra.mxu0 %v710
  %849 = vmatprep.subr.bf16.mxu0 0
  %850 = vmatpush2.bf16.msra.mxu0 %v709
  %851 = vmatprep.subr.bf16.mxu0 0
  %852 = vmatpush2.bf16.msra.mxu0 %v708
  %853 = vmatprep.subr.bf16.mxu0 0
  %854 = vmatpush2.bf16.msra.mxu0 %v707
  %855 = vmatprep.subr.bf16.mxu0 0
  %856 = vmatpush2.bf16.msra.mxu0 %v706
  %857 = vmatprep.subr.bf16.mxu0 0
  %858 = vmatpush2.bf16.msra.mxu0 %v705
  %859 = vmatprep.subr.bf16.mxu0 0
  %860 = vmatpush2.bf16.msra.mxu0 %v704
  %861 = vmatprep.mubr.bf16.mxu0 %v377
  %862 = vmatmul.mubr.bf16.gmra.mxu0 %v376
  %v863 = vpop.f32.mrf.mxu0
  %v864 = vadd.f32 %v198, %v863
  %v865 = vpop.f32.mrf.mxu0
  %v866 = vpop.f32.mrf.mxu0
  %v867 = vadd.f32 %v198, %v866
  %v868 = vpop.f32.mrf.mxu0
  %869 = vmatprep.mubr.bf16.mxu0 %v384
  %870 = vmatmul.mubr.bf16.gmra.mxu0 %v383
  %v871 = vpop.f32.mrf.mxu0
  %v872 = vadd.f32 %v198, %v871
  %v873 = vpop.f32.mrf.mxu0
  %v874 = vpop.f32.mrf.mxu0
  %v875 = vadd.f32 %v198, %v874
  %v876 = vpop.f32.mrf.mxu0
  %877 = vmatprep.mubr.bf16.mxu0 %v391
  %878 = vmatmul.mubr.bf16.gmra.mxu0 %v390
  %v879 = vpop.f32.mrf.mxu0
  %v880 = vadd.f32 %v198, %v879
  %v881 = vpop.f32.mrf.mxu0
  %v882 = vpop.f32.mrf.mxu0
  %v883 = vadd.f32 %v198, %v882
  %v884 = vpop.f32.mrf.mxu0
  %885 = vmatprep.mubr.bf16.mxu0 %v398
  %886 = vmatmul.mubr.bf16.gmra.mxu0 %v397
  %v887 = vpop.f32.mrf.mxu0
  %v888 = vadd.f32 %v198, %v887
  %v889 = vpop.f32.mrf.mxu0
  %v890 = vpop.f32.mrf.mxu0
  %v891 = vadd.f32 %v198, %v890
  %v892 = vpop.f32.mrf.mxu0
  %893 = vmatprep.mubr.bf16.mxu0 %v405
  %894 = vmatmul.mubr.bf16.gmra.mxu0 %v404
  %v895 = vpop.f32.mrf.mxu0
  %v896 = vadd.f32 %v198, %v895
  %v897 = vpop.f32.mrf.mxu0
  %v898 = vpop.f32.mrf.mxu0
  %v899 = vadd.f32 %v198, %v898
  %v900 = vpop.f32.mrf.mxu0
  %901 = vmatprep.mubr.bf16.mxu0 %v412
  %902 = vmatmul.mubr.bf16.gmra.mxu0 %v411
  %v903 = vpop.f32.mrf.mxu0
  %v904 = vadd.f32 %v198, %v903
  %v905 = vpop.f32.mrf.mxu0
  %v906 = vpop.f32.mrf.mxu0
  %v907 = vadd.f32 %v198, %v906
  %v908 = vpop.f32.mrf.mxu0
  %909 = vmatprep.mubr.bf16.mxu0 %v419
  %910 = vmatmul.mubr.bf16.gmra.mxu0 %v418
  %v911 = vpop.f32.mrf.mxu0
  %v912 = vadd.f32 %v198, %v911
  %v913 = vpop.f32.mrf.mxu0
  %v914 = vpop.f32.mrf.mxu0
  %v915 = vadd.f32 %v198, %v914
  %v916 = vpop.f32.mrf.mxu0
  %917 = vmatprep.mubr.bf16.mxu0 %v426
  %918 = vmatmul.mubr.bf16.gmra.mxu0 %v425
  %v919 = vpop.f32.mrf.mxu0
  %v920 = vadd.f32 %v198, %v919
  %v921 = vpop.f32.mrf.mxu0
  %v922 = vpop.f32.mrf.mxu0
  %v923 = vadd.f32 %v198, %v922
  %v924 = vpop.f32.mrf.mxu0
  %925 = vdwg.mxu0
  %926 = vmatprep.subr.bf16.mxu0 0
  %927 = vmatpush1.bf16.msra.mxu0 %v719
  %928 = vmatprep.subr.bf16.mxu0 0
  %929 = vmatpush1.bf16.msra.mxu0 %v718
  %930 = vmatprep.subr.bf16.mxu0 0
  %931 = vmatpush1.bf16.msra.mxu0 %v717
  %932 = vmatprep.subr.bf16.mxu0 0
  %933 = vmatpush1.bf16.msra.mxu0 %v716
  %934 = vmatprep.subr.bf16.mxu0 0
  %935 = vmatpush1.bf16.msra.mxu0 %v715
  %936 = vmatprep.subr.bf16.mxu0 0
  %937 = vmatpush1.bf16.msra.mxu0 %v714
  %938 = vmatprep.subr.bf16.mxu0 0
  %939 = vmatpush1.bf16.msra.mxu0 %v713
  %940 = vmatprep.subr.bf16.mxu0 0
  %941 = vmatpush1.bf16.msra.mxu0 %v712
  %942 = vmatprep.subr.bf16.mxu0 0
  %943 = vmatpush2.bf16.msra.mxu0 %v727
  %944 = vmatprep.subr.bf16.mxu0 0
  %945 = vmatpush2.bf16.msra.mxu0 %v726
  %946 = vmatprep.subr.bf16.mxu0 0
  %947 = vmatpush2.bf16.msra.mxu0 %v725
  %948 = vmatprep.subr.bf16.mxu0 0
  %949 = vmatpush2.bf16.msra.mxu0 %v724
  %950 = vmatprep.subr.bf16.mxu0 0
  %951 = vmatpush2.bf16.msra.mxu0 %v723
  %952 = vmatprep.subr.bf16.mxu0 0
  %953 = vmatpush2.bf16.msra.mxu0 %v722
  %954 = vmatprep.subr.bf16.mxu0 0
  %955 = vmatpush2.bf16.msra.mxu0 %v721
  %956 = vmatprep.subr.bf16.mxu0 0
  %957 = vmatpush2.bf16.msra.mxu0 %v720
  %958 = vmatprep.mubr.bf16.mxu0 %v379
  %959 = vmatmul.mubr.bf16.gmra.mxu0 %v378
  %v960 = vpop.f32.mrf.mxu0
  %v961 = vadd.f32 %v864, %v960
  %v962 = vpop.f32.mrf.mxu0
  %v963 = vpop.f32.mrf.mxu0
  %v964 = vadd.f32 %v867, %v963
  %v965 = vpop.f32.mrf.mxu0
  %966 = vmatprep.mubr.bf16.mxu0 %v386
  %967 = vmatmul.mubr.bf16.gmra.mxu0 %v385
  %v968 = vpop.f32.mrf.mxu0
  %v969 = vadd.f32 %v872, %v968
  %v970 = vpop.f32.mrf.mxu0
  %v971 = vpop.f32.mrf.mxu0
  %v972 = vadd.f32 %v875, %v971
  %v973 = vpop.f32.mrf.mxu0
  %974 = vmatprep.mubr.bf16.mxu0 %v393
  %975 = vmatmul.mubr.bf16.gmra.mxu0 %v392
  %v976 = vpop.f32.mrf.mxu0
  %v977 = vadd.f32 %v880, %v976
  %v978 = vpop.f32.mrf.mxu0
  %v979 = vpop.f32.mrf.mxu0
  %v980 = vadd.f32 %v883, %v979
  %v981 = vpop.f32.mrf.mxu0
  %982 = vmatprep.mubr.bf16.mxu0 %v400
  %983 = vmatmul.mubr.bf16.gmra.mxu0 %v399
  %v984 = vpop.f32.mrf.mxu0
  %v985 = vadd.f32 %v888, %v984
  %v986 = vpop.f32.mrf.mxu0
  %v987 = vpop.f32.mrf.mxu0
  %v988 = vadd.f32 %v891, %v987
  %v989 = vpop.f32.mrf.mxu0
  %990 = vmatprep.mubr.bf16.mxu0 %v407
  %991 = vmatmul.mubr.bf16.gmra.mxu0 %v406
  %v992 = vpop.f32.mrf.mxu0
  %v993 = vadd.f32 %v896, %v992
  %v994 = vpop.f32.mrf.mxu0
  %v995 = vpop.f32.mrf.mxu0
  %v996 = vadd.f32 %v899, %v995
  %v997 = vpop.f32.mrf.mxu0
  %998 = vmatprep.mubr.bf16.mxu0 %v414
  %999 = vmatmul.mubr.bf16.gmra.mxu0 %v413
  %v1000 = vpop.f32.mrf.mxu0
  %v1001 = vadd.f32 %v904, %v1000
  %v1002 = vpop.f32.mrf.mxu0
  %v1003 = vpop.f32.mrf.mxu0
  %v1004 = vadd.f32 %v907, %v1003
  %v1005 = vpop.f32.mrf.mxu0
  %1006 = vmatprep.mubr.bf16.mxu0 %v421
  %1007 = vmatmul.mubr.bf16.gmra.mxu0 %v420
  %v1008 = vpop.f32.mrf.mxu0
  %v1009 = vadd.f32 %v912, %v1008
  %v1010 = vpop.f32.mrf.mxu0
  %v1011 = vpop.f32.mrf.mxu0
  %v1012 = vadd.f32 %v915, %v1011
  %v1013 = vpop.f32.mrf.mxu0
  %1014 = vmatprep.mubr.bf16.mxu0 %v428
  %1015 = vmatmul.mubr.bf16.gmra.mxu0 %v427
  %v1016 = vpop.f32.mrf.mxu0
  %v1017 = vadd.f32 %v920, %v1016
  %v1018 = vpop.f32.mrf.mxu0
  %v1019 = vpop.f32.mrf.mxu0
  %v1020 = vadd.f32 %v923, %v1019
  %v1021 = vpop.f32.mrf.mxu0
  %1022 = vdwg.mxu0
  %1023 = vmatprep.subr.bf16.mxu0 0
  %1024 = vmatpush1.bf16.msra.mxu0 %v735
  %1025 = vmatprep.subr.bf16.mxu0 0
  %1026 = vmatpush1.bf16.msra.mxu0 %v734
  %1027 = vmatprep.subr.bf16.mxu0 0
  %1028 = vmatpush1.bf16.msra.mxu0 %v733
  %1029 = vmatprep.subr.bf16.mxu0 0
  %1030 = vmatpush1.bf16.msra.mxu0 %v732
  %1031 = vmatprep.subr.bf16.mxu0 0
  %1032 = vmatpush1.bf16.msra.mxu0 %v731
  %1033 = vmatprep.subr.bf16.mxu0 0
  %1034 = vmatpush1.bf16.msra.mxu0 %v730
  %1035 = vmatprep.subr.bf16.mxu0 0
  %1036 = vmatpush1.bf16.msra.mxu0 %v729
  %1037 = vmatprep.subr.bf16.mxu0 0
  %1038 = vmatpush1.bf16.msra.mxu0 %v728
  %1039 = vmatprep.subr.bf16.mxu0 0
  %1040 = vmatpush2.bf16.msra.mxu0 %v743
  %1041 = vmatprep.subr.bf16.mxu0 0
  %1042 = vmatpush2.bf16.msra.mxu0 %v742
  %1043 = vmatprep.subr.bf16.mxu0 0
  %1044 = vmatpush2.bf16.msra.mxu0 %v741
  %1045 = vmatprep.subr.bf16.mxu0 0
  %1046 = vmatpush2.bf16.msra.mxu0 %v740
  %1047 = vmatprep.subr.bf16.mxu0 0
  %1048 = vmatpush2.bf16.msra.mxu0 %v739
  %1049 = vmatprep.subr.bf16.mxu0 0
  %1050 = vmatpush2.bf16.msra.mxu0 %v738
  %1051 = vmatprep.subr.bf16.mxu0 0
  %1052 = vmatpush2.bf16.msra.mxu0 %v737
  %1053 = vmatprep.subr.bf16.mxu0 0
  %1054 = vmatpush2.bf16.msra.mxu0 %v736
  %1055 = vmatprep.mubr.bf16.mxu0 %v381
  %1056 = vmatmul.mubr.bf16.gmra.mxu0 %v380
  %v1057 = vpop.f32.mrf.mxu0
  %v1058 = vadd.f32 %v961, %v1057
  %v1059 = vpop.f32.mrf.mxu0
  %v1060 = vpop.f32.mrf.mxu0
  %v1061 = vadd.f32 %v964, %v1060
  %v1062 = vpop.f32.mrf.mxu0
  %1063 = vmatprep.mubr.bf16.mxu0 %v388
  %1064 = vmatmul.mubr.bf16.gmra.mxu0 %v387
  %v1065 = vpop.f32.mrf.mxu0
  %v1066 = vadd.f32 %v969, %v1065
  %v1067 = vpop.f32.mrf.mxu0
  %v1068 = vpop.f32.mrf.mxu0
  %v1069 = vadd.f32 %v972, %v1068
  %v1070 = vpop.f32.mrf.mxu0
  %1071 = vmatprep.mubr.bf16.mxu0 %v395
  %1072 = vmatmul.mubr.bf16.gmra.mxu0 %v394
  %v1073 = vpop.f32.mrf.mxu0
  %v1074 = vadd.f32 %v977, %v1073
  %v1075 = vpop.f32.mrf.mxu0
  %v1076 = vpop.f32.mrf.mxu0
  %v1077 = vadd.f32 %v980, %v1076
  %v1078 = vpop.f32.mrf.mxu0
  %1079 = vmatprep.mubr.bf16.mxu0 %v402
  %1080 = vmatmul.mubr.bf16.gmra.mxu0 %v401
  %v1081 = vpop.f32.mrf.mxu0
  %v1082 = vadd.f32 %v985, %v1081
  %v1083 = vpop.f32.mrf.mxu0
  %v1084 = vpop.f32.mrf.mxu0
  %v1085 = vadd.f32 %v988, %v1084
  %v1086 = vpop.f32.mrf.mxu0
  %1087 = vmatprep.mubr.bf16.mxu0 %v409
  %1088 = vmatmul.mubr.bf16.gmra.mxu0 %v408
  %v1089 = vpop.f32.mrf.mxu0
  %v1090 = vadd.f32 %v993, %v1089
  %v1091 = vpop.f32.mrf.mxu0
  %v1092 = vpop.f32.mrf.mxu0
  %v1093 = vadd.f32 %v996, %v1092
  %v1094 = vpop.f32.mrf.mxu0
  %1095 = vmatprep.mubr.bf16.mxu0 %v416
  %1096 = vmatmul.mubr.bf16.gmra.mxu0 %v415
  %v1097 = vpop.f32.mrf.mxu0
  %v1098 = vadd.f32 %v1001, %v1097
  %v1099 = vpop.f32.mrf.mxu0
  %v1100 = vpop.f32.mrf.mxu0
  %v1101 = vadd.f32 %v1004, %v1100
  %v1102 = vpop.f32.mrf.mxu0
  %1103 = vmatprep.mubr.bf16.mxu0 %v423
  %1104 = vmatmul.mubr.bf16.gmra.mxu0 %v422
  %v1105 = vpop.f32.mrf.mxu0
  %v1106 = vadd.f32 %v1009, %v1105
  %v1107 = vpop.f32.mrf.mxu0
  %v1108 = vpop.f32.mrf.mxu0
  %v1109 = vadd.f32 %v1012, %v1108
  %v1110 = vpop.f32.mrf.mxu0
  %1111 = vmatprep.mubr.bf16.mxu0 %v430
  %1112 = vmatmul.mubr.bf16.gmra.mxu0 %v429
  %v1113 = vpop.f32.mrf.mxu0
  %v1114 = vadd.f32 %v1017, %v1113
  %v1115 = vpop.f32.mrf.mxu0
  %v1116 = vpop.f32.mrf.mxu0
  %v1117 = vadd.f32 %v1020, %v1116
  %v1118 = vpop.f32.mrf.mxu0
  %1119 = vdwg.mxu0
  %1120 = vmatprep.subr.bf16.mxu0 0
  %1121 = vmatpush1.bf16.msra.mxu0 0
  %1122 = vmatprep.subr.bf16.mxu0 0
  %1123 = vmatpush1.bf16.msra.mxu0 0
  %1124 = vmatprep.subr.bf16.mxu0 0
  %1125 = vmatpush1.bf16.msra.mxu0 %v749
  %1126 = vmatprep.subr.bf16.mxu0 0
  %1127 = vmatpush1.bf16.msra.mxu0 %v748
  %1128 = vmatprep.subr.bf16.mxu0 0
  %1129 = vmatpush1.bf16.msra.mxu0 %v747
  %1130 = vmatprep.subr.bf16.mxu0 0
  %1131 = vmatpush1.bf16.msra.mxu0 %v746
  %1132 = vmatprep.subr.bf16.mxu0 0
  %1133 = vmatpush1.bf16.msra.mxu0 %v745
  %1134 = vmatprep.subr.bf16.mxu0 0
  %1135 = vmatpush1.bf16.msra.mxu0 %v744
  %1136 = vmatprep.subr.bf16.mxu0 0
  %1137 = vmatpush2.bf16.msra.mxu0 0
  %1138 = vmatprep.subr.bf16.mxu0 0
  %1139 = vmatpush2.bf16.msra.mxu0 0
  %1140 = vmatprep.subr.bf16.mxu0 0
  %1141 = vmatpush2.bf16.msra.mxu0 0
  %1142 = vmatprep.subr.bf16.mxu0 0
  %1143 = vmatpush2.bf16.msra.mxu0 0
  %1144 = vmatprep.subr.bf16.mxu0 0
  %1145 = vmatpush2.bf16.msra.mxu0 0
  %1146 = vmatprep.subr.bf16.mxu0 0
  %1147 = vmatpush2.bf16.msra.mxu0 0
  %1148 = vmatprep.subr.bf16.mxu0 0
  %1149 = vmatpush2.bf16.msra.mxu0 0
  %1150 = vmatprep.subr.bf16.mxu0 0
  %1151 = vmatpush2.bf16.msra.mxu0 0
  %1152 = vmatprep.mubr.bf16.mxu0 0
  %1153 = vmatmul.mubr.bf16.gmra.mxu0 %v806
  %v1154 = vpop.f32.mrf.mxu0
  %v1155 = vadd.f32 %v1058, %v1154
  %v1156 = vpop.f32.mrf.mxu0
  %v1157 = vpop.f32.mrf.mxu0
  %v1158 = vadd.f32 %v1061, %v1157
  %v1159 = vpop.f32.mrf.mxu0
  %1160 = vmatprep.mubr.bf16.mxu0 0
  %1161 = vmatmul.mubr.bf16.gmra.mxu0 %v809
  %v1162 = vpop.f32.mrf.mxu0
  %v1163 = vadd.f32 %v1066, %v1162
  %v1164 = vpop.f32.mrf.mxu0
  %v1165 = vpop.f32.mrf.mxu0
  %v1166 = vadd.f32 %v1069, %v1165
  %v1167 = vpop.f32.mrf.mxu0
  %1168 = vmatprep.mubr.bf16.mxu0 0
  %1169 = vmatmul.mubr.bf16.gmra.mxu0 %v812
  %v1170 = vpop.f32.mrf.mxu0
  %v1171 = vadd.f32 %v1074, %v1170
  %v1172 = vpop.f32.mrf.mxu0
  %v1173 = vpop.f32.mrf.mxu0
  %v1174 = vadd.f32 %v1077, %v1173
  %v1175 = vpop.f32.mrf.mxu0
  %1176 = vmatprep.mubr.bf16.mxu0 0
  %1177 = vmatmul.mubr.bf16.gmra.mxu0 %v815
  %v1178 = vpop.f32.mrf.mxu0
  %v1179 = vadd.f32 %v1082, %v1178
  %v1180 = vpop.f32.mrf.mxu0
  %v1181 = vpop.f32.mrf.mxu0
  %v1182 = vadd.f32 %v1085, %v1181
  %v1183 = vpop.f32.mrf.mxu0
  %1184 = vmatprep.mubr.bf16.mxu0 0
  %1185 = vmatmul.mubr.bf16.gmra.mxu0 %v818
  %v1186 = vpop.f32.mrf.mxu0
  %v1187 = vadd.f32 %v1090, %v1186
  %v1188 = vpop.f32.mrf.mxu0
  %v1189 = vpop.f32.mrf.mxu0
  %v1190 = vadd.f32 %v1093, %v1189
  %v1191 = vpop.f32.mrf.mxu0
  %1192 = vmatprep.mubr.bf16.mxu0 0
  %1193 = vmatmul.mubr.bf16.gmra.mxu0 %v821
  %v1194 = vpop.f32.mrf.mxu0
  %v1195 = vadd.f32 %v1098, %v1194
  %v1196 = vpop.f32.mrf.mxu0
  %v1197 = vpop.f32.mrf.mxu0
  %v1198 = vadd.f32 %v1101, %v1197
  %v1199 = vpop.f32.mrf.mxu0
  %1200 = vmatprep.mubr.bf16.mxu0 0
  %1201 = vmatmul.mubr.bf16.gmra.mxu0 %v824
  %v1202 = vpop.f32.mrf.mxu0
  %v1203 = vadd.f32 %v1106, %v1202
  %v1204 = vpop.f32.mrf.mxu0
  %v1205 = vpop.f32.mrf.mxu0
  %v1206 = vadd.f32 %v1109, %v1205
  %v1207 = vpop.f32.mrf.mxu0
  %1208 = vmatprep.mubr.bf16.mxu0 0
  %1209 = vmatmul.mubr.bf16.gmra.mxu0 %v827
  %v1210 = vpop.f32.mrf.mxu0
  %v1211 = vadd.f32 %v1114, %v1210
  %v1212 = vpop.f32.mrf.mxu0
  %v1213 = vpop.f32.mrf.mxu0
  %v1214 = vadd.f32 %v1117, %v1213
  %v1215 = vpop.f32.mrf.mxu0
  %1216 = vdwg.mxu0
  %v1217 = vmax.f32 %v1155, 0.0
  %v1218 = vmax.f32 %v1158, 0.0
  %v1219 = vmax.f32 %v1163, 0.0
  %v1220 = vmax.f32 %v1166, 0.0
  %v1221 = vmax.f32 %v1171, 0.0
  %v1222 = vmax.f32 %v1174, 0.0
  %v1223 = vmax.f32 %v1179, 0.0
  %v1224 = vmax.f32 %v1182, 0.0
  %v1225 = vmax.f32 %v1187, 0.0
  %v1226 = vmax.f32 %v1190, 0.0
  %v1227 = vmax.f32 %v1195, 0.0
  %v1228 = vmax.f32 %v1198, 0.0
  %v1229 = vmax.f32 %v1203, 0.0
  %v1230 = vmax.f32 %v1206, 0.0
  %v1231 = vmax.f32 %v1211, 0.0
  %v1232 = vmax.f32 %v1214, 0.0
  %vm1233 = vcmask 261120
  %v1234 = vsel %vm1233, %v1217, 0.0
  %v1235 = vsel %vm1233, %v1218, 0.0
  %v1236 = vadd.f32 %v1234, %v1235
  %v1237 = vsel %vm1233, %v1219, 0.0
  %v1238 = vadd.f32 %v1236, %v1237
  %v1239 = vsel %vm1233, %v1220, 0.0
  %v1240 = vadd.f32 %v1238, %v1239
  %v1241 = vsel %vm1233, %v1221, 0.0
  %v1242 = vadd.f32 %v1240, %v1241
  %v1243 = vsel %vm1233, %v1222, 0.0
  %v1244 = vadd.f32 %v1242, %v1243
  %v1245 = vsel %vm1233, %v1223, 0.0
  %v1246 = vadd.f32 %v1244, %v1245
  %v1247 = vsel %vm1233, %v1224, 0.0
  %v1248 = vadd.f32 %v1246, %v1247
  %v1249 = vsel %vm1233, %v1225, 0.0
  %v1250 = vadd.f32 %v1248, %v1249
  %v1251 = vsel %vm1233, %v1226, 0.0
  %v1252 = vadd.f32 %v1250, %v1251
  %v1253 = vsel %vm1233, %v1227, 0.0
  %v1254 = vadd.f32 %v1252, %v1253
  %v1255 = vsel %vm1233, %v1228, 0.0
  %v1256 = vadd.f32 %v1254, %v1255
  %v1257 = vsel %vm1233, %v1229, 0.0
  %v1258 = vadd.f32 %v1256, %v1257
  %v1259 = vsel %vm1233, %v1230, 0.0
  %v1260 = vadd.f32 %v1258, %v1259
  %v1261 = vsel %vm1233, %v1231, 0.0
  %v1262 = vadd.f32 %v1260, %v1261
  %v1263 = vsel %vm1233, %v1232, 0.0
  %v1264 = vadd.f32 %v1262, %v1263
  %v1265 = vrot.slane %v1264, 4
  %v1266 = vadd.f32 %v1264, %v1265
  %v1267 = vrot.slane %v1266, 2
  %v1268 = vadd.f32 %v1266, %v1267
  %v1269 = vrot.slane %v1268, 1
  %v1270 = vadd.f32 %v1268, %v1269
  %v1271 = vmul.f32 %v1270, 0.0078125
  %v1272 = vsub.f32 %v1217, %v1271
  %v1273 = vsub.f32 %v1218, %v1271
  %v1274 = vsub.f32 %v1219, %v1271
  %v1275 = vsub.f32 %v1220, %v1271
  %v1276 = vsub.f32 %v1221, %v1271
  %v1277 = vsub.f32 %v1222, %v1271
  %v1278 = vsub.f32 %v1223, %v1271
  %v1279 = vsub.f32 %v1224, %v1271
  %v1280 = vsub.f32 %v1225, %v1271
  %v1281 = vsub.f32 %v1226, %v1271
  %v1282 = vsub.f32 %v1227, %v1271
  %v1283 = vsub.f32 %v1228, %v1271
  %v1284 = vsub.f32 %v1229, %v1271
  %v1285 = vsub.f32 %v1230, %v1271
  %v1286 = vsub.f32 %v1231, %v1271
  %v1287 = vsub.f32 %v1232, %v1271
  %v1288 = vmul.f32 %v1272, %v1272
  %v1289 = vmul.f32 %v1273, %v1273
  %v1290 = vmul.f32 %v1274, %v1274
  %v1291 = vmul.f32 %v1275, %v1275
  %v1292 = vmul.f32 %v1276, %v1276
  %v1293 = vmul.f32 %v1277, %v1277
  %v1294 = vmul.f32 %v1278, %v1278
  %v1295 = vmul.f32 %v1279, %v1279
  %v1296 = vmul.f32 %v1280, %v1280
  %v1297 = vmul.f32 %v1281, %v1281
  %v1298 = vmul.f32 %v1282, %v1282
  %v1299 = vmul.f32 %v1283, %v1283
  %v1300 = vmul.f32 %v1284, %v1284
  %v1301 = vmul.f32 %v1285, %v1285
  %v1302 = vmul.f32 %v1286, %v1286
  %v1303 = vmul.f32 %v1287, %v1287
  %v1304 = vsel %vm1233, %v1288, 0.0
  %v1305 = vsel %vm1233, %v1289, 0.0
  %v1306 = vadd.f32 %v1304, %v1305
  %v1307 = vsel %vm1233, %v1290, 0.0
  %v1308 = vadd.f32 %v1306, %v1307
  %v1309 = vsel %vm1233, %v1291, 0.0
  %v1310 = vadd.f32 %v1308, %v1309
  %v1311 = vsel %vm1233, %v1292, 0.0
  %v1312 = vadd.f32 %v1310, %v1311
  %v1313 = vsel %vm1233, %v1293, 0.0
  %v1314 = vadd.f32 %v1312, %v1313
  %v1315 = vsel %vm1233, %v1294, 0.0
  %v1316 = vadd.f32 %v1314, %v1315
  %v1317 = vsel %vm1233, %v1295, 0.0
  %v1318 = vadd.f32 %v1316, %v1317
  %v1319 = vsel %vm1233, %v1296, 0.0
  %v1320 = vadd.f32 %v1318, %v1319
  %v1321 = vsel %vm1233, %v1297, 0.0
  %v1322 = vadd.f32 %v1320, %v1321
  %v1323 = vsel %vm1233, %v1298, 0.0
  %v1324 = vadd.f32 %v1322, %v1323
  %v1325 = vsel %vm1233, %v1299, 0.0
  %v1326 = vadd.f32 %v1324, %v1325
  %v1327 = vsel %vm1233, %v1300, 0.0
  %v1328 = vadd.f32 %v1326, %v1327
  %v1329 = vsel %vm1233, %v1301, 0.0
  %v1330 = vadd.f32 %v1328, %v1329
  %v1331 = vsel %vm1233, %v1302, 0.0
  %v1332 = vadd.f32 %v1330, %v1331
  %v1333 = vsel %vm1233, %v1303, 0.0
  %v1334 = vadd.f32 %v1332, %v1333
  %v1335 = vrot.slane %v1334, 4
  %v1336 = vadd.f32 %v1334, %v1335
  %v1337 = vrot.slane %v1336, 2
  %v1338 = vadd.f32 %v1336, %v1337
  %v1339 = vrot.slane %v1338, 1
  %v1340 = vadd.f32 %v1338, %v1339
  %v1341 = vmul.f32 %v1340, 0.0078125
  %v1342 = vld [vmem:[%s3] sm:$0x1]
  %v1343 = vadd.f32 %v1341, 1e-05
  %v1344 = vrsqrt.pop %v1343
  %v1345 = vmul.f32 %v1342, %v1344
  %v1347 = vlaneseq
  %v1348 = vshrl.u32 %v1347, 7
  %v1349 = vsub.s32 0, %v1348
  %v1350 = vrot.slane %v1345, %v1349
  %v1352 = vmul.f32 %v1272, %v1350
  %v1353 = vmul.f32 %v1273, %v1350
  %v1354 = vmul.f32 %v1274, %v1350
  %v1355 = vmul.f32 %v1275, %v1350
  %v1356 = vmul.f32 %v1276, %v1350
  %v1357 = vmul.f32 %v1277, %v1350
  %v1358 = vmul.f32 %v1278, %v1350
  %v1359 = vmul.f32 %v1279, %v1350
  %v1360 = vmul.f32 %v1280, %v1350
  %v1361 = vmul.f32 %v1281, %v1350
  %v1362 = vmul.f32 %v1282, %v1350
  %v1363 = vmul.f32 %v1283, %v1350
  %v1364 = vmul.f32 %v1284, %v1350
  %v1365 = vmul.f32 %v1285, %v1350
  %v1366 = vmul.f32 %v1286, %v1350
  %v1367 = vmul.f32 %v1287, %v1350
  %v1368 = vld [vmem:[%s4] sm:$0x1]
  %v1370 = vlaneseq
  %v1371 = vshrl.u32 %v1370, 7
  %v1372 = vsub.s32 0, %v1371
  %v1373 = vrot.slane %v1368, %v1372
  %v1375 = vadd.f32 %v1352, %v1373
  %v1376 = vadd.f32 %v1353, %v1373
  %v1377 = vadd.f32 %v1354, %v1373
  %v1378 = vadd.f32 %v1355, %v1373
  %v1379 = vadd.f32 %v1356, %v1373
  %v1380 = vadd.f32 %v1357, %v1373
  %v1381 = vadd.f32 %v1358, %v1373
  %v1382 = vadd.f32 %v1359, %v1373
  %v1383 = vadd.f32 %v1360, %v1373
  %v1384 = vadd.f32 %v1361, %v1373
  %v1385 = vadd.f32 %v1362, %v1373
  %v1386 = vadd.f32 %v1363, %v1373
  %v1387 = vadd.f32 %v1364, %v1373
  %v1388 = vadd.f32 %v1365, %v1373
  %v1389 = vadd.f32 %v1366, %v1373
  %v1390 = vadd.f32 %v1367, %v1373
  %1391 = vst.msk [vmem:[%s5] sm:$0xff] %vm1233, %v1375
  %1392 = vst.msk [vmem:[%s5 + $0x8] sm:$0xff] %vm1233, %v1376
  %1393 = vst.msk [vmem:[%s5 + $0x10] sm:$0xff] %vm1233, %v1377
  %1394 = vst.msk [vmem:[%s5 + $0x18] sm:$0xff] %vm1233, %v1378
  %1395 = vst.msk [vmem:[%s5 + $0x20] sm:$0xff] %vm1233, %v1379
  %1396 = vst.msk [vmem:[%s5 + $0x28] sm:$0xff] %vm1233, %v1380
  %1397 = vst.msk [vmem:[%s5 + $0x30] sm:$0xff] %vm1233, %v1381
  %1398 = vst.msk [vmem:[%s5 + $0x38] sm:$0xff] %vm1233, %v1382
  %1399 = vst.msk [vmem:[%s5 + $0x40] sm:$0xff] %vm1233, %v1383
  %1400 = vst.msk [vmem:[%s5 + $0x48] sm:$0xff] %vm1233, %v1384
  %1401 = vst.msk [vmem:[%s5 + $0x50] sm:$0xff] %vm1233, %v1385
  %1402 = vst.msk [vmem:[%s5 + $0x58] sm:$0xff] %vm1233, %v1386
  %1403 = vst.msk [vmem:[%s5 + $0x60] sm:$0xff] %vm1233, %v1387
  %1404 = vst.msk [vmem:[%s5 + $0x68] sm:$0xff] %vm1233, %v1388
  %1405 = vst.msk [vmem:[%s5 + $0x70] sm:$0xff] %vm1233, %v1389
  %1406 = vst.msk [vmem:[%s5 + $0x78] sm:$0xff] %vm1233, %v1390
  // Predicated region
  $region22: #{unet_forward.20} parent=0 // pred_check
    _
  $region23: #{unet_forward.20} parent=0 // pred_check_branch
    %1408 = sbr.rel (0) target = $region25
  $region24: #{unet_forward.20} parent=0 // pred_region
    _
  $region25: #{unet_forward.20} parent=0 // pred_fallthru
    _
  // Predicated region
  $region26: #{unet_forward.20} parent=0 // pred_check
    _
  $region27: #{unet_forward.20} parent=0 // pred_check_branch
    %1410 = sbr.rel (0) target = $region29
  $region28: #{unet_forward.20} parent=0 // pred_region
    _
  $region29: #{unet_forward.20} parent=0 // pred_fallthru
    _

// kernel: unet_forward.21
$region0: #{unet_forward.21}
  #allocation0 [shape = 'u32[]', space=smem, size = 0x4, offset = 0x4, fixed_abs, tag = 'smem constant byte address 0x4 - core index']
  #allocation1 [shape = 'u32[144,128]{1,0:T(1,128)}', space=vmem, size = 0x12000, scoped, tag = 'internal scratch']
  #allocation2 [shape = 'f32[1,1]{1,0:T(1,128)S(1)}', space=vmem, size = 0x200, scoped, tag = 'scoped memory for unet_forward.21']
  %s0 = inlined_call_operand.vmem [shape: f32[64,256], index: 0, kind: input, shape index: {}]
  %s1 = inlined_call_operand.vmem [shape: f32[2,32,64], index: 1, kind: input, shape index: {}]
  %s2 = inlined_call_operand.vmem [shape: f32[2,16,256], index: 2, kind: input, shape index: {}]
  %s3 = inlined_call_operand.vmem [shape: f32[1,32], index: 3, kind: input, shape index: {}]
  %s4 = inlined_call_operand.vmem [shape: f32[1,16], index: 4, kind: input, shape index: {}]
  %s5 = inlined_call_operand.<no memory space> [shape: f32[1,1], index: 5, kind: input, shape index: {}]
  %s6 = inlined_call_operand.vmem [shape: f32[2,1,256], index: 6, kind: output, shape index: {}]
  %s7 = sld [smem:[#allocation0]]
  $region34: #{unet_forward.21} parent=0
    _
  %s9 = ssub.s32 1, %s7
  %s10 = scalar_select 0, %s9, %s7
  %v11 = vstv %s5
  %12 = vst [vmem:[#allocation2] sm:$0x1] %v11
  // Predicated region
  $region2: #{unet_forward.21} parent=0 // pred_check
    _
  $region3: #{unet_forward.21} parent=0 // pred_check_branch
    %14 = sbr.rel (0) target = $region5
  $region4: #{unet_forward.21} parent=0 // pred_region
    _
  $region5: #{unet_forward.21} parent=0 // pred_fallthru
    _
  // Predicated region
  $region6: #{unet_forward.21} parent=0 // pred_check
    _
  $region7: #{unet_forward.21} parent=0 // pred_check_branch
    %16 = sbr.rel (0) target = $region9
  $region8: #{unet_forward.21} parent=0 // pred_region
    _
  $region9: #{unet_forward.21} parent=0 // pred_fallthru
    _
  // Predicated region
  $region10: #{unet_forward.21} parent=0 // pred_check
    _
  $region11: #{unet_forward.21} parent=0 // pred_check_branch
    %18 = sbr.rel (0) target = $region13
  $region12: #{unet_forward.21} parent=0 // pred_region
    _
  $region13: #{unet_forward.21} parent=0 // pred_fallthru
    _
  // Predicated region
  $region14: #{unet_forward.21} parent=0 // pred_check
    _
  $region15: #{unet_forward.21} parent=0 // pred_check_branch
    %20 = sbr.rel (0) target = $region17
  $region16: #{unet_forward.21} parent=0 // pred_region
    _
  $region17: #{unet_forward.21} parent=0 // pred_fallthru
    _
  // Predicated region
  $region18: #{unet_forward.21} parent=0 // pred_check
    _
  $region19: #{unet_forward.21} parent=0 // pred_check_branch
    %22 = sbr.rel (0) target = $region21
  $region20: #{unet_forward.21} parent=0 // pred_region
    _
  $region21: #{unet_forward.21} parent=0 // pred_fallthru
    _
  // Predicated region
  $region22: #{unet_forward.21} parent=0 // pred_check
    _
  $region23: #{unet_forward.21} parent=0 // pred_check_branch
    %24 = sbr.rel (0) target = $region25
  $region24: #{unet_forward.21} parent=0 // pred_region
    _
  $region25: #{unet_forward.21} parent=0 // pred_fallthru
    _
  %v25 = vld [vmem:[%s1] sm:$0xff]
  %v26 = vld [vmem:[%s1 + $0x8] sm:$0xff]
  %v27 = vld [vmem:[%s1 + $0x10] sm:$0xff]
  %v28 = vld [vmem:[%s1 + $0x18] sm:$0xff]
  %v29 = vld [vmem:[%s0] sm:$0xff]
  %v30 = vld [vmem:[%s0 + $0x8] sm:$0xff]
  %v31 = vld [vmem:[%s0 + $0x10] sm:$0xff]
  %v32 = vld [vmem:[%s0 + $0x18] sm:$0xff]
  %v33 = vld [vmem:[%s0 + $0x20] sm:$0xff]
  %v34 = vld [vmem:[%s0 + $0x28] sm:$0xff]
  %v35 = vld [vmem:[%s0 + $0x30] sm:$0xff]
  %v36 = vld [vmem:[%s0 + $0x38] sm:$0xff]
  %v37 = vld [vmem:[%s0 + $0x40] sm:$0xff]
  %v38 = vld [vmem:[%s0 + $0x48] sm:$0xff]
  %v39 = vld [vmem:[%s0 + $0x50] sm:$0xff]
  %v40 = vld [vmem:[%s0 + $0x58] sm:$0xff]
  %v41 = vld [vmem:[%s0 + $0x60] sm:$0xff]
  %v42 = vld [vmem:[%s0 + $0x68] sm:$0xff]
  %v43 = vld [vmem:[%s0 + $0x70] sm:$0xff]
  %v44 = vld [vmem:[%s0 + $0x78] sm:$0xff]
  %vm45 = vcmask 523264
  %v47 = vsel %vm45, %v25, 0
  %v50 = vsel %vm45, %v26, 0
  %v53 = vsel %vm45, %v27, 0
  %v56 = vsel %vm45, %v28, 0
  %58 = vmatprep.subr.mxu0 0.0
  %59 = vmatpush1.msra.mxu0 0.0
  %60 = vmatprep.subr.mxu0 0.0
  %61 = vmatpush1.msra.mxu0 0.0
  %62 = vmatprep.subr.mxu0 0.0
  %63 = vmatpush1.msra.mxu0 0.0
  %64 = vmatprep.subr.mxu0 0.0
  %65 = vmatpush1.msra.mxu0 0.0
  %66 = vmatprep.subr.mxu0 0.0
  %67 = vmatpush1.msra.mxu0 0.0
  %68 = vmatprep.subr.mxu0 0.0
  %69 = vmatpush1.msra.mxu0 0.0
  %70 = vmatprep.subr.mxu0 0.0
  %71 = vmatpush1.msra.mxu0 0.0
  %72 = vmatprep.subr.mxu0 0.0
  %73 = vmatpush1.msra.mxu0 0.0
  %74 = vmatprep.subr.mxu0 %v44
  %75 = vmatpush1.msra.mxu0 %v43
  %76 = vmatprep.subr.mxu0 %v42
  %77 = vmatpush1.msra.mxu0 %v41
  %78 = vmatprep.subr.mxu0 %v40
  %79 = vmatpush1.msra.mxu0 %v39
  %80 = vmatprep.subr.mxu0 %v38
  %81 = vmatpush1.msra.mxu0 %v37
  %82 = vmatprep.subr.mxu0 %v36
  %83 = vmatpush1.msra.mxu0 %v35
  %84 = vmatprep.subr.mxu0 %v34
  %85 = vmatpush1.msra.mxu0 %v33
  %86 = vmatprep.subr.mxu0 %v32
  %87 = vmatpush1.msra.mxu0 %v31
  %88 = vmatprep.subr.mxu0 %v30
  %89 = vmatpush1.msra.mxu0 %v29
  %90 = vmatprep.subr.mxu0 0.0
  %91 = vmatpush2.msra.mxu0 0.0
  %92 = vmatprep.subr.mxu0 0.0
  %93 = vmatpush2.msra.mxu0 0.0
  %94 = vmatprep.subr.mxu0 0.0
  %95 = vmatpush2.msra.mxu0 0.0
  %96 = vmatprep.subr.mxu0 0.0
  %97 = vmatpush2.msra.mxu0 0.0
  %98 = vmatprep.subr.mxu0 0.0
  %99 = vmatpush2.msra.mxu0 0.0
  %100 = vmatprep.subr.mxu0 0.0
  %101 = vmatpush2.msra.mxu0 0.0
  %102 = vmatprep.subr.mxu0 0.0
  %103 = vmatpush2.msra.mxu0 0.0
  %104 = vmatprep.subr.mxu0 0.0
  %105 = vmatpush2.msra.mxu0 0.0
  %106 = vmatprep.subr.mxu0 0.0
  %107 = vmatpush2.msra.mxu0 0.0
  %108 = vmatprep.subr.mxu0 0.0
  %109 = vmatpush2.msra.mxu0 0.0
  %110 = vmatprep.subr.mxu0 0.0
  %111 = vmatpush2.msra.mxu0 0.0
  %112 = vmatprep.subr.mxu0 0.0
  %113 = vmatpush2.msra.mxu0 0.0
  %114 = vmatprep.subr.mxu0 0.0
  %115 = vmatpush2.msra.mxu0 0.0
  %116 = vmatprep.subr.mxu0 0.0
  %117 = vmatpush2.msra.mxu0 0.0
  %118 = vmatprep.subr.mxu0 0.0
  %119 = vmatpush2.msra.mxu0 0.0
  %120 = vmatprep.subr.mxu0 0.0
  %121 = vmatpush2.msra.mxu0 0.0
  %122 = vmatprep.mubr.f32.mxu0 0.0
  %123 = vmatmul.mubr.f32.gmra.mxu0 %v47
  %v124 = vpop.f32.mrf.mxu0
  %v125 = vadd.f32 0.0, %v124
  %v126 = vpop.f32.mrf.mxu0
  %v127 = vadd.f32 0.0, %v126
  %128 = vmatprep.mubr.f32.mxu0 0.0
  %129 = vmatmul.mubr.f32.gmra.mxu0 %v50
  %v130 = vpop.f32.mrf.mxu0
  %v131 = vadd.f32 0.0, %v130
  %v132 = vpop.f32.mrf.mxu0
  %v133 = vadd.f32 0.0, %v132
  %134 = vmatprep.mubr.f32.mxu0 0.0
  %135 = vmatmul.mubr.f32.gmra.mxu0 %v53
  %v136 = vpop.f32.mrf.mxu0
  %v137 = vadd.f32 0.0, %v136
  %v138 = vpop.f32.mrf.mxu0
  %v139 = vadd.f32 0.0, %v138
  %140 = vmatprep.mubr.f32.mxu0 0.0
  %141 = vmatmul.mubr.f32.gmra.mxu0 %v56
  %v142 = vpop.f32.mrf.mxu0
  %v143 = vadd.f32 0.0, %v142
  %v144 = vpop.f32.mrf.mxu0
  %v145 = vadd.f32 0.0, %v144
  %146 = vdwg.mxu0
  %v147 = vld [vmem:[%s3] sm:$0x1]
  %v148 = vld [vmem:[%s4] sm:$0x1]
  %v149 = vld [vmem:[%s2] sm:$0xff]
  %v150 = vld [vmem:[%s2 + $0x8] sm:$0xff]
  %v151 = vld [vmem:[%s2 + $0x10] sm:$0xff]
  %v152 = vld [vmem:[%s2 + $0x18] sm:$0xff]
  %vm153 = vcmask 130048
  %v155 = vsel %vm153, %v148, 0
  %157 = vmatprep.subr.mxu0 0.0
  %158 = vmatpush1.msra.mxu0 0.0
  %159 = vmatprep.subr.mxu0 0.0
  %160 = vmatpush1.msra.mxu0 0.0
  %161 = vmatprep.subr.mxu0 0.0
  %162 = vmatpush1.msra.mxu0 0.0
  %163 = vmatprep.subr.mxu0 0.0
  %164 = vmatpush1.msra.mxu0 0.0
  %165 = vmatprep.subr.mxu0 0.0
  %166 = vmatpush1.msra.mxu0 0.0
  %167 = vmatprep.subr.mxu0 0.0
  %168 = vmatpush1.msra.mxu0 0.0
  %169 = vmatprep.subr.mxu0 0.0
  %170 = vmatpush1.msra.mxu0 0.0
  %171 = vmatprep.subr.mxu0 0.0
  %172 = vmatpush1.msra.mxu0 0.0
  %173 = vmatprep.subr.mxu0 0.0
  %174 = vmatpush1.msra.mxu0 0.0
  %175 = vmatprep.subr.mxu0 0.0
  %176 = vmatpush1.msra.mxu0 0.0
  %177 = vmatprep.subr.mxu0 0.0
  %178 = vmatpush1.msra.mxu0 0.0
  %179 = vmatprep.subr.mxu0 0.0
  %180 = vmatpush1.msra.mxu0 0.0
  %181 = vmatprep.subr.mxu0 0.0
  %182 = vmatpush1.msra.mxu0 0.0
  %183 = vmatprep.subr.mxu0 0.0
  %184 = vmatpush1.msra.mxu0 0.0
  %185 = vmatprep.subr.mxu0 %v152
  %186 = vmatpush1.msra.mxu0 %v151
  %187 = vmatprep.subr.mxu0 %v150
  %188 = vmatpush1.msra.mxu0 %v149
  %189 = vmatprep.subr.mxu0 0.0
  %190 = vmatpush2.msra.mxu0 0.0
  %191 = vmatprep.subr.mxu0 0.0
  %192 = vmatpush2.msra.mxu0 0.0
  %193 = vmatprep.subr.mxu0 0.0
  %194 = vmatpush2.msra.mxu0 0.0
  %195 = vmatprep.subr.mxu0 0.0
  %196 = vmatpush2.msra.mxu0 0.0
  %197 = vmatprep.subr.mxu0 0.0
  %198 = vmatpush2.msra.mxu0 0.0
  %199 = vmatprep.subr.mxu0 0.0
  %200 = vmatpush2.msra.mxu0 0.0
  %201 = vmatprep.subr.mxu0 0.0
  %202 = vmatpush2.msra.mxu0 0.0
  %203 = vmatprep.subr.mxu0 0.0
  %204 = vmatpush2.msra.mxu0 0.0
  %205 = vmatprep.subr.mxu0 0.0
  %206 = vmatpush2.msra.mxu0 0.0
  %207 = vmatprep.subr.mxu0 0.0
  %208 = vmatpush2.msra.mxu0 0.0
  %209 = vmatprep.subr.mxu0 0.0
  %210 = vmatpush2.msra.mxu0 0.0
  %211 = vmatprep.subr.mxu0 0.0
  %212 = vmatpush2.msra.mxu0 0.0
  %213 = vmatprep.subr.mxu0 0.0
  %214 = vmatpush2.msra.mxu0 0.0
  %215 = vmatprep.subr.mxu0 0.0
  %216 = vmatpush2.msra.mxu0 0.0
  %217 = vmatprep.subr.mxu0 0.0
  %218 = vmatpush2.msra.mxu0 0.0
  %219 = vmatprep.subr.mxu0 0.0
  %220 = vmatpush2.msra.mxu0 0.0
  %221 = vmatprep.mubr.f32.mxu0 0.0
  %222 = vmatmul.mubr.f32.gmra.mxu0 %v155
  %v223 = vpop.f32.mrf.mxu0
  %v224 = vadd.f32 0.0, %v223
  %v225 = vpop.f32.mrf.mxu0
  %v226 = vadd.f32 0.0, %v225
  %227 = vdwg.mxu0
  %vm228 = vcmask 261120
  %v230 = vsel %vm228, %v147, 0
  %232 = vmatprep.subr.mxu0 0.0
  %233 = vmatpush1.msra.mxu0 0.0
  %234 = vmatprep.subr.mxu0 0.0
  %235 = vmatpush1.msra.mxu0 0.0
  %236 = vmatprep.subr.mxu0 0.0
  %237 = vmatpush1.msra.mxu0 0.0
  %238 = vmatprep.subr.mxu0 0.0
  %239 = vmatpush1.msra.mxu0 0.0
  %240 = vmatprep.subr.mxu0 0.0
  %241 = vmatpush1.msra.mxu0 0.0
  %242 = vmatprep.subr.mxu0 0.0
  %243 = vmatpush1.msra.mxu0 0.0
  %244 = vmatprep.subr.mxu0 0.0
  %245 = vmatpush1.msra.mxu0 0.0
  %246 = vmatprep.subr.mxu0 0.0
  %247 = vmatpush1.msra.mxu0 0.0
  %248 = vmatprep.subr.mxu0 0.0
  %249 = vmatpush1.msra.mxu0 0.0
  %250 = vmatprep.subr.mxu0 0.0
  %251 = vmatpush1.msra.mxu0 0.0
  %252 = vmatprep.subr.mxu0 0.0
  %253 = vmatpush1.msra.mxu0 0.0
  %254 = vmatprep.subr.mxu0 0.0
  %255 = vmatpush1.msra.mxu0 0.0
  %256 = vmatprep.subr.mxu0 %v145
  %257 = vmatpush1.msra.mxu0 %v143
  %258 = vmatprep.subr.mxu0 %v139
  %259 = vmatpush1.msra.mxu0 %v137
  %260 = vmatprep.subr.mxu0 %v133
  %261 = vmatpush1.msra.mxu0 %v131
  %262 = vmatprep.subr.mxu0 %v127
  %263 = vmatpush1.msra.mxu0 %v125
  %264 = vmatprep.subr.mxu0 0.0
  %265 = vmatpush2.msra.mxu0 0.0
  %266 = vmatprep.subr.mxu0 0.0
  %267 = vmatpush2.msra.mxu0 0.0
  %268 = vmatprep.subr.mxu0 0.0
  %269 = vmatpush2.msra.mxu0 0.0
  %270 = vmatprep.subr.mxu0 0.0
  %271 = vmatpush2.msra.mxu0 0.0
  %272 = vmatprep.subr.mxu0 0.0
  %273 = vmatpush2.msra.mxu0 0.0
  %274 = vmatprep.subr.mxu0 0.0
  %275 = vmatpush2.msra.mxu0 0.0
  %276 = vmatprep.subr.mxu0 0.0
  %277 = vmatpush2.msra.mxu0 0.0
  %278 = vmatprep.subr.mxu0 0.0
  %279 = vmatpush2.msra.mxu0 0.0
  %280 = vmatprep.subr.mxu0 0.0
  %281 = vmatpush2.msra.mxu0 0.0
  %282 = vmatprep.subr.mxu0 0.0
  %283 = vmatpush2.msra.mxu0 0.0
  %284 = vmatprep.subr.mxu0 0.0
  %285 = vmatpush2.msra.mxu0 0.0
  %286 = vmatprep.subr.mxu0 0.0
  %287 = vmatpush2.msra.mxu0 0.0
  %288 = vmatprep.subr.mxu0 0.0
  %289 = vmatpush2.msra.mxu0 0.0
  %290 = vmatprep.subr.mxu0 0.0
  %291 = vmatpush2.msra.mxu0 0.0
  %292 = vmatprep.subr.mxu0 0.0
  %293 = vmatpush2.msra.mxu0 0.0
  %294 = vmatprep.subr.mxu0 0.0
  %295 = vmatpush2.msra.mxu0 0.0
  %296 = vmatprep.mubr.f32.mxu0 0.0
  %297 = vmatmul.mubr.f32.gmra.mxu0 %v230
  %v298 = vpop.f32.mrf.mxu0
  %v299 = vadd.f32 %v224, %v298
  %v300 = vpop.f32.mrf.mxu0
  %v301 = vadd.f32 %v226, %v300
  %302 = vdwg.mxu0
  %v303 = vld [vmem:[#allocation2] sm:$0x1]
  %305 = vset.pattern.permute.xlu0 0
  %306 = vperm.xlu0 %305, %v303
  %v307 = vpop.permute.xlu0 %306
  %v309 = vlaneseq
  %v310 = vshrl.u32 %v309, 7
  %v311 = vsub.s32 0, %v310
  %v312 = vrot.slane %v307, %v311
  %v313 = vadd.f32 %v299, %v312
  %v314 = vadd.f32 %v301, %v312
  %v315 = vxor.u32 %v313, 2147483648
  %v316 = vxor.u32 %v314, 2147483648
  %v317 = vmul.f32 %v315, 1.442695
  %v318 = vpow.pop %v317
  %v319 = vmul.f32 %v316, 1.442695
  %v320 = vpow.pop %v319
  %v321 = vadd.f32 %v318, 1.0
  %v322 = vadd.f32 %v320, 1.0
  %v323 = vrcp.pop %v321
  %v324 = vmul.f32 1.0, %v323
  %v325 = vrcp.pop %v322
  %v326 = vmul.f32 1.0, %v325
  %v329 = vcombine.low %v324, %v326
  %v331 = vunpack.c.l.s4 1966171168
  %v332 = vunpack.c.0.s8 %v331
  %v333 = vlaneseq
  %v334 = vshrl.u32 %v333, 7
  %v335 = vsub.s32 %v332, %v334
  %v336 = vrot.slane %v329, %v335
  %v338 = vunpack.c.l.s4 1966171168
  %v339 = vunpack.c.0.s8 %v338
  %v340 = vlaneseq
  %v341 = vshrl.u32 %v340, 7
  %v342 = vsub.s32 %v339, %v341
  %v343 = vrot.slane %v336, %v342
  %v345 = vlaneseq
  %vm346 = vcmp.ge.s32.totalorder %v345, 0
  %vm347 = vcmp.lt.s32.totalorder %v345, 256
  %vm348 = vmand %vm346, %vm347
  %349 = vst.msk [vmem:[%s6] sm:$0x3] %vm348, %v343
  %s350 = scalar_lea.vmem %s1, 32
  %v351 = vld [vmem:[%s350] sm:$0xff]
  %v352 = vld [vmem:[%s350 + $0x8] sm:$0xff]
  %v353 = vld [vmem:[%s350 + $0x10] sm:$0xff]
  %v354 = vld [vmem:[%s350 + $0x18] sm:$0xff]
  %v355 = vld [vmem:[%s0] sm:$0xff]
  %v356 = vld [vmem:[%s0 + $0x8] sm:$0xff]
  %v357 = vld [vmem:[%s0 + $0x10] sm:$0xff]
  %v358 = vld [vmem:[%s0 + $0x18] sm:$0xff]
  %v359 = vld [vmem:[%s0 + $0x20] sm:$0xff]
  %v360 = vld [vmem:[%s0 + $0x28] sm:$0xff]
  %v361 = vld [vmem:[%s0 + $0x30] sm:$0xff]
  %v362 = vld [vmem:[%s0 + $0x38] sm:$0xff]
  %v363 = vld [vmem:[%s0 + $0x40] sm:$0xff]
  %v364 = vld [vmem:[%s0 + $0x48] sm:$0xff]
  %v365 = vld [vmem:[%s0 + $0x50] sm:$0xff]
  %v366 = vld [vmem:[%s0 + $0x58] sm:$0xff]
  %v367 = vld [vmem:[%s0 + $0x60] sm:$0xff]
  %v368 = vld [vmem:[%s0 + $0x68] sm:$0xff]
  %v369 = vld [vmem:[%s0 + $0x70] sm:$0xff]
  %v370 = vld [vmem:[%s0 + $0x78] sm:$0xff]
  %v372 = vsel %vm45, %v351, 0
  %v375 = vsel %vm45, %v352, 0
  %v378 = vsel %vm45, %v353, 0
  %v381 = vsel %vm45, %v354, 0
  %383 = vmatprep.subr.mxu0 0.0
  %384 = vmatpush1.msra.mxu0 0.0
  %385 = vmatprep.subr.mxu0 0.0
  %386 = vmatpush1.msra.mxu0 0.0
  %387 = vmatprep.subr.mxu0 0.0
  %388 = vmatpush1.msra.mxu0 0.0
  %389 = vmatprep.subr.mxu0 0.0
  %390 = vmatpush1.msra.mxu0 0.0
  %391 = vmatprep.subr.mxu0 0.0
  %392 = vmatpush1.msra.mxu0 0.0
  %393 = vmatprep.subr.mxu0 0.0
  %394 = vmatpush1.msra.mxu0 0.0
  %395 = vmatprep.subr.mxu0 0.0
  %396 = vmatpush1.msra.mxu0 0.0
  %397 = vmatprep.subr.mxu0 0.0
  %398 = vmatpush1.msra.mxu0 0.0
  %399 = vmatprep.subr.mxu0 %v370
  %400 = vmatpush1.msra.mxu0 %v369
  %401 = vmatprep.subr.mxu0 %v368
  %402 = vmatpush1.msra.mxu0 %v367
  %403 = vmatprep.subr.mxu0 %v366
  %404 = vmatpush1.msra.mxu0 %v365
  %405 = vmatprep.subr.mxu0 %v364
  %406 = vmatpush1.msra.mxu0 %v363
  %407 = vmatprep.subr.mxu0 %v362
  %408 = vmatpush1.msra.mxu0 %v361
  %409 = vmatprep.subr.mxu0 %v360
  %410 = vmatpush1.msra.mxu0 %v359
  %411 = vmatprep.subr.mxu0 %v358
  %412 = vmatpush1.msra.mxu0 %v357
  %413 = vmatprep.subr.mxu0 %v356
  %414 = vmatpush1.msra.mxu0 %v355
  %415 = vmatprep.subr.mxu0 0.0
  %416 = vmatpush2.msra.mxu0 0.0
  %417 = vmatprep.subr.mxu0 0.0
  %418 = vmatpush2.msra.mxu0 0.0
  %419 = vmatprep.subr.mxu0 0.0
  %420 = vmatpush2.msra.mxu0 0.0
  %421 = vmatprep.subr.mxu0 0.0
  %422 = vmatpush2.msra.mxu0 0.0
  %423 = vmatprep.subr.mxu0 0.0
  %424 = vmatpush2.msra.mxu0 0.0
  %425 = vmatprep.subr.mxu0 0.0
  %426 = vmatpush2.msra.mxu0 0.0
  %427 = vmatprep.subr.mxu0 0.0
  %428 = vmatpush2.msra.mxu0 0.0
  %429 = vmatprep.subr.mxu0 0.0
  %430 = vmatpush2.msra.mxu0 0.0
  %431 = vmatprep.subr.mxu0 0.0
  %432 = vmatpush2.msra.mxu0 0.0
  %433 = vmatprep.subr.mxu0 0.0
  %434 = vmatpush2.msra.mxu0 0.0
  %435 = vmatprep.subr.mxu0 0.0
  %436 = vmatpush2.msra.mxu0 0.0
  %437 = vmatprep.subr.mxu0 0.0
  %438 = vmatpush2.msra.mxu0 0.0
  %439 = vmatprep.subr.mxu0 0.0
  %440 = vmatpush2.msra.mxu0 0.0
  %441 = vmatprep.subr.mxu0 0.0
  %442 = vmatpush2.msra.mxu0 0.0
  %443 = vmatprep.subr.mxu0 0.0
  %444 = vmatpush2.msra.mxu0 0.0
  %445 = vmatprep.subr.mxu0 0.0
  %446 = vmatpush2.msra.mxu0 0.0
  %447 = vmatprep.mubr.f32.mxu0 0.0
  %448 = vmatmul.mubr.f32.gmra.mxu0 %v372
  %v449 = vpop.f32.mrf.mxu0
  %v450 = vadd.f32 0.0, %v449
  %v451 = vpop.f32.mrf.mxu0
  %v452 = vadd.f32 0.0, %v451
  %453 = vmatprep.mubr.f32.mxu0 0.0
  %454 = vmatmul.mubr.f32.gmra.mxu0 %v375
  %v455 = vpop.f32.mrf.mxu0
  %v456 = vadd.f32 0.0, %v455
  %v457 = vpop.f32.mrf.mxu0
  %v458 = vadd.f32 0.0, %v457
  %459 = vmatprep.mubr.f32.mxu0 0.0
  %460 = vmatmul.mubr.f32.gmra.mxu0 %v378
  %v461 = vpop.f32.mrf.mxu0
  %v462 = vadd.f32 0.0, %v461
  %v463 = vpop.f32.mrf.mxu0
  %v464 = vadd.f32 0.0, %v463
  %465 = vmatprep.mubr.f32.mxu0 0.0
  %466 = vmatmul.mubr.f32.gmra.mxu0 %v381
  %v467 = vpop.f32.mrf.mxu0
  %v468 = vadd.f32 0.0, %v467
  %v469 = vpop.f32.mrf.mxu0
  %v470 = vadd.f32 0.0, %v469
  %471 = vdwg.mxu0
  %v472 = vld [vmem:[%s3] sm:$0x1]
  %v473 = vld [vmem:[%s4] sm:$0x1]
  %s474 = scalar_lea.vmem %s2, 32
  %v475 = vld [vmem:[%s474] sm:$0xff]
  %v476 = vld [vmem:[%s474 + $0x8] sm:$0xff]
  %v477 = vld [vmem:[%s474 + $0x10] sm:$0xff]
  %v478 = vld [vmem:[%s474 + $0x18] sm:$0xff]
  %v480 = vsel %vm153, %v473, 0
  %482 = vmatprep.subr.mxu0 0.0
  %483 = vmatpush1.msra.mxu0 0.0
  %484 = vmatprep.subr.mxu0 0.0
  %485 = vmatpush1.msra.mxu0 0.0
  %486 = vmatprep.subr.mxu0 0.0
  %487 = vmatpush1.msra.mxu0 0.0
  %488 = vmatprep.subr.mxu0 0.0
  %489 = vmatpush1.msra.mxu0 0.0
  %490 = vmatprep.subr.mxu0 0.0
  %491 = vmatpush1.msra.mxu0 0.0
  %492 = vmatprep.subr.mxu0 0.0
  %493 = vmatpush1.msra.mxu0 0.0
  %494 = vmatprep.subr.mxu0 0.0
  %495 = vmatpush1.msra.mxu0 0.0
  %496 = vmatprep.subr.mxu0 0.0
  %497 = vmatpush1.msra.mxu0 0.0
  %498 = vmatprep.subr.mxu0 0.0
  %499 = vmatpush1.msra.mxu0 0.0
  %500 = vmatprep.subr.mxu0 0.0
  %501 = vmatpush1.msra.mxu0 0.0
  %502 = vmatprep.subr.mxu0 0.0
  %503 = vmatpush1.msra.mxu0 0.0
  %504 = vmatprep.subr.mxu0 0.0
  %505 = vmatpush1.msra.mxu0 0.0
  %506 = vmatprep.subr.mxu0 0.0
  %507 = vmatpush1.msra.mxu0 0.0
  %508 = vmatprep.subr.mxu0 0.0
  %509 = vmatpush1.msra.mxu0 0.0
  %510 = vmatprep.subr.mxu0 %v478
  %511 = vmatpush1.msra.mxu0 %v477
  %512 = vmatprep.subr.mxu0 %v476
  %513 = vmatpush1.msra.mxu0 %v475
  %514 = vmatprep.subr.mxu0 0.0
  %515 = vmatpush2.msra.mxu0 0.0
  %516 = vmatprep.subr.mxu0 0.0
  %517 = vmatpush2.msra.mxu0 0.0
  %518 = vmatprep.subr.mxu0 0.0
  %519 = vmatpush2.msra.mxu0 0.0
  %520 = vmatprep.subr.mxu0 0.0
  %521 = vmatpush2.msra.mxu0 0.0
  %522 = vmatprep.subr.mxu0 0.0
  %523 = vmatpush2.msra.mxu0 0.0
  %524 = vmatprep.subr.mxu0 0.0
  %525 = vmatpush2.msra.mxu0 0.0
  %526 = vmatprep.subr.mxu0 0.0
  %527 = vmatpush2.msra.mxu0 0.0
  %528 = vmatprep.subr.mxu0 0.0
  %529 = vmatpush2.msra.mxu0 0.0
  %530 = vmatprep.subr.mxu0 0.0
  %531 = vmatpush2.msra.mxu0 0.0
  %532 = vmatprep.subr.mxu0 0.0
  %533 = vmatpush2.msra.mxu0 0.0
  %534 = vmatprep.subr.mxu0 0.0
  %535 = vmatpush2.msra.mxu0 0.0
  %536 = vmatprep.subr.mxu0 0.0
  %537 = vmatpush2.msra.mxu0 0.0
  %538 = vmatprep.subr.mxu0 0.0
  %539 = vmatpush2.msra.mxu0 0.0
  %540 = vmatprep.subr.mxu0 0.0
  %541 = vmatpush2.msra.mxu0 0.0
  %542 = vmatprep.subr.mxu0 0.0
  %543 = vmatpush2.msra.mxu0 0.0
  %544 = vmatprep.subr.mxu0 0.0
  %545 = vmatpush2.msra.mxu0 0.0
  %546 = vmatprep.mubr.f32.mxu0 0.0
  %547 = vmatmul.mubr.f32.gmra.mxu0 %v480
  %v548 = vpop.f32.mrf.mxu0
  %v549 = vadd.f32 0.0, %v548
  %v550 = vpop.f32.mrf.mxu0
  %v551 = vadd.f32 0.0, %v550
  %552 = vdwg.mxu0
  %v554 = vsel %vm228, %v472, 0
  %556 = vmatprep.subr.mxu0 0.0
  %557 = vmatpush1.msra.mxu0 0.0
  %558 = vmatprep.subr.mxu0 0.0
  %559 = vmatpush1.msra.mxu0 0.0
  %560 = vmatprep.subr.mxu0 0.0
  %561 = vmatpush1.msra.mxu0 0.0
  %562 = vmatprep.subr.mxu0 0.0
  %563 = vmatpush1.msra.mxu0 0.0
  %564 = vmatprep.subr.mxu0 0.0
  %565 = vmatpush1.msra.mxu0 0.0
  %566 = vmatprep.subr.mxu0 0.0
  %567 = vmatpush1.msra.mxu0 0.0
  %568 = vmatprep.subr.mxu0 0.0
  %569 = vmatpush1.msra.mxu0 0.0
  %570 = vmatprep.subr.mxu0 0.0
  %571 = vmatpush1.msra.mxu0 0.0
  %572 = vmatprep.subr.mxu0 0.0
  %573 = vmatpush1.msra.mxu0 0.0
  %574 = vmatprep.subr.mxu0 0.0
  %575 = vmatpush1.msra.mxu0 0.0
  %576 = vmatprep.subr.mxu0 0.0
  %577 = vmatpush1.msra.mxu0 0.0
  %578 = vmatprep.subr.mxu0 0.0
  %579 = vmatpush1.msra.mxu0 0.0
  %580 = vmatprep.subr.mxu0 %v470
  %581 = vmatpush1.msra.mxu0 %v468
  %582 = vmatprep.subr.mxu0 %v464
  %583 = vmatpush1.msra.mxu0 %v462
  %584 = vmatprep.subr.mxu0 %v458
  %585 = vmatpush1.msra.mxu0 %v456
  %586 = vmatprep.subr.mxu0 %v452
  %587 = vmatpush1.msra.mxu0 %v450
  %588 = vmatprep.subr.mxu0 0.0
  %589 = vmatpush2.msra.mxu0 0.0
  %590 = vmatprep.subr.mxu0 0.0
  %591 = vmatpush2.msra.mxu0 0.0
  %592 = vmatprep.subr.mxu0 0.0
  %593 = vmatpush2.msra.mxu0 0.0
  %594 = vmatprep.subr.mxu0 0.0
  %595 = vmatpush2.msra.mxu0 0.0
  %596 = vmatprep.subr.mxu0 0.0
  %597 = vmatpush2.msra.mxu0 0.0
  %598 = vmatprep.subr.mxu0 0.0
  %599 = vmatpush2.msra.mxu0 0.0
  %600 = vmatprep.subr.mxu0 0.0
  %601 = vmatpush2.msra.mxu0 0.0
  %602 = vmatprep.subr.mxu0 0.0
  %603 = vmatpush2.msra.mxu0 0.0
  %604 = vmatprep.subr.mxu0 0.0
  %605 = vmatpush2.msra.mxu0 0.0
  %606 = vmatprep.subr.mxu0 0.0
  %607 = vmatpush2.msra.mxu0 0.0
  %608 = vmatprep.subr.mxu0 0.0
  %609 = vmatpush2.msra.mxu0 0.0
  %610 = vmatprep.subr.mxu0 0.0
  %611 = vmatpush2.msra.mxu0 0.0
  %612 = vmatprep.subr.mxu0 0.0
  %613 = vmatpush2.msra.mxu0 0.0
  %614 = vmatprep.subr.mxu0 0.0
  %615 = vmatpush2.msra.mxu0 0.0
  %616 = vmatprep.subr.mxu0 0.0
  %617 = vmatpush2.msra.mxu0 0.0
  %618 = vmatprep.subr.mxu0 0.0
  %619 = vmatpush2.msra.mxu0 0.0
  %620 = vmatprep.mubr.f32.mxu0 0.0
  %621 = vmatmul.mubr.f32.gmra.mxu0 %v554
  %v622 = vpop.f32.mrf.mxu0
  %v623 = vadd.f32 %v549, %v622
  %v624 = vpop.f32.mrf.mxu0
  %v625 = vadd.f32 %v551, %v624
  %626 = vdwg.mxu0
  %v627 = vld [vmem:[#allocation2] sm:$0x1]
  %629 = vset.pattern.permute.xlu0 0
  %630 = vperm.xlu0 %629, %v627
  %v631 = vpop.permute.xlu0 %630
  %v633 = vlaneseq
  %v634 = vshrl.u32 %v633, 7
  %v635 = vsub.s32 0, %v634
  %v636 = vrot.slane %v631, %v635
  %v637 = vadd.f32 %v623, %v636
  %v638 = vadd.f32 %v625, %v636
  %v639 = vxor.u32 %v637, 2147483648
  %v640 = vxor.u32 %v638, 2147483648
  %v641 = vmul.f32 %v639, 1.442695
  %v642 = vpow.pop %v641
  %v643 = vmul.f32 %v640, 1.442695
  %v644 = vpow.pop %v643
  %v645 = vadd.f32 %v642, 1.0
  %v646 = vadd.f32 %v644, 1.0
  %v647 = vrcp.pop %v645
  %v648 = vmul.f32 1.0, %v647
  %v649 = vrcp.pop %v646
  %v650 = vmul.f32 1.0, %v649
  %v653 = vcombine.low %v648, %v650
  %v655 = vunpack.c.l.s4 1966171168
  %v656 = vunpack.c.0.s8 %v655
  %v657 = vlaneseq
  %v658 = vshrl.u32 %v657, 7
  %v659 = vsub.s32 %v656, %v658
  %v660 = vrot.slane %v653, %v659
  %v662 = vunpack.c.l.s4 1966171168
  %v663 = vunpack.c.0.s8 %v662
  %v664 = vlaneseq
  %v665 = vshrl.u32 %v664, 7
  %v666 = vsub.s32 %v663, %v665
  %v667 = vrot.slane %v660, %v666
  %s669 = scalar_lea.vmem %s6, 2
  %670 = vst.msk [vmem:[%s669] sm:$0x3] %vm348, %v667
  // Predicated region
  $region26: #{unet_forward.21} parent=0 // pred_check
    _
  $region27: #{unet_forward.21} parent=0 // pred_check_branch
    %672 = sbr.rel (0) target = $region29
  $region28: #{unet_forward.21} parent=0 // pred_region
    _
  $region29: #{unet_forward.21} parent=0 // pred_fallthru
    _
  // Predicated region
  $region30: #{unet_forward.21} parent=0 // pred_check
    _
  $region31: #{unet_forward.21} parent=0 // pred_check_branch
    %674 = sbr.rel (0) target = $region33
  $region32: #{unet_forward.21} parent=0 // pred_region
    _
  $region33: #{unet_forward.21} parent=0 // pred_fallthru
    _

</llo_original>
